<compile_context>
chip_gen: v6e
topology: v6e:2x2x1
jax: 0.10.0
libtpu: 0.0.40
codegen_flags: <defaults>
</compile_context>

<pallas_src>
import jax
import jax.numpy as jnp
from jax import lax
from jax.experimental import pallas as pl
from jax.experimental.pallas import tpu as pltpu


C_IN, C_OUT, K, STRIDE, PAD = 3, 19, 3, 2, 1
H = W = 31
OH = (H + 2 * PAD - K) // STRIDE + 1    # 16
OW = (W + 2 * PAD - K) // STRIDE + 1    # 16
NPOS = OH * OW                          # 256
NTAP = C_IN * K * K                     # 27
GCOLS = K * NPOS                        # 768 (kw-major blocks of 256 output positions)


def _fused_conv_relu_kernel(x_ref, w_ref, b_ref, o_ref):
    # x_ref: (1, 3, 31, 31) f32 input image
    # w_ref: (27, 19, 1)  f32, row = kh*9 + kw*3 + c, value = weight[o, c, kh, kw]
    # b_ref: (19, 1)      f32
    # o_ref: (19, 256)    f32, columns ordered oh*16 + ow (lane-dense)
    f32 = jnp.float32

    # Width-selection matrix (also applies the horizontal zero padding):
    #   G[j, kw*256 + oh*16 + ow] = 1 iff j == 2*ow + kw - 1   (j = input column 0..30)
    j_idx = lax.broadcasted_iota(jnp.int32, (W, GCOLS), 0)
    q_idx = lax.broadcasted_iota(jnp.int32, (W, GCOLS), 1)
    ow = q_idx & (OW - 1)                 # q % 16
    kw_col = q_idx >> 8                   # q // 256
    g_sel = (j_idx == 2 * ow + kw_col - 1).astype(f32)          # (31, 768)

    # Row index / output-row index used by the per-kh height masks.
    i_idx = lax.broadcasted_iota(jnp.int32, (H, GCOLS), 0)
    oh = (q_idx >> 4) & (OH - 1)          # (q // 16) % 16

    # Width-gathered slabs, one per input channel (exact 0/1 selection on the MXU):
    #   u[c][i, kw*256 + oh*16 + ow] = x[c, i, 2*ow + kw - 1]   (0 where padded)
    u = [
        jnp.dot(x_ref[0, c], g_sel,
                preferred_element_type=f32, precision=lax.Precision.HIGHEST)
        for c in range(C_IN)
    ]

    acc = jnp.zeros((C_OUT, NPOS), f32)
    for kh in range(K):
        # Height mask (also applies the vertical zero padding):
        #   m[i, .] = 1 iff i == 2*oh + kh - 1
        m = (i_idx == 2 * oh + kh - 1).astype(f32)              # (31, 768)
        for c in range(C_IN):
            # Patch rows for (c, kh, all kw): (1, 768)
            red = jnp.sum(u[c] * m, axis=0, keepdims=True)
            for kw_i in range(K):
                row = red[:, kw_i * NPOS:(kw_i + 1) * NPOS]     # (1, 256), 256-aligned slice
                w_col = w_ref[kh * 9 + kw_i * 3 + c]            # (19, 1)
                acc = acc + w_col * row                         # rank-1 VPU MAC

    o_ref[...] = jnp.maximum(acc + b_ref[...], 0.0)


def prepare_params(weight, bias):
    """One-time (per deployment) weight/bias re-layout; kept OUT of the jitted path."""
    # (o, c, kh, kw) -> (kh, kw, c, o) -> (27, 19, 1); row index = kh*9 + kw*3 + c.
    w_prep = jnp.transpose(weight.astype(jnp.float32), (2, 3, 1, 0)).reshape(NTAP, C_OUT, 1)
    b_prep = bias.astype(jnp.float32).reshape(C_OUT, 1)
    return w_prep, b_prep


_COST = pl.CostEstimate(
    flops=2 * C_IN * H * W * GCOLS + 2 * NTAP * C_OUT * NPOS,   # ~4.7 MFLOP
    transcendentals=0,
    bytes_accessed=(C_IN * H * W + NTAP * C_OUT + C_OUT + C_OUT * NPOS) * 4,  # ~33 KB
)


@jax.jit
def model_forward(x, w_prep, b_prep):
    """Model.forward: conv(3->19, k=3, s=2, p=1) -> flatten -> relu."""
    out = pl.pallas_call(
        _fused_conv_relu_kernel,
        out_shape=jax.ShapeDtypeStruct((C_OUT, NPOS), jnp.float32),
        in_specs=[
            pl.BlockSpec(memory_space=pltpu.MemorySpace.VMEM),
            pl.BlockSpec(memory_space=pltpu.MemorySpace.VMEM),
            pl.BlockSpec(memory_space=pltpu.MemorySpace.VMEM),
        ],
        out_specs=pl.BlockSpec(memory_space=pltpu.MemorySpace.VMEM),
        cost_estimate=_COST,
    )(x.astype(jnp.float32), w_prep, b_prep)
    # TODO(synk): the original module calls v1.view(1, 1056), but the conv output has
    # 19*16*16 = 4864 elements, so that view would raise in PyTorch; flatten to the
    # actual element count instead.
    return out.reshape(1, C_OUT * NPOS)


if __name__ == "__main__":
    key = jax.random.PRNGKey(0)
    kx, kwgt, kb = jax.random.split(key, 3)

    x1 = jax.random.normal(kx, (1, C_IN, H, W), dtype=jnp.float32)
    # Deterministic Conv2d parameter init (uniform in +-1/sqrt(fan_in), like PyTorch default).
    fan_in = C_IN * K * K
    bound = 1.0 / (fan_in ** 0.5)
    weight = jax.random.uniform(kwgt, (C_OUT, C_IN, K, K), jnp.float32, -bound, bound)
    bias = jax.random.uniform(kb, (C_OUT,), jnp.float32, -bound, bound)

    w_prep, b_prep = prepare_params(weight, bias)
    y = model_forward(x1, w_prep, b_prep)
    jax.block_until_ready(y)

    # Pure-JAX reference: conv -> bias -> ReLU -> flatten (same math as the module).
    ref = lax.conv_general_dilated(
        x1, weight, window_strides=(STRIDE, STRIDE),
        padding=((PAD, PAD), (PAD, PAD)),
        dimension_numbers=("NCHW", "OIHW", "NCHW"),
        precision=lax.Precision.HIGHEST)
    ref = jnp.maximum(ref + bias[None, :, None, None], 0.0).reshape(1, -1)

    assert y.shape == (1, C_OUT * OH * OW)
    assert bool(jnp.all(y >= 0.0))                       # ReLU applied
    assert bool(jnp.allclose(y, ref, rtol=1e-4, atol=1e-4))
    print("KERNEL_OK")
</pallas_src>

<mosaic_0001>
module attributes {stable_mosaic.version = 11 : i64} {
  func.func @_fused_conv_relu_kernel(%arg0: memref<1x3x31x31xf32, #tpu.memory_space<vmem>>, %arg1: memref<27x19x1xf32, #tpu.memory_space<vmem>>, %arg2: memref<19x1xf32, #tpu.memory_space<vmem>>, %arg3: memref<19x256xf32, #tpu.memory_space<vmem>>) attributes {dimension_semantics = [], scalar_prefetch = 0 : i64, scratch_operands = 0 : i64, tpu.core_type = #tpu.core_type<tc>} {
    %0 = tpu.iota {dimensions = array<i32: 0>} : vector<31x768xi32>
    %1 = tpu.iota {dimensions = array<i32: 1>} : vector<31x768xi32>
    %c15_i32 = arith.constant 15 : i32
    %2 = vector.broadcast %c15_i32 : i32 to vector<31x768xi32>
    %3 = arith.andi %1, %2 : vector<31x768xi32>
    %c8_i32 = arith.constant 8 : i32
    %4 = vector.broadcast %c8_i32 : i32 to vector<31x768xi32>
    %5 = arith.shrsi %1, %4 : vector<31x768xi32>
    %c2_i32 = arith.constant 2 : i32
    %6 = vector.broadcast %c2_i32 : i32 to vector<31x768xi32>
    %7 = arith.muli %6, %3 : vector<31x768xi32>
    %8 = arith.addi %7, %5 : vector<31x768xi32>
    %c1_i32 = arith.constant 1 : i32
    %9 = vector.broadcast %c1_i32 : i32 to vector<31x768xi32>
    %10 = arith.subi %8, %9 : vector<31x768xi32>
    %11 = arith.cmpi eq, %0, %10 : vector<31x768xi32>
    %12 = arith.extui %11 : vector<31x768xi1> to vector<31x768xi32>
    %13 = arith.sitofp %12 : vector<31x768xi32> to vector<31x768xf32>
    %14 = tpu.iota {dimensions = array<i32: 0>} : vector<31x768xi32>
    %c4_i32 = arith.constant 4 : i32
    %15 = vector.broadcast %c4_i32 : i32 to vector<31x768xi32>
    %16 = arith.shrsi %1, %15 : vector<31x768xi32>
    %c15_i32_0 = arith.constant 15 : i32
    %17 = vector.broadcast %c15_i32_0 : i32 to vector<31x768xi32>
    %18 = arith.andi %16, %17 : vector<31x768xi32>
    %c0 = arith.constant 0 : index
    %c0_1 = arith.constant 0 : index
    %c0_2 = arith.constant 0 : index
    %c0_3 = arith.constant 0 : index
    %19 = vector.load %arg0[%c0, %c0_1, %c0_2, %c0_3] : memref<1x3x31x31xf32, #tpu.memory_space<vmem>>, vector<1x1x31x31xf32>
    %20 = vector.shape_cast %19 : vector<1x1x31x31xf32> to vector<31x31xf32>
    %cst = arith.constant dense<0.000000e+00> : vector<31x768xf32>
    %21 = tpu.matmul %20, %13, %cst {dimension_numbers = #tpu.dot_dimension_numbers<[1], [0], [0], [1], [0, 0, 1, 1], [], []>, precision = #tpu.contract_precision<fp32>} : vector<31x31xf32>, vector<31x768xf32>, vector<31x768xf32> -> vector<31x768xf32>
    %c0_4 = arith.constant 0 : index
    %c1 = arith.constant 1 : index
    %c0_5 = arith.constant 0 : index
    %c0_6 = arith.constant 0 : index
    %22 = vector.load %arg0[%c0_4, %c1, %c0_5, %c0_6] : memref<1x3x31x31xf32, #tpu.memory_space<vmem>>, vector<1x1x31x31xf32>
    %23 = vector.shape_cast %22 : vector<1x1x31x31xf32> to vector<31x31xf32>
    %cst_7 = arith.constant dense<0.000000e+00> : vector<31x768xf32>
    %24 = tpu.matmul %23, %13, %cst_7 {dimension_numbers = #tpu.dot_dimension_numbers<[1], [0], [0], [1], [0, 0, 1, 1], [], []>, precision = #tpu.contract_precision<fp32>} : vector<31x31xf32>, vector<31x768xf32>, vector<31x768xf32> -> vector<31x768xf32>
    %c0_8 = arith.constant 0 : index
    %c2 = arith.constant 2 : index
    %c0_9 = arith.constant 0 : index
    %c0_10 = arith.constant 0 : index
    %25 = vector.load %arg0[%c0_8, %c2, %c0_9, %c0_10] : memref<1x3x31x31xf32, #tpu.memory_space<vmem>>, vector<1x1x31x31xf32>
    %26 = vector.shape_cast %25 : vector<1x1x31x31xf32> to vector<31x31xf32>
    %cst_11 = arith.constant dense<0.000000e+00> : vector<31x768xf32>
    %27 = tpu.matmul %26, %13, %cst_11 {dimension_numbers = #tpu.dot_dimension_numbers<[1], [0], [0], [1], [0, 0, 1, 1], [], []>, precision = #tpu.contract_precision<fp32>} : vector<31x31xf32>, vector<31x768xf32>, vector<31x768xf32> -> vector<31x768xf32>
    %cst_12 = arith.constant 0.000000e+00 : f32
    %28 = vector.broadcast %cst_12 : f32 to vector<19x256xf32>
    %c2_i32_13 = arith.constant 2 : i32
    %29 = vector.broadcast %c2_i32_13 : i32 to vector<31x768xi32>
    %30 = arith.muli %29, %18 : vector<31x768xi32>
    %c0_i32 = arith.constant 0 : i32
    %31 = vector.broadcast %c0_i32 : i32 to vector<31x768xi32>
    %32 = arith.addi %30, %31 : vector<31x768xi32>
    %c1_i32_14 = arith.constant 1 : i32
    %33 = vector.broadcast %c1_i32_14 : i32 to vector<31x768xi32>
    %34 = arith.subi %32, %33 : vector<31x768xi32>
    %35 = arith.cmpi eq, %14, %34 : vector<31x768xi32>
    %36 = arith.extui %35 : vector<31x768xi1> to vector<31x768xi32>
    %37 = arith.sitofp %36 : vector<31x768xi32> to vector<31x768xf32>
    %38 = arith.mulf %21, %37 : vector<31x768xf32>
    %cst_15 = arith.constant dense<0.000000e+00> : vector<768xf32>
    %39 = vector.multi_reduction <add>, %38, %cst_15 [0] : vector<31x768xf32> to vector<768xf32>
    %40 = vector.shape_cast %39 : vector<768xf32> to vector<1x768xf32>
    %41 = vector.extract_strided_slice %40 {offsets = [0, 0], sizes = [1, 256], strides = [1, 1]} : vector<1x768xf32> to vector<1x256xf32>
    %c0_16 = arith.constant 0 : index
    %c0_17 = arith.constant 0 : index
    %c0_18 = arith.constant 0 : index
    %42 = vector.load %arg1[%c0_16, %c0_17, %c0_18] : memref<27x19x1xf32, #tpu.memory_space<vmem>>, vector<1x19x1xf32>
    %43 = vector.shape_cast %42 : vector<1x19x1xf32> to vector<19x1xf32>
    %44 = vector.broadcast %43 : vector<19x1xf32> to vector<19x256xf32>
    %45 = vector.broadcast %41 : vector<1x256xf32> to vector<19x256xf32>
    %46 = arith.mulf %44, %45 : vector<19x256xf32>
    %47 = arith.addf %28, %46 : vector<19x256xf32>
    %48 = vector.extract_strided_slice %40 {offsets = [0, 256], sizes = [1, 256], strides = [1, 1]} : vector<1x768xf32> to vector<1x256xf32>
    %c3 = arith.constant 3 : index
    %c0_19 = arith.constant 0 : index
    %c0_20 = arith.constant 0 : index
    %49 = vector.load %arg1[%c3, %c0_19, %c0_20] : memref<27x19x1xf32, #tpu.memory_space<vmem>>, vector<1x19x1xf32>
    %50 = vector.shape_cast %49 : vector<1x19x1xf32> to vector<19x1xf32>
    %51 = vector.broadcast %50 : vector<19x1xf32> to vector<19x256xf32>
    %52 = vector.broadcast %48 : vector<1x256xf32> to vector<19x256xf32>
    %53 = arith.mulf %51, %52 : vector<19x256xf32>
    %54 = arith.addf %47, %53 : vector<19x256xf32>
    %55 = vector.extract_strided_slice %40 {offsets = [0, 512], sizes = [1, 256], strides = [1, 1]} : vector<1x768xf32> to vector<1x256xf32>
    %c6 = arith.constant 6 : index
    %c0_21 = arith.constant 0 : index
    %c0_22 = arith.constant 0 : index
    %56 = vector.load %arg1[%c6, %c0_21, %c0_22] : memref<27x19x1xf32, #tpu.memory_space<vmem>>, vector<1x19x1xf32>
    %57 = vector.shape_cast %56 : vector<1x19x1xf32> to vector<19x1xf32>
    %58 = vector.broadcast %57 : vector<19x1xf32> to vector<19x256xf32>
    %59 = vector.broadcast %55 : vector<1x256xf32> to vector<19x256xf32>
    %60 = arith.mulf %58, %59 : vector<19x256xf32>
    %61 = arith.addf %54, %60 : vector<19x256xf32>
    %62 = arith.mulf %24, %37 : vector<31x768xf32>
    %cst_23 = arith.constant dense<0.000000e+00> : vector<768xf32>
    %63 = vector.multi_reduction <add>, %62, %cst_23 [0] : vector<31x768xf32> to vector<768xf32>
    %64 = vector.shape_cast %63 : vector<768xf32> to vector<1x768xf32>
    %65 = vector.extract_strided_slice %64 {offsets = [0, 0], sizes = [1, 256], strides = [1, 1]} : vector<1x768xf32> to vector<1x256xf32>
    %c1_24 = arith.constant 1 : index
    %c0_25 = arith.constant 0 : index
    %c0_26 = arith.constant 0 : index
    %66 = vector.load %arg1[%c1_24, %c0_25, %c0_26] : memref<27x19x1xf32, #tpu.memory_space<vmem>>, vector<1x19x1xf32>
    %67 = vector.shape_cast %66 : vector<1x19x1xf32> to vector<19x1xf32>
    %68 = vector.broadcast %67 : vector<19x1xf32> to vector<19x256xf32>
    %69 = vector.broadcast %65 : vector<1x256xf32> to vector<19x256xf32>
    %70 = arith.mulf %68, %69 : vector<19x256xf32>
    %71 = arith.addf %61, %70 : vector<19x256xf32>
    %72 = vector.extract_strided_slice %64 {offsets = [0, 256], sizes = [1, 256], strides = [1, 1]} : vector<1x768xf32> to vector<1x256xf32>
    %c4 = arith.constant 4 : index
    %c0_27 = arith.constant 0 : index
    %c0_28 = arith.constant 0 : index
    %73 = vector.load %arg1[%c4, %c0_27, %c0_28] : memref<27x19x1xf32, #tpu.memory_space<vmem>>, vector<1x19x1xf32>
    %74 = vector.shape_cast %73 : vector<1x19x1xf32> to vector<19x1xf32>
    %75 = vector.broadcast %74 : vector<19x1xf32> to vector<19x256xf32>
    %76 = vector.broadcast %72 : vector<1x256xf32> to vector<19x256xf32>
    %77 = arith.mulf %75, %76 : vector<19x256xf32>
    %78 = arith.addf %71, %77 : vector<19x256xf32>
    %79 = vector.extract_strided_slice %64 {offsets = [0, 512], sizes = [1, 256], strides = [1, 1]} : vector<1x768xf32> to vector<1x256xf32>
    %c7 = arith.constant 7 : index
    %c0_29 = arith.constant 0 : index
    %c0_30 = arith.constant 0 : index
    %80 = vector.load %arg1[%c7, %c0_29, %c0_30] : memref<27x19x1xf32, #tpu.memory_space<vmem>>, vector<1x19x1xf32>
    %81 = vector.shape_cast %80 : vector<1x19x1xf32> to vector<19x1xf32>
    %82 = vector.broadcast %81 : vector<19x1xf32> to vector<19x256xf32>
    %83 = vector.broadcast %79 : vector<1x256xf32> to vector<19x256xf32>
    %84 = arith.mulf %82, %83 : vector<19x256xf32>
    %85 = arith.addf %78, %84 : vector<19x256xf32>
    %86 = arith.mulf %27, %37 : vector<31x768xf32>
    %cst_31 = arith.constant dense<0.000000e+00> : vector<768xf32>
    %87 = vector.multi_reduction <add>, %86, %cst_31 [0] : vector<31x768xf32> to vector<768xf32>
    %88 = vector.shape_cast %87 : vector<768xf32> to vector<1x768xf32>
    %89 = vector.extract_strided_slice %88 {offsets = [0, 0], sizes = [1, 256], strides = [1, 1]} : vector<1x768xf32> to vector<1x256xf32>
    %c2_32 = arith.constant 2 : index
    %c0_33 = arith.constant 0 : index
    %c0_34 = arith.constant 0 : index
    %90 = vector.load %arg1[%c2_32, %c0_33, %c0_34] : memref<27x19x1xf32, #tpu.memory_space<vmem>>, vector<1x19x1xf32>
    %91 = vector.shape_cast %90 : vector<1x19x1xf32> to vector<19x1xf32>
    %92 = vector.broadcast %91 : vector<19x1xf32> to vector<19x256xf32>
    %93 = vector.broadcast %89 : vector<1x256xf32> to vector<19x256xf32>
    %94 = arith.mulf %92, %93 : vector<19x256xf32>
    %95 = arith.addf %85, %94 : vector<19x256xf32>
    %96 = vector.extract_strided_slice %88 {offsets = [0, 256], sizes = [1, 256], strides = [1, 1]} : vector<1x768xf32> to vector<1x256xf32>
    %c5 = arith.constant 5 : index
    %c0_35 = arith.constant 0 : index
    %c0_36 = arith.constant 0 : index
    %97 = vector.load %arg1[%c5, %c0_35, %c0_36] : memref<27x19x1xf32, #tpu.memory_space<vmem>>, vector<1x19x1xf32>
    %98 = vector.shape_cast %97 : vector<1x19x1xf32> to vector<19x1xf32>
    %99 = vector.broadcast %98 : vector<19x1xf32> to vector<19x256xf32>
    %100 = vector.broadcast %96 : vector<1x256xf32> to vector<19x256xf32>
    %101 = arith.mulf %99, %100 : vector<19x256xf32>
    %102 = arith.addf %95, %101 : vector<19x256xf32>
    %103 = vector.extract_strided_slice %88 {offsets = [0, 512], sizes = [1, 256], strides = [1, 1]} : vector<1x768xf32> to vector<1x256xf32>
    %c8 = arith.constant 8 : index
    %c0_37 = arith.constant 0 : index
    %c0_38 = arith.constant 0 : index
    %104 = vector.load %arg1[%c8, %c0_37, %c0_38] : memref<27x19x1xf32, #tpu.memory_space<vmem>>, vector<1x19x1xf32>
    %105 = vector.shape_cast %104 : vector<1x19x1xf32> to vector<19x1xf32>
    %106 = vector.broadcast %105 : vector<19x1xf32> to vector<19x256xf32>
    %107 = vector.broadcast %103 : vector<1x256xf32> to vector<19x256xf32>
    %108 = arith.mulf %106, %107 : vector<19x256xf32>
    %109 = arith.addf %102, %108 : vector<19x256xf32>
    %c2_i32_39 = arith.constant 2 : i32
    %110 = vector.broadcast %c2_i32_39 : i32 to vector<31x768xi32>
    %111 = arith.muli %110, %18 : vector<31x768xi32>
    %c1_i32_40 = arith.constant 1 : i32
    %112 = vector.broadcast %c1_i32_40 : i32 to vector<31x768xi32>
    %113 = arith.addi %111, %112 : vector<31x768xi32>
    %c1_i32_41 = arith.constant 1 : i32
    %114 = vector.broadcast %c1_i32_41 : i32 to vector<31x768xi32>
    %115 = arith.subi %113, %114 : vector<31x768xi32>
    %116 = arith.cmpi eq, %14, %115 : vector<31x768xi32>
    %117 = arith.extui %116 : vector<31x768xi1> to vector<31x768xi32>
    %118 = arith.sitofp %117 : vector<31x768xi32> to vector<31x768xf32>
    %119 = arith.mulf %21, %118 : vector<31x768xf32>
    %cst_42 = arith.constant dense<0.000000e+00> : vector<768xf32>
    %120 = vector.multi_reduction <add>, %119, %cst_42 [0] : vector<31x768xf32> to vector<768xf32>
    %121 = vector.shape_cast %120 : vector<768xf32> to vector<1x768xf32>
    %122 = vector.extract_strided_slice %121 {offsets = [0, 0], sizes = [1, 256], strides = [1, 1]} : vector<1x768xf32> to vector<1x256xf32>
    %c9 = arith.constant 9 : index
    %c0_43 = arith.constant 0 : index
    %c0_44 = arith.constant 0 : index
    %123 = vector.load %arg1[%c9, %c0_43, %c0_44] : memref<27x19x1xf32, #tpu.memory_space<vmem>>, vector<1x19x1xf32>
    %124 = vector.shape_cast %123 : vector<1x19x1xf32> to vector<19x1xf32>
    %125 = vector.broadcast %124 : vector<19x1xf32> to vector<19x256xf32>
    %126 = vector.broadcast %122 : vector<1x256xf32> to vector<19x256xf32>
    %127 = arith.mulf %125, %126 : vector<19x256xf32>
    %128 = arith.addf %109, %127 : vector<19x256xf32>
    %129 = vector.extract_strided_slice %121 {offsets = [0, 256], sizes = [1, 256], strides = [1, 1]} : vector<1x768xf32> to vector<1x256xf32>
    %c12 = arith.constant 12 : index
    %c0_45 = arith.constant 0 : index
    %c0_46 = arith.constant 0 : index
    %130 = vector.load %arg1[%c12, %c0_45, %c0_46] : memref<27x19x1xf32, #tpu.memory_space<vmem>>, vector<1x19x1xf32>
    %131 = vector.shape_cast %130 : vector<1x19x1xf32> to vector<19x1xf32>
    %132 = vector.broadcast %131 : vector<19x1xf32> to vector<19x256xf32>
    %133 = vector.broadcast %129 : vector<1x256xf32> to vector<19x256xf32>
    %134 = arith.mulf %132, %133 : vector<19x256xf32>
    %135 = arith.addf %128, %134 : vector<19x256xf32>
    %136 = vector.extract_strided_slice %121 {offsets = [0, 512], sizes = [1, 256], strides = [1, 1]} : vector<1x768xf32> to vector<1x256xf32>
    %c15 = arith.constant 15 : index
    %c0_47 = arith.constant 0 : index
    %c0_48 = arith.constant 0 : index
    %137 = vector.load %arg1[%c15, %c0_47, %c0_48] : memref<27x19x1xf32, #tpu.memory_space<vmem>>, vector<1x19x1xf32>
    %138 = vector.shape_cast %137 : vector<1x19x1xf32> to vector<19x1xf32>
    %139 = vector.broadcast %138 : vector<19x1xf32> to vector<19x256xf32>
    %140 = vector.broadcast %136 : vector<1x256xf32> to vector<19x256xf32>
    %141 = arith.mulf %139, %140 : vector<19x256xf32>
    %142 = arith.addf %135, %141 : vector<19x256xf32>
    %143 = arith.mulf %24, %118 : vector<31x768xf32>
    %cst_49 = arith.constant dense<0.000000e+00> : vector<768xf32>
    %144 = vector.multi_reduction <add>, %143, %cst_49 [0] : vector<31x768xf32> to vector<768xf32>
    %145 = vector.shape_cast %144 : vector<768xf32> to vector<1x768xf32>
    %146 = vector.extract_strided_slice %145 {offsets = [0, 0], sizes = [1, 256], strides = [1, 1]} : vector<1x768xf32> to vector<1x256xf32>
    %c10 = arith.constant 10 : index
    %c0_50 = arith.constant 0 : index
    %c0_51 = arith.constant 0 : index
    %147 = vector.load %arg1[%c10, %c0_50, %c0_51] : memref<27x19x1xf32, #tpu.memory_space<vmem>>, vector<1x19x1xf32>
    %148 = vector.shape_cast %147 : vector<1x19x1xf32> to vector<19x1xf32>
    %149 = vector.broadcast %148 : vector<19x1xf32> to vector<19x256xf32>
    %150 = vector.broadcast %146 : vector<1x256xf32> to vector<19x256xf32>
    %151 = arith.mulf %149, %150 : vector<19x256xf32>
    %152 = arith.addf %142, %151 : vector<19x256xf32>
    %153 = vector.extract_strided_slice %145 {offsets = [0, 256], sizes = [1, 256], strides = [1, 1]} : vector<1x768xf32> to vector<1x256xf32>
    %c13 = arith.constant 13 : index
    %c0_52 = arith.constant 0 : index
    %c0_53 = arith.constant 0 : index
    %154 = vector.load %arg1[%c13, %c0_52, %c0_53] : memref<27x19x1xf32, #tpu.memory_space<vmem>>, vector<1x19x1xf32>
    %155 = vector.shape_cast %154 : vector<1x19x1xf32> to vector<19x1xf32>
    %156 = vector.broadcast %155 : vector<19x1xf32> to vector<19x256xf32>
    %157 = vector.broadcast %153 : vector<1x256xf32> to vector<19x256xf32>
    %158 = arith.mulf %156, %157 : vector<19x256xf32>
    %159 = arith.addf %152, %158 : vector<19x256xf32>
    %160 = vector.extract_strided_slice %145 {offsets = [0, 512], sizes = [1, 256], strides = [1, 1]} : vector<1x768xf32> to vector<1x256xf32>
    %c16 = arith.constant 16 : index
    %c0_54 = arith.constant 0 : index
    %c0_55 = arith.constant 0 : index
    %161 = vector.load %arg1[%c16, %c0_54, %c0_55] : memref<27x19x1xf32, #tpu.memory_space<vmem>>, vector<1x19x1xf32>
    %162 = vector.shape_cast %161 : vector<1x19x1xf32> to vector<19x1xf32>
    %163 = vector.broadcast %162 : vector<19x1xf32> to vector<19x256xf32>
    %164 = vector.broadcast %160 : vector<1x256xf32> to vector<19x256xf32>
    %165 = arith.mulf %163, %164 : vector<19x256xf32>
    %166 = arith.addf %159, %165 : vector<19x256xf32>
    %167 = arith.mulf %27, %118 : vector<31x768xf32>
    %cst_56 = arith.constant dense<0.000000e+00> : vector<768xf32>
    %168 = vector.multi_reduction <add>, %167, %cst_56 [0] : vector<31x768xf32> to vector<768xf32>
    %169 = vector.shape_cast %168 : vector<768xf32> to vector<1x768xf32>
    %170 = vector.extract_strided_slice %169 {offsets = [0, 0], sizes = [1, 256], strides = [1, 1]} : vector<1x768xf32> to vector<1x256xf32>
    %c11 = arith.constant 11 : index
    %c0_57 = arith.constant 0 : index
    %c0_58 = arith.constant 0 : index
    %171 = vector.load %arg1[%c11, %c0_57, %c0_58] : memref<27x19x1xf32, #tpu.memory_space<vmem>>, vector<1x19x1xf32>
    %172 = vector.shape_cast %171 : vector<1x19x1xf32> to vector<19x1xf32>
    %173 = vector.broadcast %172 : vector<19x1xf32> to vector<19x256xf32>
    %174 = vector.broadcast %170 : vector<1x256xf32> to vector<19x256xf32>
    %175 = arith.mulf %173, %174 : vector<19x256xf32>
    %176 = arith.addf %166, %175 : vector<19x256xf32>
    %177 = vector.extract_strided_slice %169 {offsets = [0, 256], sizes = [1, 256], strides = [1, 1]} : vector<1x768xf32> to vector<1x256xf32>
    %c14 = arith.constant 14 : index
    %c0_59 = arith.constant 0 : index
    %c0_60 = arith.constant 0 : index
    %178 = vector.load %arg1[%c14, %c0_59, %c0_60] : memref<27x19x1xf32, #tpu.memory_space<vmem>>, vector<1x19x1xf32>
    %179 = vector.shape_cast %178 : vector<1x19x1xf32> to vector<19x1xf32>
    %180 = vector.broadcast %179 : vector<19x1xf32> to vector<19x256xf32>
    %181 = vector.broadcast %177 : vector<1x256xf32> to vector<19x256xf32>
    %182 = arith.mulf %180, %181 : vector<19x256xf32>
    %183 = arith.addf %176, %182 : vector<19x256xf32>
    %184 = vector.extract_strided_slice %169 {offsets = [0, 512], sizes = [1, 256], strides = [1, 1]} : vector<1x768xf32> to vector<1x256xf32>
    %c17 = arith.constant 17 : index
    %c0_61 = arith.constant 0 : index
    %c0_62 = arith.constant 0 : index
    %185 = vector.load %arg1[%c17, %c0_61, %c0_62] : memref<27x19x1xf32, #tpu.memory_space<vmem>>, vector<1x19x1xf32>
    %186 = vector.shape_cast %185 : vector<1x19x1xf32> to vector<19x1xf32>
    %187 = vector.broadcast %186 : vector<19x1xf32> to vector<19x256xf32>
    %188 = vector.broadcast %184 : vector<1x256xf32> to vector<19x256xf32>
    %189 = arith.mulf %187, %188 : vector<19x256xf32>
    %190 = arith.addf %183, %189 : vector<19x256xf32>
    %c2_i32_63 = arith.constant 2 : i32
    %191 = vector.broadcast %c2_i32_63 : i32 to vector<31x768xi32>
    %192 = arith.muli %191, %18 : vector<31x768xi32>
    %c2_i32_64 = arith.constant 2 : i32
    %193 = vector.broadcast %c2_i32_64 : i32 to vector<31x768xi32>
    %194 = arith.addi %192, %193 : vector<31x768xi32>
    %c1_i32_65 = arith.constant 1 : i32
    %195 = vector.broadcast %c1_i32_65 : i32 to vector<31x768xi32>
    %196 = arith.subi %194, %195 : vector<31x768xi32>
    %197 = arith.cmpi eq, %14, %196 : vector<31x768xi32>
    %198 = arith.extui %197 : vector<31x768xi1> to vector<31x768xi32>
    %199 = arith.sitofp %198 : vector<31x768xi32> to vector<31x768xf32>
    %200 = arith.mulf %21, %199 : vector<31x768xf32>
    %cst_66 = arith.constant dense<0.000000e+00> : vector<768xf32>
    %201 = vector.multi_reduction <add>, %200, %cst_66 [0] : vector<31x768xf32> to vector<768xf32>
    %202 = vector.shape_cast %201 : vector<768xf32> to vector<1x768xf32>
    %203 = vector.extract_strided_slice %202 {offsets = [0, 0], sizes = [1, 256], strides = [1, 1]} : vector<1x768xf32> to vector<1x256xf32>
    %c18 = arith.constant 18 : index
    %c0_67 = arith.constant 0 : index
    %c0_68 = arith.constant 0 : index
    %204 = vector.load %arg1[%c18, %c0_67, %c0_68] : memref<27x19x1xf32, #tpu.memory_space<vmem>>, vector<1x19x1xf32>
    %205 = vector.shape_cast %204 : vector<1x19x1xf32> to vector<19x1xf32>
    %206 = vector.broadcast %205 : vector<19x1xf32> to vector<19x256xf32>
    %207 = vector.broadcast %203 : vector<1x256xf32> to vector<19x256xf32>
    %208 = arith.mulf %206, %207 : vector<19x256xf32>
    %209 = arith.addf %190, %208 : vector<19x256xf32>
    %210 = vector.extract_strided_slice %202 {offsets = [0, 256], sizes = [1, 256], strides = [1, 1]} : vector<1x768xf32> to vector<1x256xf32>
    %c21 = arith.constant 21 : index
    %c0_69 = arith.constant 0 : index
    %c0_70 = arith.constant 0 : index
    %211 = vector.load %arg1[%c21, %c0_69, %c0_70] : memref<27x19x1xf32, #tpu.memory_space<vmem>>, vector<1x19x1xf32>
    %212 = vector.shape_cast %211 : vector<1x19x1xf32> to vector<19x1xf32>
    %213 = vector.broadcast %212 : vector<19x1xf32> to vector<19x256xf32>
    %214 = vector.broadcast %210 : vector<1x256xf32> to vector<19x256xf32>
    %215 = arith.mulf %213, %214 : vector<19x256xf32>
    %216 = arith.addf %209, %215 : vector<19x256xf32>
    %217 = vector.extract_strided_slice %202 {offsets = [0, 512], sizes = [1, 256], strides = [1, 1]} : vector<1x768xf32> to vector<1x256xf32>
    %c24 = arith.constant 24 : index
    %c0_71 = arith.constant 0 : index
    %c0_72 = arith.constant 0 : index
    %218 = vector.load %arg1[%c24, %c0_71, %c0_72] : memref<27x19x1xf32, #tpu.memory_space<vmem>>, vector<1x19x1xf32>
    %219 = vector.shape_cast %218 : vector<1x19x1xf32> to vector<19x1xf32>
    %220 = vector.broadcast %219 : vector<19x1xf32> to vector<19x256xf32>
    %221 = vector.broadcast %217 : vector<1x256xf32> to vector<19x256xf32>
    %222 = arith.mulf %220, %221 : vector<19x256xf32>
    %223 = arith.addf %216, %222 : vector<19x256xf32>
    %224 = arith.mulf %24, %199 : vector<31x768xf32>
    %cst_73 = arith.constant dense<0.000000e+00> : vector<768xf32>
    %225 = vector.multi_reduction <add>, %224, %cst_73 [0] : vector<31x768xf32> to vector<768xf32>
    %226 = vector.shape_cast %225 : vector<768xf32> to vector<1x768xf32>
    %227 = vector.extract_strided_slice %226 {offsets = [0, 0], sizes = [1, 256], strides = [1, 1]} : vector<1x768xf32> to vector<1x256xf32>
    %c19 = arith.constant 19 : index
    %c0_74 = arith.constant 0 : index
    %c0_75 = arith.constant 0 : index
    %228 = vector.load %arg1[%c19, %c0_74, %c0_75] : memref<27x19x1xf32, #tpu.memory_space<vmem>>, vector<1x19x1xf32>
    %229 = vector.shape_cast %228 : vector<1x19x1xf32> to vector<19x1xf32>
    %230 = vector.broadcast %229 : vector<19x1xf32> to vector<19x256xf32>
    %231 = vector.broadcast %227 : vector<1x256xf32> to vector<19x256xf32>
    %232 = arith.mulf %230, %231 : vector<19x256xf32>
    %233 = arith.addf %223, %232 : vector<19x256xf32>
    %234 = vector.extract_strided_slice %226 {offsets = [0, 256], sizes = [1, 256], strides = [1, 1]} : vector<1x768xf32> to vector<1x256xf32>
    %c22 = arith.constant 22 : index
    %c0_76 = arith.constant 0 : index
    %c0_77 = arith.constant 0 : index
    %235 = vector.load %arg1[%c22, %c0_76, %c0_77] : memref<27x19x1xf32, #tpu.memory_space<vmem>>, vector<1x19x1xf32>
    %236 = vector.shape_cast %235 : vector<1x19x1xf32> to vector<19x1xf32>
    %237 = vector.broadcast %236 : vector<19x1xf32> to vector<19x256xf32>
    %238 = vector.broadcast %234 : vector<1x256xf32> to vector<19x256xf32>
    %239 = arith.mulf %237, %238 : vector<19x256xf32>
    %240 = arith.addf %233, %239 : vector<19x256xf32>
    %241 = vector.extract_strided_slice %226 {offsets = [0, 512], sizes = [1, 256], strides = [1, 1]} : vector<1x768xf32> to vector<1x256xf32>
    %c25 = arith.constant 25 : index
    %c0_78 = arith.constant 0 : index
    %c0_79 = arith.constant 0 : index
    %242 = vector.load %arg1[%c25, %c0_78, %c0_79] : memref<27x19x1xf32, #tpu.memory_space<vmem>>, vector<1x19x1xf32>
    %243 = vector.shape_cast %242 : vector<1x19x1xf32> to vector<19x1xf32>
    %244 = vector.broadcast %243 : vector<19x1xf32> to vector<19x256xf32>
    %245 = vector.broadcast %241 : vector<1x256xf32> to vector<19x256xf32>
    %246 = arith.mulf %244, %245 : vector<19x256xf32>
    %247 = arith.addf %240, %246 : vector<19x256xf32>
    %248 = arith.mulf %27, %199 : vector<31x768xf32>
    %cst_80 = arith.constant dense<0.000000e+00> : vector<768xf32>
    %249 = vector.multi_reduction <add>, %248, %cst_80 [0] : vector<31x768xf32> to vector<768xf32>
    %250 = vector.shape_cast %249 : vector<768xf32> to vector<1x768xf32>
    %251 = vector.extract_strided_slice %250 {offsets = [0, 0], sizes = [1, 256], strides = [1, 1]} : vector<1x768xf32> to vector<1x256xf32>
    %c20 = arith.constant 20 : index
    %c0_81 = arith.constant 0 : index
    %c0_82 = arith.constant 0 : index
    %252 = vector.load %arg1[%c20, %c0_81, %c0_82] : memref<27x19x1xf32, #tpu.memory_space<vmem>>, vector<1x19x1xf32>
    %253 = vector.shape_cast %252 : vector<1x19x1xf32> to vector<19x1xf32>
    %254 = vector.broadcast %253 : vector<19x1xf32> to vector<19x256xf32>
    %255 = vector.broadcast %251 : vector<1x256xf32> to vector<19x256xf32>
    %256 = arith.mulf %254, %255 : vector<19x256xf32>
    %257 = arith.addf %247, %256 : vector<19x256xf32>
    %258 = vector.extract_strided_slice %250 {offsets = [0, 256], sizes = [1, 256], strides = [1, 1]} : vector<1x768xf32> to vector<1x256xf32>
    %c23 = arith.constant 23 : index
    %c0_83 = arith.constant 0 : index
    %c0_84 = arith.constant 0 : index
    %259 = vector.load %arg1[%c23, %c0_83, %c0_84] : memref<27x19x1xf32, #tpu.memory_space<vmem>>, vector<1x19x1xf32>
    %260 = vector.shape_cast %259 : vector<1x19x1xf32> to vector<19x1xf32>
    %261 = vector.broadcast %260 : vector<19x1xf32> to vector<19x256xf32>
    %262 = vector.broadcast %258 : vector<1x256xf32> to vector<19x256xf32>
    %263 = arith.mulf %261, %262 : vector<19x256xf32>
    %264 = arith.addf %257, %263 : vector<19x256xf32>
    %265 = vector.extract_strided_slice %250 {offsets = [0, 512], sizes = [1, 256], strides = [1, 1]} : vector<1x768xf32> to vector<1x256xf32>
    %c26 = arith.constant 26 : index
    %c0_85 = arith.constant 0 : index
    %c0_86 = arith.constant 0 : index
    %266 = vector.load %arg1[%c26, %c0_85, %c0_86] : memref<27x19x1xf32, #tpu.memory_space<vmem>>, vector<1x19x1xf32>
    %267 = vector.shape_cast %266 : vector<1x19x1xf32> to vector<19x1xf32>
    %268 = vector.broadcast %267 : vector<19x1xf32> to vector<19x256xf32>
    %269 = vector.broadcast %265 : vector<1x256xf32> to vector<19x256xf32>
    %270 = arith.mulf %268, %269 : vector<19x256xf32>
    %271 = arith.addf %264, %270 : vector<19x256xf32>
    %c0_87 = arith.constant 0 : index
    %c0_88 = arith.constant 0 : index
    %272 = vector.load %arg2[%c0_87, %c0_88] : memref<19x1xf32, #tpu.memory_space<vmem>>, vector<19x1xf32>
    %273 = vector.broadcast %272 : vector<19x1xf32> to vector<19x256xf32>
    %274 = arith.addf %271, %273 : vector<19x256xf32>
    %cst_89 = arith.constant 0.000000e+00 : f32
    %275 = vector.broadcast %cst_89 : f32 to vector<19x256xf32>
    %276 = arith.maximumf %274, %275 : vector<19x256xf32>
    %c0_90 = arith.constant 0 : index
    %c0_91 = arith.constant 0 : index
    %277 = vector.load %arg3[%c0_90, %c0_91] : memref<19x256xf32, #tpu.memory_space<vmem>>, vector<19x256xf32>
    tpu.vector_store %arg3[%c0_90, %c0_91], %276 {strides = array<i32>} : memref<19x256xf32, #tpu.memory_space<vmem>>, vector<19x256xf32>,
    return
  }
}

</mosaic_0001>

<llo_original>
// kernel: model_forward.1
$region0: #{model_forward.1}
  #allocation0 [shape = 'u32[]', space=smem, size = 0x4, offset = 0x4, fixed_abs, tag = 'smem constant byte address 0x4 - core index']
  #allocation1 [shape = 'u32[144,128]{1,0:T(1,128)}', space=vmem, size = 0x12000, scoped, tag = 'internal scratch']
  %s0 = inlined_call_operand.vmem [shape: f32[1,3,31,31], index: 0, kind: input, shape index: {}]
  %s1 = inlined_call_operand.vmem [shape: f32[27,19,1], index: 1, kind: input, shape index: {}]
  %s2 = inlined_call_operand.vmem [shape: f32[19,1], index: 2, kind: input, shape index: {}]
  %s3 = inlined_call_operand.vmem [shape: f32[19,256], index: 3, kind: output, shape index: {}]
  %s4 = sld [smem:[#allocation0]]
  $region22: #{model_forward.1} parent=0
    _
  %s6 = ssub.s32 1, %s4
  %s7 = scalar_select 0, %s6, %s4
  // Predicated region
  $region2: #{model_forward.1} parent=0 // pred_check
    _
  $region3: #{model_forward.1} parent=0 // pred_check_branch
    %9 = sbr.rel (0) target = $region5
  $region4: #{model_forward.1} parent=0 // pred_region
    _
  $region5: #{model_forward.1} parent=0 // pred_fallthru
    _
  // Predicated region
  $region6: #{model_forward.1} parent=0 // pred_check
    _
  $region7: #{model_forward.1} parent=0 // pred_check_branch
    %11 = sbr.rel (0) target = $region9
  $region8: #{model_forward.1} parent=0 // pred_region
    _
  $region9: #{model_forward.1} parent=0 // pred_fallthru
    _
  // Predicated region
  $region10: #{model_forward.1} parent=0 // pred_check
    _
  $region11: #{model_forward.1} parent=0 // pred_check_branch
    %13 = sbr.rel (0) target = $region13
  $region12: #{model_forward.1} parent=0 // pred_region
    _
  $region13: #{model_forward.1} parent=0 // pred_fallthru
    _
  %v14 = vlaneseq
  %v15 = vshrl.u32 %v14, 7
  %v16 = vadd.s32 %v15, 8
  %v17 = vadd.s32 %v15, 16
  %v18 = vadd.s32 %v15, 24
  %v19 = vlaneseq
  %v20 = vand.u32 %v19, 127
  %v21 = vadd.s32 %v20, 128
  %v22 = vadd.s32 %v20, 256
  %v23 = vadd.s32 %v20, 384
  %v24 = vadd.s32 %v20, 512
  %v25 = vadd.s32 %v20, 640
  %v26 = vand.u32 %v20, 15
  %v27 = vand.u32 %v21, 15
  %v28 = vand.u32 %v22, 15
  %v29 = vand.u32 %v23, 15
  %v30 = vand.u32 %v24, 15
  %v31 = vand.u32 %v25, 15
  %v32 = vshra.s32 %v20, 8
  %v33 = vshra.s32 %v21, 8
  %v34 = vshra.s32 %v22, 8
  %v35 = vshra.s32 %v23, 8
  %v36 = vshra.s32 %v24, 8
  %v37 = vshra.s32 %v25, 8
  %v38 = vmul.u32 %v26, 2
  %v39 = vmul.u32 %v27, 2
  %v40 = vmul.u32 %v28, 2
  %v41 = vmul.u32 %v29, 2
  %v42 = vmul.u32 %v30, 2
  %v43 = vmul.u32 %v31, 2
  %v44 = vadd.s32 %v38, %v32
  %v45 = vadd.s32 %v39, %v33
  %v46 = vadd.s32 %v40, %v34
  %v47 = vadd.s32 %v41, %v35
  %v48 = vadd.s32 %v42, %v36
  %v49 = vadd.s32 %v43, %v37
  %v50 = vsub.s32 %v44, 1
  %v51 = vsub.s32 %v45, 1
  %v52 = vsub.s32 %v46, 1
  %v53 = vsub.s32 %v47, 1
  %v54 = vsub.s32 %v48, 1
  %v55 = vsub.s32 %v49, 1
  %vm56 = vcmp.eq.s32.totalorder %v15, %v50
  %vm57 = vcmp.eq.s32.totalorder %v15, %v51
  %vm58 = vcmp.eq.s32.totalorder %v15, %v52
  %vm59 = vcmp.eq.s32.totalorder %v15, %v53
  %vm60 = vcmp.eq.s32.totalorder %v15, %v54
  %vm61 = vcmp.eq.s32.totalorder %v15, %v55
  %vm62 = vcmp.eq.s32.totalorder %v16, %v50
  %vm63 = vcmp.eq.s32.totalorder %v16, %v51
  %vm64 = vcmp.eq.s32.totalorder %v16, %v52
  %vm65 = vcmp.eq.s32.totalorder %v16, %v53
  %vm66 = vcmp.eq.s32.totalorder %v16, %v54
  %vm67 = vcmp.eq.s32.totalorder %v16, %v55
  %vm68 = vcmp.eq.s32.totalorder %v17, %v50
  %vm69 = vcmp.eq.s32.totalorder %v17, %v51
  %vm70 = vcmp.eq.s32.totalorder %v17, %v52
  %vm71 = vcmp.eq.s32.totalorder %v17, %v53
  %vm72 = vcmp.eq.s32.totalorder %v17, %v54
  %vm73 = vcmp.eq.s32.totalorder %v17, %v55
  %vm74 = vcmp.eq.s32.totalorder %v18, %v50
  %vm75 = vcmp.eq.s32.totalorder %v18, %v51
  %vm76 = vcmp.eq.s32.totalorder %v18, %v52
  %vm77 = vcmp.eq.s32.totalorder %v18, %v53
  %vm78 = vcmp.eq.s32.totalorder %v18, %v54
  %vm79 = vcmp.eq.s32.totalorder %v18, %v55
  %v80 = vsel %vm56, 1, 0
  %v81 = vsel %vm57, 1, 0
  %v82 = vsel %vm58, 1, 0
  %v83 = vsel %vm59, 1, 0
  %v84 = vsel %vm60, 1, 0
  %v85 = vsel %vm61, 1, 0
  %v86 = vsel %vm62, 1, 0
  %v87 = vsel %vm63, 1, 0
  %v88 = vsel %vm64, 1, 0
  %v89 = vsel %vm65, 1, 0
  %v90 = vsel %vm66, 1, 0
  %v91 = vsel %vm67, 1, 0
  %v92 = vsel %vm68, 1, 0
  %v93 = vsel %vm69, 1, 0
  %v94 = vsel %vm70, 1, 0
  %v95 = vsel %vm71, 1, 0
  %v96 = vsel %vm72, 1, 0
  %v97 = vsel %vm73, 1, 0
  %v98 = vsel %vm74, 1, 0
  %v99 = vsel %vm75, 1, 0
  %v100 = vsel %vm76, 1, 0
  %v101 = vsel %vm77, 1, 0
  %v102 = vsel %vm78, 1, 0
  %v103 = vsel %vm79, 1, 0
  %v104 = vcvt.s32.f32 %v80
  %v105 = vcvt.s32.f32 %v81
  %v106 = vcvt.s32.f32 %v82
  %v107 = vcvt.s32.f32 %v83
  %v108 = vcvt.s32.f32 %v84
  %v109 = vcvt.s32.f32 %v85
  %v110 = vcvt.s32.f32 %v86
  %v111 = vcvt.s32.f32 %v87
  %v112 = vcvt.s32.f32 %v88
  %v113 = vcvt.s32.f32 %v89
  %v114 = vcvt.s32.f32 %v90
  %v115 = vcvt.s32.f32 %v91
  %v116 = vcvt.s32.f32 %v92
  %v117 = vcvt.s32.f32 %v93
  %v118 = vcvt.s32.f32 %v94
  %v119 = vcvt.s32.f32 %v95
  %v120 = vcvt.s32.f32 %v96
  %v121 = vcvt.s32.f32 %v97
  %v122 = vcvt.s32.f32 %v98
  %v123 = vcvt.s32.f32 %v99
  %v124 = vcvt.s32.f32 %v100
  %v125 = vcvt.s32.f32 %v101
  %v126 = vcvt.s32.f32 %v102
  %v127 = vcvt.s32.f32 %v103
  %v128 = vshra.s32 %v20, 4
  %v129 = vshra.s32 %v21, 4
  %v130 = vshra.s32 %v22, 4
  %v131 = vshra.s32 %v23, 4
  %v132 = vshra.s32 %v24, 4
  %v133 = vshra.s32 %v25, 4
  %v134 = vand.u32 %v128, 15
  %v135 = vand.u32 %v129, 15
  %v136 = vand.u32 %v130, 15
  %v137 = vand.u32 %v131, 15
  %v138 = vand.u32 %v132, 15
  %v139 = vand.u32 %v133, 15
  %v140 = vld [vmem:[%s0] sm:$0xff]
  %v141 = vld [vmem:[%s0 + $0x8] sm:$0xff]
  %v142 = vld [vmem:[%s0 + $0x10] sm:$0xff]
  %v143 = vld [vmem:[%s0 + $0x18] sm:$0x7f]
  %vm144 = vcmask 252928
  %v146 = vsel %vm144, %v140, 0
  %v149 = vsel %vm144, %v141, 0
  %v152 = vsel %vm144, %v142, 0
  %v155 = vsel %vm144, %v143, 0
  %vm157 = vcmask 1046528
  %v159 = vsel %vm157, %v122, 0
  %v162 = vsel %vm157, %v123, 0
  %v165 = vsel %vm157, %v124, 0
  %v168 = vsel %vm157, %v125, 0
  %v171 = vsel %vm157, %v126, 0
  %v174 = vsel %vm157, %v127, 0
  %176 = vmatprep.subr.mxu0 0.0
  %177 = vmatpush1.msra.mxu0 0.0
  %178 = vmatprep.subr.mxu0 0.0
  %179 = vmatpush1.msra.mxu0 0.0
  %180 = vmatprep.subr.mxu0 0.0
  %181 = vmatpush1.msra.mxu0 0.0
  %182 = vmatprep.subr.mxu0 0.0
  %183 = vmatpush1.msra.mxu0 0.0
  %184 = vmatprep.subr.mxu0 0.0
  %185 = vmatpush1.msra.mxu0 0.0
  %186 = vmatprep.subr.mxu0 0.0
  %187 = vmatpush1.msra.mxu0 0.0
  %188 = vmatprep.subr.mxu0 0.0
  %189 = vmatpush1.msra.mxu0 0.0
  %190 = vmatprep.subr.mxu0 0.0
  %191 = vmatpush1.msra.mxu0 0.0
  %192 = vmatprep.subr.mxu0 0.0
  %193 = vmatpush1.msra.mxu0 0.0
  %194 = vmatprep.subr.mxu0 0.0
  %195 = vmatpush1.msra.mxu0 0.0
  %196 = vmatprep.subr.mxu0 0.0
  %197 = vmatpush1.msra.mxu0 0.0
  %198 = vmatprep.subr.mxu0 0.0
  %199 = vmatpush1.msra.mxu0 0.0
  %v200 = vand.u32 %v162, 4294901760
  %201 = vmatprep.subr.mxu0 %v200
  %v202 = vand.u32 %v159, 4294901760
  %203 = vmatpush1.msra.mxu0 %v202
  %v204 = vand.u32 %v117, 4294901760
  %205 = vmatprep.subr.mxu0 %v204
  %v206 = vand.u32 %v116, 4294901760
  %207 = vmatpush1.msra.mxu0 %v206
  %v208 = vand.u32 %v111, 4294901760
  %209 = vmatprep.subr.mxu0 %v208
  %v210 = vand.u32 %v110, 4294901760
  %211 = vmatpush1.msra.mxu0 %v210
  %v212 = vand.u32 %v105, 4294901760
  %213 = vmatprep.subr.mxu0 %v212
  %v214 = vand.u32 %v104, 4294901760
  %215 = vmatpush1.msra.mxu0 %v214
  %216 = vmatprep.subr.mxu0 0.0
  %217 = vmatpush2.msra.mxu0 0.0
  %218 = vmatprep.subr.mxu0 0.0
  %219 = vmatpush2.msra.mxu0 0.0
  %220 = vmatprep.subr.mxu0 0.0
  %221 = vmatpush2.msra.mxu0 0.0
  %222 = vmatprep.subr.mxu0 0.0
  %223 = vmatpush2.msra.mxu0 0.0
  %224 = vmatprep.subr.mxu0 0.0
  %225 = vmatpush2.msra.mxu0 0.0
  %226 = vmatprep.subr.mxu0 0.0
  %227 = vmatpush2.msra.mxu0 0.0
  %228 = vmatprep.subr.mxu0 0.0
  %229 = vmatpush2.msra.mxu0 0.0
  %230 = vmatprep.subr.mxu0 0.0
  %231 = vmatpush2.msra.mxu0 0.0
  %232 = vmatprep.subr.mxu0 0.0
  %233 = vmatpush2.msra.mxu0 0.0
  %234 = vmatprep.subr.mxu0 0.0
  %235 = vmatpush2.msra.mxu0 0.0
  %236 = vmatprep.subr.mxu0 0.0
  %237 = vmatpush2.msra.mxu0 0.0
  %238 = vmatprep.subr.mxu0 0.0
  %239 = vmatpush2.msra.mxu0 0.0
  %240 = vmatprep.subr.mxu0 0.0
  %241 = vmatpush2.msra.mxu0 0.0
  %242 = vmatprep.subr.mxu0 0.0
  %243 = vmatpush2.msra.mxu0 0.0
  %244 = vmatprep.subr.mxu0 0.0
  %245 = vmatpush2.msra.mxu0 0.0
  %246 = vmatprep.subr.mxu0 0.0
  %247 = vmatpush2.msra.mxu0 0.0
  %248 = vmatprep.mubr.f32.mxu0 0.0
  %v249 = vand.u32 %v146, 4294901760
  %v250 = vsub.f32 %v146, %v249
  %v251 = vand.u32 %v250, 4294901760
  %v252 = vsub.f32 %v250, %v251
  %v253 = vand.u32 %v252, 4294901760
  %254 = vmatmul.mubr.f32.gmra.mxu0 %v253
  %v255 = vpop.f32.mrf.mxu0
  %v256 = vadd.f32 0.0, %v255
  %v257 = vpop.f32.mrf.mxu0
  %v258 = vadd.f32 0.0, %v257
  %259 = vmatprep.mubr.f32.mxu0 0.0
  %v260 = vand.u32 %v149, 4294901760
  %v261 = vsub.f32 %v149, %v260
  %v262 = vand.u32 %v261, 4294901760
  %v263 = vsub.f32 %v261, %v262
  %v264 = vand.u32 %v263, 4294901760
  %265 = vmatmul.mubr.f32.gmra.mxu0 %v264
  %v266 = vpop.f32.mrf.mxu0
  %v267 = vadd.f32 0.0, %v266
  %v268 = vpop.f32.mrf.mxu0
  %v269 = vadd.f32 0.0, %v268
  %270 = vmatprep.mubr.f32.mxu0 0.0
  %v271 = vand.u32 %v152, 4294901760
  %v272 = vsub.f32 %v152, %v271
  %v273 = vand.u32 %v272, 4294901760
  %v274 = vsub.f32 %v272, %v273
  %v275 = vand.u32 %v274, 4294901760
  %276 = vmatmul.mubr.f32.gmra.mxu0 %v275
  %v277 = vpop.f32.mrf.mxu0
  %v278 = vadd.f32 0.0, %v277
  %v279 = vpop.f32.mrf.mxu0
  %v280 = vadd.f32 0.0, %v279
  %281 = vmatprep.mubr.f32.mxu0 0.0
  %v282 = vand.u32 %v155, 4294901760
  %v283 = vsub.f32 %v155, %v282
  %v284 = vand.u32 %v283, 4294901760
  %v285 = vsub.f32 %v283, %v284
  %v286 = vand.u32 %v285, 4294901760
  %287 = vmatmul.mubr.f32.gmra.mxu0 %v286
  %v288 = vpop.f32.mrf.mxu0
  %v289 = vadd.f32 0.0, %v288
  %v290 = vpop.f32.mrf.mxu0
  %v291 = vadd.f32 0.0, %v290
  %292 = vdwg.mxu0
  %293 = vmatprep.subr.mxu0 0.0
  %294 = vmatpush1.msra.mxu0 0.0
  %295 = vmatprep.subr.mxu0 0.0
  %296 = vmatpush1.msra.mxu0 0.0
  %297 = vmatprep.subr.mxu0 0.0
  %298 = vmatpush1.msra.mxu0 0.0
  %299 = vmatprep.subr.mxu0 0.0
  %300 = vmatpush1.msra.mxu0 0.0
  %301 = vmatprep.subr.mxu0 0.0
  %302 = vmatpush1.msra.mxu0 0.0
  %303 = vmatprep.subr.mxu0 0.0
  %304 = vmatpush1.msra.mxu0 0.0
  %305 = vmatprep.subr.mxu0 0.0
  %306 = vmatpush1.msra.mxu0 0.0
  %307 = vmatprep.subr.mxu0 0.0
  %308 = vmatpush1.msra.mxu0 0.0
  %309 = vmatprep.subr.mxu0 0.0
  %310 = vmatpush1.msra.mxu0 0.0
  %311 = vmatprep.subr.mxu0 0.0
  %312 = vmatpush1.msra.mxu0 0.0
  %313 = vmatprep.subr.mxu0 0.0
  %314 = vmatpush1.msra.mxu0 0.0
  %315 = vmatprep.subr.mxu0 0.0
  %316 = vmatpush1.msra.mxu0 0.0
  %v317 = vand.u32 %v162, 4294901760
  %v318 = vsub.f32 %v162, %v317
  %v319 = vand.u32 %v318, 4294901760
  %v320 = vsub.f32 %v318, %v319
  %v321 = vand.u32 %v320, 4294901760
  %322 = vmatprep.subr.mxu0 %v321
  %v323 = vand.u32 %v159, 4294901760
  %v324 = vsub.f32 %v159, %v323
  %v325 = vand.u32 %v324, 4294901760
  %v326 = vsub.f32 %v324, %v325
  %v327 = vand.u32 %v326, 4294901760
  %328 = vmatpush1.msra.mxu0 %v327
  %v329 = vand.u32 %v117, 4294901760
  %v330 = vsub.f32 %v117, %v329
  %v331 = vand.u32 %v330, 4294901760
  %v332 = vsub.f32 %v330, %v331
  %v333 = vand.u32 %v332, 4294901760
  %334 = vmatprep.subr.mxu0 %v333
  %v335 = vand.u32 %v116, 4294901760
  %v336 = vsub.f32 %v116, %v335
  %v337 = vand.u32 %v336, 4294901760
  %v338 = vsub.f32 %v336, %v337
  %v339 = vand.u32 %v338, 4294901760
  %340 = vmatpush1.msra.mxu0 %v339
  %v341 = vand.u32 %v111, 4294901760
  %v342 = vsub.f32 %v111, %v341
  %v343 = vand.u32 %v342, 4294901760
  %v344 = vsub.f32 %v342, %v343
  %v345 = vand.u32 %v344, 4294901760
  %346 = vmatprep.subr.mxu0 %v345
  %v347 = vand.u32 %v110, 4294901760
  %v348 = vsub.f32 %v110, %v347
  %v349 = vand.u32 %v348, 4294901760
  %v350 = vsub.f32 %v348, %v349
  %v351 = vand.u32 %v350, 4294901760
  %352 = vmatpush1.msra.mxu0 %v351
  %v353 = vand.u32 %v105, 4294901760
  %v354 = vsub.f32 %v105, %v353
  %v355 = vand.u32 %v354, 4294901760
  %v356 = vsub.f32 %v354, %v355
  %v357 = vand.u32 %v356, 4294901760
  %358 = vmatprep.subr.mxu0 %v357
  %v359 = vand.u32 %v104, 4294901760
  %v360 = vsub.f32 %v104, %v359
  %v361 = vand.u32 %v360, 4294901760
  %v362 = vsub.f32 %v360, %v361
  %v363 = vand.u32 %v362, 4294901760
  %364 = vmatpush1.msra.mxu0 %v363
  %365 = vmatprep.subr.mxu0 0.0
  %366 = vmatpush2.msra.mxu0 0.0
  %367 = vmatprep.subr.mxu0 0.0
  %368 = vmatpush2.msra.mxu0 0.0
  %369 = vmatprep.subr.mxu0 0.0
  %370 = vmatpush2.msra.mxu0 0.0
  %371 = vmatprep.subr.mxu0 0.0
  %372 = vmatpush2.msra.mxu0 0.0
  %373 = vmatprep.subr.mxu0 0.0
  %374 = vmatpush2.msra.mxu0 0.0
  %375 = vmatprep.subr.mxu0 0.0
  %376 = vmatpush2.msra.mxu0 0.0
  %377 = vmatprep.subr.mxu0 0.0
  %378 = vmatpush2.msra.mxu0 0.0
  %379 = vmatprep.subr.mxu0 0.0
  %380 = vmatpush2.msra.mxu0 0.0
  %381 = vmatprep.subr.mxu0 0.0
  %382 = vmatpush2.msra.mxu0 0.0
  %383 = vmatprep.subr.mxu0 0.0
  %384 = vmatpush2.msra.mxu0 0.0
  %385 = vmatprep.subr.mxu0 0.0
  %386 = vmatpush2.msra.mxu0 0.0
  %387 = vmatprep.subr.mxu0 0.0
  %388 = vmatpush2.msra.mxu0 0.0
  %389 = vmatprep.subr.mxu0 0.0
  %390 = vmatpush2.msra.mxu0 0.0
  %391 = vmatprep.subr.mxu0 0.0
  %392 = vmatpush2.msra.mxu0 0.0
  %393 = vmatprep.subr.mxu0 0.0
  %394 = vmatpush2.msra.mxu0 0.0
  %395 = vmatprep.subr.mxu0 0.0
  %396 = vmatpush2.msra.mxu0 0.0
  %397 = vmatprep.mubr.f32.mxu0 0.0
  %v398 = vand.u32 %v146, 4294901760
  %399 = vmatmul.mubr.f32.gmra.mxu0 %v398
  %v400 = vpop.f32.mrf.mxu0
  %v401 = vadd.f32 %v256, %v400
  %v402 = vpop.f32.mrf.mxu0
  %v403 = vadd.f32 %v258, %v402
  %404 = vmatprep.mubr.f32.mxu0 0.0
  %v405 = vand.u32 %v149, 4294901760
  %406 = vmatmul.mubr.f32.gmra.mxu0 %v405
  %v407 = vpop.f32.mrf.mxu0
  %v408 = vadd.f32 %v267, %v407
  %v409 = vpop.f32.mrf.mxu0
  %v410 = vadd.f32 %v269, %v409
  %411 = vmatprep.mubr.f32.mxu0 0.0
  %v412 = vand.u32 %v152, 4294901760
  %413 = vmatmul.mubr.f32.gmra.mxu0 %v412
  %v414 = vpop.f32.mrf.mxu0
  %v415 = vadd.f32 %v278, %v414
  %v416 = vpop.f32.mrf.mxu0
  %v417 = vadd.f32 %v280, %v416
  %418 = vmatprep.mubr.f32.mxu0 0.0
  %v419 = vand.u32 %v155, 4294901760
  %420 = vmatmul.mubr.f32.gmra.mxu0 %v419
  %v421 = vpop.f32.mrf.mxu0
  %v422 = vadd.f32 %v289, %v421
  %v423 = vpop.f32.mrf.mxu0
  %v424 = vadd.f32 %v291, %v423
  %425 = vdwg.mxu0
  %426 = vmatprep.subr.mxu0 0.0
  %427 = vmatpush1.msra.mxu0 0.0
  %428 = vmatprep.subr.mxu0 0.0
  %429 = vmatpush1.msra.mxu0 0.0
  %430 = vmatprep.subr.mxu0 0.0
  %431 = vmatpush1.msra.mxu0 0.0
  %432 = vmatprep.subr.mxu0 0.0
  %433 = vmatpush1.msra.mxu0 0.0
  %434 = vmatprep.subr.mxu0 0.0
  %435 = vmatpush1.msra.mxu0 0.0
  %436 = vmatprep.subr.mxu0 0.0
  %437 = vmatpush1.msra.mxu0 0.0
  %438 = vmatprep.subr.mxu0 0.0
  %439 = vmatpush1.msra.mxu0 0.0
  %440 = vmatprep.subr.mxu0 0.0
  %441 = vmatpush1.msra.mxu0 0.0
  %442 = vmatprep.subr.mxu0 0.0
  %443 = vmatpush1.msra.mxu0 0.0
  %444 = vmatprep.subr.mxu0 0.0
  %445 = vmatpush1.msra.mxu0 0.0
  %446 = vmatprep.subr.mxu0 0.0
  %447 = vmatpush1.msra.mxu0 0.0
  %448 = vmatprep.subr.mxu0 0.0
  %449 = vmatpush1.msra.mxu0 0.0
  %v450 = vand.u32 %v162, 4294901760
  %v451 = vsub.f32 %v162, %v450
  %452 = vmatprep.subr.mxu0 %v451
  %v453 = vand.u32 %v159, 4294901760
  %v454 = vsub.f32 %v159, %v453
  %455 = vmatpush1.msra.mxu0 %v454
  %v456 = vand.u32 %v117, 4294901760
  %v457 = vsub.f32 %v117, %v456
  %458 = vmatprep.subr.mxu0 %v457
  %v459 = vand.u32 %v116, 4294901760
  %v460 = vsub.f32 %v116, %v459
  %461 = vmatpush1.msra.mxu0 %v460
  %v462 = vand.u32 %v111, 4294901760
  %v463 = vsub.f32 %v111, %v462
  %464 = vmatprep.subr.mxu0 %v463
  %v465 = vand.u32 %v110, 4294901760
  %v466 = vsub.f32 %v110, %v465
  %467 = vmatpush1.msra.mxu0 %v466
  %v468 = vand.u32 %v105, 4294901760
  %v469 = vsub.f32 %v105, %v468
  %470 = vmatprep.subr.mxu0 %v469
  %v471 = vand.u32 %v104, 4294901760
  %v472 = vsub.f32 %v104, %v471
  %473 = vmatpush1.msra.mxu0 %v472
  %474 = vmatprep.subr.mxu0 0.0
  %475 = vmatpush2.msra.mxu0 0.0
  %476 = vmatprep.subr.mxu0 0.0
  %477 = vmatpush2.msra.mxu0 0.0
  %478 = vmatprep.subr.mxu0 0.0
  %479 = vmatpush2.msra.mxu0 0.0
  %480 = vmatprep.subr.mxu0 0.0
  %481 = vmatpush2.msra.mxu0 0.0
  %482 = vmatprep.subr.mxu0 0.0
  %483 = vmatpush2.msra.mxu0 0.0
  %484 = vmatprep.subr.mxu0 0.0
  %485 = vmatpush2.msra.mxu0 0.0
  %486 = vmatprep.subr.mxu0 0.0
  %487 = vmatpush2.msra.mxu0 0.0
  %488 = vmatprep.subr.mxu0 0.0
  %489 = vmatpush2.msra.mxu0 0.0
  %490 = vmatprep.subr.mxu0 0.0
  %491 = vmatpush2.msra.mxu0 0.0
  %492 = vmatprep.subr.mxu0 0.0
  %493 = vmatpush2.msra.mxu0 0.0
  %494 = vmatprep.subr.mxu0 0.0
  %495 = vmatpush2.msra.mxu0 0.0
  %496 = vmatprep.subr.mxu0 0.0
  %497 = vmatpush2.msra.mxu0 0.0
  %498 = vmatprep.subr.mxu0 0.0
  %499 = vmatpush2.msra.mxu0 0.0
  %500 = vmatprep.subr.mxu0 0.0
  %501 = vmatpush2.msra.mxu0 0.0
  %502 = vmatprep.subr.mxu0 0.0
  %503 = vmatpush2.msra.mxu0 0.0
  %504 = vmatprep.subr.mxu0 0.0
  %505 = vmatpush2.msra.mxu0 0.0
  %506 = vmatprep.mubr.f32.mxu0 0.0
  %v507 = vand.u32 %v146, 4294901760
  %v508 = vsub.f32 %v146, %v507
  %509 = vmatmul.mubr.f32.gmra.mxu0 %v508
  %v510 = vpop.f32.mrf.mxu0
  %v511 = vadd.f32 %v401, %v510
  %v512 = vpop.f32.mrf.mxu0
  %v513 = vadd.f32 %v403, %v512
  %514 = vmatprep.mubr.f32.mxu0 0.0
  %v515 = vand.u32 %v149, 4294901760
  %v516 = vsub.f32 %v149, %v515
  %517 = vmatmul.mubr.f32.gmra.mxu0 %v516
  %v518 = vpop.f32.mrf.mxu0
  %v519 = vadd.f32 %v408, %v518
  %v520 = vpop.f32.mrf.mxu0
  %v521 = vadd.f32 %v410, %v520
  %522 = vmatprep.mubr.f32.mxu0 0.0
  %v523 = vand.u32 %v152, 4294901760
  %v524 = vsub.f32 %v152, %v523
  %525 = vmatmul.mubr.f32.gmra.mxu0 %v524
  %v526 = vpop.f32.mrf.mxu0
  %v527 = vadd.f32 %v415, %v526
  %v528 = vpop.f32.mrf.mxu0
  %v529 = vadd.f32 %v417, %v528
  %530 = vmatprep.mubr.f32.mxu0 0.0
  %v531 = vand.u32 %v155, 4294901760
  %v532 = vsub.f32 %v155, %v531
  %533 = vmatmul.mubr.f32.gmra.mxu0 %v532
  %v534 = vpop.f32.mrf.mxu0
  %v535 = vadd.f32 %v422, %v534
  %v536 = vpop.f32.mrf.mxu0
  %v537 = vadd.f32 %v424, %v536
  %538 = vdwg.mxu0
  %539 = vmatprep.subr.mxu0 0.0
  %540 = vmatpush1.msra.mxu0 0.0
  %541 = vmatprep.subr.mxu0 0.0
  %542 = vmatpush1.msra.mxu0 0.0
  %543 = vmatprep.subr.mxu0 0.0
  %544 = vmatpush1.msra.mxu0 0.0
  %545 = vmatprep.subr.mxu0 0.0
  %546 = vmatpush1.msra.mxu0 0.0
  %547 = vmatprep.subr.mxu0 0.0
  %548 = vmatpush1.msra.mxu0 0.0
  %549 = vmatprep.subr.mxu0 0.0
  %550 = vmatpush1.msra.mxu0 0.0
  %551 = vmatprep.subr.mxu0 0.0
  %552 = vmatpush1.msra.mxu0 0.0
  %553 = vmatprep.subr.mxu0 0.0
  %554 = vmatpush1.msra.mxu0 0.0
  %555 = vmatprep.subr.mxu0 0.0
  %556 = vmatpush1.msra.mxu0 0.0
  %557 = vmatprep.subr.mxu0 0.0
  %558 = vmatpush1.msra.mxu0 0.0
  %559 = vmatprep.subr.mxu0 0.0
  %560 = vmatpush1.msra.mxu0 0.0
  %561 = vmatprep.subr.mxu0 0.0
  %562 = vmatpush1.msra.mxu0 0.0
  %v563 = vand.u32 %v162, 4294901760
  %564 = vmatprep.subr.mxu0 %v563
  %v565 = vand.u32 %v159, 4294901760
  %566 = vmatpush1.msra.mxu0 %v565
  %v567 = vand.u32 %v117, 4294901760
  %568 = vmatprep.subr.mxu0 %v567
  %v569 = vand.u32 %v116, 4294901760
  %570 = vmatpush1.msra.mxu0 %v569
  %v571 = vand.u32 %v111, 4294901760
  %572 = vmatprep.subr.mxu0 %v571
  %v573 = vand.u32 %v110, 4294901760
  %574 = vmatpush1.msra.mxu0 %v573
  %v575 = vand.u32 %v105, 4294901760
  %576 = vmatprep.subr.mxu0 %v575
  %v577 = vand.u32 %v104, 4294901760
  %578 = vmatpush1.msra.mxu0 %v577
  %579 = vmatprep.subr.mxu0 0.0
  %580 = vmatpush2.msra.mxu0 0.0
  %581 = vmatprep.subr.mxu0 0.0
  %582 = vmatpush2.msra.mxu0 0.0
  %583 = vmatprep.subr.mxu0 0.0
  %584 = vmatpush2.msra.mxu0 0.0
  %585 = vmatprep.subr.mxu0 0.0
  %586 = vmatpush2.msra.mxu0 0.0
  %587 = vmatprep.subr.mxu0 0.0
  %588 = vmatpush2.msra.mxu0 0.0
  %589 = vmatprep.subr.mxu0 0.0
  %590 = vmatpush2.msra.mxu0 0.0
  %591 = vmatprep.subr.mxu0 0.0
  %592 = vmatpush2.msra.mxu0 0.0
  %593 = vmatprep.subr.mxu0 0.0
  %594 = vmatpush2.msra.mxu0 0.0
  %595 = vmatprep.subr.mxu0 0.0
  %596 = vmatpush2.msra.mxu0 0.0
  %597 = vmatprep.subr.mxu0 0.0
  %598 = vmatpush2.msra.mxu0 0.0
  %599 = vmatprep.subr.mxu0 0.0
  %600 = vmatpush2.msra.mxu0 0.0
  %601 = vmatprep.subr.mxu0 0.0
  %602 = vmatpush2.msra.mxu0 0.0
  %603 = vmatprep.subr.mxu0 0.0
  %604 = vmatpush2.msra.mxu0 0.0
  %605 = vmatprep.subr.mxu0 0.0
  %606 = vmatpush2.msra.mxu0 0.0
  %607 = vmatprep.subr.mxu0 0.0
  %608 = vmatpush2.msra.mxu0 0.0
  %609 = vmatprep.subr.mxu0 0.0
  %610 = vmatpush2.msra.mxu0 0.0
  %611 = vmatprep.mubr.f32.mxu0 0.0
  %v612 = vand.u32 %v146, 4294901760
  %v613 = vsub.f32 %v146, %v612
  %v614 = vand.u32 %v613, 4294901760
  %615 = vmatmul.mubr.f32.gmra.mxu0 %v614
  %v616 = vpop.f32.mrf.mxu0
  %v617 = vadd.f32 %v511, %v616
  %v618 = vpop.f32.mrf.mxu0
  %v619 = vadd.f32 %v513, %v618
  %620 = vmatprep.mubr.f32.mxu0 0.0
  %v621 = vand.u32 %v149, 4294901760
  %v622 = vsub.f32 %v149, %v621
  %v623 = vand.u32 %v622, 4294901760
  %624 = vmatmul.mubr.f32.gmra.mxu0 %v623
  %v625 = vpop.f32.mrf.mxu0
  %v626 = vadd.f32 %v519, %v625
  %v627 = vpop.f32.mrf.mxu0
  %v628 = vadd.f32 %v521, %v627
  %629 = vmatprep.mubr.f32.mxu0 0.0
  %v630 = vand.u32 %v152, 4294901760
  %v631 = vsub.f32 %v152, %v630
  %v632 = vand.u32 %v631, 4294901760
  %633 = vmatmul.mubr.f32.gmra.mxu0 %v632
  %v634 = vpop.f32.mrf.mxu0
  %v635 = vadd.f32 %v527, %v634
  %v636 = vpop.f32.mrf.mxu0
  %v637 = vadd.f32 %v529, %v636
  %638 = vmatprep.mubr.f32.mxu0 0.0
  %v639 = vand.u32 %v155, 4294901760
  %v640 = vsub.f32 %v155, %v639
  %v641 = vand.u32 %v640, 4294901760
  %642 = vmatmul.mubr.f32.gmra.mxu0 %v641
  %v643 = vpop.f32.mrf.mxu0
  %v644 = vadd.f32 %v535, %v643
  %v645 = vpop.f32.mrf.mxu0
  %v646 = vadd.f32 %v537, %v645
  %647 = vdwg.mxu0
  %648 = vmatprep.subr.mxu0 0.0
  %649 = vmatpush1.msra.mxu0 0.0
  %650 = vmatprep.subr.mxu0 0.0
  %651 = vmatpush1.msra.mxu0 0.0
  %652 = vmatprep.subr.mxu0 0.0
  %653 = vmatpush1.msra.mxu0 0.0
  %654 = vmatprep.subr.mxu0 0.0
  %655 = vmatpush1.msra.mxu0 0.0
  %656 = vmatprep.subr.mxu0 0.0
  %657 = vmatpush1.msra.mxu0 0.0
  %658 = vmatprep.subr.mxu0 0.0
  %659 = vmatpush1.msra.mxu0 0.0
  %660 = vmatprep.subr.mxu0 0.0
  %661 = vmatpush1.msra.mxu0 0.0
  %662 = vmatprep.subr.mxu0 0.0
  %663 = vmatpush1.msra.mxu0 0.0
  %664 = vmatprep.subr.mxu0 0.0
  %665 = vmatpush1.msra.mxu0 0.0
  %666 = vmatprep.subr.mxu0 0.0
  %667 = vmatpush1.msra.mxu0 0.0
  %668 = vmatprep.subr.mxu0 0.0
  %669 = vmatpush1.msra.mxu0 0.0
  %670 = vmatprep.subr.mxu0 0.0
  %671 = vmatpush1.msra.mxu0 0.0
  %v672 = vand.u32 %v162, 4294901760
  %v673 = vsub.f32 %v162, %v672
  %v674 = vand.u32 %v673, 4294901760
  %675 = vmatprep.subr.mxu0 %v674
  %v676 = vand.u32 %v159, 4294901760
  %v677 = vsub.f32 %v159, %v676
  %v678 = vand.u32 %v677, 4294901760
  %679 = vmatpush1.msra.mxu0 %v678
  %v680 = vand.u32 %v117, 4294901760
  %v681 = vsub.f32 %v117, %v680
  %v682 = vand.u32 %v681, 4294901760
  %683 = vmatprep.subr.mxu0 %v682
  %v684 = vand.u32 %v116, 4294901760
  %v685 = vsub.f32 %v116, %v684
  %v686 = vand.u32 %v685, 4294901760
  %687 = vmatpush1.msra.mxu0 %v686
  %v688 = vand.u32 %v111, 4294901760
  %v689 = vsub.f32 %v111, %v688
  %v690 = vand.u32 %v689, 4294901760
  %691 = vmatprep.subr.mxu0 %v690
  %v692 = vand.u32 %v110, 4294901760
  %v693 = vsub.f32 %v110, %v692
  %v694 = vand.u32 %v693, 4294901760
  %695 = vmatpush1.msra.mxu0 %v694
  %v696 = vand.u32 %v105, 4294901760
  %v697 = vsub.f32 %v105, %v696
  %v698 = vand.u32 %v697, 4294901760
  %699 = vmatprep.subr.mxu0 %v698
  %v700 = vand.u32 %v104, 4294901760
  %v701 = vsub.f32 %v104, %v700
  %v702 = vand.u32 %v701, 4294901760
  %703 = vmatpush1.msra.mxu0 %v702
  %704 = vmatprep.subr.mxu0 0.0
  %705 = vmatpush2.msra.mxu0 0.0
  %706 = vmatprep.subr.mxu0 0.0
  %707 = vmatpush2.msra.mxu0 0.0
  %708 = vmatprep.subr.mxu0 0.0
  %709 = vmatpush2.msra.mxu0 0.0
  %710 = vmatprep.subr.mxu0 0.0
  %711 = vmatpush2.msra.mxu0 0.0
  %712 = vmatprep.subr.mxu0 0.0
  %713 = vmatpush2.msra.mxu0 0.0
  %714 = vmatprep.subr.mxu0 0.0
  %715 = vmatpush2.msra.mxu0 0.0
  %716 = vmatprep.subr.mxu0 0.0
  %717 = vmatpush2.msra.mxu0 0.0
  %718 = vmatprep.subr.mxu0 0.0
  %719 = vmatpush2.msra.mxu0 0.0
  %720 = vmatprep.subr.mxu0 0.0
  %721 = vmatpush2.msra.mxu0 0.0
  %722 = vmatprep.subr.mxu0 0.0
  %723 = vmatpush2.msra.mxu0 0.0
  %724 = vmatprep.subr.mxu0 0.0
  %725 = vmatpush2.msra.mxu0 0.0
  %726 = vmatprep.subr.mxu0 0.0
  %727 = vmatpush2.msra.mxu0 0.0
  %728 = vmatprep.subr.mxu0 0.0
  %729 = vmatpush2.msra.mxu0 0.0
  %730 = vmatprep.subr.mxu0 0.0
  %731 = vmatpush2.msra.mxu0 0.0
  %732 = vmatprep.subr.mxu0 0.0
  %733 = vmatpush2.msra.mxu0 0.0
  %734 = vmatprep.subr.mxu0 0.0
  %735 = vmatpush2.msra.mxu0 0.0
  %736 = vmatprep.mubr.f32.mxu0 0.0
  %v737 = vand.u32 %v146, 4294901760
  %738 = vmatmul.mubr.f32.gmra.mxu0 %v737
  %v739 = vpop.f32.mrf.mxu0
  %v740 = vadd.f32 %v617, %v739
  %v741 = vpop.f32.mrf.mxu0
  %v742 = vadd.f32 %v619, %v741
  %743 = vmatprep.mubr.f32.mxu0 0.0
  %v744 = vand.u32 %v149, 4294901760
  %745 = vmatmul.mubr.f32.gmra.mxu0 %v744
  %v746 = vpop.f32.mrf.mxu0
  %v747 = vadd.f32 %v626, %v746
  %v748 = vpop.f32.mrf.mxu0
  %v749 = vadd.f32 %v628, %v748
  %750 = vmatprep.mubr.f32.mxu0 0.0
  %v751 = vand.u32 %v152, 4294901760
  %752 = vmatmul.mubr.f32.gmra.mxu0 %v751
  %v753 = vpop.f32.mrf.mxu0
  %v754 = vadd.f32 %v635, %v753
  %v755 = vpop.f32.mrf.mxu0
  %v756 = vadd.f32 %v637, %v755
  %757 = vmatprep.mubr.f32.mxu0 0.0
  %v758 = vand.u32 %v155, 4294901760
  %759 = vmatmul.mubr.f32.gmra.mxu0 %v758
  %v760 = vpop.f32.mrf.mxu0
  %v761 = vadd.f32 %v644, %v760
  %v762 = vpop.f32.mrf.mxu0
  %v763 = vadd.f32 %v646, %v762
  %764 = vdwg.mxu0
  %765 = vmatprep.subr.mxu0 0.0
  %766 = vmatpush1.msra.mxu0 0.0
  %767 = vmatprep.subr.mxu0 0.0
  %768 = vmatpush1.msra.mxu0 0.0
  %769 = vmatprep.subr.mxu0 0.0
  %770 = vmatpush1.msra.mxu0 0.0
  %771 = vmatprep.subr.mxu0 0.0
  %772 = vmatpush1.msra.mxu0 0.0
  %773 = vmatprep.subr.mxu0 0.0
  %774 = vmatpush1.msra.mxu0 0.0
  %775 = vmatprep.subr.mxu0 0.0
  %776 = vmatpush1.msra.mxu0 0.0
  %777 = vmatprep.subr.mxu0 0.0
  %778 = vmatpush1.msra.mxu0 0.0
  %779 = vmatprep.subr.mxu0 0.0
  %780 = vmatpush1.msra.mxu0 0.0
  %781 = vmatprep.subr.mxu0 0.0
  %782 = vmatpush1.msra.mxu0 0.0
  %783 = vmatprep.subr.mxu0 0.0
  %784 = vmatpush1.msra.mxu0 0.0
  %785 = vmatprep.subr.mxu0 0.0
  %786 = vmatpush1.msra.mxu0 0.0
  %787 = vmatprep.subr.mxu0 0.0
  %788 = vmatpush1.msra.mxu0 0.0
  %v789 = vand.u32 %v162, 4294901760
  %790 = vmatprep.subr.mxu0 %v789
  %v791 = vand.u32 %v159, 4294901760
  %792 = vmatpush1.msra.mxu0 %v791
  %v793 = vand.u32 %v117, 4294901760
  %794 = vmatprep.subr.mxu0 %v793
  %v795 = vand.u32 %v116, 4294901760
  %796 = vmatpush1.msra.mxu0 %v795
  %v797 = vand.u32 %v111, 4294901760
  %798 = vmatprep.subr.mxu0 %v797
  %v799 = vand.u32 %v110, 4294901760
  %800 = vmatpush1.msra.mxu0 %v799
  %v801 = vand.u32 %v105, 4294901760
  %802 = vmatprep.subr.mxu0 %v801
  %v803 = vand.u32 %v104, 4294901760
  %804 = vmatpush1.msra.mxu0 %v803
  %805 = vmatprep.subr.mxu0 0.0
  %806 = vmatpush2.msra.mxu0 0.0
  %807 = vmatprep.subr.mxu0 0.0
  %808 = vmatpush2.msra.mxu0 0.0
  %809 = vmatprep.subr.mxu0 0.0
  %810 = vmatpush2.msra.mxu0 0.0
  %811 = vmatprep.subr.mxu0 0.0
  %812 = vmatpush2.msra.mxu0 0.0
  %813 = vmatprep.subr.mxu0 0.0
  %814 = vmatpush2.msra.mxu0 0.0
  %815 = vmatprep.subr.mxu0 0.0
  %816 = vmatpush2.msra.mxu0 0.0
  %817 = vmatprep.subr.mxu0 0.0
  %818 = vmatpush2.msra.mxu0 0.0
  %819 = vmatprep.subr.mxu0 0.0
  %820 = vmatpush2.msra.mxu0 0.0
  %821 = vmatprep.subr.mxu0 0.0
  %822 = vmatpush2.msra.mxu0 0.0
  %823 = vmatprep.subr.mxu0 0.0
  %824 = vmatpush2.msra.mxu0 0.0
  %825 = vmatprep.subr.mxu0 0.0
  %826 = vmatpush2.msra.mxu0 0.0
  %827 = vmatprep.subr.mxu0 0.0
  %828 = vmatpush2.msra.mxu0 0.0
  %829 = vmatprep.subr.mxu0 0.0
  %830 = vmatpush2.msra.mxu0 0.0
  %831 = vmatprep.subr.mxu0 0.0
  %832 = vmatpush2.msra.mxu0 0.0
  %833 = vmatprep.subr.mxu0 0.0
  %834 = vmatpush2.msra.mxu0 0.0
  %835 = vmatprep.subr.mxu0 0.0
  %836 = vmatpush2.msra.mxu0 0.0
  %837 = vmatprep.mubr.f32.mxu0 0.0
  %v838 = vand.u32 %v146, 4294901760
  %839 = vmatmul.mubr.f32.gmra.mxu0 %v838
  %v840 = vpop.f32.mrf.mxu0
  %v841 = vadd.f32 %v740, %v840
  %v842 = vpop.f32.mrf.mxu0
  %v843 = vadd.f32 %v742, %v842
  %844 = vmatprep.mubr.f32.mxu0 0.0
  %v845 = vand.u32 %v149, 4294901760
  %846 = vmatmul.mubr.f32.gmra.mxu0 %v845
  %v847 = vpop.f32.mrf.mxu0
  %v848 = vadd.f32 %v747, %v847
  %v849 = vpop.f32.mrf.mxu0
  %v850 = vadd.f32 %v749, %v849
  %851 = vmatprep.mubr.f32.mxu0 0.0
  %v852 = vand.u32 %v152, 4294901760
  %853 = vmatmul.mubr.f32.gmra.mxu0 %v852
  %v854 = vpop.f32.mrf.mxu0
  %v855 = vadd.f32 %v754, %v854
  %v856 = vpop.f32.mrf.mxu0
  %v857 = vadd.f32 %v756, %v856
  %858 = vmatprep.mubr.f32.mxu0 0.0
  %v859 = vand.u32 %v155, 4294901760
  %860 = vmatmul.mubr.f32.gmra.mxu0 %v859
  %v861 = vpop.f32.mrf.mxu0
  %v862 = vadd.f32 %v761, %v861
  %v863 = vpop.f32.mrf.mxu0
  %v864 = vadd.f32 %v763, %v863
  %865 = vdwg.mxu0
  %866 = vmatprep.subr.mxu0 0.0
  %867 = vmatpush1.msra.mxu0 0.0
  %868 = vmatprep.subr.mxu0 0.0
  %869 = vmatpush1.msra.mxu0 0.0
  %870 = vmatprep.subr.mxu0 0.0
  %871 = vmatpush1.msra.mxu0 0.0
  %872 = vmatprep.subr.mxu0 0.0
  %873 = vmatpush1.msra.mxu0 0.0
  %874 = vmatprep.subr.mxu0 0.0
  %875 = vmatpush1.msra.mxu0 0.0
  %876 = vmatprep.subr.mxu0 0.0
  %877 = vmatpush1.msra.mxu0 0.0
  %878 = vmatprep.subr.mxu0 0.0
  %879 = vmatpush1.msra.mxu0 0.0
  %880 = vmatprep.subr.mxu0 0.0
  %881 = vmatpush1.msra.mxu0 0.0
  %882 = vmatprep.subr.mxu0 0.0
  %883 = vmatpush1.msra.mxu0 0.0
  %884 = vmatprep.subr.mxu0 0.0
  %885 = vmatpush1.msra.mxu0 0.0
  %886 = vmatprep.subr.mxu0 0.0
  %887 = vmatpush1.msra.mxu0 0.0
  %888 = vmatprep.subr.mxu0 0.0
  %889 = vmatpush1.msra.mxu0 0.0
  %v890 = vand.u32 %v168, 4294901760
  %891 = vmatprep.subr.mxu0 %v890
  %v892 = vand.u32 %v165, 4294901760
  %893 = vmatpush1.msra.mxu0 %v892
  %v894 = vand.u32 %v119, 4294901760
  %895 = vmatprep.subr.mxu0 %v894
  %v896 = vand.u32 %v118, 4294901760
  %897 = vmatpush1.msra.mxu0 %v896
  %v898 = vand.u32 %v113, 4294901760
  %899 = vmatprep.subr.mxu0 %v898
  %v900 = vand.u32 %v112, 4294901760
  %901 = vmatpush1.msra.mxu0 %v900
  %v902 = vand.u32 %v107, 4294901760
  %903 = vmatprep.subr.mxu0 %v902
  %v904 = vand.u32 %v106, 4294901760
  %905 = vmatpush1.msra.mxu0 %v904
  %906 = vmatprep.subr.mxu0 0.0
  %907 = vmatpush2.msra.mxu0 0.0
  %908 = vmatprep.subr.mxu0 0.0
  %909 = vmatpush2.msra.mxu0 0.0
  %910 = vmatprep.subr.mxu0 0.0
  %911 = vmatpush2.msra.mxu0 0.0
  %912 = vmatprep.subr.mxu0 0.0
  %913 = vmatpush2.msra.mxu0 0.0
  %914 = vmatprep.subr.mxu0 0.0
  %915 = vmatpush2.msra.mxu0 0.0
  %916 = vmatprep.subr.mxu0 0.0
  %917 = vmatpush2.msra.mxu0 0.0
  %918 = vmatprep.subr.mxu0 0.0
  %919 = vmatpush2.msra.mxu0 0.0
  %920 = vmatprep.subr.mxu0 0.0
  %921 = vmatpush2.msra.mxu0 0.0
  %922 = vmatprep.subr.mxu0 0.0
  %923 = vmatpush2.msra.mxu0 0.0
  %924 = vmatprep.subr.mxu0 0.0
  %925 = vmatpush2.msra.mxu0 0.0
  %926 = vmatprep.subr.mxu0 0.0
  %927 = vmatpush2.msra.mxu0 0.0
  %928 = vmatprep.subr.mxu0 0.0
  %929 = vmatpush2.msra.mxu0 0.0
  %930 = vmatprep.subr.mxu0 0.0
  %931 = vmatpush2.msra.mxu0 0.0
  %932 = vmatprep.subr.mxu0 0.0
  %933 = vmatpush2.msra.mxu0 0.0
  %934 = vmatprep.subr.mxu0 0.0
  %935 = vmatpush2.msra.mxu0 0.0
  %936 = vmatprep.subr.mxu0 0.0
  %937 = vmatpush2.msra.mxu0 0.0
  %938 = vmatprep.mubr.f32.mxu0 0.0
  %v939 = vand.u32 %v146, 4294901760
  %v940 = vsub.f32 %v146, %v939
  %v941 = vand.u32 %v940, 4294901760
  %v942 = vsub.f32 %v940, %v941
  %v943 = vand.u32 %v942, 4294901760
  %944 = vmatmul.mubr.f32.gmra.mxu0 %v943
  %v945 = vpop.f32.mrf.mxu0
  %v946 = vadd.f32 0.0, %v945
  %v947 = vpop.f32.mrf.mxu0
  %v948 = vadd.f32 0.0, %v947
  %949 = vmatprep.mubr.f32.mxu0 0.0
  %v950 = vand.u32 %v149, 4294901760
  %v951 = vsub.f32 %v149, %v950
  %v952 = vand.u32 %v951, 4294901760
  %v953 = vsub.f32 %v951, %v952
  %v954 = vand.u32 %v953, 4294901760
  %955 = vmatmul.mubr.f32.gmra.mxu0 %v954
  %v956 = vpop.f32.mrf.mxu0
  %v957 = vadd.f32 0.0, %v956
  %v958 = vpop.f32.mrf.mxu0
  %v959 = vadd.f32 0.0, %v958
  %960 = vmatprep.mubr.f32.mxu0 0.0
  %v961 = vand.u32 %v152, 4294901760
  %v962 = vsub.f32 %v152, %v961
  %v963 = vand.u32 %v962, 4294901760
  %v964 = vsub.f32 %v962, %v963
  %v965 = vand.u32 %v964, 4294901760
  %966 = vmatmul.mubr.f32.gmra.mxu0 %v965
  %v967 = vpop.f32.mrf.mxu0
  %v968 = vadd.f32 0.0, %v967
  %v969 = vpop.f32.mrf.mxu0
  %v970 = vadd.f32 0.0, %v969
  %971 = vmatprep.mubr.f32.mxu0 0.0
  %v972 = vand.u32 %v155, 4294901760
  %v973 = vsub.f32 %v155, %v972
  %v974 = vand.u32 %v973, 4294901760
  %v975 = vsub.f32 %v973, %v974
  %v976 = vand.u32 %v975, 4294901760
  %977 = vmatmul.mubr.f32.gmra.mxu0 %v976
  %v978 = vpop.f32.mrf.mxu0
  %v979 = vadd.f32 0.0, %v978
  %v980 = vpop.f32.mrf.mxu0
  %v981 = vadd.f32 0.0, %v980
  %982 = vdwg.mxu0
  %983 = vmatprep.subr.mxu0 0.0
  %984 = vmatpush1.msra.mxu0 0.0
  %985 = vmatprep.subr.mxu0 0.0
  %986 = vmatpush1.msra.mxu0 0.0
  %987 = vmatprep.subr.mxu0 0.0
  %988 = vmatpush1.msra.mxu0 0.0
  %989 = vmatprep.subr.mxu0 0.0
  %990 = vmatpush1.msra.mxu0 0.0
  %991 = vmatprep.subr.mxu0 0.0
  %992 = vmatpush1.msra.mxu0 0.0
  %993 = vmatprep.subr.mxu0 0.0
  %994 = vmatpush1.msra.mxu0 0.0
  %995 = vmatprep.subr.mxu0 0.0
  %996 = vmatpush1.msra.mxu0 0.0
  %997 = vmatprep.subr.mxu0 0.0
  %998 = vmatpush1.msra.mxu0 0.0
  %999 = vmatprep.subr.mxu0 0.0
  %1000 = vmatpush1.msra.mxu0 0.0
  %1001 = vmatprep.subr.mxu0 0.0
  %1002 = vmatpush1.msra.mxu0 0.0
  %1003 = vmatprep.subr.mxu0 0.0
  %1004 = vmatpush1.msra.mxu0 0.0
  %1005 = vmatprep.subr.mxu0 0.0
  %1006 = vmatpush1.msra.mxu0 0.0
  %v1007 = vand.u32 %v168, 4294901760
  %v1008 = vsub.f32 %v168, %v1007
  %v1009 = vand.u32 %v1008, 4294901760
  %v1010 = vsub.f32 %v1008, %v1009
  %v1011 = vand.u32 %v1010, 4294901760
  %1012 = vmatprep.subr.mxu0 %v1011
  %v1013 = vand.u32 %v165, 4294901760
  %v1014 = vsub.f32 %v165, %v1013
  %v1015 = vand.u32 %v1014, 4294901760
  %v1016 = vsub.f32 %v1014, %v1015
  %v1017 = vand.u32 %v1016, 4294901760
  %1018 = vmatpush1.msra.mxu0 %v1017
  %v1019 = vand.u32 %v119, 4294901760
  %v1020 = vsub.f32 %v119, %v1019
  %v1021 = vand.u32 %v1020, 4294901760
  %v1022 = vsub.f32 %v1020, %v1021
  %v1023 = vand.u32 %v1022, 4294901760
  %1024 = vmatprep.subr.mxu0 %v1023
  %v1025 = vand.u32 %v118, 4294901760
  %v1026 = vsub.f32 %v118, %v1025
  %v1027 = vand.u32 %v1026, 4294901760
  %v1028 = vsub.f32 %v1026, %v1027
  %v1029 = vand.u32 %v1028, 4294901760
  %1030 = vmatpush1.msra.mxu0 %v1029
  %v1031 = vand.u32 %v113, 4294901760
  %v1032 = vsub.f32 %v113, %v1031
  %v1033 = vand.u32 %v1032, 4294901760
  %v1034 = vsub.f32 %v1032, %v1033
  %v1035 = vand.u32 %v1034, 4294901760
  %1036 = vmatprep.subr.mxu0 %v1035
  %v1037 = vand.u32 %v112, 4294901760
  %v1038 = vsub.f32 %v112, %v1037
  %v1039 = vand.u32 %v1038, 4294901760
  %v1040 = vsub.f32 %v1038, %v1039
  %v1041 = vand.u32 %v1040, 4294901760
  %1042 = vmatpush1.msra.mxu0 %v1041
  %v1043 = vand.u32 %v107, 4294901760
  %v1044 = vsub.f32 %v107, %v1043
  %v1045 = vand.u32 %v1044, 4294901760
  %v1046 = vsub.f32 %v1044, %v1045
  %v1047 = vand.u32 %v1046, 4294901760
  %1048 = vmatprep.subr.mxu0 %v1047
  %v1049 = vand.u32 %v106, 4294901760
  %v1050 = vsub.f32 %v106, %v1049
  %v1051 = vand.u32 %v1050, 4294901760
  %v1052 = vsub.f32 %v1050, %v1051
  %v1053 = vand.u32 %v1052, 4294901760
  %1054 = vmatpush1.msra.mxu0 %v1053
  %1055 = vmatprep.subr.mxu0 0.0
  %1056 = vmatpush2.msra.mxu0 0.0
  %1057 = vmatprep.subr.mxu0 0.0
  %1058 = vmatpush2.msra.mxu0 0.0
  %1059 = vmatprep.subr.mxu0 0.0
  %1060 = vmatpush2.msra.mxu0 0.0
  %1061 = vmatprep.subr.mxu0 0.0
  %1062 = vmatpush2.msra.mxu0 0.0
  %1063 = vmatprep.subr.mxu0 0.0
  %1064 = vmatpush2.msra.mxu0 0.0
  %1065 = vmatprep.subr.mxu0 0.0
  %1066 = vmatpush2.msra.mxu0 0.0
  %1067 = vmatprep.subr.mxu0 0.0
  %1068 = vmatpush2.msra.mxu0 0.0
  %1069 = vmatprep.subr.mxu0 0.0
  %1070 = vmatpush2.msra.mxu0 0.0
  %1071 = vmatprep.subr.mxu0 0.0
  %1072 = vmatpush2.msra.mxu0 0.0
  %1073 = vmatprep.subr.mxu0 0.0
  %1074 = vmatpush2.msra.mxu0 0.0
  %1075 = vmatprep.subr.mxu0 0.0
  %1076 = vmatpush2.msra.mxu0 0.0
  %1077 = vmatprep.subr.mxu0 0.0
  %1078 = vmatpush2.msra.mxu0 0.0
  %1079 = vmatprep.subr.mxu0 0.0
  %1080 = vmatpush2.msra.mxu0 0.0
  %1081 = vmatprep.subr.mxu0 0.0
  %1082 = vmatpush2.msra.mxu0 0.0
  %1083 = vmatprep.subr.mxu0 0.0
  %1084 = vmatpush2.msra.mxu0 0.0
  %1085 = vmatprep.subr.mxu0 0.0
  %1086 = vmatpush2.msra.mxu0 0.0
  %1087 = vmatprep.mubr.f32.mxu0 0.0
  %v1088 = vand.u32 %v146, 4294901760
  %1089 = vmatmul.mubr.f32.gmra.mxu0 %v1088
  %v1090 = vpop.f32.mrf.mxu0
  %v1091 = vadd.f32 %v946, %v1090
  %v1092 = vpop.f32.mrf.mxu0
  %v1093 = vadd.f32 %v948, %v1092
  %1094 = vmatprep.mubr.f32.mxu0 0.0
  %v1095 = vand.u32 %v149, 4294901760
  %1096 = vmatmul.mubr.f32.gmra.mxu0 %v1095
  %v1097 = vpop.f32.mrf.mxu0
  %v1098 = vadd.f32 %v957, %v1097
  %v1099 = vpop.f32.mrf.mxu0
  %v1100 = vadd.f32 %v959, %v1099
  %1101 = vmatprep.mubr.f32.mxu0 0.0
  %v1102 = vand.u32 %v152, 4294901760
  %1103 = vmatmul.mubr.f32.gmra.mxu0 %v1102
  %v1104 = vpop.f32.mrf.mxu0
  %v1105 = vadd.f32 %v968, %v1104
  %v1106 = vpop.f32.mrf.mxu0
  %v1107 = vadd.f32 %v970, %v1106
  %1108 = vmatprep.mubr.f32.mxu0 0.0
  %v1109 = vand.u32 %v155, 4294901760
  %1110 = vmatmul.mubr.f32.gmra.mxu0 %v1109
  %v1111 = vpop.f32.mrf.mxu0
  %v1112 = vadd.f32 %v979, %v1111
  %v1113 = vpop.f32.mrf.mxu0
  %v1114 = vadd.f32 %v981, %v1113
  %1115 = vdwg.mxu0
  %1116 = vmatprep.subr.mxu0 0.0
  %1117 = vmatpush1.msra.mxu0 0.0
  %1118 = vmatprep.subr.mxu0 0.0
  %1119 = vmatpush1.msra.mxu0 0.0
  %1120 = vmatprep.subr.mxu0 0.0
  %1121 = vmatpush1.msra.mxu0 0.0
  %1122 = vmatprep.subr.mxu0 0.0
  %1123 = vmatpush1.msra.mxu0 0.0
  %1124 = vmatprep.subr.mxu0 0.0
  %1125 = vmatpush1.msra.mxu0 0.0
  %1126 = vmatprep.subr.mxu0 0.0
  %1127 = vmatpush1.msra.mxu0 0.0
  %1128 = vmatprep.subr.mxu0 0.0
  %1129 = vmatpush1.msra.mxu0 0.0
  %1130 = vmatprep.subr.mxu0 0.0
  %1131 = vmatpush1.msra.mxu0 0.0
  %1132 = vmatprep.subr.mxu0 0.0
  %1133 = vmatpush1.msra.mxu0 0.0
  %1134 = vmatprep.subr.mxu0 0.0
  %1135 = vmatpush1.msra.mxu0 0.0
  %1136 = vmatprep.subr.mxu0 0.0
  %1137 = vmatpush1.msra.mxu0 0.0
  %1138 = vmatprep.subr.mxu0 0.0
  %1139 = vmatpush1.msra.mxu0 0.0
  %v1140 = vand.u32 %v168, 4294901760
  %v1141 = vsub.f32 %v168, %v1140
  %1142 = vmatprep.subr.mxu0 %v1141
  %v1143 = vand.u32 %v165, 4294901760
  %v1144 = vsub.f32 %v165, %v1143
  %1145 = vmatpush1.msra.mxu0 %v1144
  %v1146 = vand.u32 %v119, 4294901760
  %v1147 = vsub.f32 %v119, %v1146
  %1148 = vmatprep.subr.mxu0 %v1147
  %v1149 = vand.u32 %v118, 4294901760
  %v1150 = vsub.f32 %v118, %v1149
  %1151 = vmatpush1.msra.mxu0 %v1150
  %v1152 = vand.u32 %v113, 4294901760
  %v1153 = vsub.f32 %v113, %v1152
  %1154 = vmatprep.subr.mxu0 %v1153
  %v1155 = vand.u32 %v112, 4294901760
  %v1156 = vsub.f32 %v112, %v1155
  %1157 = vmatpush1.msra.mxu0 %v1156
  %v1158 = vand.u32 %v107, 4294901760
  %v1159 = vsub.f32 %v107, %v1158
  %1160 = vmatprep.subr.mxu0 %v1159
  %v1161 = vand.u32 %v106, 4294901760
  %v1162 = vsub.f32 %v106, %v1161
  %1163 = vmatpush1.msra.mxu0 %v1162
  %1164 = vmatprep.subr.mxu0 0.0
  %1165 = vmatpush2.msra.mxu0 0.0
  %1166 = vmatprep.subr.mxu0 0.0
  %1167 = vmatpush2.msra.mxu0 0.0
  %1168 = vmatprep.subr.mxu0 0.0
  %1169 = vmatpush2.msra.mxu0 0.0
  %1170 = vmatprep.subr.mxu0 0.0
  %1171 = vmatpush2.msra.mxu0 0.0
  %1172 = vmatprep.subr.mxu0 0.0
  %1173 = vmatpush2.msra.mxu0 0.0
  %1174 = vmatprep.subr.mxu0 0.0
  %1175 = vmatpush2.msra.mxu0 0.0
  %1176 = vmatprep.subr.mxu0 0.0
  %1177 = vmatpush2.msra.mxu0 0.0
  %1178 = vmatprep.subr.mxu0 0.0
  %1179 = vmatpush2.msra.mxu0 0.0
  %1180 = vmatprep.subr.mxu0 0.0
  %1181 = vmatpush2.msra.mxu0 0.0
  %1182 = vmatprep.subr.mxu0 0.0
  %1183 = vmatpush2.msra.mxu0 0.0
  %1184 = vmatprep.subr.mxu0 0.0
  %1185 = vmatpush2.msra.mxu0 0.0
  %1186 = vmatprep.subr.mxu0 0.0
  %1187 = vmatpush2.msra.mxu0 0.0
  %1188 = vmatprep.subr.mxu0 0.0
  %1189 = vmatpush2.msra.mxu0 0.0
  %1190 = vmatprep.subr.mxu0 0.0
  %1191 = vmatpush2.msra.mxu0 0.0
  %1192 = vmatprep.subr.mxu0 0.0
  %1193 = vmatpush2.msra.mxu0 0.0
  %1194 = vmatprep.subr.mxu0 0.0
  %1195 = vmatpush2.msra.mxu0 0.0
  %1196 = vmatprep.mubr.f32.mxu0 0.0
  %v1197 = vand.u32 %v146, 4294901760
  %v1198 = vsub.f32 %v146, %v1197
  %1199 = vmatmul.mubr.f32.gmra.mxu0 %v1198
  %v1200 = vpop.f32.mrf.mxu0
  %v1201 = vadd.f32 %v1091, %v1200
  %v1202 = vpop.f32.mrf.mxu0
  %v1203 = vadd.f32 %v1093, %v1202
  %1204 = vmatprep.mubr.f32.mxu0 0.0
  %v1205 = vand.u32 %v149, 4294901760
  %v1206 = vsub.f32 %v149, %v1205
  %1207 = vmatmul.mubr.f32.gmra.mxu0 %v1206
  %v1208 = vpop.f32.mrf.mxu0
  %v1209 = vadd.f32 %v1098, %v1208
  %v1210 = vpop.f32.mrf.mxu0
  %v1211 = vadd.f32 %v1100, %v1210
  %1212 = vmatprep.mubr.f32.mxu0 0.0
  %v1213 = vand.u32 %v152, 4294901760
  %v1214 = vsub.f32 %v152, %v1213
  %1215 = vmatmul.mubr.f32.gmra.mxu0 %v1214
  %v1216 = vpop.f32.mrf.mxu0
  %v1217 = vadd.f32 %v1105, %v1216
  %v1218 = vpop.f32.mrf.mxu0
  %v1219 = vadd.f32 %v1107, %v1218
  %1220 = vmatprep.mubr.f32.mxu0 0.0
  %v1221 = vand.u32 %v155, 4294901760
  %v1222 = vsub.f32 %v155, %v1221
  %1223 = vmatmul.mubr.f32.gmra.mxu0 %v1222
  %v1224 = vpop.f32.mrf.mxu0
  %v1225 = vadd.f32 %v1112, %v1224
  %v1226 = vpop.f32.mrf.mxu0
  %v1227 = vadd.f32 %v1114, %v1226
  %1228 = vdwg.mxu0
  %1229 = vmatprep.subr.mxu0 0.0
  %1230 = vmatpush1.msra.mxu0 0.0
  %1231 = vmatprep.subr.mxu0 0.0
  %1232 = vmatpush1.msra.mxu0 0.0
  %1233 = vmatprep.subr.mxu0 0.0
  %1234 = vmatpush1.msra.mxu0 0.0
  %1235 = vmatprep.subr.mxu0 0.0
  %1236 = vmatpush1.msra.mxu0 0.0
  %1237 = vmatprep.subr.mxu0 0.0
  %1238 = vmatpush1.msra.mxu0 0.0
  %1239 = vmatprep.subr.mxu0 0.0
  %1240 = vmatpush1.msra.mxu0 0.0
  %1241 = vmatprep.subr.mxu0 0.0
  %1242 = vmatpush1.msra.mxu0 0.0
  %1243 = vmatprep.subr.mxu0 0.0
  %1244 = vmatpush1.msra.mxu0 0.0
  %1245 = vmatprep.subr.mxu0 0.0
  %1246 = vmatpush1.msra.mxu0 0.0
  %1247 = vmatprep.subr.mxu0 0.0
  %1248 = vmatpush1.msra.mxu0 0.0
  %1249 = vmatprep.subr.mxu0 0.0
  %1250 = vmatpush1.msra.mxu0 0.0
  %1251 = vmatprep.subr.mxu0 0.0
  %1252 = vmatpush1.msra.mxu0 0.0
  %v1253 = vand.u32 %v168, 4294901760
  %1254 = vmatprep.subr.mxu0 %v1253
  %v1255 = vand.u32 %v165, 4294901760
  %1256 = vmatpush1.msra.mxu0 %v1255
  %v1257 = vand.u32 %v119, 4294901760
  %1258 = vmatprep.subr.mxu0 %v1257
  %v1259 = vand.u32 %v118, 4294901760
  %1260 = vmatpush1.msra.mxu0 %v1259
  %v1261 = vand.u32 %v113, 4294901760
  %1262 = vmatprep.subr.mxu0 %v1261
  %v1263 = vand.u32 %v112, 4294901760
  %1264 = vmatpush1.msra.mxu0 %v1263
  %v1265 = vand.u32 %v107, 4294901760
  %1266 = vmatprep.subr.mxu0 %v1265
  %v1267 = vand.u32 %v106, 4294901760
  %1268 = vmatpush1.msra.mxu0 %v1267
  %1269 = vmatprep.subr.mxu0 0.0
  %1270 = vmatpush2.msra.mxu0 0.0
  %1271 = vmatprep.subr.mxu0 0.0
  %1272 = vmatpush2.msra.mxu0 0.0
  %1273 = vmatprep.subr.mxu0 0.0
  %1274 = vmatpush2.msra.mxu0 0.0
  %1275 = vmatprep.subr.mxu0 0.0
  %1276 = vmatpush2.msra.mxu0 0.0
  %1277 = vmatprep.subr.mxu0 0.0
  %1278 = vmatpush2.msra.mxu0 0.0
  %1279 = vmatprep.subr.mxu0 0.0
  %1280 = vmatpush2.msra.mxu0 0.0
  %1281 = vmatprep.subr.mxu0 0.0
  %1282 = vmatpush2.msra.mxu0 0.0
  %1283 = vmatprep.subr.mxu0 0.0
  %1284 = vmatpush2.msra.mxu0 0.0
  %1285 = vmatprep.subr.mxu0 0.0
  %1286 = vmatpush2.msra.mxu0 0.0
  %1287 = vmatprep.subr.mxu0 0.0
  %1288 = vmatpush2.msra.mxu0 0.0
  %1289 = vmatprep.subr.mxu0 0.0
  %1290 = vmatpush2.msra.mxu0 0.0
  %1291 = vmatprep.subr.mxu0 0.0
  %1292 = vmatpush2.msra.mxu0 0.0
  %1293 = vmatprep.subr.mxu0 0.0
  %1294 = vmatpush2.msra.mxu0 0.0
  %1295 = vmatprep.subr.mxu0 0.0
  %1296 = vmatpush2.msra.mxu0 0.0
  %1297 = vmatprep.subr.mxu0 0.0
  %1298 = vmatpush2.msra.mxu0 0.0
  %1299 = vmatprep.subr.mxu0 0.0
  %1300 = vmatpush2.msra.mxu0 0.0
  %1301 = vmatprep.mubr.f32.mxu0 0.0
  %v1302 = vand.u32 %v146, 4294901760
  %v1303 = vsub.f32 %v146, %v1302
  %v1304 = vand.u32 %v1303, 4294901760
  %1305 = vmatmul.mubr.f32.gmra.mxu0 %v1304
  %v1306 = vpop.f32.mrf.mxu0
  %v1307 = vadd.f32 %v1201, %v1306
  %v1308 = vpop.f32.mrf.mxu0
  %v1309 = vadd.f32 %v1203, %v1308
  %1310 = vmatprep.mubr.f32.mxu0 0.0
  %v1311 = vand.u32 %v149, 4294901760
  %v1312 = vsub.f32 %v149, %v1311
  %v1313 = vand.u32 %v1312, 4294901760
  %1314 = vmatmul.mubr.f32.gmra.mxu0 %v1313
  %v1315 = vpop.f32.mrf.mxu0
  %v1316 = vadd.f32 %v1209, %v1315
  %v1317 = vpop.f32.mrf.mxu0
  %v1318 = vadd.f32 %v1211, %v1317
  %1319 = vmatprep.mubr.f32.mxu0 0.0
  %v1320 = vand.u32 %v152, 4294901760
  %v1321 = vsub.f32 %v152, %v1320
  %v1322 = vand.u32 %v1321, 4294901760
  %1323 = vmatmul.mubr.f32.gmra.mxu0 %v1322
  %v1324 = vpop.f32.mrf.mxu0
  %v1325 = vadd.f32 %v1217, %v1324
  %v1326 = vpop.f32.mrf.mxu0
  %v1327 = vadd.f32 %v1219, %v1326
  %1328 = vmatprep.mubr.f32.mxu0 0.0
  %v1329 = vand.u32 %v155, 4294901760
  %v1330 = vsub.f32 %v155, %v1329
  %v1331 = vand.u32 %v1330, 4294901760
  %1332 = vmatmul.mubr.f32.gmra.mxu0 %v1331
  %v1333 = vpop.f32.mrf.mxu0
  %v1334 = vadd.f32 %v1225, %v1333
  %v1335 = vpop.f32.mrf.mxu0
  %v1336 = vadd.f32 %v1227, %v1335
  %1337 = vdwg.mxu0
  %1338 = vmatprep.subr.mxu0 0.0
  %1339 = vmatpush1.msra.mxu0 0.0
  %1340 = vmatprep.subr.mxu0 0.0
  %1341 = vmatpush1.msra.mxu0 0.0
  %1342 = vmatprep.subr.mxu0 0.0
  %1343 = vmatpush1.msra.mxu0 0.0
  %1344 = vmatprep.subr.mxu0 0.0
  %1345 = vmatpush1.msra.mxu0 0.0
  %1346 = vmatprep.subr.mxu0 0.0
  %1347 = vmatpush1.msra.mxu0 0.0
  %1348 = vmatprep.subr.mxu0 0.0
  %1349 = vmatpush1.msra.mxu0 0.0
  %1350 = vmatprep.subr.mxu0 0.0
  %1351 = vmatpush1.msra.mxu0 0.0
  %1352 = vmatprep.subr.mxu0 0.0
  %1353 = vmatpush1.msra.mxu0 0.0
  %1354 = vmatprep.subr.mxu0 0.0
  %1355 = vmatpush1.msra.mxu0 0.0
  %1356 = vmatprep.subr.mxu0 0.0
  %1357 = vmatpush1.msra.mxu0 0.0
  %1358 = vmatprep.subr.mxu0 0.0
  %1359 = vmatpush1.msra.mxu0 0.0
  %1360 = vmatprep.subr.mxu0 0.0
  %1361 = vmatpush1.msra.mxu0 0.0
  %v1362 = vand.u32 %v168, 4294901760
  %v1363 = vsub.f32 %v168, %v1362
  %v1364 = vand.u32 %v1363, 4294901760
  %1365 = vmatprep.subr.mxu0 %v1364
  %v1366 = vand.u32 %v165, 4294901760
  %v1367 = vsub.f32 %v165, %v1366
  %v1368 = vand.u32 %v1367, 4294901760
  %1369 = vmatpush1.msra.mxu0 %v1368
  %v1370 = vand.u32 %v119, 4294901760
  %v1371 = vsub.f32 %v119, %v1370
  %v1372 = vand.u32 %v1371, 4294901760
  %1373 = vmatprep.subr.mxu0 %v1372
  %v1374 = vand.u32 %v118, 4294901760
  %v1375 = vsub.f32 %v118, %v1374
  %v1376 = vand.u32 %v1375, 4294901760
  %1377 = vmatpush1.msra.mxu0 %v1376
  %v1378 = vand.u32 %v113, 4294901760
  %v1379 = vsub.f32 %v113, %v1378
  %v1380 = vand.u32 %v1379, 4294901760
  %1381 = vmatprep.subr.mxu0 %v1380
  %v1382 = vand.u32 %v112, 4294901760
  %v1383 = vsub.f32 %v112, %v1382
  %v1384 = vand.u32 %v1383, 4294901760
  %1385 = vmatpush1.msra.mxu0 %v1384
  %v1386 = vand.u32 %v107, 4294901760
  %v1387 = vsub.f32 %v107, %v1386
  %v1388 = vand.u32 %v1387, 4294901760
  %1389 = vmatprep.subr.mxu0 %v1388
  %v1390 = vand.u32 %v106, 4294901760
  %v1391 = vsub.f32 %v106, %v1390
  %v1392 = vand.u32 %v1391, 4294901760
  %1393 = vmatpush1.msra.mxu0 %v1392
  %1394 = vmatprep.subr.mxu0 0.0
  %1395 = vmatpush2.msra.mxu0 0.0
  %1396 = vmatprep.subr.mxu0 0.0
  %1397 = vmatpush2.msra.mxu0 0.0
  %1398 = vmatprep.subr.mxu0 0.0
  %1399 = vmatpush2.msra.mxu0 0.0
  %1400 = vmatprep.subr.mxu0 0.0
  %1401 = vmatpush2.msra.mxu0 0.0
  %1402 = vmatprep.subr.mxu0 0.0
  %1403 = vmatpush2.msra.mxu0 0.0
  %1404 = vmatprep.subr.mxu0 0.0
  %1405 = vmatpush2.msra.mxu0 0.0
  %1406 = vmatprep.subr.mxu0 0.0
  %1407 = vmatpush2.msra.mxu0 0.0
  %1408 = vmatprep.subr.mxu0 0.0
  %1409 = vmatpush2.msra.mxu0 0.0
  %1410 = vmatprep.subr.mxu0 0.0
  %1411 = vmatpush2.msra.mxu0 0.0
  %1412 = vmatprep.subr.mxu0 0.0
  %1413 = vmatpush2.msra.mxu0 0.0
  %1414 = vmatprep.subr.mxu0 0.0
  %1415 = vmatpush2.msra.mxu0 0.0
  %1416 = vmatprep.subr.mxu0 0.0
  %1417 = vmatpush2.msra.mxu0 0.0
  %1418 = vmatprep.subr.mxu0 0.0
  %1419 = vmatpush2.msra.mxu0 0.0
  %1420 = vmatprep.subr.mxu0 0.0
  %1421 = vmatpush2.msra.mxu0 0.0
  %1422 = vmatprep.subr.mxu0 0.0
  %1423 = vmatpush2.msra.mxu0 0.0
  %1424 = vmatprep.subr.mxu0 0.0
  %1425 = vmatpush2.msra.mxu0 0.0
  %1426 = vmatprep.mubr.f32.mxu0 0.0
  %v1427 = vand.u32 %v146, 4294901760
  %1428 = vmatmul.mubr.f32.gmra.mxu0 %v1427
  %v1429 = vpop.f32.mrf.mxu0
  %v1430 = vadd.f32 %v1307, %v1429
  %v1431 = vpop.f32.mrf.mxu0
  %v1432 = vadd.f32 %v1309, %v1431
  %1433 = vmatprep.mubr.f32.mxu0 0.0
  %v1434 = vand.u32 %v149, 4294901760
  %1435 = vmatmul.mubr.f32.gmra.mxu0 %v1434
  %v1436 = vpop.f32.mrf.mxu0
  %v1437 = vadd.f32 %v1316, %v1436
  %v1438 = vpop.f32.mrf.mxu0
  %v1439 = vadd.f32 %v1318, %v1438
  %1440 = vmatprep.mubr.f32.mxu0 0.0
  %v1441 = vand.u32 %v152, 4294901760
  %1442 = vmatmul.mubr.f32.gmra.mxu0 %v1441
  %v1443 = vpop.f32.mrf.mxu0
  %v1444 = vadd.f32 %v1325, %v1443
  %v1445 = vpop.f32.mrf.mxu0
  %v1446 = vadd.f32 %v1327, %v1445
  %1447 = vmatprep.mubr.f32.mxu0 0.0
  %v1448 = vand.u32 %v155, 4294901760
  %1449 = vmatmul.mubr.f32.gmra.mxu0 %v1448
  %v1450 = vpop.f32.mrf.mxu0
  %v1451 = vadd.f32 %v1334, %v1450
  %v1452 = vpop.f32.mrf.mxu0
  %v1453 = vadd.f32 %v1336, %v1452
  %1454 = vdwg.mxu0
  %1455 = vmatprep.subr.mxu0 0.0
  %1456 = vmatpush1.msra.mxu0 0.0
  %1457 = vmatprep.subr.mxu0 0.0
  %1458 = vmatpush1.msra.mxu0 0.0
  %1459 = vmatprep.subr.mxu0 0.0
  %1460 = vmatpush1.msra.mxu0 0.0
  %1461 = vmatprep.subr.mxu0 0.0
  %1462 = vmatpush1.msra.mxu0 0.0
  %1463 = vmatprep.subr.mxu0 0.0
  %1464 = vmatpush1.msra.mxu0 0.0
  %1465 = vmatprep.subr.mxu0 0.0
  %1466 = vmatpush1.msra.mxu0 0.0
  %1467 = vmatprep.subr.mxu0 0.0
  %1468 = vmatpush1.msra.mxu0 0.0
  %1469 = vmatprep.subr.mxu0 0.0
  %1470 = vmatpush1.msra.mxu0 0.0
  %1471 = vmatprep.subr.mxu0 0.0
  %1472 = vmatpush1.msra.mxu0 0.0
  %1473 = vmatprep.subr.mxu0 0.0
  %1474 = vmatpush1.msra.mxu0 0.0
  %1475 = vmatprep.subr.mxu0 0.0
  %1476 = vmatpush1.msra.mxu0 0.0
  %1477 = vmatprep.subr.mxu0 0.0
  %1478 = vmatpush1.msra.mxu0 0.0
  %v1479 = vand.u32 %v168, 4294901760
  %1480 = vmatprep.subr.mxu0 %v1479
  %v1481 = vand.u32 %v165, 4294901760
  %1482 = vmatpush1.msra.mxu0 %v1481
  %v1483 = vand.u32 %v119, 4294901760
  %1484 = vmatprep.subr.mxu0 %v1483
  %v1485 = vand.u32 %v118, 4294901760
  %1486 = vmatpush1.msra.mxu0 %v1485
  %v1487 = vand.u32 %v113, 4294901760
  %1488 = vmatprep.subr.mxu0 %v1487
  %v1489 = vand.u32 %v112, 4294901760
  %1490 = vmatpush1.msra.mxu0 %v1489
  %v1491 = vand.u32 %v107, 4294901760
  %1492 = vmatprep.subr.mxu0 %v1491
  %v1493 = vand.u32 %v106, 4294901760
  %1494 = vmatpush1.msra.mxu0 %v1493
  %1495 = vmatprep.subr.mxu0 0.0
  %1496 = vmatpush2.msra.mxu0 0.0
  %1497 = vmatprep.subr.mxu0 0.0
  %1498 = vmatpush2.msra.mxu0 0.0
  %1499 = vmatprep.subr.mxu0 0.0
  %1500 = vmatpush2.msra.mxu0 0.0
  %1501 = vmatprep.subr.mxu0 0.0
  %1502 = vmatpush2.msra.mxu0 0.0
  %1503 = vmatprep.subr.mxu0 0.0
  %1504 = vmatpush2.msra.mxu0 0.0
  %1505 = vmatprep.subr.mxu0 0.0
  %1506 = vmatpush2.msra.mxu0 0.0
  %1507 = vmatprep.subr.mxu0 0.0
  %1508 = vmatpush2.msra.mxu0 0.0
  %1509 = vmatprep.subr.mxu0 0.0
  %1510 = vmatpush2.msra.mxu0 0.0
  %1511 = vmatprep.subr.mxu0 0.0
  %1512 = vmatpush2.msra.mxu0 0.0
  %1513 = vmatprep.subr.mxu0 0.0
  %1514 = vmatpush2.msra.mxu0 0.0
  %1515 = vmatprep.subr.mxu0 0.0
  %1516 = vmatpush2.msra.mxu0 0.0
  %1517 = vmatprep.subr.mxu0 0.0
  %1518 = vmatpush2.msra.mxu0 0.0
  %1519 = vmatprep.subr.mxu0 0.0
  %1520 = vmatpush2.msra.mxu0 0.0
  %1521 = vmatprep.subr.mxu0 0.0
  %1522 = vmatpush2.msra.mxu0 0.0
  %1523 = vmatprep.subr.mxu0 0.0
  %1524 = vmatpush2.msra.mxu0 0.0
  %1525 = vmatprep.subr.mxu0 0.0
  %1526 = vmatpush2.msra.mxu0 0.0
  %1527 = vmatprep.mubr.f32.mxu0 0.0
  %v1528 = vand.u32 %v146, 4294901760
  %1529 = vmatmul.mubr.f32.gmra.mxu0 %v1528
  %v1530 = vpop.f32.mrf.mxu0
  %v1531 = vadd.f32 %v1430, %v1530
  %v1532 = vpop.f32.mrf.mxu0
  %v1533 = vadd.f32 %v1432, %v1532
  %1534 = vmatprep.mubr.f32.mxu0 0.0
  %v1535 = vand.u32 %v149, 4294901760
  %1536 = vmatmul.mubr.f32.gmra.mxu0 %v1535
  %v1537 = vpop.f32.mrf.mxu0
  %v1538 = vadd.f32 %v1437, %v1537
  %v1539 = vpop.f32.mrf.mxu0
  %v1540 = vadd.f32 %v1439, %v1539
  %1541 = vmatprep.mubr.f32.mxu0 0.0
  %v1542 = vand.u32 %v152, 4294901760
  %1543 = vmatmul.mubr.f32.gmra.mxu0 %v1542
  %v1544 = vpop.f32.mrf.mxu0
  %v1545 = vadd.f32 %v1444, %v1544
  %v1546 = vpop.f32.mrf.mxu0
  %v1547 = vadd.f32 %v1446, %v1546
  %1548 = vmatprep.mubr.f32.mxu0 0.0
  %v1549 = vand.u32 %v155, 4294901760
  %1550 = vmatmul.mubr.f32.gmra.mxu0 %v1549
  %v1551 = vpop.f32.mrf.mxu0
  %v1552 = vadd.f32 %v1451, %v1551
  %v1553 = vpop.f32.mrf.mxu0
  %v1554 = vadd.f32 %v1453, %v1553
  %1555 = vdwg.mxu0
  %1556 = vmatprep.subr.mxu0 0.0
  %1557 = vmatpush1.msra.mxu0 0.0
  %1558 = vmatprep.subr.mxu0 0.0
  %1559 = vmatpush1.msra.mxu0 0.0
  %1560 = vmatprep.subr.mxu0 0.0
  %1561 = vmatpush1.msra.mxu0 0.0
  %1562 = vmatprep.subr.mxu0 0.0
  %1563 = vmatpush1.msra.mxu0 0.0
  %1564 = vmatprep.subr.mxu0 0.0
  %1565 = vmatpush1.msra.mxu0 0.0
  %1566 = vmatprep.subr.mxu0 0.0
  %1567 = vmatpush1.msra.mxu0 0.0
  %1568 = vmatprep.subr.mxu0 0.0
  %1569 = vmatpush1.msra.mxu0 0.0
  %1570 = vmatprep.subr.mxu0 0.0
  %1571 = vmatpush1.msra.mxu0 0.0
  %1572 = vmatprep.subr.mxu0 0.0
  %1573 = vmatpush1.msra.mxu0 0.0
  %1574 = vmatprep.subr.mxu0 0.0
  %1575 = vmatpush1.msra.mxu0 0.0
  %1576 = vmatprep.subr.mxu0 0.0
  %1577 = vmatpush1.msra.mxu0 0.0
  %1578 = vmatprep.subr.mxu0 0.0
  %1579 = vmatpush1.msra.mxu0 0.0
  %v1580 = vand.u32 %v174, 4294901760
  %1581 = vmatprep.subr.mxu0 %v1580
  %v1582 = vand.u32 %v171, 4294901760
  %1583 = vmatpush1.msra.mxu0 %v1582
  %v1584 = vand.u32 %v121, 4294901760
  %1585 = vmatprep.subr.mxu0 %v1584
  %v1586 = vand.u32 %v120, 4294901760
  %1587 = vmatpush1.msra.mxu0 %v1586
  %v1588 = vand.u32 %v115, 4294901760
  %1589 = vmatprep.subr.mxu0 %v1588
  %v1590 = vand.u32 %v114, 4294901760
  %1591 = vmatpush1.msra.mxu0 %v1590
  %v1592 = vand.u32 %v109, 4294901760
  %1593 = vmatprep.subr.mxu0 %v1592
  %v1594 = vand.u32 %v108, 4294901760
  %1595 = vmatpush1.msra.mxu0 %v1594
  %1596 = vmatprep.subr.mxu0 0.0
  %1597 = vmatpush2.msra.mxu0 0.0
  %1598 = vmatprep.subr.mxu0 0.0
  %1599 = vmatpush2.msra.mxu0 0.0
  %1600 = vmatprep.subr.mxu0 0.0
  %1601 = vmatpush2.msra.mxu0 0.0
  %1602 = vmatprep.subr.mxu0 0.0
  %1603 = vmatpush2.msra.mxu0 0.0
  %1604 = vmatprep.subr.mxu0 0.0
  %1605 = vmatpush2.msra.mxu0 0.0
  %1606 = vmatprep.subr.mxu0 0.0
  %1607 = vmatpush2.msra.mxu0 0.0
  %1608 = vmatprep.subr.mxu0 0.0
  %1609 = vmatpush2.msra.mxu0 0.0
  %1610 = vmatprep.subr.mxu0 0.0
  %1611 = vmatpush2.msra.mxu0 0.0
  %1612 = vmatprep.subr.mxu0 0.0
  %1613 = vmatpush2.msra.mxu0 0.0
  %1614 = vmatprep.subr.mxu0 0.0
  %1615 = vmatpush2.msra.mxu0 0.0
  %1616 = vmatprep.subr.mxu0 0.0
  %1617 = vmatpush2.msra.mxu0 0.0
  %1618 = vmatprep.subr.mxu0 0.0
  %1619 = vmatpush2.msra.mxu0 0.0
  %1620 = vmatprep.subr.mxu0 0.0
  %1621 = vmatpush2.msra.mxu0 0.0
  %1622 = vmatprep.subr.mxu0 0.0
  %1623 = vmatpush2.msra.mxu0 0.0
  %1624 = vmatprep.subr.mxu0 0.0
  %1625 = vmatpush2.msra.mxu0 0.0
  %1626 = vmatprep.subr.mxu0 0.0
  %1627 = vmatpush2.msra.mxu0 0.0
  %1628 = vmatprep.mubr.f32.mxu0 0.0
  %v1629 = vand.u32 %v146, 4294901760
  %v1630 = vsub.f32 %v146, %v1629
  %v1631 = vand.u32 %v1630, 4294901760
  %v1632 = vsub.f32 %v1630, %v1631
  %v1633 = vand.u32 %v1632, 4294901760
  %1634 = vmatmul.mubr.f32.gmra.mxu0 %v1633
  %v1635 = vpop.f32.mrf.mxu0
  %v1636 = vadd.f32 0.0, %v1635
  %v1637 = vpop.f32.mrf.mxu0
  %v1638 = vadd.f32 0.0, %v1637
  %1639 = vmatprep.mubr.f32.mxu0 0.0
  %v1640 = vand.u32 %v149, 4294901760
  %v1641 = vsub.f32 %v149, %v1640
  %v1642 = vand.u32 %v1641, 4294901760
  %v1643 = vsub.f32 %v1641, %v1642
  %v1644 = vand.u32 %v1643, 4294901760
  %1645 = vmatmul.mubr.f32.gmra.mxu0 %v1644
  %v1646 = vpop.f32.mrf.mxu0
  %v1647 = vadd.f32 0.0, %v1646
  %v1648 = vpop.f32.mrf.mxu0
  %v1649 = vadd.f32 0.0, %v1648
  %1650 = vmatprep.mubr.f32.mxu0 0.0
  %v1651 = vand.u32 %v152, 4294901760
  %v1652 = vsub.f32 %v152, %v1651
  %v1653 = vand.u32 %v1652, 4294901760
  %v1654 = vsub.f32 %v1652, %v1653
  %v1655 = vand.u32 %v1654, 4294901760
  %1656 = vmatmul.mubr.f32.gmra.mxu0 %v1655
  %v1657 = vpop.f32.mrf.mxu0
  %v1658 = vadd.f32 0.0, %v1657
  %v1659 = vpop.f32.mrf.mxu0
  %v1660 = vadd.f32 0.0, %v1659
  %1661 = vmatprep.mubr.f32.mxu0 0.0
  %v1662 = vand.u32 %v155, 4294901760
  %v1663 = vsub.f32 %v155, %v1662
  %v1664 = vand.u32 %v1663, 4294901760
  %v1665 = vsub.f32 %v1663, %v1664
  %v1666 = vand.u32 %v1665, 4294901760
  %1667 = vmatmul.mubr.f32.gmra.mxu0 %v1666
  %v1668 = vpop.f32.mrf.mxu0
  %v1669 = vadd.f32 0.0, %v1668
  %v1670 = vpop.f32.mrf.mxu0
  %v1671 = vadd.f32 0.0, %v1670
  %1672 = vdwg.mxu0
  %1673 = vmatprep.subr.mxu0 0.0
  %1674 = vmatpush1.msra.mxu0 0.0
  %1675 = vmatprep.subr.mxu0 0.0
  %1676 = vmatpush1.msra.mxu0 0.0
  %1677 = vmatprep.subr.mxu0 0.0
  %1678 = vmatpush1.msra.mxu0 0.0
  %1679 = vmatprep.subr.mxu0 0.0
  %1680 = vmatpush1.msra.mxu0 0.0
  %1681 = vmatprep.subr.mxu0 0.0
  %1682 = vmatpush1.msra.mxu0 0.0
  %1683 = vmatprep.subr.mxu0 0.0
  %1684 = vmatpush1.msra.mxu0 0.0
  %1685 = vmatprep.subr.mxu0 0.0
  %1686 = vmatpush1.msra.mxu0 0.0
  %1687 = vmatprep.subr.mxu0 0.0
  %1688 = vmatpush1.msra.mxu0 0.0
  %1689 = vmatprep.subr.mxu0 0.0
  %1690 = vmatpush1.msra.mxu0 0.0
  %1691 = vmatprep.subr.mxu0 0.0
  %1692 = vmatpush1.msra.mxu0 0.0
  %1693 = vmatprep.subr.mxu0 0.0
  %1694 = vmatpush1.msra.mxu0 0.0
  %1695 = vmatprep.subr.mxu0 0.0
  %1696 = vmatpush1.msra.mxu0 0.0
  %v1697 = vand.u32 %v174, 4294901760
  %v1698 = vsub.f32 %v174, %v1697
  %v1699 = vand.u32 %v1698, 4294901760
  %v1700 = vsub.f32 %v1698, %v1699
  %v1701 = vand.u32 %v1700, 4294901760
  %1702 = vmatprep.subr.mxu0 %v1701
  %v1703 = vand.u32 %v171, 4294901760
  %v1704 = vsub.f32 %v171, %v1703
  %v1705 = vand.u32 %v1704, 4294901760
  %v1706 = vsub.f32 %v1704, %v1705
  %v1707 = vand.u32 %v1706, 4294901760
  %1708 = vmatpush1.msra.mxu0 %v1707
  %v1709 = vand.u32 %v121, 4294901760
  %v1710 = vsub.f32 %v121, %v1709
  %v1711 = vand.u32 %v1710, 4294901760
  %v1712 = vsub.f32 %v1710, %v1711
  %v1713 = vand.u32 %v1712, 4294901760
  %1714 = vmatprep.subr.mxu0 %v1713
  %v1715 = vand.u32 %v120, 4294901760
  %v1716 = vsub.f32 %v120, %v1715
  %v1717 = vand.u32 %v1716, 4294901760
  %v1718 = vsub.f32 %v1716, %v1717
  %v1719 = vand.u32 %v1718, 4294901760
  %1720 = vmatpush1.msra.mxu0 %v1719
  %v1721 = vand.u32 %v115, 4294901760
  %v1722 = vsub.f32 %v115, %v1721
  %v1723 = vand.u32 %v1722, 4294901760
  %v1724 = vsub.f32 %v1722, %v1723
  %v1725 = vand.u32 %v1724, 4294901760
  %1726 = vmatprep.subr.mxu0 %v1725
  %v1727 = vand.u32 %v114, 4294901760
  %v1728 = vsub.f32 %v114, %v1727
  %v1729 = vand.u32 %v1728, 4294901760
  %v1730 = vsub.f32 %v1728, %v1729
  %v1731 = vand.u32 %v1730, 4294901760
  %1732 = vmatpush1.msra.mxu0 %v1731
  %v1733 = vand.u32 %v109, 4294901760
  %v1734 = vsub.f32 %v109, %v1733
  %v1735 = vand.u32 %v1734, 4294901760
  %v1736 = vsub.f32 %v1734, %v1735
  %v1737 = vand.u32 %v1736, 4294901760
  %1738 = vmatprep.subr.mxu0 %v1737
  %v1739 = vand.u32 %v108, 4294901760
  %v1740 = vsub.f32 %v108, %v1739
  %v1741 = vand.u32 %v1740, 4294901760
  %v1742 = vsub.f32 %v1740, %v1741
  %v1743 = vand.u32 %v1742, 4294901760
  %1744 = vmatpush1.msra.mxu0 %v1743
  %1745 = vmatprep.subr.mxu0 0.0
  %1746 = vmatpush2.msra.mxu0 0.0
  %1747 = vmatprep.subr.mxu0 0.0
  %1748 = vmatpush2.msra.mxu0 0.0
  %1749 = vmatprep.subr.mxu0 0.0
  %1750 = vmatpush2.msra.mxu0 0.0
  %1751 = vmatprep.subr.mxu0 0.0
  %1752 = vmatpush2.msra.mxu0 0.0
  %1753 = vmatprep.subr.mxu0 0.0
  %1754 = vmatpush2.msra.mxu0 0.0
  %1755 = vmatprep.subr.mxu0 0.0
  %1756 = vmatpush2.msra.mxu0 0.0
  %1757 = vmatprep.subr.mxu0 0.0
  %1758 = vmatpush2.msra.mxu0 0.0
  %1759 = vmatprep.subr.mxu0 0.0
  %1760 = vmatpush2.msra.mxu0 0.0
  %1761 = vmatprep.subr.mxu0 0.0
  %1762 = vmatpush2.msra.mxu0 0.0
  %1763 = vmatprep.subr.mxu0 0.0
  %1764 = vmatpush2.msra.mxu0 0.0
  %1765 = vmatprep.subr.mxu0 0.0
  %1766 = vmatpush2.msra.mxu0 0.0
  %1767 = vmatprep.subr.mxu0 0.0
  %1768 = vmatpush2.msra.mxu0 0.0
  %1769 = vmatprep.subr.mxu0 0.0
  %1770 = vmatpush2.msra.mxu0 0.0
  %1771 = vmatprep.subr.mxu0 0.0
  %1772 = vmatpush2.msra.mxu0 0.0
  %1773 = vmatprep.subr.mxu0 0.0
  %1774 = vmatpush2.msra.mxu0 0.0
  %1775 = vmatprep.subr.mxu0 0.0
  %1776 = vmatpush2.msra.mxu0 0.0
  %1777 = vmatprep.mubr.f32.mxu0 0.0
  %v1778 = vand.u32 %v146, 4294901760
  %1779 = vmatmul.mubr.f32.gmra.mxu0 %v1778
  %v1780 = vpop.f32.mrf.mxu0
  %v1781 = vadd.f32 %v1636, %v1780
  %v1782 = vpop.f32.mrf.mxu0
  %v1783 = vadd.f32 %v1638, %v1782
  %1784 = vmatprep.mubr.f32.mxu0 0.0
  %v1785 = vand.u32 %v149, 4294901760
  %1786 = vmatmul.mubr.f32.gmra.mxu0 %v1785
  %v1787 = vpop.f32.mrf.mxu0
  %v1788 = vadd.f32 %v1647, %v1787
  %v1789 = vpop.f32.mrf.mxu0
  %v1790 = vadd.f32 %v1649, %v1789
  %1791 = vmatprep.mubr.f32.mxu0 0.0
  %v1792 = vand.u32 %v152, 4294901760
  %1793 = vmatmul.mubr.f32.gmra.mxu0 %v1792
  %v1794 = vpop.f32.mrf.mxu0
  %v1795 = vadd.f32 %v1658, %v1794
  %v1796 = vpop.f32.mrf.mxu0
  %v1797 = vadd.f32 %v1660, %v1796
  %1798 = vmatprep.mubr.f32.mxu0 0.0
  %v1799 = vand.u32 %v155, 4294901760
  %1800 = vmatmul.mubr.f32.gmra.mxu0 %v1799
  %v1801 = vpop.f32.mrf.mxu0
  %v1802 = vadd.f32 %v1669, %v1801
  %v1803 = vpop.f32.mrf.mxu0
  %v1804 = vadd.f32 %v1671, %v1803
  %1805 = vdwg.mxu0
  %1806 = vmatprep.subr.mxu0 0.0
  %1807 = vmatpush1.msra.mxu0 0.0
  %1808 = vmatprep.subr.mxu0 0.0
  %1809 = vmatpush1.msra.mxu0 0.0
  %1810 = vmatprep.subr.mxu0 0.0
  %1811 = vmatpush1.msra.mxu0 0.0
  %1812 = vmatprep.subr.mxu0 0.0
  %1813 = vmatpush1.msra.mxu0 0.0
  %1814 = vmatprep.subr.mxu0 0.0
  %1815 = vmatpush1.msra.mxu0 0.0
  %1816 = vmatprep.subr.mxu0 0.0
  %1817 = vmatpush1.msra.mxu0 0.0
  %1818 = vmatprep.subr.mxu0 0.0
  %1819 = vmatpush1.msra.mxu0 0.0
  %1820 = vmatprep.subr.mxu0 0.0
  %1821 = vmatpush1.msra.mxu0 0.0
  %1822 = vmatprep.subr.mxu0 0.0
  %1823 = vmatpush1.msra.mxu0 0.0
  %1824 = vmatprep.subr.mxu0 0.0
  %1825 = vmatpush1.msra.mxu0 0.0
  %1826 = vmatprep.subr.mxu0 0.0
  %1827 = vmatpush1.msra.mxu0 0.0
  %1828 = vmatprep.subr.mxu0 0.0
  %1829 = vmatpush1.msra.mxu0 0.0
  %v1830 = vand.u32 %v174, 4294901760
  %v1831 = vsub.f32 %v174, %v1830
  %1832 = vmatprep.subr.mxu0 %v1831
  %v1833 = vand.u32 %v171, 4294901760
  %v1834 = vsub.f32 %v171, %v1833
  %1835 = vmatpush1.msra.mxu0 %v1834
  %v1836 = vand.u32 %v121, 4294901760
  %v1837 = vsub.f32 %v121, %v1836
  %1838 = vmatprep.subr.mxu0 %v1837
  %v1839 = vand.u32 %v120, 4294901760
  %v1840 = vsub.f32 %v120, %v1839
  %1841 = vmatpush1.msra.mxu0 %v1840
  %v1842 = vand.u32 %v115, 4294901760
  %v1843 = vsub.f32 %v115, %v1842
  %1844 = vmatprep.subr.mxu0 %v1843
  %v1845 = vand.u32 %v114, 4294901760
  %v1846 = vsub.f32 %v114, %v1845
  %1847 = vmatpush1.msra.mxu0 %v1846
  %v1848 = vand.u32 %v109, 4294901760
  %v1849 = vsub.f32 %v109, %v1848
  %1850 = vmatprep.subr.mxu0 %v1849
  %v1851 = vand.u32 %v108, 4294901760
  %v1852 = vsub.f32 %v108, %v1851
  %1853 = vmatpush1.msra.mxu0 %v1852
  %1854 = vmatprep.subr.mxu0 0.0
  %1855 = vmatpush2.msra.mxu0 0.0
  %1856 = vmatprep.subr.mxu0 0.0
  %1857 = vmatpush2.msra.mxu0 0.0
  %1858 = vmatprep.subr.mxu0 0.0
  %1859 = vmatpush2.msra.mxu0 0.0
  %1860 = vmatprep.subr.mxu0 0.0
  %1861 = vmatpush2.msra.mxu0 0.0
  %1862 = vmatprep.subr.mxu0 0.0
  %1863 = vmatpush2.msra.mxu0 0.0
  %1864 = vmatprep.subr.mxu0 0.0
  %1865 = vmatpush2.msra.mxu0 0.0
  %1866 = vmatprep.subr.mxu0 0.0
  %1867 = vmatpush2.msra.mxu0 0.0
  %1868 = vmatprep.subr.mxu0 0.0
  %1869 = vmatpush2.msra.mxu0 0.0
  %1870 = vmatprep.subr.mxu0 0.0
  %1871 = vmatpush2.msra.mxu0 0.0
  %1872 = vmatprep.subr.mxu0 0.0
  %1873 = vmatpush2.msra.mxu0 0.0
  %1874 = vmatprep.subr.mxu0 0.0
  %1875 = vmatpush2.msra.mxu0 0.0
  %1876 = vmatprep.subr.mxu0 0.0
  %1877 = vmatpush2.msra.mxu0 0.0
  %1878 = vmatprep.subr.mxu0 0.0
  %1879 = vmatpush2.msra.mxu0 0.0
  %1880 = vmatprep.subr.mxu0 0.0
  %1881 = vmatpush2.msra.mxu0 0.0
  %1882 = vmatprep.subr.mxu0 0.0
  %1883 = vmatpush2.msra.mxu0 0.0
  %1884 = vmatprep.subr.mxu0 0.0
  %1885 = vmatpush2.msra.mxu0 0.0
  %1886 = vmatprep.mubr.f32.mxu0 0.0
  %v1887 = vand.u32 %v146, 4294901760
  %v1888 = vsub.f32 %v146, %v1887
  %1889 = vmatmul.mubr.f32.gmra.mxu0 %v1888
  %v1890 = vpop.f32.mrf.mxu0
  %v1891 = vadd.f32 %v1781, %v1890
  %v1892 = vpop.f32.mrf.mxu0
  %v1893 = vadd.f32 %v1783, %v1892
  %1894 = vmatprep.mubr.f32.mxu0 0.0
  %v1895 = vand.u32 %v149, 4294901760
  %v1896 = vsub.f32 %v149, %v1895
  %1897 = vmatmul.mubr.f32.gmra.mxu0 %v1896
  %v1898 = vpop.f32.mrf.mxu0
  %v1899 = vadd.f32 %v1788, %v1898
  %v1900 = vpop.f32.mrf.mxu0
  %v1901 = vadd.f32 %v1790, %v1900
  %1902 = vmatprep.mubr.f32.mxu0 0.0
  %v1903 = vand.u32 %v152, 4294901760
  %v1904 = vsub.f32 %v152, %v1903
  %1905 = vmatmul.mubr.f32.gmra.mxu0 %v1904
  %v1906 = vpop.f32.mrf.mxu0
  %v1907 = vadd.f32 %v1795, %v1906
  %v1908 = vpop.f32.mrf.mxu0
  %v1909 = vadd.f32 %v1797, %v1908
  %1910 = vmatprep.mubr.f32.mxu0 0.0
  %v1911 = vand.u32 %v155, 4294901760
  %v1912 = vsub.f32 %v155, %v1911
  %1913 = vmatmul.mubr.f32.gmra.mxu0 %v1912
  %v1914 = vpop.f32.mrf.mxu0
  %v1915 = vadd.f32 %v1802, %v1914
  %v1916 = vpop.f32.mrf.mxu0
  %v1917 = vadd.f32 %v1804, %v1916
  %1918 = vdwg.mxu0
  %1919 = vmatprep.subr.mxu0 0.0
  %1920 = vmatpush1.msra.mxu0 0.0
  %1921 = vmatprep.subr.mxu0 0.0
  %1922 = vmatpush1.msra.mxu0 0.0
  %1923 = vmatprep.subr.mxu0 0.0
  %1924 = vmatpush1.msra.mxu0 0.0
  %1925 = vmatprep.subr.mxu0 0.0
  %1926 = vmatpush1.msra.mxu0 0.0
  %1927 = vmatprep.subr.mxu0 0.0
  %1928 = vmatpush1.msra.mxu0 0.0
  %1929 = vmatprep.subr.mxu0 0.0
  %1930 = vmatpush1.msra.mxu0 0.0
  %1931 = vmatprep.subr.mxu0 0.0
  %1932 = vmatpush1.msra.mxu0 0.0
  %1933 = vmatprep.subr.mxu0 0.0
  %1934 = vmatpush1.msra.mxu0 0.0
  %1935 = vmatprep.subr.mxu0 0.0
  %1936 = vmatpush1.msra.mxu0 0.0
  %1937 = vmatprep.subr.mxu0 0.0
  %1938 = vmatpush1.msra.mxu0 0.0
  %1939 = vmatprep.subr.mxu0 0.0
  %1940 = vmatpush1.msra.mxu0 0.0
  %1941 = vmatprep.subr.mxu0 0.0
  %1942 = vmatpush1.msra.mxu0 0.0
  %v1943 = vand.u32 %v174, 4294901760
  %1944 = vmatprep.subr.mxu0 %v1943
  %v1945 = vand.u32 %v171, 4294901760
  %1946 = vmatpush1.msra.mxu0 %v1945
  %v1947 = vand.u32 %v121, 4294901760
  %1948 = vmatprep.subr.mxu0 %v1947
  %v1949 = vand.u32 %v120, 4294901760
  %1950 = vmatpush1.msra.mxu0 %v1949
  %v1951 = vand.u32 %v115, 4294901760
  %1952 = vmatprep.subr.mxu0 %v1951
  %v1953 = vand.u32 %v114, 4294901760
  %1954 = vmatpush1.msra.mxu0 %v1953
  %v1955 = vand.u32 %v109, 4294901760
  %1956 = vmatprep.subr.mxu0 %v1955
  %v1957 = vand.u32 %v108, 4294901760
  %1958 = vmatpush1.msra.mxu0 %v1957
  %1959 = vmatprep.subr.mxu0 0.0
  %1960 = vmatpush2.msra.mxu0 0.0
  %1961 = vmatprep.subr.mxu0 0.0
  %1962 = vmatpush2.msra.mxu0 0.0
  %1963 = vmatprep.subr.mxu0 0.0
  %1964 = vmatpush2.msra.mxu0 0.0
  %1965 = vmatprep.subr.mxu0 0.0
  %1966 = vmatpush2.msra.mxu0 0.0
  %1967 = vmatprep.subr.mxu0 0.0
  %1968 = vmatpush2.msra.mxu0 0.0
  %1969 = vmatprep.subr.mxu0 0.0
  %1970 = vmatpush2.msra.mxu0 0.0
  %1971 = vmatprep.subr.mxu0 0.0
  %1972 = vmatpush2.msra.mxu0 0.0
  %1973 = vmatprep.subr.mxu0 0.0
  %1974 = vmatpush2.msra.mxu0 0.0
  %1975 = vmatprep.subr.mxu0 0.0
  %1976 = vmatpush2.msra.mxu0 0.0
  %1977 = vmatprep.subr.mxu0 0.0
  %1978 = vmatpush2.msra.mxu0 0.0
  %1979 = vmatprep.subr.mxu0 0.0
  %1980 = vmatpush2.msra.mxu0 0.0
  %1981 = vmatprep.subr.mxu0 0.0
  %1982 = vmatpush2.msra.mxu0 0.0
  %1983 = vmatprep.subr.mxu0 0.0
  %1984 = vmatpush2.msra.mxu0 0.0
  %1985 = vmatprep.subr.mxu0 0.0
  %1986 = vmatpush2.msra.mxu0 0.0
  %1987 = vmatprep.subr.mxu0 0.0
  %1988 = vmatpush2.msra.mxu0 0.0
  %1989 = vmatprep.subr.mxu0 0.0
  %1990 = vmatpush2.msra.mxu0 0.0
  %1991 = vmatprep.mubr.f32.mxu0 0.0
  %v1992 = vand.u32 %v146, 4294901760
  %v1993 = vsub.f32 %v146, %v1992
  %v1994 = vand.u32 %v1993, 4294901760
  %1995 = vmatmul.mubr.f32.gmra.mxu0 %v1994
  %v1996 = vpop.f32.mrf.mxu0
  %v1997 = vadd.f32 %v1891, %v1996
  %v1998 = vpop.f32.mrf.mxu0
  %v1999 = vadd.f32 %v1893, %v1998
  %2000 = vmatprep.mubr.f32.mxu0 0.0
  %v2001 = vand.u32 %v149, 4294901760
  %v2002 = vsub.f32 %v149, %v2001
  %v2003 = vand.u32 %v2002, 4294901760
  %2004 = vmatmul.mubr.f32.gmra.mxu0 %v2003
  %v2005 = vpop.f32.mrf.mxu0
  %v2006 = vadd.f32 %v1899, %v2005
  %v2007 = vpop.f32.mrf.mxu0
  %v2008 = vadd.f32 %v1901, %v2007
  %2009 = vmatprep.mubr.f32.mxu0 0.0
  %v2010 = vand.u32 %v152, 4294901760
  %v2011 = vsub.f32 %v152, %v2010
  %v2012 = vand.u32 %v2011, 4294901760
  %2013 = vmatmul.mubr.f32.gmra.mxu0 %v2012
  %v2014 = vpop.f32.mrf.mxu0
  %v2015 = vadd.f32 %v1907, %v2014
  %v2016 = vpop.f32.mrf.mxu0
  %v2017 = vadd.f32 %v1909, %v2016
  %2018 = vmatprep.mubr.f32.mxu0 0.0
  %v2019 = vand.u32 %v155, 4294901760
  %v2020 = vsub.f32 %v155, %v2019
  %v2021 = vand.u32 %v2020, 4294901760
  %2022 = vmatmul.mubr.f32.gmra.mxu0 %v2021
  %v2023 = vpop.f32.mrf.mxu0
  %v2024 = vadd.f32 %v1915, %v2023
  %v2025 = vpop.f32.mrf.mxu0
  %v2026 = vadd.f32 %v1917, %v2025
  %2027 = vdwg.mxu0
  %2028 = vmatprep.subr.mxu0 0.0
  %2029 = vmatpush1.msra.mxu0 0.0
  %2030 = vmatprep.subr.mxu0 0.0
  %2031 = vmatpush1.msra.mxu0 0.0
  %2032 = vmatprep.subr.mxu0 0.0
  %2033 = vmatpush1.msra.mxu0 0.0
  %2034 = vmatprep.subr.mxu0 0.0
  %2035 = vmatpush1.msra.mxu0 0.0
  %2036 = vmatprep.subr.mxu0 0.0
  %2037 = vmatpush1.msra.mxu0 0.0
  %2038 = vmatprep.subr.mxu0 0.0
  %2039 = vmatpush1.msra.mxu0 0.0
  %2040 = vmatprep.subr.mxu0 0.0
  %2041 = vmatpush1.msra.mxu0 0.0
  %2042 = vmatprep.subr.mxu0 0.0
  %2043 = vmatpush1.msra.mxu0 0.0
  %2044 = vmatprep.subr.mxu0 0.0
  %2045 = vmatpush1.msra.mxu0 0.0
  %2046 = vmatprep.subr.mxu0 0.0
  %2047 = vmatpush1.msra.mxu0 0.0
  %2048 = vmatprep.subr.mxu0 0.0
  %2049 = vmatpush1.msra.mxu0 0.0
  %2050 = vmatprep.subr.mxu0 0.0
  %2051 = vmatpush1.msra.mxu0 0.0
  %v2052 = vand.u32 %v174, 4294901760
  %v2053 = vsub.f32 %v174, %v2052
  %v2054 = vand.u32 %v2053, 4294901760
  %2055 = vmatprep.subr.mxu0 %v2054
  %v2056 = vand.u32 %v171, 4294901760
  %v2057 = vsub.f32 %v171, %v2056
  %v2058 = vand.u32 %v2057, 4294901760
  %2059 = vmatpush1.msra.mxu0 %v2058
  %v2060 = vand.u32 %v121, 4294901760
  %v2061 = vsub.f32 %v121, %v2060
  %v2062 = vand.u32 %v2061, 4294901760
  %2063 = vmatprep.subr.mxu0 %v2062
  %v2064 = vand.u32 %v120, 4294901760
  %v2065 = vsub.f32 %v120, %v2064
  %v2066 = vand.u32 %v2065, 4294901760
  %2067 = vmatpush1.msra.mxu0 %v2066
  %v2068 = vand.u32 %v115, 4294901760
  %v2069 = vsub.f32 %v115, %v2068
  %v2070 = vand.u32 %v2069, 4294901760
  %2071 = vmatprep.subr.mxu0 %v2070
  %v2072 = vand.u32 %v114, 4294901760
  %v2073 = vsub.f32 %v114, %v2072
  %v2074 = vand.u32 %v2073, 4294901760
  %2075 = vmatpush1.msra.mxu0 %v2074
  %v2076 = vand.u32 %v109, 4294901760
  %v2077 = vsub.f32 %v109, %v2076
  %v2078 = vand.u32 %v2077, 4294901760
  %2079 = vmatprep.subr.mxu0 %v2078
  %v2080 = vand.u32 %v108, 4294901760
  %v2081 = vsub.f32 %v108, %v2080
  %v2082 = vand.u32 %v2081, 4294901760
  %2083 = vmatpush1.msra.mxu0 %v2082
  %2084 = vmatprep.subr.mxu0 0.0
  %2085 = vmatpush2.msra.mxu0 0.0
  %2086 = vmatprep.subr.mxu0 0.0
  %2087 = vmatpush2.msra.mxu0 0.0
  %2088 = vmatprep.subr.mxu0 0.0
  %2089 = vmatpush2.msra.mxu0 0.0
  %2090 = vmatprep.subr.mxu0 0.0
  %2091 = vmatpush2.msra.mxu0 0.0
  %2092 = vmatprep.subr.mxu0 0.0
  %2093 = vmatpush2.msra.mxu0 0.0
  %2094 = vmatprep.subr.mxu0 0.0
  %2095 = vmatpush2.msra.mxu0 0.0
  %2096 = vmatprep.subr.mxu0 0.0
  %2097 = vmatpush2.msra.mxu0 0.0
  %2098 = vmatprep.subr.mxu0 0.0
  %2099 = vmatpush2.msra.mxu0 0.0
  %2100 = vmatprep.subr.mxu0 0.0
  %2101 = vmatpush2.msra.mxu0 0.0
  %2102 = vmatprep.subr.mxu0 0.0
  %2103 = vmatpush2.msra.mxu0 0.0
  %2104 = vmatprep.subr.mxu0 0.0
  %2105 = vmatpush2.msra.mxu0 0.0
  %2106 = vmatprep.subr.mxu0 0.0
  %2107 = vmatpush2.msra.mxu0 0.0
  %2108 = vmatprep.subr.mxu0 0.0
  %2109 = vmatpush2.msra.mxu0 0.0
  %2110 = vmatprep.subr.mxu0 0.0
  %2111 = vmatpush2.msra.mxu0 0.0
  %2112 = vmatprep.subr.mxu0 0.0
  %2113 = vmatpush2.msra.mxu0 0.0
  %2114 = vmatprep.subr.mxu0 0.0
  %2115 = vmatpush2.msra.mxu0 0.0
  %2116 = vmatprep.mubr.f32.mxu0 0.0
  %v2117 = vand.u32 %v146, 4294901760
  %2118 = vmatmul.mubr.f32.gmra.mxu0 %v2117
  %v2119 = vpop.f32.mrf.mxu0
  %v2120 = vadd.f32 %v1997, %v2119
  %v2121 = vpop.f32.mrf.mxu0
  %v2122 = vadd.f32 %v1999, %v2121
  %2123 = vmatprep.mubr.f32.mxu0 0.0
  %v2124 = vand.u32 %v149, 4294901760
  %2125 = vmatmul.mubr.f32.gmra.mxu0 %v2124
  %v2126 = vpop.f32.mrf.mxu0
  %v2127 = vadd.f32 %v2006, %v2126
  %v2128 = vpop.f32.mrf.mxu0
  %v2129 = vadd.f32 %v2008, %v2128
  %2130 = vmatprep.mubr.f32.mxu0 0.0
  %v2131 = vand.u32 %v152, 4294901760
  %2132 = vmatmul.mubr.f32.gmra.mxu0 %v2131
  %v2133 = vpop.f32.mrf.mxu0
  %v2134 = vadd.f32 %v2015, %v2133
  %v2135 = vpop.f32.mrf.mxu0
  %v2136 = vadd.f32 %v2017, %v2135
  %2137 = vmatprep.mubr.f32.mxu0 0.0
  %v2138 = vand.u32 %v155, 4294901760
  %2139 = vmatmul.mubr.f32.gmra.mxu0 %v2138
  %v2140 = vpop.f32.mrf.mxu0
  %v2141 = vadd.f32 %v2024, %v2140
  %v2142 = vpop.f32.mrf.mxu0
  %v2143 = vadd.f32 %v2026, %v2142
  %2144 = vdwg.mxu0
  %2145 = vmatprep.subr.mxu0 0.0
  %2146 = vmatpush1.msra.mxu0 0.0
  %2147 = vmatprep.subr.mxu0 0.0
  %2148 = vmatpush1.msra.mxu0 0.0
  %2149 = vmatprep.subr.mxu0 0.0
  %2150 = vmatpush1.msra.mxu0 0.0
  %2151 = vmatprep.subr.mxu0 0.0
  %2152 = vmatpush1.msra.mxu0 0.0
  %2153 = vmatprep.subr.mxu0 0.0
  %2154 = vmatpush1.msra.mxu0 0.0
  %2155 = vmatprep.subr.mxu0 0.0
  %2156 = vmatpush1.msra.mxu0 0.0
  %2157 = vmatprep.subr.mxu0 0.0
  %2158 = vmatpush1.msra.mxu0 0.0
  %2159 = vmatprep.subr.mxu0 0.0
  %2160 = vmatpush1.msra.mxu0 0.0
  %2161 = vmatprep.subr.mxu0 0.0
  %2162 = vmatpush1.msra.mxu0 0.0
  %2163 = vmatprep.subr.mxu0 0.0
  %2164 = vmatpush1.msra.mxu0 0.0
  %2165 = vmatprep.subr.mxu0 0.0
  %2166 = vmatpush1.msra.mxu0 0.0
  %2167 = vmatprep.subr.mxu0 0.0
  %2168 = vmatpush1.msra.mxu0 0.0
  %v2169 = vand.u32 %v174, 4294901760
  %2170 = vmatprep.subr.mxu0 %v2169
  %v2171 = vand.u32 %v171, 4294901760
  %2172 = vmatpush1.msra.mxu0 %v2171
  %v2173 = vand.u32 %v121, 4294901760
  %2174 = vmatprep.subr.mxu0 %v2173
  %v2175 = vand.u32 %v120, 4294901760
  %2176 = vmatpush1.msra.mxu0 %v2175
  %v2177 = vand.u32 %v115, 4294901760
  %2178 = vmatprep.subr.mxu0 %v2177
  %v2179 = vand.u32 %v114, 4294901760
  %2180 = vmatpush1.msra.mxu0 %v2179
  %v2181 = vand.u32 %v109, 4294901760
  %2182 = vmatprep.subr.mxu0 %v2181
  %v2183 = vand.u32 %v108, 4294901760
  %2184 = vmatpush1.msra.mxu0 %v2183
  %2185 = vmatprep.subr.mxu0 0.0
  %2186 = vmatpush2.msra.mxu0 0.0
  %2187 = vmatprep.subr.mxu0 0.0
  %2188 = vmatpush2.msra.mxu0 0.0
  %2189 = vmatprep.subr.mxu0 0.0
  %2190 = vmatpush2.msra.mxu0 0.0
  %2191 = vmatprep.subr.mxu0 0.0
  %2192 = vmatpush2.msra.mxu0 0.0
  %2193 = vmatprep.subr.mxu0 0.0
  %2194 = vmatpush2.msra.mxu0 0.0
  %2195 = vmatprep.subr.mxu0 0.0
  %2196 = vmatpush2.msra.mxu0 0.0
  %2197 = vmatprep.subr.mxu0 0.0
  %2198 = vmatpush2.msra.mxu0 0.0
  %2199 = vmatprep.subr.mxu0 0.0
  %2200 = vmatpush2.msra.mxu0 0.0
  %2201 = vmatprep.subr.mxu0 0.0
  %2202 = vmatpush2.msra.mxu0 0.0
  %2203 = vmatprep.subr.mxu0 0.0
  %2204 = vmatpush2.msra.mxu0 0.0
  %2205 = vmatprep.subr.mxu0 0.0
  %2206 = vmatpush2.msra.mxu0 0.0
  %2207 = vmatprep.subr.mxu0 0.0
  %2208 = vmatpush2.msra.mxu0 0.0
  %2209 = vmatprep.subr.mxu0 0.0
  %2210 = vmatpush2.msra.mxu0 0.0
  %2211 = vmatprep.subr.mxu0 0.0
  %2212 = vmatpush2.msra.mxu0 0.0
  %2213 = vmatprep.subr.mxu0 0.0
  %2214 = vmatpush2.msra.mxu0 0.0
  %2215 = vmatprep.subr.mxu0 0.0
  %2216 = vmatpush2.msra.mxu0 0.0
  %2217 = vmatprep.mubr.f32.mxu0 0.0
  %v2218 = vand.u32 %v146, 4294901760
  %2219 = vmatmul.mubr.f32.gmra.mxu0 %v2218
  %v2220 = vpop.f32.mrf.mxu0
  %v2221 = vadd.f32 %v2120, %v2220
  %v2222 = vpop.f32.mrf.mxu0
  %v2223 = vadd.f32 %v2122, %v2222
  %2224 = vmatprep.mubr.f32.mxu0 0.0
  %v2225 = vand.u32 %v149, 4294901760
  %2226 = vmatmul.mubr.f32.gmra.mxu0 %v2225
  %v2227 = vpop.f32.mrf.mxu0
  %v2228 = vadd.f32 %v2127, %v2227
  %v2229 = vpop.f32.mrf.mxu0
  %v2230 = vadd.f32 %v2129, %v2229
  %2231 = vmatprep.mubr.f32.mxu0 0.0
  %v2232 = vand.u32 %v152, 4294901760
  %2233 = vmatmul.mubr.f32.gmra.mxu0 %v2232
  %v2234 = vpop.f32.mrf.mxu0
  %v2235 = vadd.f32 %v2134, %v2234
  %v2236 = vpop.f32.mrf.mxu0
  %v2237 = vadd.f32 %v2136, %v2236
  %2238 = vmatprep.mubr.f32.mxu0 0.0
  %v2239 = vand.u32 %v155, 4294901760
  %2240 = vmatmul.mubr.f32.gmra.mxu0 %v2239
  %v2241 = vpop.f32.mrf.mxu0
  %v2242 = vadd.f32 %v2141, %v2241
  %v2243 = vpop.f32.mrf.mxu0
  %v2244 = vadd.f32 %v2143, %v2243
  %2245 = vdwg.mxu0
  %s2246 = scalar_lea.vmem %s0, 32
  %v2247 = vld [vmem:[%s2246] sm:$0xff]
  %v2248 = vld [vmem:[%s2246 + $0x8] sm:$0xff]
  %v2249 = vld [vmem:[%s2246 + $0x10] sm:$0xff]
  %v2250 = vld [vmem:[%s2246 + $0x18] sm:$0x7f]
  %v2252 = vsel %vm144, %v2247, 0
  %v2255 = vsel %vm144, %v2248, 0
  %v2258 = vsel %vm144, %v2249, 0
  %v2261 = vsel %vm144, %v2250, 0
  %2263 = vmatprep.subr.mxu0 0.0
  %2264 = vmatpush1.msra.mxu0 0.0
  %2265 = vmatprep.subr.mxu0 0.0
  %2266 = vmatpush1.msra.mxu0 0.0
  %2267 = vmatprep.subr.mxu0 0.0
  %2268 = vmatpush1.msra.mxu0 0.0
  %2269 = vmatprep.subr.mxu0 0.0
  %2270 = vmatpush1.msra.mxu0 0.0
  %2271 = vmatprep.subr.mxu0 0.0
  %2272 = vmatpush1.msra.mxu0 0.0
  %2273 = vmatprep.subr.mxu0 0.0
  %2274 = vmatpush1.msra.mxu0 0.0
  %2275 = vmatprep.subr.mxu0 0.0
  %2276 = vmatpush1.msra.mxu0 0.0
  %2277 = vmatprep.subr.mxu0 0.0
  %2278 = vmatpush1.msra.mxu0 0.0
  %2279 = vmatprep.subr.mxu0 0.0
  %2280 = vmatpush1.msra.mxu0 0.0
  %2281 = vmatprep.subr.mxu0 0.0
  %2282 = vmatpush1.msra.mxu0 0.0
  %2283 = vmatprep.subr.mxu0 0.0
  %2284 = vmatpush1.msra.mxu0 0.0
  %2285 = vmatprep.subr.mxu0 0.0
  %2286 = vmatpush1.msra.mxu0 0.0
  %v2287 = vand.u32 %v162, 4294901760
  %2288 = vmatprep.subr.mxu0 %v2287
  %v2289 = vand.u32 %v159, 4294901760
  %2290 = vmatpush1.msra.mxu0 %v2289
  %v2291 = vand.u32 %v117, 4294901760
  %2292 = vmatprep.subr.mxu0 %v2291
  %v2293 = vand.u32 %v116, 4294901760
  %2294 = vmatpush1.msra.mxu0 %v2293
  %v2295 = vand.u32 %v111, 4294901760
  %2296 = vmatprep.subr.mxu0 %v2295
  %v2297 = vand.u32 %v110, 4294901760
  %2298 = vmatpush1.msra.mxu0 %v2297
  %v2299 = vand.u32 %v105, 4294901760
  %2300 = vmatprep.subr.mxu0 %v2299
  %v2301 = vand.u32 %v104, 4294901760
  %2302 = vmatpush1.msra.mxu0 %v2301
  %2303 = vmatprep.subr.mxu0 0.0
  %2304 = vmatpush2.msra.mxu0 0.0
  %2305 = vmatprep.subr.mxu0 0.0
  %2306 = vmatpush2.msra.mxu0 0.0
  %2307 = vmatprep.subr.mxu0 0.0
  %2308 = vmatpush2.msra.mxu0 0.0
  %2309 = vmatprep.subr.mxu0 0.0
  %2310 = vmatpush2.msra.mxu0 0.0
  %2311 = vmatprep.subr.mxu0 0.0
  %2312 = vmatpush2.msra.mxu0 0.0
  %2313 = vmatprep.subr.mxu0 0.0
  %2314 = vmatpush2.msra.mxu0 0.0
  %2315 = vmatprep.subr.mxu0 0.0
  %2316 = vmatpush2.msra.mxu0 0.0
  %2317 = vmatprep.subr.mxu0 0.0
  %2318 = vmatpush2.msra.mxu0 0.0
  %2319 = vmatprep.subr.mxu0 0.0
  %2320 = vmatpush2.msra.mxu0 0.0
  %2321 = vmatprep.subr.mxu0 0.0
  %2322 = vmatpush2.msra.mxu0 0.0
  %2323 = vmatprep.subr.mxu0 0.0
  %2324 = vmatpush2.msra.mxu0 0.0
  %2325 = vmatprep.subr.mxu0 0.0
  %2326 = vmatpush2.msra.mxu0 0.0
  %2327 = vmatprep.subr.mxu0 0.0
  %2328 = vmatpush2.msra.mxu0 0.0
  %2329 = vmatprep.subr.mxu0 0.0
  %2330 = vmatpush2.msra.mxu0 0.0
  %2331 = vmatprep.subr.mxu0 0.0
  %2332 = vmatpush2.msra.mxu0 0.0
  %2333 = vmatprep.subr.mxu0 0.0
  %2334 = vmatpush2.msra.mxu0 0.0
  %2335 = vmatprep.mubr.f32.mxu0 0.0
  %v2336 = vand.u32 %v2252, 4294901760
  %v2337 = vsub.f32 %v2252, %v2336
  %v2338 = vand.u32 %v2337, 4294901760
  %v2339 = vsub.f32 %v2337, %v2338
  %v2340 = vand.u32 %v2339, 4294901760
  %2341 = vmatmul.mubr.f32.gmra.mxu0 %v2340
  %v2342 = vpop.f32.mrf.mxu0
  %v2343 = vadd.f32 0.0, %v2342
  %v2344 = vpop.f32.mrf.mxu0
  %v2345 = vadd.f32 0.0, %v2344
  %2346 = vmatprep.mubr.f32.mxu0 0.0
  %v2347 = vand.u32 %v2255, 4294901760
  %v2348 = vsub.f32 %v2255, %v2347
  %v2349 = vand.u32 %v2348, 4294901760
  %v2350 = vsub.f32 %v2348, %v2349
  %v2351 = vand.u32 %v2350, 4294901760
  %2352 = vmatmul.mubr.f32.gmra.mxu0 %v2351
  %v2353 = vpop.f32.mrf.mxu0
  %v2354 = vadd.f32 0.0, %v2353
  %v2355 = vpop.f32.mrf.mxu0
  %v2356 = vadd.f32 0.0, %v2355
  %2357 = vmatprep.mubr.f32.mxu0 0.0
  %v2358 = vand.u32 %v2258, 4294901760
  %v2359 = vsub.f32 %v2258, %v2358
  %v2360 = vand.u32 %v2359, 4294901760
  %v2361 = vsub.f32 %v2359, %v2360
  %v2362 = vand.u32 %v2361, 4294901760
  %2363 = vmatmul.mubr.f32.gmra.mxu0 %v2362
  %v2364 = vpop.f32.mrf.mxu0
  %v2365 = vadd.f32 0.0, %v2364
  %v2366 = vpop.f32.mrf.mxu0
  %v2367 = vadd.f32 0.0, %v2366
  %2368 = vmatprep.mubr.f32.mxu0 0.0
  %v2369 = vand.u32 %v2261, 4294901760
  %v2370 = vsub.f32 %v2261, %v2369
  %v2371 = vand.u32 %v2370, 4294901760
  %v2372 = vsub.f32 %v2370, %v2371
  %v2373 = vand.u32 %v2372, 4294901760
  %2374 = vmatmul.mubr.f32.gmra.mxu0 %v2373
  %v2375 = vpop.f32.mrf.mxu0
  %v2376 = vadd.f32 0.0, %v2375
  %v2377 = vpop.f32.mrf.mxu0
  %v2378 = vadd.f32 0.0, %v2377
  %2379 = vdwg.mxu0
  %2380 = vmatprep.subr.mxu0 0.0
  %2381 = vmatpush1.msra.mxu0 0.0
  %2382 = vmatprep.subr.mxu0 0.0
  %2383 = vmatpush1.msra.mxu0 0.0
  %2384 = vmatprep.subr.mxu0 0.0
  %2385 = vmatpush1.msra.mxu0 0.0
  %2386 = vmatprep.subr.mxu0 0.0
  %2387 = vmatpush1.msra.mxu0 0.0
  %2388 = vmatprep.subr.mxu0 0.0
  %2389 = vmatpush1.msra.mxu0 0.0
  %2390 = vmatprep.subr.mxu0 0.0
  %2391 = vmatpush1.msra.mxu0 0.0
  %2392 = vmatprep.subr.mxu0 0.0
  %2393 = vmatpush1.msra.mxu0 0.0
  %2394 = vmatprep.subr.mxu0 0.0
  %2395 = vmatpush1.msra.mxu0 0.0
  %2396 = vmatprep.subr.mxu0 0.0
  %2397 = vmatpush1.msra.mxu0 0.0
  %2398 = vmatprep.subr.mxu0 0.0
  %2399 = vmatpush1.msra.mxu0 0.0
  %2400 = vmatprep.subr.mxu0 0.0
  %2401 = vmatpush1.msra.mxu0 0.0
  %2402 = vmatprep.subr.mxu0 0.0
  %2403 = vmatpush1.msra.mxu0 0.0
  %v2404 = vand.u32 %v162, 4294901760
  %v2405 = vsub.f32 %v162, %v2404
  %v2406 = vand.u32 %v2405, 4294901760
  %v2407 = vsub.f32 %v2405, %v2406
  %v2408 = vand.u32 %v2407, 4294901760
  %2409 = vmatprep.subr.mxu0 %v2408
  %v2410 = vand.u32 %v159, 4294901760
  %v2411 = vsub.f32 %v159, %v2410
  %v2412 = vand.u32 %v2411, 4294901760
  %v2413 = vsub.f32 %v2411, %v2412
  %v2414 = vand.u32 %v2413, 4294901760
  %2415 = vmatpush1.msra.mxu0 %v2414
  %v2416 = vand.u32 %v117, 4294901760
  %v2417 = vsub.f32 %v117, %v2416
  %v2418 = vand.u32 %v2417, 4294901760
  %v2419 = vsub.f32 %v2417, %v2418
  %v2420 = vand.u32 %v2419, 4294901760
  %2421 = vmatprep.subr.mxu0 %v2420
  %v2422 = vand.u32 %v116, 4294901760
  %v2423 = vsub.f32 %v116, %v2422
  %v2424 = vand.u32 %v2423, 4294901760
  %v2425 = vsub.f32 %v2423, %v2424
  %v2426 = vand.u32 %v2425, 4294901760
  %2427 = vmatpush1.msra.mxu0 %v2426
  %v2428 = vand.u32 %v111, 4294901760
  %v2429 = vsub.f32 %v111, %v2428
  %v2430 = vand.u32 %v2429, 4294901760
  %v2431 = vsub.f32 %v2429, %v2430
  %v2432 = vand.u32 %v2431, 4294901760
  %2433 = vmatprep.subr.mxu0 %v2432
  %v2434 = vand.u32 %v110, 4294901760
  %v2435 = vsub.f32 %v110, %v2434
  %v2436 = vand.u32 %v2435, 4294901760
  %v2437 = vsub.f32 %v2435, %v2436
  %v2438 = vand.u32 %v2437, 4294901760
  %2439 = vmatpush1.msra.mxu0 %v2438
  %v2440 = vand.u32 %v105, 4294901760
  %v2441 = vsub.f32 %v105, %v2440
  %v2442 = vand.u32 %v2441, 4294901760
  %v2443 = vsub.f32 %v2441, %v2442
  %v2444 = vand.u32 %v2443, 4294901760
  %2445 = vmatprep.subr.mxu0 %v2444
  %v2446 = vand.u32 %v104, 4294901760
  %v2447 = vsub.f32 %v104, %v2446
  %v2448 = vand.u32 %v2447, 4294901760
  %v2449 = vsub.f32 %v2447, %v2448
  %v2450 = vand.u32 %v2449, 4294901760
  %2451 = vmatpush1.msra.mxu0 %v2450
  %2452 = vmatprep.subr.mxu0 0.0
  %2453 = vmatpush2.msra.mxu0 0.0
  %2454 = vmatprep.subr.mxu0 0.0
  %2455 = vmatpush2.msra.mxu0 0.0
  %2456 = vmatprep.subr.mxu0 0.0
  %2457 = vmatpush2.msra.mxu0 0.0
  %2458 = vmatprep.subr.mxu0 0.0
  %2459 = vmatpush2.msra.mxu0 0.0
  %2460 = vmatprep.subr.mxu0 0.0
  %2461 = vmatpush2.msra.mxu0 0.0
  %2462 = vmatprep.subr.mxu0 0.0
  %2463 = vmatpush2.msra.mxu0 0.0
  %2464 = vmatprep.subr.mxu0 0.0
  %2465 = vmatpush2.msra.mxu0 0.0
  %2466 = vmatprep.subr.mxu0 0.0
  %2467 = vmatpush2.msra.mxu0 0.0
  %2468 = vmatprep.subr.mxu0 0.0
  %2469 = vmatpush2.msra.mxu0 0.0
  %2470 = vmatprep.subr.mxu0 0.0
  %2471 = vmatpush2.msra.mxu0 0.0
  %2472 = vmatprep.subr.mxu0 0.0
  %2473 = vmatpush2.msra.mxu0 0.0
  %2474 = vmatprep.subr.mxu0 0.0
  %2475 = vmatpush2.msra.mxu0 0.0
  %2476 = vmatprep.subr.mxu0 0.0
  %2477 = vmatpush2.msra.mxu0 0.0
  %2478 = vmatprep.subr.mxu0 0.0
  %2479 = vmatpush2.msra.mxu0 0.0
  %2480 = vmatprep.subr.mxu0 0.0
  %2481 = vmatpush2.msra.mxu0 0.0
  %2482 = vmatprep.subr.mxu0 0.0
  %2483 = vmatpush2.msra.mxu0 0.0
  %2484 = vmatprep.mubr.f32.mxu0 0.0
  %v2485 = vand.u32 %v2252, 4294901760
  %2486 = vmatmul.mubr.f32.gmra.mxu0 %v2485
  %v2487 = vpop.f32.mrf.mxu0
  %v2488 = vadd.f32 %v2343, %v2487
  %v2489 = vpop.f32.mrf.mxu0
  %v2490 = vadd.f32 %v2345, %v2489
  %2491 = vmatprep.mubr.f32.mxu0 0.0
  %v2492 = vand.u32 %v2255, 4294901760
  %2493 = vmatmul.mubr.f32.gmra.mxu0 %v2492
  %v2494 = vpop.f32.mrf.mxu0
  %v2495 = vadd.f32 %v2354, %v2494
  %v2496 = vpop.f32.mrf.mxu0
  %v2497 = vadd.f32 %v2356, %v2496
  %2498 = vmatprep.mubr.f32.mxu0 0.0
  %v2499 = vand.u32 %v2258, 4294901760
  %2500 = vmatmul.mubr.f32.gmra.mxu0 %v2499
  %v2501 = vpop.f32.mrf.mxu0
  %v2502 = vadd.f32 %v2365, %v2501
  %v2503 = vpop.f32.mrf.mxu0
  %v2504 = vadd.f32 %v2367, %v2503
  %2505 = vmatprep.mubr.f32.mxu0 0.0
  %v2506 = vand.u32 %v2261, 4294901760
  %2507 = vmatmul.mubr.f32.gmra.mxu0 %v2506
  %v2508 = vpop.f32.mrf.mxu0
  %v2509 = vadd.f32 %v2376, %v2508
  %v2510 = vpop.f32.mrf.mxu0
  %v2511 = vadd.f32 %v2378, %v2510
  %2512 = vdwg.mxu0
  %2513 = vmatprep.subr.mxu0 0.0
  %2514 = vmatpush1.msra.mxu0 0.0
  %2515 = vmatprep.subr.mxu0 0.0
  %2516 = vmatpush1.msra.mxu0 0.0
  %2517 = vmatprep.subr.mxu0 0.0
  %2518 = vmatpush1.msra.mxu0 0.0
  %2519 = vmatprep.subr.mxu0 0.0
  %2520 = vmatpush1.msra.mxu0 0.0
  %2521 = vmatprep.subr.mxu0 0.0
  %2522 = vmatpush1.msra.mxu0 0.0
  %2523 = vmatprep.subr.mxu0 0.0
  %2524 = vmatpush1.msra.mxu0 0.0
  %2525 = vmatprep.subr.mxu0 0.0
  %2526 = vmatpush1.msra.mxu0 0.0
  %2527 = vmatprep.subr.mxu0 0.0
  %2528 = vmatpush1.msra.mxu0 0.0
  %2529 = vmatprep.subr.mxu0 0.0
  %2530 = vmatpush1.msra.mxu0 0.0
  %2531 = vmatprep.subr.mxu0 0.0
  %2532 = vmatpush1.msra.mxu0 0.0
  %2533 = vmatprep.subr.mxu0 0.0
  %2534 = vmatpush1.msra.mxu0 0.0
  %2535 = vmatprep.subr.mxu0 0.0
  %2536 = vmatpush1.msra.mxu0 0.0
  %v2537 = vand.u32 %v162, 4294901760
  %v2538 = vsub.f32 %v162, %v2537
  %2539 = vmatprep.subr.mxu0 %v2538
  %v2540 = vand.u32 %v159, 4294901760
  %v2541 = vsub.f32 %v159, %v2540
  %2542 = vmatpush1.msra.mxu0 %v2541
  %v2543 = vand.u32 %v117, 4294901760
  %v2544 = vsub.f32 %v117, %v2543
  %2545 = vmatprep.subr.mxu0 %v2544
  %v2546 = vand.u32 %v116, 4294901760
  %v2547 = vsub.f32 %v116, %v2546
  %2548 = vmatpush1.msra.mxu0 %v2547
  %v2549 = vand.u32 %v111, 4294901760
  %v2550 = vsub.f32 %v111, %v2549
  %2551 = vmatprep.subr.mxu0 %v2550
  %v2552 = vand.u32 %v110, 4294901760
  %v2553 = vsub.f32 %v110, %v2552
  %2554 = vmatpush1.msra.mxu0 %v2553
  %v2555 = vand.u32 %v105, 4294901760
  %v2556 = vsub.f32 %v105, %v2555
  %2557 = vmatprep.subr.mxu0 %v2556
  %v2558 = vand.u32 %v104, 4294901760
  %v2559 = vsub.f32 %v104, %v2558
  %2560 = vmatpush1.msra.mxu0 %v2559
  %2561 = vmatprep.subr.mxu0 0.0
  %2562 = vmatpush2.msra.mxu0 0.0
  %2563 = vmatprep.subr.mxu0 0.0
  %2564 = vmatpush2.msra.mxu0 0.0
  %2565 = vmatprep.subr.mxu0 0.0
  %2566 = vmatpush2.msra.mxu0 0.0
  %2567 = vmatprep.subr.mxu0 0.0
  %2568 = vmatpush2.msra.mxu0 0.0
  %2569 = vmatprep.subr.mxu0 0.0
  %2570 = vmatpush2.msra.mxu0 0.0
  %2571 = vmatprep.subr.mxu0 0.0
  %2572 = vmatpush2.msra.mxu0 0.0
  %2573 = vmatprep.subr.mxu0 0.0
  %2574 = vmatpush2.msra.mxu0 0.0
  %2575 = vmatprep.subr.mxu0 0.0
  %2576 = vmatpush2.msra.mxu0 0.0
  %2577 = vmatprep.subr.mxu0 0.0
  %2578 = vmatpush2.msra.mxu0 0.0
  %2579 = vmatprep.subr.mxu0 0.0
  %2580 = vmatpush2.msra.mxu0 0.0
  %2581 = vmatprep.subr.mxu0 0.0
  %2582 = vmatpush2.msra.mxu0 0.0
  %2583 = vmatprep.subr.mxu0 0.0
  %2584 = vmatpush2.msra.mxu0 0.0
  %2585 = vmatprep.subr.mxu0 0.0
  %2586 = vmatpush2.msra.mxu0 0.0
  %2587 = vmatprep.subr.mxu0 0.0
  %2588 = vmatpush2.msra.mxu0 0.0
  %2589 = vmatprep.subr.mxu0 0.0
  %2590 = vmatpush2.msra.mxu0 0.0
  %2591 = vmatprep.subr.mxu0 0.0
  %2592 = vmatpush2.msra.mxu0 0.0
  %2593 = vmatprep.mubr.f32.mxu0 0.0
  %v2594 = vand.u32 %v2252, 4294901760
  %v2595 = vsub.f32 %v2252, %v2594
  %2596 = vmatmul.mubr.f32.gmra.mxu0 %v2595
  %v2597 = vpop.f32.mrf.mxu0
  %v2598 = vadd.f32 %v2488, %v2597
  %v2599 = vpop.f32.mrf.mxu0
  %v2600 = vadd.f32 %v2490, %v2599
  %2601 = vmatprep.mubr.f32.mxu0 0.0
  %v2602 = vand.u32 %v2255, 4294901760
  %v2603 = vsub.f32 %v2255, %v2602
  %2604 = vmatmul.mubr.f32.gmra.mxu0 %v2603
  %v2605 = vpop.f32.mrf.mxu0
  %v2606 = vadd.f32 %v2495, %v2605
  %v2607 = vpop.f32.mrf.mxu0
  %v2608 = vadd.f32 %v2497, %v2607
  %2609 = vmatprep.mubr.f32.mxu0 0.0
  %v2610 = vand.u32 %v2258, 4294901760
  %v2611 = vsub.f32 %v2258, %v2610
  %2612 = vmatmul.mubr.f32.gmra.mxu0 %v2611
  %v2613 = vpop.f32.mrf.mxu0
  %v2614 = vadd.f32 %v2502, %v2613
  %v2615 = vpop.f32.mrf.mxu0
  %v2616 = vadd.f32 %v2504, %v2615
  %2617 = vmatprep.mubr.f32.mxu0 0.0
  %v2618 = vand.u32 %v2261, 4294901760
  %v2619 = vsub.f32 %v2261, %v2618
  %2620 = vmatmul.mubr.f32.gmra.mxu0 %v2619
  %v2621 = vpop.f32.mrf.mxu0
  %v2622 = vadd.f32 %v2509, %v2621
  %v2623 = vpop.f32.mrf.mxu0
  %v2624 = vadd.f32 %v2511, %v2623
  %2625 = vdwg.mxu0
  %2626 = vmatprep.subr.mxu0 0.0
  %2627 = vmatpush1.msra.mxu0 0.0
  %2628 = vmatprep.subr.mxu0 0.0
  %2629 = vmatpush1.msra.mxu0 0.0
  %2630 = vmatprep.subr.mxu0 0.0
  %2631 = vmatpush1.msra.mxu0 0.0
  %2632 = vmatprep.subr.mxu0 0.0
  %2633 = vmatpush1.msra.mxu0 0.0
  %2634 = vmatprep.subr.mxu0 0.0
  %2635 = vmatpush1.msra.mxu0 0.0
  %2636 = vmatprep.subr.mxu0 0.0
  %2637 = vmatpush1.msra.mxu0 0.0
  %2638 = vmatprep.subr.mxu0 0.0
  %2639 = vmatpush1.msra.mxu0 0.0
  %2640 = vmatprep.subr.mxu0 0.0
  %2641 = vmatpush1.msra.mxu0 0.0
  %2642 = vmatprep.subr.mxu0 0.0
  %2643 = vmatpush1.msra.mxu0 0.0
  %2644 = vmatprep.subr.mxu0 0.0
  %2645 = vmatpush1.msra.mxu0 0.0
  %2646 = vmatprep.subr.mxu0 0.0
  %2647 = vmatpush1.msra.mxu0 0.0
  %2648 = vmatprep.subr.mxu0 0.0
  %2649 = vmatpush1.msra.mxu0 0.0
  %v2650 = vand.u32 %v162, 4294901760
  %2651 = vmatprep.subr.mxu0 %v2650
  %v2652 = vand.u32 %v159, 4294901760
  %2653 = vmatpush1.msra.mxu0 %v2652
  %v2654 = vand.u32 %v117, 4294901760
  %2655 = vmatprep.subr.mxu0 %v2654
  %v2656 = vand.u32 %v116, 4294901760
  %2657 = vmatpush1.msra.mxu0 %v2656
  %v2658 = vand.u32 %v111, 4294901760
  %2659 = vmatprep.subr.mxu0 %v2658
  %v2660 = vand.u32 %v110, 4294901760
  %2661 = vmatpush1.msra.mxu0 %v2660
  %v2662 = vand.u32 %v105, 4294901760
  %2663 = vmatprep.subr.mxu0 %v2662
  %v2664 = vand.u32 %v104, 4294901760
  %2665 = vmatpush1.msra.mxu0 %v2664
  %2666 = vmatprep.subr.mxu0 0.0
  %2667 = vmatpush2.msra.mxu0 0.0
  %2668 = vmatprep.subr.mxu0 0.0
  %2669 = vmatpush2.msra.mxu0 0.0
  %2670 = vmatprep.subr.mxu0 0.0
  %2671 = vmatpush2.msra.mxu0 0.0
  %2672 = vmatprep.subr.mxu0 0.0
  %2673 = vmatpush2.msra.mxu0 0.0
  %2674 = vmatprep.subr.mxu0 0.0
  %2675 = vmatpush2.msra.mxu0 0.0
  %2676 = vmatprep.subr.mxu0 0.0
  %2677 = vmatpush2.msra.mxu0 0.0
  %2678 = vmatprep.subr.mxu0 0.0
  %2679 = vmatpush2.msra.mxu0 0.0
  %2680 = vmatprep.subr.mxu0 0.0
  %2681 = vmatpush2.msra.mxu0 0.0
  %2682 = vmatprep.subr.mxu0 0.0
  %2683 = vmatpush2.msra.mxu0 0.0
  %2684 = vmatprep.subr.mxu0 0.0
  %2685 = vmatpush2.msra.mxu0 0.0
  %2686 = vmatprep.subr.mxu0 0.0
  %2687 = vmatpush2.msra.mxu0 0.0
  %2688 = vmatprep.subr.mxu0 0.0
  %2689 = vmatpush2.msra.mxu0 0.0
  %2690 = vmatprep.subr.mxu0 0.0
  %2691 = vmatpush2.msra.mxu0 0.0
  %2692 = vmatprep.subr.mxu0 0.0
  %2693 = vmatpush2.msra.mxu0 0.0
  %2694 = vmatprep.subr.mxu0 0.0
  %2695 = vmatpush2.msra.mxu0 0.0
  %2696 = vmatprep.subr.mxu0 0.0
  %2697 = vmatpush2.msra.mxu0 0.0
  %2698 = vmatprep.mubr.f32.mxu0 0.0
  %v2699 = vand.u32 %v2252, 4294901760
  %v2700 = vsub.f32 %v2252, %v2699
  %v2701 = vand.u32 %v2700, 4294901760
  %2702 = vmatmul.mubr.f32.gmra.mxu0 %v2701
  %v2703 = vpop.f32.mrf.mxu0
  %v2704 = vadd.f32 %v2598, %v2703
  %v2705 = vpop.f32.mrf.mxu0
  %v2706 = vadd.f32 %v2600, %v2705
  %2707 = vmatprep.mubr.f32.mxu0 0.0
  %v2708 = vand.u32 %v2255, 4294901760
  %v2709 = vsub.f32 %v2255, %v2708
  %v2710 = vand.u32 %v2709, 4294901760
  %2711 = vmatmul.mubr.f32.gmra.mxu0 %v2710
  %v2712 = vpop.f32.mrf.mxu0
  %v2713 = vadd.f32 %v2606, %v2712
  %v2714 = vpop.f32.mrf.mxu0
  %v2715 = vadd.f32 %v2608, %v2714
  %2716 = vmatprep.mubr.f32.mxu0 0.0
  %v2717 = vand.u32 %v2258, 4294901760
  %v2718 = vsub.f32 %v2258, %v2717
  %v2719 = vand.u32 %v2718, 4294901760
  %2720 = vmatmul.mubr.f32.gmra.mxu0 %v2719
  %v2721 = vpop.f32.mrf.mxu0
  %v2722 = vadd.f32 %v2614, %v2721
  %v2723 = vpop.f32.mrf.mxu0
  %v2724 = vadd.f32 %v2616, %v2723
  %2725 = vmatprep.mubr.f32.mxu0 0.0
  %v2726 = vand.u32 %v2261, 4294901760
  %v2727 = vsub.f32 %v2261, %v2726
  %v2728 = vand.u32 %v2727, 4294901760
  %2729 = vmatmul.mubr.f32.gmra.mxu0 %v2728
  %v2730 = vpop.f32.mrf.mxu0
  %v2731 = vadd.f32 %v2622, %v2730
  %v2732 = vpop.f32.mrf.mxu0
  %v2733 = vadd.f32 %v2624, %v2732
  %2734 = vdwg.mxu0
  %2735 = vmatprep.subr.mxu0 0.0
  %2736 = vmatpush1.msra.mxu0 0.0
  %2737 = vmatprep.subr.mxu0 0.0
  %2738 = vmatpush1.msra.mxu0 0.0
  %2739 = vmatprep.subr.mxu0 0.0
  %2740 = vmatpush1.msra.mxu0 0.0
  %2741 = vmatprep.subr.mxu0 0.0
  %2742 = vmatpush1.msra.mxu0 0.0
  %2743 = vmatprep.subr.mxu0 0.0
  %2744 = vmatpush1.msra.mxu0 0.0
  %2745 = vmatprep.subr.mxu0 0.0
  %2746 = vmatpush1.msra.mxu0 0.0
  %2747 = vmatprep.subr.mxu0 0.0
  %2748 = vmatpush1.msra.mxu0 0.0
  %2749 = vmatprep.subr.mxu0 0.0
  %2750 = vmatpush1.msra.mxu0 0.0
  %2751 = vmatprep.subr.mxu0 0.0
  %2752 = vmatpush1.msra.mxu0 0.0
  %2753 = vmatprep.subr.mxu0 0.0
  %2754 = vmatpush1.msra.mxu0 0.0
  %2755 = vmatprep.subr.mxu0 0.0
  %2756 = vmatpush1.msra.mxu0 0.0
  %2757 = vmatprep.subr.mxu0 0.0
  %2758 = vmatpush1.msra.mxu0 0.0
  %v2759 = vand.u32 %v162, 4294901760
  %v2760 = vsub.f32 %v162, %v2759
  %v2761 = vand.u32 %v2760, 4294901760
  %2762 = vmatprep.subr.mxu0 %v2761
  %v2763 = vand.u32 %v159, 4294901760
  %v2764 = vsub.f32 %v159, %v2763
  %v2765 = vand.u32 %v2764, 4294901760
  %2766 = vmatpush1.msra.mxu0 %v2765
  %v2767 = vand.u32 %v117, 4294901760
  %v2768 = vsub.f32 %v117, %v2767
  %v2769 = vand.u32 %v2768, 4294901760
  %2770 = vmatprep.subr.mxu0 %v2769
  %v2771 = vand.u32 %v116, 4294901760
  %v2772 = vsub.f32 %v116, %v2771
  %v2773 = vand.u32 %v2772, 4294901760
  %2774 = vmatpush1.msra.mxu0 %v2773
  %v2775 = vand.u32 %v111, 4294901760
  %v2776 = vsub.f32 %v111, %v2775
  %v2777 = vand.u32 %v2776, 4294901760
  %2778 = vmatprep.subr.mxu0 %v2777
  %v2779 = vand.u32 %v110, 4294901760
  %v2780 = vsub.f32 %v110, %v2779
  %v2781 = vand.u32 %v2780, 4294901760
  %2782 = vmatpush1.msra.mxu0 %v2781
  %v2783 = vand.u32 %v105, 4294901760
  %v2784 = vsub.f32 %v105, %v2783
  %v2785 = vand.u32 %v2784, 4294901760
  %2786 = vmatprep.subr.mxu0 %v2785
  %v2787 = vand.u32 %v104, 4294901760
  %v2788 = vsub.f32 %v104, %v2787
  %v2789 = vand.u32 %v2788, 4294901760
  %2790 = vmatpush1.msra.mxu0 %v2789
  %2791 = vmatprep.subr.mxu0 0.0
  %2792 = vmatpush2.msra.mxu0 0.0
  %2793 = vmatprep.subr.mxu0 0.0
  %2794 = vmatpush2.msra.mxu0 0.0
  %2795 = vmatprep.subr.mxu0 0.0
  %2796 = vmatpush2.msra.mxu0 0.0
  %2797 = vmatprep.subr.mxu0 0.0
  %2798 = vmatpush2.msra.mxu0 0.0
  %2799 = vmatprep.subr.mxu0 0.0
  %2800 = vmatpush2.msra.mxu0 0.0
  %2801 = vmatprep.subr.mxu0 0.0
  %2802 = vmatpush2.msra.mxu0 0.0
  %2803 = vmatprep.subr.mxu0 0.0
  %2804 = vmatpush2.msra.mxu0 0.0
  %2805 = vmatprep.subr.mxu0 0.0
  %2806 = vmatpush2.msra.mxu0 0.0
  %2807 = vmatprep.subr.mxu0 0.0
  %2808 = vmatpush2.msra.mxu0 0.0
  %2809 = vmatprep.subr.mxu0 0.0
  %2810 = vmatpush2.msra.mxu0 0.0
  %2811 = vmatprep.subr.mxu0 0.0
  %2812 = vmatpush2.msra.mxu0 0.0
  %2813 = vmatprep.subr.mxu0 0.0
  %2814 = vmatpush2.msra.mxu0 0.0
  %2815 = vmatprep.subr.mxu0 0.0
  %2816 = vmatpush2.msra.mxu0 0.0
  %2817 = vmatprep.subr.mxu0 0.0
  %2818 = vmatpush2.msra.mxu0 0.0
  %2819 = vmatprep.subr.mxu0 0.0
  %2820 = vmatpush2.msra.mxu0 0.0
  %2821 = vmatprep.subr.mxu0 0.0
  %2822 = vmatpush2.msra.mxu0 0.0
  %2823 = vmatprep.mubr.f32.mxu0 0.0
  %v2824 = vand.u32 %v2252, 4294901760
  %2825 = vmatmul.mubr.f32.gmra.mxu0 %v2824
  %v2826 = vpop.f32.mrf.mxu0
  %v2827 = vadd.f32 %v2704, %v2826
  %v2828 = vpop.f32.mrf.mxu0
  %v2829 = vadd.f32 %v2706, %v2828
  %2830 = vmatprep.mubr.f32.mxu0 0.0
  %v2831 = vand.u32 %v2255, 4294901760
  %2832 = vmatmul.mubr.f32.gmra.mxu0 %v2831
  %v2833 = vpop.f32.mrf.mxu0
  %v2834 = vadd.f32 %v2713, %v2833
  %v2835 = vpop.f32.mrf.mxu0
  %v2836 = vadd.f32 %v2715, %v2835
  %2837 = vmatprep.mubr.f32.mxu0 0.0
  %v2838 = vand.u32 %v2258, 4294901760
  %2839 = vmatmul.mubr.f32.gmra.mxu0 %v2838
  %v2840 = vpop.f32.mrf.mxu0
  %v2841 = vadd.f32 %v2722, %v2840
  %v2842 = vpop.f32.mrf.mxu0
  %v2843 = vadd.f32 %v2724, %v2842
  %2844 = vmatprep.mubr.f32.mxu0 0.0
  %v2845 = vand.u32 %v2261, 4294901760
  %2846 = vmatmul.mubr.f32.gmra.mxu0 %v2845
  %v2847 = vpop.f32.mrf.mxu0
  %v2848 = vadd.f32 %v2731, %v2847
  %v2849 = vpop.f32.mrf.mxu0
  %v2850 = vadd.f32 %v2733, %v2849
  %2851 = vdwg.mxu0
  %2852 = vmatprep.subr.mxu0 0.0
  %2853 = vmatpush1.msra.mxu0 0.0
  %2854 = vmatprep.subr.mxu0 0.0
  %2855 = vmatpush1.msra.mxu0 0.0
  %2856 = vmatprep.subr.mxu0 0.0
  %2857 = vmatpush1.msra.mxu0 0.0
  %2858 = vmatprep.subr.mxu0 0.0
  %2859 = vmatpush1.msra.mxu0 0.0
  %2860 = vmatprep.subr.mxu0 0.0
  %2861 = vmatpush1.msra.mxu0 0.0
  %2862 = vmatprep.subr.mxu0 0.0
  %2863 = vmatpush1.msra.mxu0 0.0
  %2864 = vmatprep.subr.mxu0 0.0
  %2865 = vmatpush1.msra.mxu0 0.0
  %2866 = vmatprep.subr.mxu0 0.0
  %2867 = vmatpush1.msra.mxu0 0.0
  %2868 = vmatprep.subr.mxu0 0.0
  %2869 = vmatpush1.msra.mxu0 0.0
  %2870 = vmatprep.subr.mxu0 0.0
  %2871 = vmatpush1.msra.mxu0 0.0
  %2872 = vmatprep.subr.mxu0 0.0
  %2873 = vmatpush1.msra.mxu0 0.0
  %2874 = vmatprep.subr.mxu0 0.0
  %2875 = vmatpush1.msra.mxu0 0.0
  %v2876 = vand.u32 %v162, 4294901760
  %2877 = vmatprep.subr.mxu0 %v2876
  %v2878 = vand.u32 %v159, 4294901760
  %2879 = vmatpush1.msra.mxu0 %v2878
  %v2880 = vand.u32 %v117, 4294901760
  %2881 = vmatprep.subr.mxu0 %v2880
  %v2882 = vand.u32 %v116, 4294901760
  %2883 = vmatpush1.msra.mxu0 %v2882
  %v2884 = vand.u32 %v111, 4294901760
  %2885 = vmatprep.subr.mxu0 %v2884
  %v2886 = vand.u32 %v110, 4294901760
  %2887 = vmatpush1.msra.mxu0 %v2886
  %v2888 = vand.u32 %v105, 4294901760
  %2889 = vmatprep.subr.mxu0 %v2888
  %v2890 = vand.u32 %v104, 4294901760
  %2891 = vmatpush1.msra.mxu0 %v2890
  %2892 = vmatprep.subr.mxu0 0.0
  %2893 = vmatpush2.msra.mxu0 0.0
  %2894 = vmatprep.subr.mxu0 0.0
  %2895 = vmatpush2.msra.mxu0 0.0
  %2896 = vmatprep.subr.mxu0 0.0
  %2897 = vmatpush2.msra.mxu0 0.0
  %2898 = vmatprep.subr.mxu0 0.0
  %2899 = vmatpush2.msra.mxu0 0.0
  %2900 = vmatprep.subr.mxu0 0.0
  %2901 = vmatpush2.msra.mxu0 0.0
  %2902 = vmatprep.subr.mxu0 0.0
  %2903 = vmatpush2.msra.mxu0 0.0
  %2904 = vmatprep.subr.mxu0 0.0
  %2905 = vmatpush2.msra.mxu0 0.0
  %2906 = vmatprep.subr.mxu0 0.0
  %2907 = vmatpush2.msra.mxu0 0.0
  %2908 = vmatprep.subr.mxu0 0.0
  %2909 = vmatpush2.msra.mxu0 0.0
  %2910 = vmatprep.subr.mxu0 0.0
  %2911 = vmatpush2.msra.mxu0 0.0
  %2912 = vmatprep.subr.mxu0 0.0
  %2913 = vmatpush2.msra.mxu0 0.0
  %2914 = vmatprep.subr.mxu0 0.0
  %2915 = vmatpush2.msra.mxu0 0.0
  %2916 = vmatprep.subr.mxu0 0.0
  %2917 = vmatpush2.msra.mxu0 0.0
  %2918 = vmatprep.subr.mxu0 0.0
  %2919 = vmatpush2.msra.mxu0 0.0
  %2920 = vmatprep.subr.mxu0 0.0
  %2921 = vmatpush2.msra.mxu0 0.0
  %2922 = vmatprep.subr.mxu0 0.0
  %2923 = vmatpush2.msra.mxu0 0.0
  %2924 = vmatprep.mubr.f32.mxu0 0.0
  %v2925 = vand.u32 %v2252, 4294901760
  %2926 = vmatmul.mubr.f32.gmra.mxu0 %v2925
  %v2927 = vpop.f32.mrf.mxu0
  %v2928 = vadd.f32 %v2827, %v2927
  %v2929 = vpop.f32.mrf.mxu0
  %v2930 = vadd.f32 %v2829, %v2929
  %2931 = vmatprep.mubr.f32.mxu0 0.0
  %v2932 = vand.u32 %v2255, 4294901760
  %2933 = vmatmul.mubr.f32.gmra.mxu0 %v2932
  %v2934 = vpop.f32.mrf.mxu0
  %v2935 = vadd.f32 %v2834, %v2934
  %v2936 = vpop.f32.mrf.mxu0
  %v2937 = vadd.f32 %v2836, %v2936
  %2938 = vmatprep.mubr.f32.mxu0 0.0
  %v2939 = vand.u32 %v2258, 4294901760
  %2940 = vmatmul.mubr.f32.gmra.mxu0 %v2939
  %v2941 = vpop.f32.mrf.mxu0
  %v2942 = vadd.f32 %v2841, %v2941
  %v2943 = vpop.f32.mrf.mxu0
  %v2944 = vadd.f32 %v2843, %v2943
  %2945 = vmatprep.mubr.f32.mxu0 0.0
  %v2946 = vand.u32 %v2261, 4294901760
  %2947 = vmatmul.mubr.f32.gmra.mxu0 %v2946
  %v2948 = vpop.f32.mrf.mxu0
  %v2949 = vadd.f32 %v2848, %v2948
  %v2950 = vpop.f32.mrf.mxu0
  %v2951 = vadd.f32 %v2850, %v2950
  %2952 = vdwg.mxu0
  %2953 = vmatprep.subr.mxu0 0.0
  %2954 = vmatpush1.msra.mxu0 0.0
  %2955 = vmatprep.subr.mxu0 0.0
  %2956 = vmatpush1.msra.mxu0 0.0
  %2957 = vmatprep.subr.mxu0 0.0
  %2958 = vmatpush1.msra.mxu0 0.0
  %2959 = vmatprep.subr.mxu0 0.0
  %2960 = vmatpush1.msra.mxu0 0.0
  %2961 = vmatprep.subr.mxu0 0.0
  %2962 = vmatpush1.msra.mxu0 0.0
  %2963 = vmatprep.subr.mxu0 0.0
  %2964 = vmatpush1.msra.mxu0 0.0
  %2965 = vmatprep.subr.mxu0 0.0
  %2966 = vmatpush1.msra.mxu0 0.0
  %2967 = vmatprep.subr.mxu0 0.0
  %2968 = vmatpush1.msra.mxu0 0.0
  %2969 = vmatprep.subr.mxu0 0.0
  %2970 = vmatpush1.msra.mxu0 0.0
  %2971 = vmatprep.subr.mxu0 0.0
  %2972 = vmatpush1.msra.mxu0 0.0
  %2973 = vmatprep.subr.mxu0 0.0
  %2974 = vmatpush1.msra.mxu0 0.0
  %2975 = vmatprep.subr.mxu0 0.0
  %2976 = vmatpush1.msra.mxu0 0.0
  %v2977 = vand.u32 %v168, 4294901760
  %2978 = vmatprep.subr.mxu0 %v2977
  %v2979 = vand.u32 %v165, 4294901760
  %2980 = vmatpush1.msra.mxu0 %v2979
  %v2981 = vand.u32 %v119, 4294901760
  %2982 = vmatprep.subr.mxu0 %v2981
  %v2983 = vand.u32 %v118, 4294901760
  %2984 = vmatpush1.msra.mxu0 %v2983
  %v2985 = vand.u32 %v113, 4294901760
  %2986 = vmatprep.subr.mxu0 %v2985
  %v2987 = vand.u32 %v112, 4294901760
  %2988 = vmatpush1.msra.mxu0 %v2987
  %v2989 = vand.u32 %v107, 4294901760
  %2990 = vmatprep.subr.mxu0 %v2989
  %v2991 = vand.u32 %v106, 4294901760
  %2992 = vmatpush1.msra.mxu0 %v2991
  %2993 = vmatprep.subr.mxu0 0.0
  %2994 = vmatpush2.msra.mxu0 0.0
  %2995 = vmatprep.subr.mxu0 0.0
  %2996 = vmatpush2.msra.mxu0 0.0
  %2997 = vmatprep.subr.mxu0 0.0
  %2998 = vmatpush2.msra.mxu0 0.0
  %2999 = vmatprep.subr.mxu0 0.0
  %3000 = vmatpush2.msra.mxu0 0.0
  %3001 = vmatprep.subr.mxu0 0.0
  %3002 = vmatpush2.msra.mxu0 0.0
  %3003 = vmatprep.subr.mxu0 0.0
  %3004 = vmatpush2.msra.mxu0 0.0
  %3005 = vmatprep.subr.mxu0 0.0
  %3006 = vmatpush2.msra.mxu0 0.0
  %3007 = vmatprep.subr.mxu0 0.0
  %3008 = vmatpush2.msra.mxu0 0.0
  %3009 = vmatprep.subr.mxu0 0.0
  %3010 = vmatpush2.msra.mxu0 0.0
  %3011 = vmatprep.subr.mxu0 0.0
  %3012 = vmatpush2.msra.mxu0 0.0
  %3013 = vmatprep.subr.mxu0 0.0
  %3014 = vmatpush2.msra.mxu0 0.0
  %3015 = vmatprep.subr.mxu0 0.0
  %3016 = vmatpush2.msra.mxu0 0.0
  %3017 = vmatprep.subr.mxu0 0.0
  %3018 = vmatpush2.msra.mxu0 0.0
  %3019 = vmatprep.subr.mxu0 0.0
  %3020 = vmatpush2.msra.mxu0 0.0
  %3021 = vmatprep.subr.mxu0 0.0
  %3022 = vmatpush2.msra.mxu0 0.0
  %3023 = vmatprep.subr.mxu0 0.0
  %3024 = vmatpush2.msra.mxu0 0.0
  %3025 = vmatprep.mubr.f32.mxu0 0.0
  %v3026 = vand.u32 %v2252, 4294901760
  %v3027 = vsub.f32 %v2252, %v3026
  %v3028 = vand.u32 %v3027, 4294901760
  %v3029 = vsub.f32 %v3027, %v3028
  %v3030 = vand.u32 %v3029, 4294901760
  %3031 = vmatmul.mubr.f32.gmra.mxu0 %v3030
  %v3032 = vpop.f32.mrf.mxu0
  %v3033 = vadd.f32 0.0, %v3032
  %v3034 = vpop.f32.mrf.mxu0
  %v3035 = vadd.f32 0.0, %v3034
  %3036 = vmatprep.mubr.f32.mxu0 0.0
  %v3037 = vand.u32 %v2255, 4294901760
  %v3038 = vsub.f32 %v2255, %v3037
  %v3039 = vand.u32 %v3038, 4294901760
  %v3040 = vsub.f32 %v3038, %v3039
  %v3041 = vand.u32 %v3040, 4294901760
  %3042 = vmatmul.mubr.f32.gmra.mxu0 %v3041
  %v3043 = vpop.f32.mrf.mxu0
  %v3044 = vadd.f32 0.0, %v3043
  %v3045 = vpop.f32.mrf.mxu0
  %v3046 = vadd.f32 0.0, %v3045
  %3047 = vmatprep.mubr.f32.mxu0 0.0
  %v3048 = vand.u32 %v2258, 4294901760
  %v3049 = vsub.f32 %v2258, %v3048
  %v3050 = vand.u32 %v3049, 4294901760
  %v3051 = vsub.f32 %v3049, %v3050
  %v3052 = vand.u32 %v3051, 4294901760
  %3053 = vmatmul.mubr.f32.gmra.mxu0 %v3052
  %v3054 = vpop.f32.mrf.mxu0
  %v3055 = vadd.f32 0.0, %v3054
  %v3056 = vpop.f32.mrf.mxu0
  %v3057 = vadd.f32 0.0, %v3056
  %3058 = vmatprep.mubr.f32.mxu0 0.0
  %v3059 = vand.u32 %v2261, 4294901760
  %v3060 = vsub.f32 %v2261, %v3059
  %v3061 = vand.u32 %v3060, 4294901760
  %v3062 = vsub.f32 %v3060, %v3061
  %v3063 = vand.u32 %v3062, 4294901760
  %3064 = vmatmul.mubr.f32.gmra.mxu0 %v3063
  %v3065 = vpop.f32.mrf.mxu0
  %v3066 = vadd.f32 0.0, %v3065
  %v3067 = vpop.f32.mrf.mxu0
  %v3068 = vadd.f32 0.0, %v3067
  %3069 = vdwg.mxu0
  %3070 = vmatprep.subr.mxu0 0.0
  %3071 = vmatpush1.msra.mxu0 0.0
  %3072 = vmatprep.subr.mxu0 0.0
  %3073 = vmatpush1.msra.mxu0 0.0
  %3074 = vmatprep.subr.mxu0 0.0
  %3075 = vmatpush1.msra.mxu0 0.0
  %3076 = vmatprep.subr.mxu0 0.0
  %3077 = vmatpush1.msra.mxu0 0.0
  %3078 = vmatprep.subr.mxu0 0.0
  %3079 = vmatpush1.msra.mxu0 0.0
  %3080 = vmatprep.subr.mxu0 0.0
  %3081 = vmatpush1.msra.mxu0 0.0
  %3082 = vmatprep.subr.mxu0 0.0
  %3083 = vmatpush1.msra.mxu0 0.0
  %3084 = vmatprep.subr.mxu0 0.0
  %3085 = vmatpush1.msra.mxu0 0.0
  %3086 = vmatprep.subr.mxu0 0.0
  %3087 = vmatpush1.msra.mxu0 0.0
  %3088 = vmatprep.subr.mxu0 0.0
  %3089 = vmatpush1.msra.mxu0 0.0
  %3090 = vmatprep.subr.mxu0 0.0
  %3091 = vmatpush1.msra.mxu0 0.0
  %3092 = vmatprep.subr.mxu0 0.0
  %3093 = vmatpush1.msra.mxu0 0.0
  %v3094 = vand.u32 %v168, 4294901760
  %v3095 = vsub.f32 %v168, %v3094
  %v3096 = vand.u32 %v3095, 4294901760
  %v3097 = vsub.f32 %v3095, %v3096
  %v3098 = vand.u32 %v3097, 4294901760
  %3099 = vmatprep.subr.mxu0 %v3098
  %v3100 = vand.u32 %v165, 4294901760
  %v3101 = vsub.f32 %v165, %v3100
  %v3102 = vand.u32 %v3101, 4294901760
  %v3103 = vsub.f32 %v3101, %v3102
  %v3104 = vand.u32 %v3103, 4294901760
  %3105 = vmatpush1.msra.mxu0 %v3104
  %v3106 = vand.u32 %v119, 4294901760
  %v3107 = vsub.f32 %v119, %v3106
  %v3108 = vand.u32 %v3107, 4294901760
  %v3109 = vsub.f32 %v3107, %v3108
  %v3110 = vand.u32 %v3109, 4294901760
  %3111 = vmatprep.subr.mxu0 %v3110
  %v3112 = vand.u32 %v118, 4294901760
  %v3113 = vsub.f32 %v118, %v3112
  %v3114 = vand.u32 %v3113, 4294901760
  %v3115 = vsub.f32 %v3113, %v3114
  %v3116 = vand.u32 %v3115, 4294901760
  %3117 = vmatpush1.msra.mxu0 %v3116
  %v3118 = vand.u32 %v113, 4294901760
  %v3119 = vsub.f32 %v113, %v3118
  %v3120 = vand.u32 %v3119, 4294901760
  %v3121 = vsub.f32 %v3119, %v3120
  %v3122 = vand.u32 %v3121, 4294901760
  %3123 = vmatprep.subr.mxu0 %v3122
  %v3124 = vand.u32 %v112, 4294901760
  %v3125 = vsub.f32 %v112, %v3124
  %v3126 = vand.u32 %v3125, 4294901760
  %v3127 = vsub.f32 %v3125, %v3126
  %v3128 = vand.u32 %v3127, 4294901760
  %3129 = vmatpush1.msra.mxu0 %v3128
  %v3130 = vand.u32 %v107, 4294901760
  %v3131 = vsub.f32 %v107, %v3130
  %v3132 = vand.u32 %v3131, 4294901760
  %v3133 = vsub.f32 %v3131, %v3132
  %v3134 = vand.u32 %v3133, 4294901760
  %3135 = vmatprep.subr.mxu0 %v3134
  %v3136 = vand.u32 %v106, 4294901760
  %v3137 = vsub.f32 %v106, %v3136
  %v3138 = vand.u32 %v3137, 4294901760
  %v3139 = vsub.f32 %v3137, %v3138
  %v3140 = vand.u32 %v3139, 4294901760
  %3141 = vmatpush1.msra.mxu0 %v3140
  %3142 = vmatprep.subr.mxu0 0.0
  %3143 = vmatpush2.msra.mxu0 0.0
  %3144 = vmatprep.subr.mxu0 0.0
  %3145 = vmatpush2.msra.mxu0 0.0
  %3146 = vmatprep.subr.mxu0 0.0
  %3147 = vmatpush2.msra.mxu0 0.0
  %3148 = vmatprep.subr.mxu0 0.0
  %3149 = vmatpush2.msra.mxu0 0.0
  %3150 = vmatprep.subr.mxu0 0.0
  %3151 = vmatpush2.msra.mxu0 0.0
  %3152 = vmatprep.subr.mxu0 0.0
  %3153 = vmatpush2.msra.mxu0 0.0
  %3154 = vmatprep.subr.mxu0 0.0
  %3155 = vmatpush2.msra.mxu0 0.0
  %3156 = vmatprep.subr.mxu0 0.0
  %3157 = vmatpush2.msra.mxu0 0.0
  %3158 = vmatprep.subr.mxu0 0.0
  %3159 = vmatpush2.msra.mxu0 0.0
  %3160 = vmatprep.subr.mxu0 0.0
  %3161 = vmatpush2.msra.mxu0 0.0
  %3162 = vmatprep.subr.mxu0 0.0
  %3163 = vmatpush2.msra.mxu0 0.0
  %3164 = vmatprep.subr.mxu0 0.0
  %3165 = vmatpush2.msra.mxu0 0.0
  %3166 = vmatprep.subr.mxu0 0.0
  %3167 = vmatpush2.msra.mxu0 0.0
  %3168 = vmatprep.subr.mxu0 0.0
  %3169 = vmatpush2.msra.mxu0 0.0
  %3170 = vmatprep.subr.mxu0 0.0
  %3171 = vmatpush2.msra.mxu0 0.0
  %3172 = vmatprep.subr.mxu0 0.0
  %3173 = vmatpush2.msra.mxu0 0.0
  %3174 = vmatprep.mubr.f32.mxu0 0.0
  %v3175 = vand.u32 %v2252, 4294901760
  %3176 = vmatmul.mubr.f32.gmra.mxu0 %v3175
  %v3177 = vpop.f32.mrf.mxu0
  %v3178 = vadd.f32 %v3033, %v3177
  %v3179 = vpop.f32.mrf.mxu0
  %v3180 = vadd.f32 %v3035, %v3179
  %3181 = vmatprep.mubr.f32.mxu0 0.0
  %v3182 = vand.u32 %v2255, 4294901760
  %3183 = vmatmul.mubr.f32.gmra.mxu0 %v3182
  %v3184 = vpop.f32.mrf.mxu0
  %v3185 = vadd.f32 %v3044, %v3184
  %v3186 = vpop.f32.mrf.mxu0
  %v3187 = vadd.f32 %v3046, %v3186
  %3188 = vmatprep.mubr.f32.mxu0 0.0
  %v3189 = vand.u32 %v2258, 4294901760
  %3190 = vmatmul.mubr.f32.gmra.mxu0 %v3189
  %v3191 = vpop.f32.mrf.mxu0
  %v3192 = vadd.f32 %v3055, %v3191
  %v3193 = vpop.f32.mrf.mxu0
  %v3194 = vadd.f32 %v3057, %v3193
  %3195 = vmatprep.mubr.f32.mxu0 0.0
  %v3196 = vand.u32 %v2261, 4294901760
  %3197 = vmatmul.mubr.f32.gmra.mxu0 %v3196
  %v3198 = vpop.f32.mrf.mxu0
  %v3199 = vadd.f32 %v3066, %v3198
  %v3200 = vpop.f32.mrf.mxu0
  %v3201 = vadd.f32 %v3068, %v3200
  %3202 = vdwg.mxu0
  %3203 = vmatprep.subr.mxu0 0.0
  %3204 = vmatpush1.msra.mxu0 0.0
  %3205 = vmatprep.subr.mxu0 0.0
  %3206 = vmatpush1.msra.mxu0 0.0
  %3207 = vmatprep.subr.mxu0 0.0
  %3208 = vmatpush1.msra.mxu0 0.0
  %3209 = vmatprep.subr.mxu0 0.0
  %3210 = vmatpush1.msra.mxu0 0.0
  %3211 = vmatprep.subr.mxu0 0.0
  %3212 = vmatpush1.msra.mxu0 0.0
  %3213 = vmatprep.subr.mxu0 0.0
  %3214 = vmatpush1.msra.mxu0 0.0
  %3215 = vmatprep.subr.mxu0 0.0
  %3216 = vmatpush1.msra.mxu0 0.0
  %3217 = vmatprep.subr.mxu0 0.0
  %3218 = vmatpush1.msra.mxu0 0.0
  %3219 = vmatprep.subr.mxu0 0.0
  %3220 = vmatpush1.msra.mxu0 0.0
  %3221 = vmatprep.subr.mxu0 0.0
  %3222 = vmatpush1.msra.mxu0 0.0
  %3223 = vmatprep.subr.mxu0 0.0
  %3224 = vmatpush1.msra.mxu0 0.0
  %3225 = vmatprep.subr.mxu0 0.0
  %3226 = vmatpush1.msra.mxu0 0.0
  %v3227 = vand.u32 %v168, 4294901760
  %v3228 = vsub.f32 %v168, %v3227
  %3229 = vmatprep.subr.mxu0 %v3228
  %v3230 = vand.u32 %v165, 4294901760
  %v3231 = vsub.f32 %v165, %v3230
  %3232 = vmatpush1.msra.mxu0 %v3231
  %v3233 = vand.u32 %v119, 4294901760
  %v3234 = vsub.f32 %v119, %v3233
  %3235 = vmatprep.subr.mxu0 %v3234
  %v3236 = vand.u32 %v118, 4294901760
  %v3237 = vsub.f32 %v118, %v3236
  %3238 = vmatpush1.msra.mxu0 %v3237
  %v3239 = vand.u32 %v113, 4294901760
  %v3240 = vsub.f32 %v113, %v3239
  %3241 = vmatprep.subr.mxu0 %v3240
  %v3242 = vand.u32 %v112, 4294901760
  %v3243 = vsub.f32 %v112, %v3242
  %3244 = vmatpush1.msra.mxu0 %v3243
  %v3245 = vand.u32 %v107, 4294901760
  %v3246 = vsub.f32 %v107, %v3245
  %3247 = vmatprep.subr.mxu0 %v3246
  %v3248 = vand.u32 %v106, 4294901760
  %v3249 = vsub.f32 %v106, %v3248
  %3250 = vmatpush1.msra.mxu0 %v3249
  %3251 = vmatprep.subr.mxu0 0.0
  %3252 = vmatpush2.msra.mxu0 0.0
  %3253 = vmatprep.subr.mxu0 0.0
  %3254 = vmatpush2.msra.mxu0 0.0
  %3255 = vmatprep.subr.mxu0 0.0
  %3256 = vmatpush2.msra.mxu0 0.0
  %3257 = vmatprep.subr.mxu0 0.0
  %3258 = vmatpush2.msra.mxu0 0.0
  %3259 = vmatprep.subr.mxu0 0.0
  %3260 = vmatpush2.msra.mxu0 0.0
  %3261 = vmatprep.subr.mxu0 0.0
  %3262 = vmatpush2.msra.mxu0 0.0
  %3263 = vmatprep.subr.mxu0 0.0
  %3264 = vmatpush2.msra.mxu0 0.0
  %3265 = vmatprep.subr.mxu0 0.0
  %3266 = vmatpush2.msra.mxu0 0.0
  %3267 = vmatprep.subr.mxu0 0.0
  %3268 = vmatpush2.msra.mxu0 0.0
  %3269 = vmatprep.subr.mxu0 0.0
  %3270 = vmatpush2.msra.mxu0 0.0
  %3271 = vmatprep.subr.mxu0 0.0
  %3272 = vmatpush2.msra.mxu0 0.0
  %3273 = vmatprep.subr.mxu0 0.0
  %3274 = vmatpush2.msra.mxu0 0.0
  %3275 = vmatprep.subr.mxu0 0.0
  %3276 = vmatpush2.msra.mxu0 0.0
  %3277 = vmatprep.subr.mxu0 0.0
  %3278 = vmatpush2.msra.mxu0 0.0
  %3279 = vmatprep.subr.mxu0 0.0
  %3280 = vmatpush2.msra.mxu0 0.0
  %3281 = vmatprep.subr.mxu0 0.0
  %3282 = vmatpush2.msra.mxu0 0.0
  %3283 = vmatprep.mubr.f32.mxu0 0.0
  %v3284 = vand.u32 %v2252, 4294901760
  %v3285 = vsub.f32 %v2252, %v3284
  %3286 = vmatmul.mubr.f32.gmra.mxu0 %v3285
  %v3287 = vpop.f32.mrf.mxu0
  %v3288 = vadd.f32 %v3178, %v3287
  %v3289 = vpop.f32.mrf.mxu0
  %v3290 = vadd.f32 %v3180, %v3289
  %3291 = vmatprep.mubr.f32.mxu0 0.0
  %v3292 = vand.u32 %v2255, 4294901760
  %v3293 = vsub.f32 %v2255, %v3292
  %3294 = vmatmul.mubr.f32.gmra.mxu0 %v3293
  %v3295 = vpop.f32.mrf.mxu0
  %v3296 = vadd.f32 %v3185, %v3295
  %v3297 = vpop.f32.mrf.mxu0
  %v3298 = vadd.f32 %v3187, %v3297
  %3299 = vmatprep.mubr.f32.mxu0 0.0
  %v3300 = vand.u32 %v2258, 4294901760
  %v3301 = vsub.f32 %v2258, %v3300
  %3302 = vmatmul.mubr.f32.gmra.mxu0 %v3301
  %v3303 = vpop.f32.mrf.mxu0
  %v3304 = vadd.f32 %v3192, %v3303
  %v3305 = vpop.f32.mrf.mxu0
  %v3306 = vadd.f32 %v3194, %v3305
  %3307 = vmatprep.mubr.f32.mxu0 0.0
  %v3308 = vand.u32 %v2261, 4294901760
  %v3309 = vsub.f32 %v2261, %v3308
  %3310 = vmatmul.mubr.f32.gmra.mxu0 %v3309
  %v3311 = vpop.f32.mrf.mxu0
  %v3312 = vadd.f32 %v3199, %v3311
  %v3313 = vpop.f32.mrf.mxu0
  %v3314 = vadd.f32 %v3201, %v3313
  %3315 = vdwg.mxu0
  %3316 = vmatprep.subr.mxu0 0.0
  %3317 = vmatpush1.msra.mxu0 0.0
  %3318 = vmatprep.subr.mxu0 0.0
  %3319 = vmatpush1.msra.mxu0 0.0
  %3320 = vmatprep.subr.mxu0 0.0
  %3321 = vmatpush1.msra.mxu0 0.0
  %3322 = vmatprep.subr.mxu0 0.0
  %3323 = vmatpush1.msra.mxu0 0.0
  %3324 = vmatprep.subr.mxu0 0.0
  %3325 = vmatpush1.msra.mxu0 0.0
  %3326 = vmatprep.subr.mxu0 0.0
  %3327 = vmatpush1.msra.mxu0 0.0
  %3328 = vmatprep.subr.mxu0 0.0
  %3329 = vmatpush1.msra.mxu0 0.0
  %3330 = vmatprep.subr.mxu0 0.0
  %3331 = vmatpush1.msra.mxu0 0.0
  %3332 = vmatprep.subr.mxu0 0.0
  %3333 = vmatpush1.msra.mxu0 0.0
  %3334 = vmatprep.subr.mxu0 0.0
  %3335 = vmatpush1.msra.mxu0 0.0
  %3336 = vmatprep.subr.mxu0 0.0
  %3337 = vmatpush1.msra.mxu0 0.0
  %3338 = vmatprep.subr.mxu0 0.0
  %3339 = vmatpush1.msra.mxu0 0.0
  %v3340 = vand.u32 %v168, 4294901760
  %3341 = vmatprep.subr.mxu0 %v3340
  %v3342 = vand.u32 %v165, 4294901760
  %3343 = vmatpush1.msra.mxu0 %v3342
  %v3344 = vand.u32 %v119, 4294901760
  %3345 = vmatprep.subr.mxu0 %v3344
  %v3346 = vand.u32 %v118, 4294901760
  %3347 = vmatpush1.msra.mxu0 %v3346
  %v3348 = vand.u32 %v113, 4294901760
  %3349 = vmatprep.subr.mxu0 %v3348
  %v3350 = vand.u32 %v112, 4294901760
  %3351 = vmatpush1.msra.mxu0 %v3350
  %v3352 = vand.u32 %v107, 4294901760
  %3353 = vmatprep.subr.mxu0 %v3352
  %v3354 = vand.u32 %v106, 4294901760
  %3355 = vmatpush1.msra.mxu0 %v3354
  %3356 = vmatprep.subr.mxu0 0.0
  %3357 = vmatpush2.msra.mxu0 0.0
  %3358 = vmatprep.subr.mxu0 0.0
  %3359 = vmatpush2.msra.mxu0 0.0
  %3360 = vmatprep.subr.mxu0 0.0
  %3361 = vmatpush2.msra.mxu0 0.0
  %3362 = vmatprep.subr.mxu0 0.0
  %3363 = vmatpush2.msra.mxu0 0.0
  %3364 = vmatprep.subr.mxu0 0.0
  %3365 = vmatpush2.msra.mxu0 0.0
  %3366 = vmatprep.subr.mxu0 0.0
  %3367 = vmatpush2.msra.mxu0 0.0
  %3368 = vmatprep.subr.mxu0 0.0
  %3369 = vmatpush2.msra.mxu0 0.0
  %3370 = vmatprep.subr.mxu0 0.0
  %3371 = vmatpush2.msra.mxu0 0.0
  %3372 = vmatprep.subr.mxu0 0.0
  %3373 = vmatpush2.msra.mxu0 0.0
  %3374 = vmatprep.subr.mxu0 0.0
  %3375 = vmatpush2.msra.mxu0 0.0
  %3376 = vmatprep.subr.mxu0 0.0
  %3377 = vmatpush2.msra.mxu0 0.0
  %3378 = vmatprep.subr.mxu0 0.0
  %3379 = vmatpush2.msra.mxu0 0.0
  %3380 = vmatprep.subr.mxu0 0.0
  %3381 = vmatpush2.msra.mxu0 0.0
  %3382 = vmatprep.subr.mxu0 0.0
  %3383 = vmatpush2.msra.mxu0 0.0
  %3384 = vmatprep.subr.mxu0 0.0
  %3385 = vmatpush2.msra.mxu0 0.0
  %3386 = vmatprep.subr.mxu0 0.0
  %3387 = vmatpush2.msra.mxu0 0.0
  %3388 = vmatprep.mubr.f32.mxu0 0.0
  %v3389 = vand.u32 %v2252, 4294901760
  %v3390 = vsub.f32 %v2252, %v3389
  %v3391 = vand.u32 %v3390, 4294901760
  %3392 = vmatmul.mubr.f32.gmra.mxu0 %v3391
  %v3393 = vpop.f32.mrf.mxu0
  %v3394 = vadd.f32 %v3288, %v3393
  %v3395 = vpop.f32.mrf.mxu0
  %v3396 = vadd.f32 %v3290, %v3395
  %3397 = vmatprep.mubr.f32.mxu0 0.0
  %v3398 = vand.u32 %v2255, 4294901760
  %v3399 = vsub.f32 %v2255, %v3398
  %v3400 = vand.u32 %v3399, 4294901760
  %3401 = vmatmul.mubr.f32.gmra.mxu0 %v3400
  %v3402 = vpop.f32.mrf.mxu0
  %v3403 = vadd.f32 %v3296, %v3402
  %v3404 = vpop.f32.mrf.mxu0
  %v3405 = vadd.f32 %v3298, %v3404
  %3406 = vmatprep.mubr.f32.mxu0 0.0
  %v3407 = vand.u32 %v2258, 4294901760
  %v3408 = vsub.f32 %v2258, %v3407
  %v3409 = vand.u32 %v3408, 4294901760
  %3410 = vmatmul.mubr.f32.gmra.mxu0 %v3409
  %v3411 = vpop.f32.mrf.mxu0
  %v3412 = vadd.f32 %v3304, %v3411
  %v3413 = vpop.f32.mrf.mxu0
  %v3414 = vadd.f32 %v3306, %v3413
  %3415 = vmatprep.mubr.f32.mxu0 0.0
  %v3416 = vand.u32 %v2261, 4294901760
  %v3417 = vsub.f32 %v2261, %v3416
  %v3418 = vand.u32 %v3417, 4294901760
  %3419 = vmatmul.mubr.f32.gmra.mxu0 %v3418
  %v3420 = vpop.f32.mrf.mxu0
  %v3421 = vadd.f32 %v3312, %v3420
  %v3422 = vpop.f32.mrf.mxu0
  %v3423 = vadd.f32 %v3314, %v3422
  %3424 = vdwg.mxu0
  %3425 = vmatprep.subr.mxu0 0.0
  %3426 = vmatpush1.msra.mxu0 0.0
  %3427 = vmatprep.subr.mxu0 0.0
  %3428 = vmatpush1.msra.mxu0 0.0
  %3429 = vmatprep.subr.mxu0 0.0
  %3430 = vmatpush1.msra.mxu0 0.0
  %3431 = vmatprep.subr.mxu0 0.0
  %3432 = vmatpush1.msra.mxu0 0.0
  %3433 = vmatprep.subr.mxu0 0.0
  %3434 = vmatpush1.msra.mxu0 0.0
  %3435 = vmatprep.subr.mxu0 0.0
  %3436 = vmatpush1.msra.mxu0 0.0
  %3437 = vmatprep.subr.mxu0 0.0
  %3438 = vmatpush1.msra.mxu0 0.0
  %3439 = vmatprep.subr.mxu0 0.0
  %3440 = vmatpush1.msra.mxu0 0.0
  %3441 = vmatprep.subr.mxu0 0.0
  %3442 = vmatpush1.msra.mxu0 0.0
  %3443 = vmatprep.subr.mxu0 0.0
  %3444 = vmatpush1.msra.mxu0 0.0
  %3445 = vmatprep.subr.mxu0 0.0
  %3446 = vmatpush1.msra.mxu0 0.0
  %3447 = vmatprep.subr.mxu0 0.0
  %3448 = vmatpush1.msra.mxu0 0.0
  %v3449 = vand.u32 %v168, 4294901760
  %v3450 = vsub.f32 %v168, %v3449
  %v3451 = vand.u32 %v3450, 4294901760
  %3452 = vmatprep.subr.mxu0 %v3451
  %v3453 = vand.u32 %v165, 4294901760
  %v3454 = vsub.f32 %v165, %v3453
  %v3455 = vand.u32 %v3454, 4294901760
  %3456 = vmatpush1.msra.mxu0 %v3455
  %v3457 = vand.u32 %v119, 4294901760
  %v3458 = vsub.f32 %v119, %v3457
  %v3459 = vand.u32 %v3458, 4294901760
  %3460 = vmatprep.subr.mxu0 %v3459
  %v3461 = vand.u32 %v118, 4294901760
  %v3462 = vsub.f32 %v118, %v3461
  %v3463 = vand.u32 %v3462, 4294901760
  %3464 = vmatpush1.msra.mxu0 %v3463
  %v3465 = vand.u32 %v113, 4294901760
  %v3466 = vsub.f32 %v113, %v3465
  %v3467 = vand.u32 %v3466, 4294901760
  %3468 = vmatprep.subr.mxu0 %v3467
  %v3469 = vand.u32 %v112, 4294901760
  %v3470 = vsub.f32 %v112, %v3469
  %v3471 = vand.u32 %v3470, 4294901760
  %3472 = vmatpush1.msra.mxu0 %v3471
  %v3473 = vand.u32 %v107, 4294901760
  %v3474 = vsub.f32 %v107, %v3473
  %v3475 = vand.u32 %v3474, 4294901760
  %3476 = vmatprep.subr.mxu0 %v3475
  %v3477 = vand.u32 %v106, 4294901760
  %v3478 = vsub.f32 %v106, %v3477
  %v3479 = vand.u32 %v3478, 4294901760
  %3480 = vmatpush1.msra.mxu0 %v3479
  %3481 = vmatprep.subr.mxu0 0.0
  %3482 = vmatpush2.msra.mxu0 0.0
  %3483 = vmatprep.subr.mxu0 0.0
  %3484 = vmatpush2.msra.mxu0 0.0
  %3485 = vmatprep.subr.mxu0 0.0
  %3486 = vmatpush2.msra.mxu0 0.0
  %3487 = vmatprep.subr.mxu0 0.0
  %3488 = vmatpush2.msra.mxu0 0.0
  %3489 = vmatprep.subr.mxu0 0.0
  %3490 = vmatpush2.msra.mxu0 0.0
  %3491 = vmatprep.subr.mxu0 0.0
  %3492 = vmatpush2.msra.mxu0 0.0
  %3493 = vmatprep.subr.mxu0 0.0
  %3494 = vmatpush2.msra.mxu0 0.0
  %3495 = vmatprep.subr.mxu0 0.0
  %3496 = vmatpush2.msra.mxu0 0.0
  %3497 = vmatprep.subr.mxu0 0.0
  %3498 = vmatpush2.msra.mxu0 0.0
  %3499 = vmatprep.subr.mxu0 0.0
  %3500 = vmatpush2.msra.mxu0 0.0
  %3501 = vmatprep.subr.mxu0 0.0
  %3502 = vmatpush2.msra.mxu0 0.0
  %3503 = vmatprep.subr.mxu0 0.0
  %3504 = vmatpush2.msra.mxu0 0.0
  %3505 = vmatprep.subr.mxu0 0.0
  %3506 = vmatpush2.msra.mxu0 0.0
  %3507 = vmatprep.subr.mxu0 0.0
  %3508 = vmatpush2.msra.mxu0 0.0
  %3509 = vmatprep.subr.mxu0 0.0
  %3510 = vmatpush2.msra.mxu0 0.0
  %3511 = vmatprep.subr.mxu0 0.0
  %3512 = vmatpush2.msra.mxu0 0.0
  %3513 = vmatprep.mubr.f32.mxu0 0.0
  %v3514 = vand.u32 %v2252, 4294901760
  %3515 = vmatmul.mubr.f32.gmra.mxu0 %v3514
  %v3516 = vpop.f32.mrf.mxu0
  %v3517 = vadd.f32 %v3394, %v3516
  %v3518 = vpop.f32.mrf.mxu0
  %v3519 = vadd.f32 %v3396, %v3518
  %3520 = vmatprep.mubr.f32.mxu0 0.0
  %v3521 = vand.u32 %v2255, 4294901760
  %3522 = vmatmul.mubr.f32.gmra.mxu0 %v3521
  %v3523 = vpop.f32.mrf.mxu0
  %v3524 = vadd.f32 %v3403, %v3523
  %v3525 = vpop.f32.mrf.mxu0
  %v3526 = vadd.f32 %v3405, %v3525
  %3527 = vmatprep.mubr.f32.mxu0 0.0
  %v3528 = vand.u32 %v2258, 4294901760
  %3529 = vmatmul.mubr.f32.gmra.mxu0 %v3528
  %v3530 = vpop.f32.mrf.mxu0
  %v3531 = vadd.f32 %v3412, %v3530
  %v3532 = vpop.f32.mrf.mxu0
  %v3533 = vadd.f32 %v3414, %v3532
  %3534 = vmatprep.mubr.f32.mxu0 0.0
  %v3535 = vand.u32 %v2261, 4294901760
  %3536 = vmatmul.mubr.f32.gmra.mxu0 %v3535
  %v3537 = vpop.f32.mrf.mxu0
  %v3538 = vadd.f32 %v3421, %v3537
  %v3539 = vpop.f32.mrf.mxu0
  %v3540 = vadd.f32 %v3423, %v3539
  %3541 = vdwg.mxu0
  %3542 = vmatprep.subr.mxu0 0.0
  %3543 = vmatpush1.msra.mxu0 0.0
  %3544 = vmatprep.subr.mxu0 0.0
  %3545 = vmatpush1.msra.mxu0 0.0
  %3546 = vmatprep.subr.mxu0 0.0
  %3547 = vmatpush1.msra.mxu0 0.0
  %3548 = vmatprep.subr.mxu0 0.0
  %3549 = vmatpush1.msra.mxu0 0.0
  %3550 = vmatprep.subr.mxu0 0.0
  %3551 = vmatpush1.msra.mxu0 0.0
  %3552 = vmatprep.subr.mxu0 0.0
  %3553 = vmatpush1.msra.mxu0 0.0
  %3554 = vmatprep.subr.mxu0 0.0
  %3555 = vmatpush1.msra.mxu0 0.0
  %3556 = vmatprep.subr.mxu0 0.0
  %3557 = vmatpush1.msra.mxu0 0.0
  %3558 = vmatprep.subr.mxu0 0.0
  %3559 = vmatpush1.msra.mxu0 0.0
  %3560 = vmatprep.subr.mxu0 0.0
  %3561 = vmatpush1.msra.mxu0 0.0
  %3562 = vmatprep.subr.mxu0 0.0
  %3563 = vmatpush1.msra.mxu0 0.0
  %3564 = vmatprep.subr.mxu0 0.0
  %3565 = vmatpush1.msra.mxu0 0.0
  %v3566 = vand.u32 %v168, 4294901760
  %3567 = vmatprep.subr.mxu0 %v3566
  %v3568 = vand.u32 %v165, 4294901760
  %3569 = vmatpush1.msra.mxu0 %v3568
  %v3570 = vand.u32 %v119, 4294901760
  %3571 = vmatprep.subr.mxu0 %v3570
  %v3572 = vand.u32 %v118, 4294901760
  %3573 = vmatpush1.msra.mxu0 %v3572
  %v3574 = vand.u32 %v113, 4294901760
  %3575 = vmatprep.subr.mxu0 %v3574
  %v3576 = vand.u32 %v112, 4294901760
  %3577 = vmatpush1.msra.mxu0 %v3576
  %v3578 = vand.u32 %v107, 4294901760
  %3579 = vmatprep.subr.mxu0 %v3578
  %v3580 = vand.u32 %v106, 4294901760
  %3581 = vmatpush1.msra.mxu0 %v3580
  %3582 = vmatprep.subr.mxu0 0.0
  %3583 = vmatpush2.msra.mxu0 0.0
  %3584 = vmatprep.subr.mxu0 0.0
  %3585 = vmatpush2.msra.mxu0 0.0
  %3586 = vmatprep.subr.mxu0 0.0
  %3587 = vmatpush2.msra.mxu0 0.0
  %3588 = vmatprep.subr.mxu0 0.0
  %3589 = vmatpush2.msra.mxu0 0.0
  %3590 = vmatprep.subr.mxu0 0.0
  %3591 = vmatpush2.msra.mxu0 0.0
  %3592 = vmatprep.subr.mxu0 0.0
  %3593 = vmatpush2.msra.mxu0 0.0
  %3594 = vmatprep.subr.mxu0 0.0
  %3595 = vmatpush2.msra.mxu0 0.0
  %3596 = vmatprep.subr.mxu0 0.0
  %3597 = vmatpush2.msra.mxu0 0.0
  %3598 = vmatprep.subr.mxu0 0.0
  %3599 = vmatpush2.msra.mxu0 0.0
  %3600 = vmatprep.subr.mxu0 0.0
  %3601 = vmatpush2.msra.mxu0 0.0
  %3602 = vmatprep.subr.mxu0 0.0
  %3603 = vmatpush2.msra.mxu0 0.0
  %3604 = vmatprep.subr.mxu0 0.0
  %3605 = vmatpush2.msra.mxu0 0.0
  %3606 = vmatprep.subr.mxu0 0.0
  %3607 = vmatpush2.msra.mxu0 0.0
  %3608 = vmatprep.subr.mxu0 0.0
  %3609 = vmatpush2.msra.mxu0 0.0
  %3610 = vmatprep.subr.mxu0 0.0
  %3611 = vmatpush2.msra.mxu0 0.0
  %3612 = vmatprep.subr.mxu0 0.0
  %3613 = vmatpush2.msra.mxu0 0.0
  %3614 = vmatprep.mubr.f32.mxu0 0.0
  %v3615 = vand.u32 %v2252, 4294901760
  %3616 = vmatmul.mubr.f32.gmra.mxu0 %v3615
  %v3617 = vpop.f32.mrf.mxu0
  %v3618 = vadd.f32 %v3517, %v3617
  %v3619 = vpop.f32.mrf.mxu0
  %v3620 = vadd.f32 %v3519, %v3619
  %3621 = vmatprep.mubr.f32.mxu0 0.0
  %v3622 = vand.u32 %v2255, 4294901760
  %3623 = vmatmul.mubr.f32.gmra.mxu0 %v3622
  %v3624 = vpop.f32.mrf.mxu0
  %v3625 = vadd.f32 %v3524, %v3624
  %v3626 = vpop.f32.mrf.mxu0
  %v3627 = vadd.f32 %v3526, %v3626
  %3628 = vmatprep.mubr.f32.mxu0 0.0
  %v3629 = vand.u32 %v2258, 4294901760
  %3630 = vmatmul.mubr.f32.gmra.mxu0 %v3629
  %v3631 = vpop.f32.mrf.mxu0
  %v3632 = vadd.f32 %v3531, %v3631
  %v3633 = vpop.f32.mrf.mxu0
  %v3634 = vadd.f32 %v3533, %v3633
  %3635 = vmatprep.mubr.f32.mxu0 0.0
  %v3636 = vand.u32 %v2261, 4294901760
  %3637 = vmatmul.mubr.f32.gmra.mxu0 %v3636
  %v3638 = vpop.f32.mrf.mxu0
  %v3639 = vadd.f32 %v3538, %v3638
  %v3640 = vpop.f32.mrf.mxu0
  %v3641 = vadd.f32 %v3540, %v3640
  %3642 = vdwg.mxu0
  %3643 = vmatprep.subr.mxu0 0.0
  %3644 = vmatpush1.msra.mxu0 0.0
  %3645 = vmatprep.subr.mxu0 0.0
  %3646 = vmatpush1.msra.mxu0 0.0
  %3647 = vmatprep.subr.mxu0 0.0
  %3648 = vmatpush1.msra.mxu0 0.0
  %3649 = vmatprep.subr.mxu0 0.0
  %3650 = vmatpush1.msra.mxu0 0.0
  %3651 = vmatprep.subr.mxu0 0.0
  %3652 = vmatpush1.msra.mxu0 0.0
  %3653 = vmatprep.subr.mxu0 0.0
  %3654 = vmatpush1.msra.mxu0 0.0
  %3655 = vmatprep.subr.mxu0 0.0
  %3656 = vmatpush1.msra.mxu0 0.0
  %3657 = vmatprep.subr.mxu0 0.0
  %3658 = vmatpush1.msra.mxu0 0.0
  %3659 = vmatprep.subr.mxu0 0.0
  %3660 = vmatpush1.msra.mxu0 0.0
  %3661 = vmatprep.subr.mxu0 0.0
  %3662 = vmatpush1.msra.mxu0 0.0
  %3663 = vmatprep.subr.mxu0 0.0
  %3664 = vmatpush1.msra.mxu0 0.0
  %3665 = vmatprep.subr.mxu0 0.0
  %3666 = vmatpush1.msra.mxu0 0.0
  %v3667 = vand.u32 %v174, 4294901760
  %3668 = vmatprep.subr.mxu0 %v3667
  %v3669 = vand.u32 %v171, 4294901760
  %3670 = vmatpush1.msra.mxu0 %v3669
  %v3671 = vand.u32 %v121, 4294901760
  %3672 = vmatprep.subr.mxu0 %v3671
  %v3673 = vand.u32 %v120, 4294901760
  %3674 = vmatpush1.msra.mxu0 %v3673
  %v3675 = vand.u32 %v115, 4294901760
  %3676 = vmatprep.subr.mxu0 %v3675
  %v3677 = vand.u32 %v114, 4294901760
  %3678 = vmatpush1.msra.mxu0 %v3677
  %v3679 = vand.u32 %v109, 4294901760
  %3680 = vmatprep.subr.mxu0 %v3679
  %v3681 = vand.u32 %v108, 4294901760
  %3682 = vmatpush1.msra.mxu0 %v3681
  %3683 = vmatprep.subr.mxu0 0.0
  %3684 = vmatpush2.msra.mxu0 0.0
  %3685 = vmatprep.subr.mxu0 0.0
  %3686 = vmatpush2.msra.mxu0 0.0
  %3687 = vmatprep.subr.mxu0 0.0
  %3688 = vmatpush2.msra.mxu0 0.0
  %3689 = vmatprep.subr.mxu0 0.0
  %3690 = vmatpush2.msra.mxu0 0.0
  %3691 = vmatprep.subr.mxu0 0.0
  %3692 = vmatpush2.msra.mxu0 0.0
  %3693 = vmatprep.subr.mxu0 0.0
  %3694 = vmatpush2.msra.mxu0 0.0
  %3695 = vmatprep.subr.mxu0 0.0
  %3696 = vmatpush2.msra.mxu0 0.0
  %3697 = vmatprep.subr.mxu0 0.0
  %3698 = vmatpush2.msra.mxu0 0.0
  %3699 = vmatprep.subr.mxu0 0.0
  %3700 = vmatpush2.msra.mxu0 0.0
  %3701 = vmatprep.subr.mxu0 0.0
  %3702 = vmatpush2.msra.mxu0 0.0
  %3703 = vmatprep.subr.mxu0 0.0
  %3704 = vmatpush2.msra.mxu0 0.0
  %3705 = vmatprep.subr.mxu0 0.0
  %3706 = vmatpush2.msra.mxu0 0.0
  %3707 = vmatprep.subr.mxu0 0.0
  %3708 = vmatpush2.msra.mxu0 0.0
  %3709 = vmatprep.subr.mxu0 0.0
  %3710 = vmatpush2.msra.mxu0 0.0
  %3711 = vmatprep.subr.mxu0 0.0
  %3712 = vmatpush2.msra.mxu0 0.0
  %3713 = vmatprep.subr.mxu0 0.0
  %3714 = vmatpush2.msra.mxu0 0.0
  %3715 = vmatprep.mubr.f32.mxu0 0.0
  %v3716 = vand.u32 %v2252, 4294901760
  %v3717 = vsub.f32 %v2252, %v3716
  %v3718 = vand.u32 %v3717, 4294901760
  %v3719 = vsub.f32 %v3717, %v3718
  %v3720 = vand.u32 %v3719, 4294901760
  %3721 = vmatmul.mubr.f32.gmra.mxu0 %v3720
  %v3722 = vpop.f32.mrf.mxu0
  %v3723 = vadd.f32 0.0, %v3722
  %v3724 = vpop.f32.mrf.mxu0
  %v3725 = vadd.f32 0.0, %v3724
  %3726 = vmatprep.mubr.f32.mxu0 0.0
  %v3727 = vand.u32 %v2255, 4294901760
  %v3728 = vsub.f32 %v2255, %v3727
  %v3729 = vand.u32 %v3728, 4294901760
  %v3730 = vsub.f32 %v3728, %v3729
  %v3731 = vand.u32 %v3730, 4294901760
  %3732 = vmatmul.mubr.f32.gmra.mxu0 %v3731
  %v3733 = vpop.f32.mrf.mxu0
  %v3734 = vadd.f32 0.0, %v3733
  %v3735 = vpop.f32.mrf.mxu0
  %v3736 = vadd.f32 0.0, %v3735
  %3737 = vmatprep.mubr.f32.mxu0 0.0
  %v3738 = vand.u32 %v2258, 4294901760
  %v3739 = vsub.f32 %v2258, %v3738
  %v3740 = vand.u32 %v3739, 4294901760
  %v3741 = vsub.f32 %v3739, %v3740
  %v3742 = vand.u32 %v3741, 4294901760
  %3743 = vmatmul.mubr.f32.gmra.mxu0 %v3742
  %v3744 = vpop.f32.mrf.mxu0
  %v3745 = vadd.f32 0.0, %v3744
  %v3746 = vpop.f32.mrf.mxu0
  %v3747 = vadd.f32 0.0, %v3746
  %3748 = vmatprep.mubr.f32.mxu0 0.0
  %v3749 = vand.u32 %v2261, 4294901760
  %v3750 = vsub.f32 %v2261, %v3749
  %v3751 = vand.u32 %v3750, 4294901760
  %v3752 = vsub.f32 %v3750, %v3751
  %v3753 = vand.u32 %v3752, 4294901760
  %3754 = vmatmul.mubr.f32.gmra.mxu0 %v3753
  %v3755 = vpop.f32.mrf.mxu0
  %v3756 = vadd.f32 0.0, %v3755
  %v3757 = vpop.f32.mrf.mxu0
  %v3758 = vadd.f32 0.0, %v3757
  %3759 = vdwg.mxu0
  %3760 = vmatprep.subr.mxu0 0.0
  %3761 = vmatpush1.msra.mxu0 0.0
  %3762 = vmatprep.subr.mxu0 0.0
  %3763 = vmatpush1.msra.mxu0 0.0
  %3764 = vmatprep.subr.mxu0 0.0
  %3765 = vmatpush1.msra.mxu0 0.0
  %3766 = vmatprep.subr.mxu0 0.0
  %3767 = vmatpush1.msra.mxu0 0.0
  %3768 = vmatprep.subr.mxu0 0.0
  %3769 = vmatpush1.msra.mxu0 0.0
  %3770 = vmatprep.subr.mxu0 0.0
  %3771 = vmatpush1.msra.mxu0 0.0
  %3772 = vmatprep.subr.mxu0 0.0
  %3773 = vmatpush1.msra.mxu0 0.0
  %3774 = vmatprep.subr.mxu0 0.0
  %3775 = vmatpush1.msra.mxu0 0.0
  %3776 = vmatprep.subr.mxu0 0.0
  %3777 = vmatpush1.msra.mxu0 0.0
  %3778 = vmatprep.subr.mxu0 0.0
  %3779 = vmatpush1.msra.mxu0 0.0
  %3780 = vmatprep.subr.mxu0 0.0
  %3781 = vmatpush1.msra.mxu0 0.0
  %3782 = vmatprep.subr.mxu0 0.0
  %3783 = vmatpush1.msra.mxu0 0.0
  %v3784 = vand.u32 %v174, 4294901760
  %v3785 = vsub.f32 %v174, %v3784
  %v3786 = vand.u32 %v3785, 4294901760
  %v3787 = vsub.f32 %v3785, %v3786
  %v3788 = vand.u32 %v3787, 4294901760
  %3789 = vmatprep.subr.mxu0 %v3788
  %v3790 = vand.u32 %v171, 4294901760
  %v3791 = vsub.f32 %v171, %v3790
  %v3792 = vand.u32 %v3791, 4294901760
  %v3793 = vsub.f32 %v3791, %v3792
  %v3794 = vand.u32 %v3793, 4294901760
  %3795 = vmatpush1.msra.mxu0 %v3794
  %v3796 = vand.u32 %v121, 4294901760
  %v3797 = vsub.f32 %v121, %v3796
  %v3798 = vand.u32 %v3797, 4294901760
  %v3799 = vsub.f32 %v3797, %v3798
  %v3800 = vand.u32 %v3799, 4294901760
  %3801 = vmatprep.subr.mxu0 %v3800
  %v3802 = vand.u32 %v120, 4294901760
  %v3803 = vsub.f32 %v120, %v3802
  %v3804 = vand.u32 %v3803, 4294901760
  %v3805 = vsub.f32 %v3803, %v3804
  %v3806 = vand.u32 %v3805, 4294901760
  %3807 = vmatpush1.msra.mxu0 %v3806
  %v3808 = vand.u32 %v115, 4294901760
  %v3809 = vsub.f32 %v115, %v3808
  %v3810 = vand.u32 %v3809, 4294901760
  %v3811 = vsub.f32 %v3809, %v3810
  %v3812 = vand.u32 %v3811, 4294901760
  %3813 = vmatprep.subr.mxu0 %v3812
  %v3814 = vand.u32 %v114, 4294901760
  %v3815 = vsub.f32 %v114, %v3814
  %v3816 = vand.u32 %v3815, 4294901760
  %v3817 = vsub.f32 %v3815, %v3816
  %v3818 = vand.u32 %v3817, 4294901760
  %3819 = vmatpush1.msra.mxu0 %v3818
  %v3820 = vand.u32 %v109, 4294901760
  %v3821 = vsub.f32 %v109, %v3820
  %v3822 = vand.u32 %v3821, 4294901760
  %v3823 = vsub.f32 %v3821, %v3822
  %v3824 = vand.u32 %v3823, 4294901760
  %3825 = vmatprep.subr.mxu0 %v3824
  %v3826 = vand.u32 %v108, 4294901760
  %v3827 = vsub.f32 %v108, %v3826
  %v3828 = vand.u32 %v3827, 4294901760
  %v3829 = vsub.f32 %v3827, %v3828
  %v3830 = vand.u32 %v3829, 4294901760
  %3831 = vmatpush1.msra.mxu0 %v3830
  %3832 = vmatprep.subr.mxu0 0.0
  %3833 = vmatpush2.msra.mxu0 0.0
  %3834 = vmatprep.subr.mxu0 0.0
  %3835 = vmatpush2.msra.mxu0 0.0
  %3836 = vmatprep.subr.mxu0 0.0
  %3837 = vmatpush2.msra.mxu0 0.0
  %3838 = vmatprep.subr.mxu0 0.0
  %3839 = vmatpush2.msra.mxu0 0.0
  %3840 = vmatprep.subr.mxu0 0.0
  %3841 = vmatpush2.msra.mxu0 0.0
  %3842 = vmatprep.subr.mxu0 0.0
  %3843 = vmatpush2.msra.mxu0 0.0
  %3844 = vmatprep.subr.mxu0 0.0
  %3845 = vmatpush2.msra.mxu0 0.0
  %3846 = vmatprep.subr.mxu0 0.0
  %3847 = vmatpush2.msra.mxu0 0.0
  %3848 = vmatprep.subr.mxu0 0.0
  %3849 = vmatpush2.msra.mxu0 0.0
  %3850 = vmatprep.subr.mxu0 0.0
  %3851 = vmatpush2.msra.mxu0 0.0
  %3852 = vmatprep.subr.mxu0 0.0
  %3853 = vmatpush2.msra.mxu0 0.0
  %3854 = vmatprep.subr.mxu0 0.0
  %3855 = vmatpush2.msra.mxu0 0.0
  %3856 = vmatprep.subr.mxu0 0.0
  %3857 = vmatpush2.msra.mxu0 0.0
  %3858 = vmatprep.subr.mxu0 0.0
  %3859 = vmatpush2.msra.mxu0 0.0
  %3860 = vmatprep.subr.mxu0 0.0
  %3861 = vmatpush2.msra.mxu0 0.0
  %3862 = vmatprep.subr.mxu0 0.0
  %3863 = vmatpush2.msra.mxu0 0.0
  %3864 = vmatprep.mubr.f32.mxu0 0.0
  %v3865 = vand.u32 %v2252, 4294901760
  %3866 = vmatmul.mubr.f32.gmra.mxu0 %v3865
  %v3867 = vpop.f32.mrf.mxu0
  %v3868 = vadd.f32 %v3723, %v3867
  %v3869 = vpop.f32.mrf.mxu0
  %v3870 = vadd.f32 %v3725, %v3869
  %3871 = vmatprep.mubr.f32.mxu0 0.0
  %v3872 = vand.u32 %v2255, 4294901760
  %3873 = vmatmul.mubr.f32.gmra.mxu0 %v3872
  %v3874 = vpop.f32.mrf.mxu0
  %v3875 = vadd.f32 %v3734, %v3874
  %v3876 = vpop.f32.mrf.mxu0
  %v3877 = vadd.f32 %v3736, %v3876
  %3878 = vmatprep.mubr.f32.mxu0 0.0
  %v3879 = vand.u32 %v2258, 4294901760
  %3880 = vmatmul.mubr.f32.gmra.mxu0 %v3879
  %v3881 = vpop.f32.mrf.mxu0
  %v3882 = vadd.f32 %v3745, %v3881
  %v3883 = vpop.f32.mrf.mxu0
  %v3884 = vadd.f32 %v3747, %v3883
  %3885 = vmatprep.mubr.f32.mxu0 0.0
  %v3886 = vand.u32 %v2261, 4294901760
  %3887 = vmatmul.mubr.f32.gmra.mxu0 %v3886
  %v3888 = vpop.f32.mrf.mxu0
  %v3889 = vadd.f32 %v3756, %v3888
  %v3890 = vpop.f32.mrf.mxu0
  %v3891 = vadd.f32 %v3758, %v3890
  %3892 = vdwg.mxu0
  %3893 = vmatprep.subr.mxu0 0.0
  %3894 = vmatpush1.msra.mxu0 0.0
  %3895 = vmatprep.subr.mxu0 0.0
  %3896 = vmatpush1.msra.mxu0 0.0
  %3897 = vmatprep.subr.mxu0 0.0
  %3898 = vmatpush1.msra.mxu0 0.0
  %3899 = vmatprep.subr.mxu0 0.0
  %3900 = vmatpush1.msra.mxu0 0.0
  %3901 = vmatprep.subr.mxu0 0.0
  %3902 = vmatpush1.msra.mxu0 0.0
  %3903 = vmatprep.subr.mxu0 0.0
  %3904 = vmatpush1.msra.mxu0 0.0
  %3905 = vmatprep.subr.mxu0 0.0
  %3906 = vmatpush1.msra.mxu0 0.0
  %3907 = vmatprep.subr.mxu0 0.0
  %3908 = vmatpush1.msra.mxu0 0.0
  %3909 = vmatprep.subr.mxu0 0.0
  %3910 = vmatpush1.msra.mxu0 0.0
  %3911 = vmatprep.subr.mxu0 0.0
  %3912 = vmatpush1.msra.mxu0 0.0
  %3913 = vmatprep.subr.mxu0 0.0
  %3914 = vmatpush1.msra.mxu0 0.0
  %3915 = vmatprep.subr.mxu0 0.0
  %3916 = vmatpush1.msra.mxu0 0.0
  %v3917 = vand.u32 %v174, 4294901760
  %v3918 = vsub.f32 %v174, %v3917
  %3919 = vmatprep.subr.mxu0 %v3918
  %v3920 = vand.u32 %v171, 4294901760
  %v3921 = vsub.f32 %v171, %v3920
  %3922 = vmatpush1.msra.mxu0 %v3921
  %v3923 = vand.u32 %v121, 4294901760
  %v3924 = vsub.f32 %v121, %v3923
  %3925 = vmatprep.subr.mxu0 %v3924
  %v3926 = vand.u32 %v120, 4294901760
  %v3927 = vsub.f32 %v120, %v3926
  %3928 = vmatpush1.msra.mxu0 %v3927
  %v3929 = vand.u32 %v115, 4294901760
  %v3930 = vsub.f32 %v115, %v3929
  %3931 = vmatprep.subr.mxu0 %v3930
  %v3932 = vand.u32 %v114, 4294901760
  %v3933 = vsub.f32 %v114, %v3932
  %3934 = vmatpush1.msra.mxu0 %v3933
  %v3935 = vand.u32 %v109, 4294901760
  %v3936 = vsub.f32 %v109, %v3935
  %3937 = vmatprep.subr.mxu0 %v3936
  %v3938 = vand.u32 %v108, 4294901760
  %v3939 = vsub.f32 %v108, %v3938
  %3940 = vmatpush1.msra.mxu0 %v3939
  %3941 = vmatprep.subr.mxu0 0.0
  %3942 = vmatpush2.msra.mxu0 0.0
  %3943 = vmatprep.subr.mxu0 0.0
  %3944 = vmatpush2.msra.mxu0 0.0
  %3945 = vmatprep.subr.mxu0 0.0
  %3946 = vmatpush2.msra.mxu0 0.0
  %3947 = vmatprep.subr.mxu0 0.0
  %3948 = vmatpush2.msra.mxu0 0.0
  %3949 = vmatprep.subr.mxu0 0.0
  %3950 = vmatpush2.msra.mxu0 0.0
  %3951 = vmatprep.subr.mxu0 0.0
  %3952 = vmatpush2.msra.mxu0 0.0
  %3953 = vmatprep.subr.mxu0 0.0
  %3954 = vmatpush2.msra.mxu0 0.0
  %3955 = vmatprep.subr.mxu0 0.0
  %3956 = vmatpush2.msra.mxu0 0.0
  %3957 = vmatprep.subr.mxu0 0.0
  %3958 = vmatpush2.msra.mxu0 0.0
  %3959 = vmatprep.subr.mxu0 0.0
  %3960 = vmatpush2.msra.mxu0 0.0
  %3961 = vmatprep.subr.mxu0 0.0
  %3962 = vmatpush2.msra.mxu0 0.0
  %3963 = vmatprep.subr.mxu0 0.0
  %3964 = vmatpush2.msra.mxu0 0.0
  %3965 = vmatprep.subr.mxu0 0.0
  %3966 = vmatpush2.msra.mxu0 0.0
  %3967 = vmatprep.subr.mxu0 0.0
  %3968 = vmatpush2.msra.mxu0 0.0
  %3969 = vmatprep.subr.mxu0 0.0
  %3970 = vmatpush2.msra.mxu0 0.0
  %3971 = vmatprep.subr.mxu0 0.0
  %3972 = vmatpush2.msra.mxu0 0.0
  %3973 = vmatprep.mubr.f32.mxu0 0.0
  %v3974 = vand.u32 %v2252, 4294901760
  %v3975 = vsub.f32 %v2252, %v3974
  %3976 = vmatmul.mubr.f32.gmra.mxu0 %v3975
  %v3977 = vpop.f32.mrf.mxu0
  %v3978 = vadd.f32 %v3868, %v3977
  %v3979 = vpop.f32.mrf.mxu0
  %v3980 = vadd.f32 %v3870, %v3979
  %3981 = vmatprep.mubr.f32.mxu0 0.0
  %v3982 = vand.u32 %v2255, 4294901760
  %v3983 = vsub.f32 %v2255, %v3982
  %3984 = vmatmul.mubr.f32.gmra.mxu0 %v3983
  %v3985 = vpop.f32.mrf.mxu0
  %v3986 = vadd.f32 %v3875, %v3985
  %v3987 = vpop.f32.mrf.mxu0
  %v3988 = vadd.f32 %v3877, %v3987
  %3989 = vmatprep.mubr.f32.mxu0 0.0
  %v3990 = vand.u32 %v2258, 4294901760
  %v3991 = vsub.f32 %v2258, %v3990
  %3992 = vmatmul.mubr.f32.gmra.mxu0 %v3991
  %v3993 = vpop.f32.mrf.mxu0
  %v3994 = vadd.f32 %v3882, %v3993
  %v3995 = vpop.f32.mrf.mxu0
  %v3996 = vadd.f32 %v3884, %v3995
  %3997 = vmatprep.mubr.f32.mxu0 0.0
  %v3998 = vand.u32 %v2261, 4294901760
  %v3999 = vsub.f32 %v2261, %v3998
  %4000 = vmatmul.mubr.f32.gmra.mxu0 %v3999
  %v4001 = vpop.f32.mrf.mxu0
  %v4002 = vadd.f32 %v3889, %v4001
  %v4003 = vpop.f32.mrf.mxu0
  %v4004 = vadd.f32 %v3891, %v4003
  %4005 = vdwg.mxu0
  %4006 = vmatprep.subr.mxu0 0.0
  %4007 = vmatpush1.msra.mxu0 0.0
  %4008 = vmatprep.subr.mxu0 0.0
  %4009 = vmatpush1.msra.mxu0 0.0
  %4010 = vmatprep.subr.mxu0 0.0
  %4011 = vmatpush1.msra.mxu0 0.0
  %4012 = vmatprep.subr.mxu0 0.0
  %4013 = vmatpush1.msra.mxu0 0.0
  %4014 = vmatprep.subr.mxu0 0.0
  %4015 = vmatpush1.msra.mxu0 0.0
  %4016 = vmatprep.subr.mxu0 0.0
  %4017 = vmatpush1.msra.mxu0 0.0
  %4018 = vmatprep.subr.mxu0 0.0
  %4019 = vmatpush1.msra.mxu0 0.0
  %4020 = vmatprep.subr.mxu0 0.0
  %4021 = vmatpush1.msra.mxu0 0.0
  %4022 = vmatprep.subr.mxu0 0.0
  %4023 = vmatpush1.msra.mxu0 0.0
  %4024 = vmatprep.subr.mxu0 0.0
  %4025 = vmatpush1.msra.mxu0 0.0
  %4026 = vmatprep.subr.mxu0 0.0
  %4027 = vmatpush1.msra.mxu0 0.0
  %4028 = vmatprep.subr.mxu0 0.0
  %4029 = vmatpush1.msra.mxu0 0.0
  %v4030 = vand.u32 %v174, 4294901760
  %4031 = vmatprep.subr.mxu0 %v4030
  %v4032 = vand.u32 %v171, 4294901760
  %4033 = vmatpush1.msra.mxu0 %v4032
  %v4034 = vand.u32 %v121, 4294901760
  %4035 = vmatprep.subr.mxu0 %v4034
  %v4036 = vand.u32 %v120, 4294901760
  %4037 = vmatpush1.msra.mxu0 %v4036
  %v4038 = vand.u32 %v115, 4294901760
  %4039 = vmatprep.subr.mxu0 %v4038
  %v4040 = vand.u32 %v114, 4294901760
  %4041 = vmatpush1.msra.mxu0 %v4040
  %v4042 = vand.u32 %v109, 4294901760
  %4043 = vmatprep.subr.mxu0 %v4042
  %v4044 = vand.u32 %v108, 4294901760
  %4045 = vmatpush1.msra.mxu0 %v4044
  %4046 = vmatprep.subr.mxu0 0.0
  %4047 = vmatpush2.msra.mxu0 0.0
  %4048 = vmatprep.subr.mxu0 0.0
  %4049 = vmatpush2.msra.mxu0 0.0
  %4050 = vmatprep.subr.mxu0 0.0
  %4051 = vmatpush2.msra.mxu0 0.0
  %4052 = vmatprep.subr.mxu0 0.0
  %4053 = vmatpush2.msra.mxu0 0.0
  %4054 = vmatprep.subr.mxu0 0.0
  %4055 = vmatpush2.msra.mxu0 0.0
  %4056 = vmatprep.subr.mxu0 0.0
  %4057 = vmatpush2.msra.mxu0 0.0
  %4058 = vmatprep.subr.mxu0 0.0
  %4059 = vmatpush2.msra.mxu0 0.0
  %4060 = vmatprep.subr.mxu0 0.0
  %4061 = vmatpush2.msra.mxu0 0.0
  %4062 = vmatprep.subr.mxu0 0.0
  %4063 = vmatpush2.msra.mxu0 0.0
  %4064 = vmatprep.subr.mxu0 0.0
  %4065 = vmatpush2.msra.mxu0 0.0
  %4066 = vmatprep.subr.mxu0 0.0
  %4067 = vmatpush2.msra.mxu0 0.0
  %4068 = vmatprep.subr.mxu0 0.0
  %4069 = vmatpush2.msra.mxu0 0.0
  %4070 = vmatprep.subr.mxu0 0.0
  %4071 = vmatpush2.msra.mxu0 0.0
  %4072 = vmatprep.subr.mxu0 0.0
  %4073 = vmatpush2.msra.mxu0 0.0
  %4074 = vmatprep.subr.mxu0 0.0
  %4075 = vmatpush2.msra.mxu0 0.0
  %4076 = vmatprep.subr.mxu0 0.0
  %4077 = vmatpush2.msra.mxu0 0.0
  %4078 = vmatprep.mubr.f32.mxu0 0.0
  %v4079 = vand.u32 %v2252, 4294901760
  %v4080 = vsub.f32 %v2252, %v4079
  %v4081 = vand.u32 %v4080, 4294901760
  %4082 = vmatmul.mubr.f32.gmra.mxu0 %v4081
  %v4083 = vpop.f32.mrf.mxu0
  %v4084 = vadd.f32 %v3978, %v4083
  %v4085 = vpop.f32.mrf.mxu0
  %v4086 = vadd.f32 %v3980, %v4085
  %4087 = vmatprep.mubr.f32.mxu0 0.0
  %v4088 = vand.u32 %v2255, 4294901760
  %v4089 = vsub.f32 %v2255, %v4088
  %v4090 = vand.u32 %v4089, 4294901760
  %4091 = vmatmul.mubr.f32.gmra.mxu0 %v4090
  %v4092 = vpop.f32.mrf.mxu0
  %v4093 = vadd.f32 %v3986, %v4092
  %v4094 = vpop.f32.mrf.mxu0
  %v4095 = vadd.f32 %v3988, %v4094
  %4096 = vmatprep.mubr.f32.mxu0 0.0
  %v4097 = vand.u32 %v2258, 4294901760
  %v4098 = vsub.f32 %v2258, %v4097
  %v4099 = vand.u32 %v4098, 4294901760
  %4100 = vmatmul.mubr.f32.gmra.mxu0 %v4099
  %v4101 = vpop.f32.mrf.mxu0
  %v4102 = vadd.f32 %v3994, %v4101
  %v4103 = vpop.f32.mrf.mxu0
  %v4104 = vadd.f32 %v3996, %v4103
  %4105 = vmatprep.mubr.f32.mxu0 0.0
  %v4106 = vand.u32 %v2261, 4294901760
  %v4107 = vsub.f32 %v2261, %v4106
  %v4108 = vand.u32 %v4107, 4294901760
  %4109 = vmatmul.mubr.f32.gmra.mxu0 %v4108
  %v4110 = vpop.f32.mrf.mxu0
  %v4111 = vadd.f32 %v4002, %v4110
  %v4112 = vpop.f32.mrf.mxu0
  %v4113 = vadd.f32 %v4004, %v4112
  %4114 = vdwg.mxu0
  %4115 = vmatprep.subr.mxu0 0.0
  %4116 = vmatpush1.msra.mxu0 0.0
  %4117 = vmatprep.subr.mxu0 0.0
  %4118 = vmatpush1.msra.mxu0 0.0
  %4119 = vmatprep.subr.mxu0 0.0
  %4120 = vmatpush1.msra.mxu0 0.0
  %4121 = vmatprep.subr.mxu0 0.0
  %4122 = vmatpush1.msra.mxu0 0.0
  %4123 = vmatprep.subr.mxu0 0.0
  %4124 = vmatpush1.msra.mxu0 0.0
  %4125 = vmatprep.subr.mxu0 0.0
  %4126 = vmatpush1.msra.mxu0 0.0
  %4127 = vmatprep.subr.mxu0 0.0
  %4128 = vmatpush1.msra.mxu0 0.0
  %4129 = vmatprep.subr.mxu0 0.0
  %4130 = vmatpush1.msra.mxu0 0.0
  %4131 = vmatprep.subr.mxu0 0.0
  %4132 = vmatpush1.msra.mxu0 0.0
  %4133 = vmatprep.subr.mxu0 0.0
  %4134 = vmatpush1.msra.mxu0 0.0
  %4135 = vmatprep.subr.mxu0 0.0
  %4136 = vmatpush1.msra.mxu0 0.0
  %4137 = vmatprep.subr.mxu0 0.0
  %4138 = vmatpush1.msra.mxu0 0.0
  %v4139 = vand.u32 %v174, 4294901760
  %v4140 = vsub.f32 %v174, %v4139
  %v4141 = vand.u32 %v4140, 4294901760
  %4142 = vmatprep.subr.mxu0 %v4141
  %v4143 = vand.u32 %v171, 4294901760
  %v4144 = vsub.f32 %v171, %v4143
  %v4145 = vand.u32 %v4144, 4294901760
  %4146 = vmatpush1.msra.mxu0 %v4145
  %v4147 = vand.u32 %v121, 4294901760
  %v4148 = vsub.f32 %v121, %v4147
  %v4149 = vand.u32 %v4148, 4294901760
  %4150 = vmatprep.subr.mxu0 %v4149
  %v4151 = vand.u32 %v120, 4294901760
  %v4152 = vsub.f32 %v120, %v4151
  %v4153 = vand.u32 %v4152, 4294901760
  %4154 = vmatpush1.msra.mxu0 %v4153
  %v4155 = vand.u32 %v115, 4294901760
  %v4156 = vsub.f32 %v115, %v4155
  %v4157 = vand.u32 %v4156, 4294901760
  %4158 = vmatprep.subr.mxu0 %v4157
  %v4159 = vand.u32 %v114, 4294901760
  %v4160 = vsub.f32 %v114, %v4159
  %v4161 = vand.u32 %v4160, 4294901760
  %4162 = vmatpush1.msra.mxu0 %v4161
  %v4163 = vand.u32 %v109, 4294901760
  %v4164 = vsub.f32 %v109, %v4163
  %v4165 = vand.u32 %v4164, 4294901760
  %4166 = vmatprep.subr.mxu0 %v4165
  %v4167 = vand.u32 %v108, 4294901760
  %v4168 = vsub.f32 %v108, %v4167
  %v4169 = vand.u32 %v4168, 4294901760
  %4170 = vmatpush1.msra.mxu0 %v4169
  %4171 = vmatprep.subr.mxu0 0.0
  %4172 = vmatpush2.msra.mxu0 0.0
  %4173 = vmatprep.subr.mxu0 0.0
  %4174 = vmatpush2.msra.mxu0 0.0
  %4175 = vmatprep.subr.mxu0 0.0
  %4176 = vmatpush2.msra.mxu0 0.0
  %4177 = vmatprep.subr.mxu0 0.0
  %4178 = vmatpush2.msra.mxu0 0.0
  %4179 = vmatprep.subr.mxu0 0.0
  %4180 = vmatpush2.msra.mxu0 0.0
  %4181 = vmatprep.subr.mxu0 0.0
  %4182 = vmatpush2.msra.mxu0 0.0
  %4183 = vmatprep.subr.mxu0 0.0
  %4184 = vmatpush2.msra.mxu0 0.0
  %4185 = vmatprep.subr.mxu0 0.0
  %4186 = vmatpush2.msra.mxu0 0.0
  %4187 = vmatprep.subr.mxu0 0.0
  %4188 = vmatpush2.msra.mxu0 0.0
  %4189 = vmatprep.subr.mxu0 0.0
  %4190 = vmatpush2.msra.mxu0 0.0
  %4191 = vmatprep.subr.mxu0 0.0
  %4192 = vmatpush2.msra.mxu0 0.0
  %4193 = vmatprep.subr.mxu0 0.0
  %4194 = vmatpush2.msra.mxu0 0.0
  %4195 = vmatprep.subr.mxu0 0.0
  %4196 = vmatpush2.msra.mxu0 0.0
  %4197 = vmatprep.subr.mxu0 0.0
  %4198 = vmatpush2.msra.mxu0 0.0
  %4199 = vmatprep.subr.mxu0 0.0
  %4200 = vmatpush2.msra.mxu0 0.0
  %4201 = vmatprep.subr.mxu0 0.0
  %4202 = vmatpush2.msra.mxu0 0.0
  %4203 = vmatprep.mubr.f32.mxu0 0.0
  %v4204 = vand.u32 %v2252, 4294901760
  %4205 = vmatmul.mubr.f32.gmra.mxu0 %v4204
  %v4206 = vpop.f32.mrf.mxu0
  %v4207 = vadd.f32 %v4084, %v4206
  %v4208 = vpop.f32.mrf.mxu0
  %v4209 = vadd.f32 %v4086, %v4208
  %4210 = vmatprep.mubr.f32.mxu0 0.0
  %v4211 = vand.u32 %v2255, 4294901760
  %4212 = vmatmul.mubr.f32.gmra.mxu0 %v4211
  %v4213 = vpop.f32.mrf.mxu0
  %v4214 = vadd.f32 %v4093, %v4213
  %v4215 = vpop.f32.mrf.mxu0
  %v4216 = vadd.f32 %v4095, %v4215
  %4217 = vmatprep.mubr.f32.mxu0 0.0
  %v4218 = vand.u32 %v2258, 4294901760
  %4219 = vmatmul.mubr.f32.gmra.mxu0 %v4218
  %v4220 = vpop.f32.mrf.mxu0
  %v4221 = vadd.f32 %v4102, %v4220
  %v4222 = vpop.f32.mrf.mxu0
  %v4223 = vadd.f32 %v4104, %v4222
  %4224 = vmatprep.mubr.f32.mxu0 0.0
  %v4225 = vand.u32 %v2261, 4294901760
  %4226 = vmatmul.mubr.f32.gmra.mxu0 %v4225
  %v4227 = vpop.f32.mrf.mxu0
  %v4228 = vadd.f32 %v4111, %v4227
  %v4229 = vpop.f32.mrf.mxu0
  %v4230 = vadd.f32 %v4113, %v4229
  %4231 = vdwg.mxu0
  %4232 = vmatprep.subr.mxu0 0.0
  %4233 = vmatpush1.msra.mxu0 0.0
  %4234 = vmatprep.subr.mxu0 0.0
  %4235 = vmatpush1.msra.mxu0 0.0
  %4236 = vmatprep.subr.mxu0 0.0
  %4237 = vmatpush1.msra.mxu0 0.0
  %4238 = vmatprep.subr.mxu0 0.0
  %4239 = vmatpush1.msra.mxu0 0.0
  %4240 = vmatprep.subr.mxu0 0.0
  %4241 = vmatpush1.msra.mxu0 0.0
  %4242 = vmatprep.subr.mxu0 0.0
  %4243 = vmatpush1.msra.mxu0 0.0
  %4244 = vmatprep.subr.mxu0 0.0
  %4245 = vmatpush1.msra.mxu0 0.0
  %4246 = vmatprep.subr.mxu0 0.0
  %4247 = vmatpush1.msra.mxu0 0.0
  %4248 = vmatprep.subr.mxu0 0.0
  %4249 = vmatpush1.msra.mxu0 0.0
  %4250 = vmatprep.subr.mxu0 0.0
  %4251 = vmatpush1.msra.mxu0 0.0
  %4252 = vmatprep.subr.mxu0 0.0
  %4253 = vmatpush1.msra.mxu0 0.0
  %4254 = vmatprep.subr.mxu0 0.0
  %4255 = vmatpush1.msra.mxu0 0.0
  %v4256 = vand.u32 %v174, 4294901760
  %4257 = vmatprep.subr.mxu0 %v4256
  %v4258 = vand.u32 %v171, 4294901760
  %4259 = vmatpush1.msra.mxu0 %v4258
  %v4260 = vand.u32 %v121, 4294901760
  %4261 = vmatprep.subr.mxu0 %v4260
  %v4262 = vand.u32 %v120, 4294901760
  %4263 = vmatpush1.msra.mxu0 %v4262
  %v4264 = vand.u32 %v115, 4294901760
  %4265 = vmatprep.subr.mxu0 %v4264
  %v4266 = vand.u32 %v114, 4294901760
  %4267 = vmatpush1.msra.mxu0 %v4266
  %v4268 = vand.u32 %v109, 4294901760
  %4269 = vmatprep.subr.mxu0 %v4268
  %v4270 = vand.u32 %v108, 4294901760
  %4271 = vmatpush1.msra.mxu0 %v4270
  %4272 = vmatprep.subr.mxu0 0.0
  %4273 = vmatpush2.msra.mxu0 0.0
  %4274 = vmatprep.subr.mxu0 0.0
  %4275 = vmatpush2.msra.mxu0 0.0
  %4276 = vmatprep.subr.mxu0 0.0
  %4277 = vmatpush2.msra.mxu0 0.0
  %4278 = vmatprep.subr.mxu0 0.0
  %4279 = vmatpush2.msra.mxu0 0.0
  %4280 = vmatprep.subr.mxu0 0.0
  %4281 = vmatpush2.msra.mxu0 0.0
  %4282 = vmatprep.subr.mxu0 0.0
  %4283 = vmatpush2.msra.mxu0 0.0
  %4284 = vmatprep.subr.mxu0 0.0
  %4285 = vmatpush2.msra.mxu0 0.0
  %4286 = vmatprep.subr.mxu0 0.0
  %4287 = vmatpush2.msra.mxu0 0.0
  %4288 = vmatprep.subr.mxu0 0.0
  %4289 = vmatpush2.msra.mxu0 0.0
  %4290 = vmatprep.subr.mxu0 0.0
  %4291 = vmatpush2.msra.mxu0 0.0
  %4292 = vmatprep.subr.mxu0 0.0
  %4293 = vmatpush2.msra.mxu0 0.0
  %4294 = vmatprep.subr.mxu0 0.0
  %4295 = vmatpush2.msra.mxu0 0.0
  %4296 = vmatprep.subr.mxu0 0.0
  %4297 = vmatpush2.msra.mxu0 0.0
  %4298 = vmatprep.subr.mxu0 0.0
  %4299 = vmatpush2.msra.mxu0 0.0
  %4300 = vmatprep.subr.mxu0 0.0
  %4301 = vmatpush2.msra.mxu0 0.0
  %4302 = vmatprep.subr.mxu0 0.0
  %4303 = vmatpush2.msra.mxu0 0.0
  %4304 = vmatprep.mubr.f32.mxu0 0.0
  %v4305 = vand.u32 %v2252, 4294901760
  %4306 = vmatmul.mubr.f32.gmra.mxu0 %v4305
  %v4307 = vpop.f32.mrf.mxu0
  %v4308 = vadd.f32 %v4207, %v4307
  %v4309 = vpop.f32.mrf.mxu0
  %v4310 = vadd.f32 %v4209, %v4309
  %4311 = vmatprep.mubr.f32.mxu0 0.0
  %v4312 = vand.u32 %v2255, 4294901760
  %4313 = vmatmul.mubr.f32.gmra.mxu0 %v4312
  %v4314 = vpop.f32.mrf.mxu0
  %v4315 = vadd.f32 %v4214, %v4314
  %v4316 = vpop.f32.mrf.mxu0
  %v4317 = vadd.f32 %v4216, %v4316
  %4318 = vmatprep.mubr.f32.mxu0 0.0
  %v4319 = vand.u32 %v2258, 4294901760
  %4320 = vmatmul.mubr.f32.gmra.mxu0 %v4319
  %v4321 = vpop.f32.mrf.mxu0
  %v4322 = vadd.f32 %v4221, %v4321
  %v4323 = vpop.f32.mrf.mxu0
  %v4324 = vadd.f32 %v4223, %v4323
  %4325 = vmatprep.mubr.f32.mxu0 0.0
  %v4326 = vand.u32 %v2261, 4294901760
  %4327 = vmatmul.mubr.f32.gmra.mxu0 %v4326
  %v4328 = vpop.f32.mrf.mxu0
  %v4329 = vadd.f32 %v4228, %v4328
  %v4330 = vpop.f32.mrf.mxu0
  %v4331 = vadd.f32 %v4230, %v4330
  %4332 = vdwg.mxu0
  %s4333 = scalar_lea.vmem %s0, 64
  %v4334 = vld [vmem:[%s4333] sm:$0xff]
  %v4335 = vld [vmem:[%s4333 + $0x8] sm:$0xff]
  %v4336 = vld [vmem:[%s4333 + $0x10] sm:$0xff]
  %v4337 = vld [vmem:[%s4333 + $0x18] sm:$0x7f]
  %v4339 = vsel %vm144, %v4334, 0
  %v4342 = vsel %vm144, %v4335, 0
  %v4345 = vsel %vm144, %v4336, 0
  %v4348 = vsel %vm144, %v4337, 0
  %4350 = vmatprep.subr.mxu0 0.0
  %4351 = vmatpush1.msra.mxu0 0.0
  %4352 = vmatprep.subr.mxu0 0.0
  %4353 = vmatpush1.msra.mxu0 0.0
  %4354 = vmatprep.subr.mxu0 0.0
  %4355 = vmatpush1.msra.mxu0 0.0
  %4356 = vmatprep.subr.mxu0 0.0
  %4357 = vmatpush1.msra.mxu0 0.0
  %4358 = vmatprep.subr.mxu0 0.0
  %4359 = vmatpush1.msra.mxu0 0.0
  %4360 = vmatprep.subr.mxu0 0.0
  %4361 = vmatpush1.msra.mxu0 0.0
  %4362 = vmatprep.subr.mxu0 0.0
  %4363 = vmatpush1.msra.mxu0 0.0
  %4364 = vmatprep.subr.mxu0 0.0
  %4365 = vmatpush1.msra.mxu0 0.0
  %4366 = vmatprep.subr.mxu0 0.0
  %4367 = vmatpush1.msra.mxu0 0.0
  %4368 = vmatprep.subr.mxu0 0.0
  %4369 = vmatpush1.msra.mxu0 0.0
  %4370 = vmatprep.subr.mxu0 0.0
  %4371 = vmatpush1.msra.mxu0 0.0
  %4372 = vmatprep.subr.mxu0 0.0
  %4373 = vmatpush1.msra.mxu0 0.0
  %v4374 = vand.u32 %v162, 4294901760
  %4375 = vmatprep.subr.mxu0 %v4374
  %v4376 = vand.u32 %v159, 4294901760
  %4377 = vmatpush1.msra.mxu0 %v4376
  %v4378 = vand.u32 %v117, 4294901760
  %4379 = vmatprep.subr.mxu0 %v4378
  %v4380 = vand.u32 %v116, 4294901760
  %4381 = vmatpush1.msra.mxu0 %v4380
  %v4382 = vand.u32 %v111, 4294901760
  %4383 = vmatprep.subr.mxu0 %v4382
  %v4384 = vand.u32 %v110, 4294901760
  %4385 = vmatpush1.msra.mxu0 %v4384
  %v4386 = vand.u32 %v105, 4294901760
  %4387 = vmatprep.subr.mxu0 %v4386
  %v4388 = vand.u32 %v104, 4294901760
  %4389 = vmatpush1.msra.mxu0 %v4388
  %4390 = vmatprep.subr.mxu0 0.0
  %4391 = vmatpush2.msra.mxu0 0.0
  %4392 = vmatprep.subr.mxu0 0.0
  %4393 = vmatpush2.msra.mxu0 0.0
  %4394 = vmatprep.subr.mxu0 0.0
  %4395 = vmatpush2.msra.mxu0 0.0
  %4396 = vmatprep.subr.mxu0 0.0
  %4397 = vmatpush2.msra.mxu0 0.0
  %4398 = vmatprep.subr.mxu0 0.0
  %4399 = vmatpush2.msra.mxu0 0.0
  %4400 = vmatprep.subr.mxu0 0.0
  %4401 = vmatpush2.msra.mxu0 0.0
  %4402 = vmatprep.subr.mxu0 0.0
  %4403 = vmatpush2.msra.mxu0 0.0
  %4404 = vmatprep.subr.mxu0 0.0
  %4405 = vmatpush2.msra.mxu0 0.0
  %4406 = vmatprep.subr.mxu0 0.0
  %4407 = vmatpush2.msra.mxu0 0.0
  %4408 = vmatprep.subr.mxu0 0.0
  %4409 = vmatpush2.msra.mxu0 0.0
  %4410 = vmatprep.subr.mxu0 0.0
  %4411 = vmatpush2.msra.mxu0 0.0
  %4412 = vmatprep.subr.mxu0 0.0
  %4413 = vmatpush2.msra.mxu0 0.0
  %4414 = vmatprep.subr.mxu0 0.0
  %4415 = vmatpush2.msra.mxu0 0.0
  %4416 = vmatprep.subr.mxu0 0.0
  %4417 = vmatpush2.msra.mxu0 0.0
  %4418 = vmatprep.subr.mxu0 0.0
  %4419 = vmatpush2.msra.mxu0 0.0
  %4420 = vmatprep.subr.mxu0 0.0
  %4421 = vmatpush2.msra.mxu0 0.0
  %4422 = vmatprep.mubr.f32.mxu0 0.0
  %v4423 = vand.u32 %v4339, 4294901760
  %v4424 = vsub.f32 %v4339, %v4423
  %v4425 = vand.u32 %v4424, 4294901760
  %v4426 = vsub.f32 %v4424, %v4425
  %v4427 = vand.u32 %v4426, 4294901760
  %4428 = vmatmul.mubr.f32.gmra.mxu0 %v4427
  %v4429 = vpop.f32.mrf.mxu0
  %v4430 = vadd.f32 0.0, %v4429
  %v4431 = vpop.f32.mrf.mxu0
  %v4432 = vadd.f32 0.0, %v4431
  %4433 = vmatprep.mubr.f32.mxu0 0.0
  %v4434 = vand.u32 %v4342, 4294901760
  %v4435 = vsub.f32 %v4342, %v4434
  %v4436 = vand.u32 %v4435, 4294901760
  %v4437 = vsub.f32 %v4435, %v4436
  %v4438 = vand.u32 %v4437, 4294901760
  %4439 = vmatmul.mubr.f32.gmra.mxu0 %v4438
  %v4440 = vpop.f32.mrf.mxu0
  %v4441 = vadd.f32 0.0, %v4440
  %v4442 = vpop.f32.mrf.mxu0
  %v4443 = vadd.f32 0.0, %v4442
  %4444 = vmatprep.mubr.f32.mxu0 0.0
  %v4445 = vand.u32 %v4345, 4294901760
  %v4446 = vsub.f32 %v4345, %v4445
  %v4447 = vand.u32 %v4446, 4294901760
  %v4448 = vsub.f32 %v4446, %v4447
  %v4449 = vand.u32 %v4448, 4294901760
  %4450 = vmatmul.mubr.f32.gmra.mxu0 %v4449
  %v4451 = vpop.f32.mrf.mxu0
  %v4452 = vadd.f32 0.0, %v4451
  %v4453 = vpop.f32.mrf.mxu0
  %v4454 = vadd.f32 0.0, %v4453
  %4455 = vmatprep.mubr.f32.mxu0 0.0
  %v4456 = vand.u32 %v4348, 4294901760
  %v4457 = vsub.f32 %v4348, %v4456
  %v4458 = vand.u32 %v4457, 4294901760
  %v4459 = vsub.f32 %v4457, %v4458
  %v4460 = vand.u32 %v4459, 4294901760
  %4461 = vmatmul.mubr.f32.gmra.mxu0 %v4460
  %v4462 = vpop.f32.mrf.mxu0
  %v4463 = vadd.f32 0.0, %v4462
  %v4464 = vpop.f32.mrf.mxu0
  %v4465 = vadd.f32 0.0, %v4464
  %4466 = vdwg.mxu0
  %4467 = vmatprep.subr.mxu0 0.0
  %4468 = vmatpush1.msra.mxu0 0.0
  %4469 = vmatprep.subr.mxu0 0.0
  %4470 = vmatpush1.msra.mxu0 0.0
  %4471 = vmatprep.subr.mxu0 0.0
  %4472 = vmatpush1.msra.mxu0 0.0
  %4473 = vmatprep.subr.mxu0 0.0
  %4474 = vmatpush1.msra.mxu0 0.0
  %4475 = vmatprep.subr.mxu0 0.0
  %4476 = vmatpush1.msra.mxu0 0.0
  %4477 = vmatprep.subr.mxu0 0.0
  %4478 = vmatpush1.msra.mxu0 0.0
  %4479 = vmatprep.subr.mxu0 0.0
  %4480 = vmatpush1.msra.mxu0 0.0
  %4481 = vmatprep.subr.mxu0 0.0
  %4482 = vmatpush1.msra.mxu0 0.0
  %4483 = vmatprep.subr.mxu0 0.0
  %4484 = vmatpush1.msra.mxu0 0.0
  %4485 = vmatprep.subr.mxu0 0.0
  %4486 = vmatpush1.msra.mxu0 0.0
  %4487 = vmatprep.subr.mxu0 0.0
  %4488 = vmatpush1.msra.mxu0 0.0
  %4489 = vmatprep.subr.mxu0 0.0
  %4490 = vmatpush1.msra.mxu0 0.0
  %v4491 = vand.u32 %v162, 4294901760
  %v4492 = vsub.f32 %v162, %v4491
  %v4493 = vand.u32 %v4492, 4294901760
  %v4494 = vsub.f32 %v4492, %v4493
  %v4495 = vand.u32 %v4494, 4294901760
  %4496 = vmatprep.subr.mxu0 %v4495
  %v4497 = vand.u32 %v159, 4294901760
  %v4498 = vsub.f32 %v159, %v4497
  %v4499 = vand.u32 %v4498, 4294901760
  %v4500 = vsub.f32 %v4498, %v4499
  %v4501 = vand.u32 %v4500, 4294901760
  %4502 = vmatpush1.msra.mxu0 %v4501
  %v4503 = vand.u32 %v117, 4294901760
  %v4504 = vsub.f32 %v117, %v4503
  %v4505 = vand.u32 %v4504, 4294901760
  %v4506 = vsub.f32 %v4504, %v4505
  %v4507 = vand.u32 %v4506, 4294901760
  %4508 = vmatprep.subr.mxu0 %v4507
  %v4509 = vand.u32 %v116, 4294901760
  %v4510 = vsub.f32 %v116, %v4509
  %v4511 = vand.u32 %v4510, 4294901760
  %v4512 = vsub.f32 %v4510, %v4511
  %v4513 = vand.u32 %v4512, 4294901760
  %4514 = vmatpush1.msra.mxu0 %v4513
  %v4515 = vand.u32 %v111, 4294901760
  %v4516 = vsub.f32 %v111, %v4515
  %v4517 = vand.u32 %v4516, 4294901760
  %v4518 = vsub.f32 %v4516, %v4517
  %v4519 = vand.u32 %v4518, 4294901760
  %4520 = vmatprep.subr.mxu0 %v4519
  %v4521 = vand.u32 %v110, 4294901760
  %v4522 = vsub.f32 %v110, %v4521
  %v4523 = vand.u32 %v4522, 4294901760
  %v4524 = vsub.f32 %v4522, %v4523
  %v4525 = vand.u32 %v4524, 4294901760
  %4526 = vmatpush1.msra.mxu0 %v4525
  %v4527 = vand.u32 %v105, 4294901760
  %v4528 = vsub.f32 %v105, %v4527
  %v4529 = vand.u32 %v4528, 4294901760
  %v4530 = vsub.f32 %v4528, %v4529
  %v4531 = vand.u32 %v4530, 4294901760
  %4532 = vmatprep.subr.mxu0 %v4531
  %v4533 = vand.u32 %v104, 4294901760
  %v4534 = vsub.f32 %v104, %v4533
  %v4535 = vand.u32 %v4534, 4294901760
  %v4536 = vsub.f32 %v4534, %v4535
  %v4537 = vand.u32 %v4536, 4294901760
  %4538 = vmatpush1.msra.mxu0 %v4537
  %4539 = vmatprep.subr.mxu0 0.0
  %4540 = vmatpush2.msra.mxu0 0.0
  %4541 = vmatprep.subr.mxu0 0.0
  %4542 = vmatpush2.msra.mxu0 0.0
  %4543 = vmatprep.subr.mxu0 0.0
  %4544 = vmatpush2.msra.mxu0 0.0
  %4545 = vmatprep.subr.mxu0 0.0
  %4546 = vmatpush2.msra.mxu0 0.0
  %4547 = vmatprep.subr.mxu0 0.0
  %4548 = vmatpush2.msra.mxu0 0.0
  %4549 = vmatprep.subr.mxu0 0.0
  %4550 = vmatpush2.msra.mxu0 0.0
  %4551 = vmatprep.subr.mxu0 0.0
  %4552 = vmatpush2.msra.mxu0 0.0
  %4553 = vmatprep.subr.mxu0 0.0
  %4554 = vmatpush2.msra.mxu0 0.0
  %4555 = vmatprep.subr.mxu0 0.0
  %4556 = vmatpush2.msra.mxu0 0.0
  %4557 = vmatprep.subr.mxu0 0.0
  %4558 = vmatpush2.msra.mxu0 0.0
  %4559 = vmatprep.subr.mxu0 0.0
  %4560 = vmatpush2.msra.mxu0 0.0
  %4561 = vmatprep.subr.mxu0 0.0
  %4562 = vmatpush2.msra.mxu0 0.0
  %4563 = vmatprep.subr.mxu0 0.0
  %4564 = vmatpush2.msra.mxu0 0.0
  %4565 = vmatprep.subr.mxu0 0.0
  %4566 = vmatpush2.msra.mxu0 0.0
  %4567 = vmatprep.subr.mxu0 0.0
  %4568 = vmatpush2.msra.mxu0 0.0
  %4569 = vmatprep.subr.mxu0 0.0
  %4570 = vmatpush2.msra.mxu0 0.0
  %4571 = vmatprep.mubr.f32.mxu0 0.0
  %v4572 = vand.u32 %v4339, 4294901760
  %4573 = vmatmul.mubr.f32.gmra.mxu0 %v4572
  %v4574 = vpop.f32.mrf.mxu0
  %v4575 = vadd.f32 %v4430, %v4574
  %v4576 = vpop.f32.mrf.mxu0
  %v4577 = vadd.f32 %v4432, %v4576
  %4578 = vmatprep.mubr.f32.mxu0 0.0
  %v4579 = vand.u32 %v4342, 4294901760
  %4580 = vmatmul.mubr.f32.gmra.mxu0 %v4579
  %v4581 = vpop.f32.mrf.mxu0
  %v4582 = vadd.f32 %v4441, %v4581
  %v4583 = vpop.f32.mrf.mxu0
  %v4584 = vadd.f32 %v4443, %v4583
  %4585 = vmatprep.mubr.f32.mxu0 0.0
  %v4586 = vand.u32 %v4345, 4294901760
  %4587 = vmatmul.mubr.f32.gmra.mxu0 %v4586
  %v4588 = vpop.f32.mrf.mxu0
  %v4589 = vadd.f32 %v4452, %v4588
  %v4590 = vpop.f32.mrf.mxu0
  %v4591 = vadd.f32 %v4454, %v4590
  %4592 = vmatprep.mubr.f32.mxu0 0.0
  %v4593 = vand.u32 %v4348, 4294901760
  %4594 = vmatmul.mubr.f32.gmra.mxu0 %v4593
  %v4595 = vpop.f32.mrf.mxu0
  %v4596 = vadd.f32 %v4463, %v4595
  %v4597 = vpop.f32.mrf.mxu0
  %v4598 = vadd.f32 %v4465, %v4597
  %4599 = vdwg.mxu0
  %4600 = vmatprep.subr.mxu0 0.0
  %4601 = vmatpush1.msra.mxu0 0.0
  %4602 = vmatprep.subr.mxu0 0.0
  %4603 = vmatpush1.msra.mxu0 0.0
  %4604 = vmatprep.subr.mxu0 0.0
  %4605 = vmatpush1.msra.mxu0 0.0
  %4606 = vmatprep.subr.mxu0 0.0
  %4607 = vmatpush1.msra.mxu0 0.0
  %4608 = vmatprep.subr.mxu0 0.0
  %4609 = vmatpush1.msra.mxu0 0.0
  %4610 = vmatprep.subr.mxu0 0.0
  %4611 = vmatpush1.msra.mxu0 0.0
  %4612 = vmatprep.subr.mxu0 0.0
  %4613 = vmatpush1.msra.mxu0 0.0
  %4614 = vmatprep.subr.mxu0 0.0
  %4615 = vmatpush1.msra.mxu0 0.0
  %4616 = vmatprep.subr.mxu0 0.0
  %4617 = vmatpush1.msra.mxu0 0.0
  %4618 = vmatprep.subr.mxu0 0.0
  %4619 = vmatpush1.msra.mxu0 0.0
  %4620 = vmatprep.subr.mxu0 0.0
  %4621 = vmatpush1.msra.mxu0 0.0
  %4622 = vmatprep.subr.mxu0 0.0
  %4623 = vmatpush1.msra.mxu0 0.0
  %v4624 = vand.u32 %v162, 4294901760
  %v4625 = vsub.f32 %v162, %v4624
  %4626 = vmatprep.subr.mxu0 %v4625
  %v4627 = vand.u32 %v159, 4294901760
  %v4628 = vsub.f32 %v159, %v4627
  %4629 = vmatpush1.msra.mxu0 %v4628
  %v4630 = vand.u32 %v117, 4294901760
  %v4631 = vsub.f32 %v117, %v4630
  %4632 = vmatprep.subr.mxu0 %v4631
  %v4633 = vand.u32 %v116, 4294901760
  %v4634 = vsub.f32 %v116, %v4633
  %4635 = vmatpush1.msra.mxu0 %v4634
  %v4636 = vand.u32 %v111, 4294901760
  %v4637 = vsub.f32 %v111, %v4636
  %4638 = vmatprep.subr.mxu0 %v4637
  %v4639 = vand.u32 %v110, 4294901760
  %v4640 = vsub.f32 %v110, %v4639
  %4641 = vmatpush1.msra.mxu0 %v4640
  %v4642 = vand.u32 %v105, 4294901760
  %v4643 = vsub.f32 %v105, %v4642
  %4644 = vmatprep.subr.mxu0 %v4643
  %v4645 = vand.u32 %v104, 4294901760
  %v4646 = vsub.f32 %v104, %v4645
  %4647 = vmatpush1.msra.mxu0 %v4646
  %4648 = vmatprep.subr.mxu0 0.0
  %4649 = vmatpush2.msra.mxu0 0.0
  %4650 = vmatprep.subr.mxu0 0.0
  %4651 = vmatpush2.msra.mxu0 0.0
  %4652 = vmatprep.subr.mxu0 0.0
  %4653 = vmatpush2.msra.mxu0 0.0
  %4654 = vmatprep.subr.mxu0 0.0
  %4655 = vmatpush2.msra.mxu0 0.0
  %4656 = vmatprep.subr.mxu0 0.0
  %4657 = vmatpush2.msra.mxu0 0.0
  %4658 = vmatprep.subr.mxu0 0.0
  %4659 = vmatpush2.msra.mxu0 0.0
  %4660 = vmatprep.subr.mxu0 0.0
  %4661 = vmatpush2.msra.mxu0 0.0
  %4662 = vmatprep.subr.mxu0 0.0
  %4663 = vmatpush2.msra.mxu0 0.0
  %4664 = vmatprep.subr.mxu0 0.0
  %4665 = vmatpush2.msra.mxu0 0.0
  %4666 = vmatprep.subr.mxu0 0.0
  %4667 = vmatpush2.msra.mxu0 0.0
  %4668 = vmatprep.subr.mxu0 0.0
  %4669 = vmatpush2.msra.mxu0 0.0
  %4670 = vmatprep.subr.mxu0 0.0
  %4671 = vmatpush2.msra.mxu0 0.0
  %4672 = vmatprep.subr.mxu0 0.0
  %4673 = vmatpush2.msra.mxu0 0.0
  %4674 = vmatprep.subr.mxu0 0.0
  %4675 = vmatpush2.msra.mxu0 0.0
  %4676 = vmatprep.subr.mxu0 0.0
  %4677 = vmatpush2.msra.mxu0 0.0
  %4678 = vmatprep.subr.mxu0 0.0
  %4679 = vmatpush2.msra.mxu0 0.0
  %4680 = vmatprep.mubr.f32.mxu0 0.0
  %v4681 = vand.u32 %v4339, 4294901760
  %v4682 = vsub.f32 %v4339, %v4681
  %4683 = vmatmul.mubr.f32.gmra.mxu0 %v4682
  %v4684 = vpop.f32.mrf.mxu0
  %v4685 = vadd.f32 %v4575, %v4684
  %v4686 = vpop.f32.mrf.mxu0
  %v4687 = vadd.f32 %v4577, %v4686
  %4688 = vmatprep.mubr.f32.mxu0 0.0
  %v4689 = vand.u32 %v4342, 4294901760
  %v4690 = vsub.f32 %v4342, %v4689
  %4691 = vmatmul.mubr.f32.gmra.mxu0 %v4690
  %v4692 = vpop.f32.mrf.mxu0
  %v4693 = vadd.f32 %v4582, %v4692
  %v4694 = vpop.f32.mrf.mxu0
  %v4695 = vadd.f32 %v4584, %v4694
  %4696 = vmatprep.mubr.f32.mxu0 0.0
  %v4697 = vand.u32 %v4345, 4294901760
  %v4698 = vsub.f32 %v4345, %v4697
  %4699 = vmatmul.mubr.f32.gmra.mxu0 %v4698
  %v4700 = vpop.f32.mrf.mxu0
  %v4701 = vadd.f32 %v4589, %v4700
  %v4702 = vpop.f32.mrf.mxu0
  %v4703 = vadd.f32 %v4591, %v4702
  %4704 = vmatprep.mubr.f32.mxu0 0.0
  %v4705 = vand.u32 %v4348, 4294901760
  %v4706 = vsub.f32 %v4348, %v4705
  %4707 = vmatmul.mubr.f32.gmra.mxu0 %v4706
  %v4708 = vpop.f32.mrf.mxu0
  %v4709 = vadd.f32 %v4596, %v4708
  %v4710 = vpop.f32.mrf.mxu0
  %v4711 = vadd.f32 %v4598, %v4710
  %4712 = vdwg.mxu0
  %4713 = vmatprep.subr.mxu0 0.0
  %4714 = vmatpush1.msra.mxu0 0.0
  %4715 = vmatprep.subr.mxu0 0.0
  %4716 = vmatpush1.msra.mxu0 0.0
  %4717 = vmatprep.subr.mxu0 0.0
  %4718 = vmatpush1.msra.mxu0 0.0
  %4719 = vmatprep.subr.mxu0 0.0
  %4720 = vmatpush1.msra.mxu0 0.0
  %4721 = vmatprep.subr.mxu0 0.0
  %4722 = vmatpush1.msra.mxu0 0.0
  %4723 = vmatprep.subr.mxu0 0.0
  %4724 = vmatpush1.msra.mxu0 0.0
  %4725 = vmatprep.subr.mxu0 0.0
  %4726 = vmatpush1.msra.mxu0 0.0
  %4727 = vmatprep.subr.mxu0 0.0
  %4728 = vmatpush1.msra.mxu0 0.0
  %4729 = vmatprep.subr.mxu0 0.0
  %4730 = vmatpush1.msra.mxu0 0.0
  %4731 = vmatprep.subr.mxu0 0.0
  %4732 = vmatpush1.msra.mxu0 0.0
  %4733 = vmatprep.subr.mxu0 0.0
  %4734 = vmatpush1.msra.mxu0 0.0
  %4735 = vmatprep.subr.mxu0 0.0
  %4736 = vmatpush1.msra.mxu0 0.0
  %v4737 = vand.u32 %v162, 4294901760
  %4738 = vmatprep.subr.mxu0 %v4737
  %v4739 = vand.u32 %v159, 4294901760
  %4740 = vmatpush1.msra.mxu0 %v4739
  %v4741 = vand.u32 %v117, 4294901760
  %4742 = vmatprep.subr.mxu0 %v4741
  %v4743 = vand.u32 %v116, 4294901760
  %4744 = vmatpush1.msra.mxu0 %v4743
  %v4745 = vand.u32 %v111, 4294901760
  %4746 = vmatprep.subr.mxu0 %v4745
  %v4747 = vand.u32 %v110, 4294901760
  %4748 = vmatpush1.msra.mxu0 %v4747
  %v4749 = vand.u32 %v105, 4294901760
  %4750 = vmatprep.subr.mxu0 %v4749
  %v4751 = vand.u32 %v104, 4294901760
  %4752 = vmatpush1.msra.mxu0 %v4751
  %4753 = vmatprep.subr.mxu0 0.0
  %4754 = vmatpush2.msra.mxu0 0.0
  %4755 = vmatprep.subr.mxu0 0.0
  %4756 = vmatpush2.msra.mxu0 0.0
  %4757 = vmatprep.subr.mxu0 0.0
  %4758 = vmatpush2.msra.mxu0 0.0
  %4759 = vmatprep.subr.mxu0 0.0
  %4760 = vmatpush2.msra.mxu0 0.0
  %4761 = vmatprep.subr.mxu0 0.0
  %4762 = vmatpush2.msra.mxu0 0.0
  %4763 = vmatprep.subr.mxu0 0.0
  %4764 = vmatpush2.msra.mxu0 0.0
  %4765 = vmatprep.subr.mxu0 0.0
  %4766 = vmatpush2.msra.mxu0 0.0
  %4767 = vmatprep.subr.mxu0 0.0
  %4768 = vmatpush2.msra.mxu0 0.0
  %4769 = vmatprep.subr.mxu0 0.0
  %4770 = vmatpush2.msra.mxu0 0.0
  %4771 = vmatprep.subr.mxu0 0.0
  %4772 = vmatpush2.msra.mxu0 0.0
  %4773 = vmatprep.subr.mxu0 0.0
  %4774 = vmatpush2.msra.mxu0 0.0
  %4775 = vmatprep.subr.mxu0 0.0
  %4776 = vmatpush2.msra.mxu0 0.0
  %4777 = vmatprep.subr.mxu0 0.0
  %4778 = vmatpush2.msra.mxu0 0.0
  %4779 = vmatprep.subr.mxu0 0.0
  %4780 = vmatpush2.msra.mxu0 0.0
  %4781 = vmatprep.subr.mxu0 0.0
  %4782 = vmatpush2.msra.mxu0 0.0
  %4783 = vmatprep.subr.mxu0 0.0
  %4784 = vmatpush2.msra.mxu0 0.0
  %4785 = vmatprep.mubr.f32.mxu0 0.0
  %v4786 = vand.u32 %v4339, 4294901760
  %v4787 = vsub.f32 %v4339, %v4786
  %v4788 = vand.u32 %v4787, 4294901760
  %4789 = vmatmul.mubr.f32.gmra.mxu0 %v4788
  %v4790 = vpop.f32.mrf.mxu0
  %v4791 = vadd.f32 %v4685, %v4790
  %v4792 = vpop.f32.mrf.mxu0
  %v4793 = vadd.f32 %v4687, %v4792
  %4794 = vmatprep.mubr.f32.mxu0 0.0
  %v4795 = vand.u32 %v4342, 4294901760
  %v4796 = vsub.f32 %v4342, %v4795
  %v4797 = vand.u32 %v4796, 4294901760
  %4798 = vmatmul.mubr.f32.gmra.mxu0 %v4797
  %v4799 = vpop.f32.mrf.mxu0
  %v4800 = vadd.f32 %v4693, %v4799
  %v4801 = vpop.f32.mrf.mxu0
  %v4802 = vadd.f32 %v4695, %v4801
  %4803 = vmatprep.mubr.f32.mxu0 0.0
  %v4804 = vand.u32 %v4345, 4294901760
  %v4805 = vsub.f32 %v4345, %v4804
  %v4806 = vand.u32 %v4805, 4294901760
  %4807 = vmatmul.mubr.f32.gmra.mxu0 %v4806
  %v4808 = vpop.f32.mrf.mxu0
  %v4809 = vadd.f32 %v4701, %v4808
  %v4810 = vpop.f32.mrf.mxu0
  %v4811 = vadd.f32 %v4703, %v4810
  %4812 = vmatprep.mubr.f32.mxu0 0.0
  %v4813 = vand.u32 %v4348, 4294901760
  %v4814 = vsub.f32 %v4348, %v4813
  %v4815 = vand.u32 %v4814, 4294901760
  %4816 = vmatmul.mubr.f32.gmra.mxu0 %v4815
  %v4817 = vpop.f32.mrf.mxu0
  %v4818 = vadd.f32 %v4709, %v4817
  %v4819 = vpop.f32.mrf.mxu0
  %v4820 = vadd.f32 %v4711, %v4819
  %4821 = vdwg.mxu0
  %4822 = vmatprep.subr.mxu0 0.0
  %4823 = vmatpush1.msra.mxu0 0.0
  %4824 = vmatprep.subr.mxu0 0.0
  %4825 = vmatpush1.msra.mxu0 0.0
  %4826 = vmatprep.subr.mxu0 0.0
  %4827 = vmatpush1.msra.mxu0 0.0
  %4828 = vmatprep.subr.mxu0 0.0
  %4829 = vmatpush1.msra.mxu0 0.0
  %4830 = vmatprep.subr.mxu0 0.0
  %4831 = vmatpush1.msra.mxu0 0.0
  %4832 = vmatprep.subr.mxu0 0.0
  %4833 = vmatpush1.msra.mxu0 0.0
  %4834 = vmatprep.subr.mxu0 0.0
  %4835 = vmatpush1.msra.mxu0 0.0
  %4836 = vmatprep.subr.mxu0 0.0
  %4837 = vmatpush1.msra.mxu0 0.0
  %4838 = vmatprep.subr.mxu0 0.0
  %4839 = vmatpush1.msra.mxu0 0.0
  %4840 = vmatprep.subr.mxu0 0.0
  %4841 = vmatpush1.msra.mxu0 0.0
  %4842 = vmatprep.subr.mxu0 0.0
  %4843 = vmatpush1.msra.mxu0 0.0
  %4844 = vmatprep.subr.mxu0 0.0
  %4845 = vmatpush1.msra.mxu0 0.0
  %v4846 = vand.u32 %v162, 4294901760
  %v4847 = vsub.f32 %v162, %v4846
  %v4848 = vand.u32 %v4847, 4294901760
  %4849 = vmatprep.subr.mxu0 %v4848
  %v4850 = vand.u32 %v159, 4294901760
  %v4851 = vsub.f32 %v159, %v4850
  %v4852 = vand.u32 %v4851, 4294901760
  %4853 = vmatpush1.msra.mxu0 %v4852
  %v4854 = vand.u32 %v117, 4294901760
  %v4855 = vsub.f32 %v117, %v4854
  %v4856 = vand.u32 %v4855, 4294901760
  %4857 = vmatprep.subr.mxu0 %v4856
  %v4858 = vand.u32 %v116, 4294901760
  %v4859 = vsub.f32 %v116, %v4858
  %v4860 = vand.u32 %v4859, 4294901760
  %4861 = vmatpush1.msra.mxu0 %v4860
  %v4862 = vand.u32 %v111, 4294901760
  %v4863 = vsub.f32 %v111, %v4862
  %v4864 = vand.u32 %v4863, 4294901760
  %4865 = vmatprep.subr.mxu0 %v4864
  %v4866 = vand.u32 %v110, 4294901760
  %v4867 = vsub.f32 %v110, %v4866
  %v4868 = vand.u32 %v4867, 4294901760
  %4869 = vmatpush1.msra.mxu0 %v4868
  %v4870 = vand.u32 %v105, 4294901760
  %v4871 = vsub.f32 %v105, %v4870
  %v4872 = vand.u32 %v4871, 4294901760
  %4873 = vmatprep.subr.mxu0 %v4872
  %v4874 = vand.u32 %v104, 4294901760
  %v4875 = vsub.f32 %v104, %v4874
  %v4876 = vand.u32 %v4875, 4294901760
  %4877 = vmatpush1.msra.mxu0 %v4876
  %4878 = vmatprep.subr.mxu0 0.0
  %4879 = vmatpush2.msra.mxu0 0.0
  %4880 = vmatprep.subr.mxu0 0.0
  %4881 = vmatpush2.msra.mxu0 0.0
  %4882 = vmatprep.subr.mxu0 0.0
  %4883 = vmatpush2.msra.mxu0 0.0
  %4884 = vmatprep.subr.mxu0 0.0
  %4885 = vmatpush2.msra.mxu0 0.0
  %4886 = vmatprep.subr.mxu0 0.0
  %4887 = vmatpush2.msra.mxu0 0.0
  %4888 = vmatprep.subr.mxu0 0.0
  %4889 = vmatpush2.msra.mxu0 0.0
  %4890 = vmatprep.subr.mxu0 0.0
  %4891 = vmatpush2.msra.mxu0 0.0
  %4892 = vmatprep.subr.mxu0 0.0
  %4893 = vmatpush2.msra.mxu0 0.0
  %4894 = vmatprep.subr.mxu0 0.0
  %4895 = vmatpush2.msra.mxu0 0.0
  %4896 = vmatprep.subr.mxu0 0.0
  %4897 = vmatpush2.msra.mxu0 0.0
  %4898 = vmatprep.subr.mxu0 0.0
  %4899 = vmatpush2.msra.mxu0 0.0
  %4900 = vmatprep.subr.mxu0 0.0
  %4901 = vmatpush2.msra.mxu0 0.0
  %4902 = vmatprep.subr.mxu0 0.0
  %4903 = vmatpush2.msra.mxu0 0.0
  %4904 = vmatprep.subr.mxu0 0.0
  %4905 = vmatpush2.msra.mxu0 0.0
  %4906 = vmatprep.subr.mxu0 0.0
  %4907 = vmatpush2.msra.mxu0 0.0
  %4908 = vmatprep.subr.mxu0 0.0
  %4909 = vmatpush2.msra.mxu0 0.0
  %4910 = vmatprep.mubr.f32.mxu0 0.0
  %v4911 = vand.u32 %v4339, 4294901760
  %4912 = vmatmul.mubr.f32.gmra.mxu0 %v4911
  %v4913 = vpop.f32.mrf.mxu0
  %v4914 = vadd.f32 %v4791, %v4913
  %v4915 = vpop.f32.mrf.mxu0
  %v4916 = vadd.f32 %v4793, %v4915
  %4917 = vmatprep.mubr.f32.mxu0 0.0
  %v4918 = vand.u32 %v4342, 4294901760
  %4919 = vmatmul.mubr.f32.gmra.mxu0 %v4918
  %v4920 = vpop.f32.mrf.mxu0
  %v4921 = vadd.f32 %v4800, %v4920
  %v4922 = vpop.f32.mrf.mxu0
  %v4923 = vadd.f32 %v4802, %v4922
  %4924 = vmatprep.mubr.f32.mxu0 0.0
  %v4925 = vand.u32 %v4345, 4294901760
  %4926 = vmatmul.mubr.f32.gmra.mxu0 %v4925
  %v4927 = vpop.f32.mrf.mxu0
  %v4928 = vadd.f32 %v4809, %v4927
  %v4929 = vpop.f32.mrf.mxu0
  %v4930 = vadd.f32 %v4811, %v4929
  %4931 = vmatprep.mubr.f32.mxu0 0.0
  %v4932 = vand.u32 %v4348, 4294901760
  %4933 = vmatmul.mubr.f32.gmra.mxu0 %v4932
  %v4934 = vpop.f32.mrf.mxu0
  %v4935 = vadd.f32 %v4818, %v4934
  %v4936 = vpop.f32.mrf.mxu0
  %v4937 = vadd.f32 %v4820, %v4936
  %4938 = vdwg.mxu0
  %4939 = vmatprep.subr.mxu0 0.0
  %4940 = vmatpush1.msra.mxu0 0.0
  %4941 = vmatprep.subr.mxu0 0.0
  %4942 = vmatpush1.msra.mxu0 0.0
  %4943 = vmatprep.subr.mxu0 0.0
  %4944 = vmatpush1.msra.mxu0 0.0
  %4945 = vmatprep.subr.mxu0 0.0
  %4946 = vmatpush1.msra.mxu0 0.0
  %4947 = vmatprep.subr.mxu0 0.0
  %4948 = vmatpush1.msra.mxu0 0.0
  %4949 = vmatprep.subr.mxu0 0.0
  %4950 = vmatpush1.msra.mxu0 0.0
  %4951 = vmatprep.subr.mxu0 0.0
  %4952 = vmatpush1.msra.mxu0 0.0
  %4953 = vmatprep.subr.mxu0 0.0
  %4954 = vmatpush1.msra.mxu0 0.0
  %4955 = vmatprep.subr.mxu0 0.0
  %4956 = vmatpush1.msra.mxu0 0.0
  %4957 = vmatprep.subr.mxu0 0.0
  %4958 = vmatpush1.msra.mxu0 0.0
  %4959 = vmatprep.subr.mxu0 0.0
  %4960 = vmatpush1.msra.mxu0 0.0
  %4961 = vmatprep.subr.mxu0 0.0
  %4962 = vmatpush1.msra.mxu0 0.0
  %v4963 = vand.u32 %v162, 4294901760
  %4964 = vmatprep.subr.mxu0 %v4963
  %v4965 = vand.u32 %v159, 4294901760
  %4966 = vmatpush1.msra.mxu0 %v4965
  %v4967 = vand.u32 %v117, 4294901760
  %4968 = vmatprep.subr.mxu0 %v4967
  %v4969 = vand.u32 %v116, 4294901760
  %4970 = vmatpush1.msra.mxu0 %v4969
  %v4971 = vand.u32 %v111, 4294901760
  %4972 = vmatprep.subr.mxu0 %v4971
  %v4973 = vand.u32 %v110, 4294901760
  %4974 = vmatpush1.msra.mxu0 %v4973
  %v4975 = vand.u32 %v105, 4294901760
  %4976 = vmatprep.subr.mxu0 %v4975
  %v4977 = vand.u32 %v104, 4294901760
  %4978 = vmatpush1.msra.mxu0 %v4977
  %4979 = vmatprep.subr.mxu0 0.0
  %4980 = vmatpush2.msra.mxu0 0.0
  %4981 = vmatprep.subr.mxu0 0.0
  %4982 = vmatpush2.msra.mxu0 0.0
  %4983 = vmatprep.subr.mxu0 0.0
  %4984 = vmatpush2.msra.mxu0 0.0
  %4985 = vmatprep.subr.mxu0 0.0
  %4986 = vmatpush2.msra.mxu0 0.0
  %4987 = vmatprep.subr.mxu0 0.0
  %4988 = vmatpush2.msra.mxu0 0.0
  %4989 = vmatprep.subr.mxu0 0.0
  %4990 = vmatpush2.msra.mxu0 0.0
  %4991 = vmatprep.subr.mxu0 0.0
  %4992 = vmatpush2.msra.mxu0 0.0
  %4993 = vmatprep.subr.mxu0 0.0
  %4994 = vmatpush2.msra.mxu0 0.0
  %4995 = vmatprep.subr.mxu0 0.0
  %4996 = vmatpush2.msra.mxu0 0.0
  %4997 = vmatprep.subr.mxu0 0.0
  %4998 = vmatpush2.msra.mxu0 0.0
  %4999 = vmatprep.subr.mxu0 0.0
  %5000 = vmatpush2.msra.mxu0 0.0
  %5001 = vmatprep.subr.mxu0 0.0
  %5002 = vmatpush2.msra.mxu0 0.0
  %5003 = vmatprep.subr.mxu0 0.0
  %5004 = vmatpush2.msra.mxu0 0.0
  %5005 = vmatprep.subr.mxu0 0.0
  %5006 = vmatpush2.msra.mxu0 0.0
  %5007 = vmatprep.subr.mxu0 0.0
  %5008 = vmatpush2.msra.mxu0 0.0
  %5009 = vmatprep.subr.mxu0 0.0
  %5010 = vmatpush2.msra.mxu0 0.0
  %5011 = vmatprep.mubr.f32.mxu0 0.0
  %v5012 = vand.u32 %v4339, 4294901760
  %5013 = vmatmul.mubr.f32.gmra.mxu0 %v5012
  %v5014 = vpop.f32.mrf.mxu0
  %v5015 = vadd.f32 %v4914, %v5014
  %v5016 = vpop.f32.mrf.mxu0
  %v5017 = vadd.f32 %v4916, %v5016
  %5018 = vmatprep.mubr.f32.mxu0 0.0
  %v5019 = vand.u32 %v4342, 4294901760
  %5020 = vmatmul.mubr.f32.gmra.mxu0 %v5019
  %v5021 = vpop.f32.mrf.mxu0
  %v5022 = vadd.f32 %v4921, %v5021
  %v5023 = vpop.f32.mrf.mxu0
  %v5024 = vadd.f32 %v4923, %v5023
  %5025 = vmatprep.mubr.f32.mxu0 0.0
  %v5026 = vand.u32 %v4345, 4294901760
  %5027 = vmatmul.mubr.f32.gmra.mxu0 %v5026
  %v5028 = vpop.f32.mrf.mxu0
  %v5029 = vadd.f32 %v4928, %v5028
  %v5030 = vpop.f32.mrf.mxu0
  %v5031 = vadd.f32 %v4930, %v5030
  %5032 = vmatprep.mubr.f32.mxu0 0.0
  %v5033 = vand.u32 %v4348, 4294901760
  %5034 = vmatmul.mubr.f32.gmra.mxu0 %v5033
  %v5035 = vpop.f32.mrf.mxu0
  %v5036 = vadd.f32 %v4935, %v5035
  %v5037 = vpop.f32.mrf.mxu0
  %v5038 = vadd.f32 %v4937, %v5037
  %5039 = vdwg.mxu0
  %5040 = vmatprep.subr.mxu0 0.0
  %5041 = vmatpush1.msra.mxu0 0.0
  %5042 = vmatprep.subr.mxu0 0.0
  %5043 = vmatpush1.msra.mxu0 0.0
  %5044 = vmatprep.subr.mxu0 0.0
  %5045 = vmatpush1.msra.mxu0 0.0
  %5046 = vmatprep.subr.mxu0 0.0
  %5047 = vmatpush1.msra.mxu0 0.0
  %5048 = vmatprep.subr.mxu0 0.0
  %5049 = vmatpush1.msra.mxu0 0.0
  %5050 = vmatprep.subr.mxu0 0.0
  %5051 = vmatpush1.msra.mxu0 0.0
  %5052 = vmatprep.subr.mxu0 0.0
  %5053 = vmatpush1.msra.mxu0 0.0
  %5054 = vmatprep.subr.mxu0 0.0
  %5055 = vmatpush1.msra.mxu0 0.0
  %5056 = vmatprep.subr.mxu0 0.0
  %5057 = vmatpush1.msra.mxu0 0.0
  %5058 = vmatprep.subr.mxu0 0.0
  %5059 = vmatpush1.msra.mxu0 0.0
  %5060 = vmatprep.subr.mxu0 0.0
  %5061 = vmatpush1.msra.mxu0 0.0
  %5062 = vmatprep.subr.mxu0 0.0
  %5063 = vmatpush1.msra.mxu0 0.0
  %v5064 = vand.u32 %v168, 4294901760
  %5065 = vmatprep.subr.mxu0 %v5064
  %v5066 = vand.u32 %v165, 4294901760
  %5067 = vmatpush1.msra.mxu0 %v5066
  %v5068 = vand.u32 %v119, 4294901760
  %5069 = vmatprep.subr.mxu0 %v5068
  %v5070 = vand.u32 %v118, 4294901760
  %5071 = vmatpush1.msra.mxu0 %v5070
  %v5072 = vand.u32 %v113, 4294901760
  %5073 = vmatprep.subr.mxu0 %v5072
  %v5074 = vand.u32 %v112, 4294901760
  %5075 = vmatpush1.msra.mxu0 %v5074
  %v5076 = vand.u32 %v107, 4294901760
  %5077 = vmatprep.subr.mxu0 %v5076
  %v5078 = vand.u32 %v106, 4294901760
  %5079 = vmatpush1.msra.mxu0 %v5078
  %5080 = vmatprep.subr.mxu0 0.0
  %5081 = vmatpush2.msra.mxu0 0.0
  %5082 = vmatprep.subr.mxu0 0.0
  %5083 = vmatpush2.msra.mxu0 0.0
  %5084 = vmatprep.subr.mxu0 0.0
  %5085 = vmatpush2.msra.mxu0 0.0
  %5086 = vmatprep.subr.mxu0 0.0
  %5087 = vmatpush2.msra.mxu0 0.0
  %5088 = vmatprep.subr.mxu0 0.0
  %5089 = vmatpush2.msra.mxu0 0.0
  %5090 = vmatprep.subr.mxu0 0.0
  %5091 = vmatpush2.msra.mxu0 0.0
  %5092 = vmatprep.subr.mxu0 0.0
  %5093 = vmatpush2.msra.mxu0 0.0
  %5094 = vmatprep.subr.mxu0 0.0
  %5095 = vmatpush2.msra.mxu0 0.0
  %5096 = vmatprep.subr.mxu0 0.0
  %5097 = vmatpush2.msra.mxu0 0.0
  %5098 = vmatprep.subr.mxu0 0.0
  %5099 = vmatpush2.msra.mxu0 0.0
  %5100 = vmatprep.subr.mxu0 0.0
  %5101 = vmatpush2.msra.mxu0 0.0
  %5102 = vmatprep.subr.mxu0 0.0
  %5103 = vmatpush2.msra.mxu0 0.0
  %5104 = vmatprep.subr.mxu0 0.0
  %5105 = vmatpush2.msra.mxu0 0.0
  %5106 = vmatprep.subr.mxu0 0.0
  %5107 = vmatpush2.msra.mxu0 0.0
  %5108 = vmatprep.subr.mxu0 0.0
  %5109 = vmatpush2.msra.mxu0 0.0
  %5110 = vmatprep.subr.mxu0 0.0
  %5111 = vmatpush2.msra.mxu0 0.0
  %5112 = vmatprep.mubr.f32.mxu0 0.0
  %v5113 = vand.u32 %v4339, 4294901760
  %v5114 = vsub.f32 %v4339, %v5113
  %v5115 = vand.u32 %v5114, 4294901760
  %v5116 = vsub.f32 %v5114, %v5115
  %v5117 = vand.u32 %v5116, 4294901760
  %5118 = vmatmul.mubr.f32.gmra.mxu0 %v5117
  %v5119 = vpop.f32.mrf.mxu0
  %v5120 = vadd.f32 0.0, %v5119
  %v5121 = vpop.f32.mrf.mxu0
  %v5122 = vadd.f32 0.0, %v5121
  %5123 = vmatprep.mubr.f32.mxu0 0.0
  %v5124 = vand.u32 %v4342, 4294901760
  %v5125 = vsub.f32 %v4342, %v5124
  %v5126 = vand.u32 %v5125, 4294901760
  %v5127 = vsub.f32 %v5125, %v5126
  %v5128 = vand.u32 %v5127, 4294901760
  %5129 = vmatmul.mubr.f32.gmra.mxu0 %v5128
  %v5130 = vpop.f32.mrf.mxu0
  %v5131 = vadd.f32 0.0, %v5130
  %v5132 = vpop.f32.mrf.mxu0
  %v5133 = vadd.f32 0.0, %v5132
  %5134 = vmatprep.mubr.f32.mxu0 0.0
  %v5135 = vand.u32 %v4345, 4294901760
  %v5136 = vsub.f32 %v4345, %v5135
  %v5137 = vand.u32 %v5136, 4294901760
  %v5138 = vsub.f32 %v5136, %v5137
  %v5139 = vand.u32 %v5138, 4294901760
  %5140 = vmatmul.mubr.f32.gmra.mxu0 %v5139
  %v5141 = vpop.f32.mrf.mxu0
  %v5142 = vadd.f32 0.0, %v5141
  %v5143 = vpop.f32.mrf.mxu0
  %v5144 = vadd.f32 0.0, %v5143
  %5145 = vmatprep.mubr.f32.mxu0 0.0
  %v5146 = vand.u32 %v4348, 4294901760
  %v5147 = vsub.f32 %v4348, %v5146
  %v5148 = vand.u32 %v5147, 4294901760
  %v5149 = vsub.f32 %v5147, %v5148
  %v5150 = vand.u32 %v5149, 4294901760
  %5151 = vmatmul.mubr.f32.gmra.mxu0 %v5150
  %v5152 = vpop.f32.mrf.mxu0
  %v5153 = vadd.f32 0.0, %v5152
  %v5154 = vpop.f32.mrf.mxu0
  %v5155 = vadd.f32 0.0, %v5154
  %5156 = vdwg.mxu0
  %5157 = vmatprep.subr.mxu0 0.0
  %5158 = vmatpush1.msra.mxu0 0.0
  %5159 = vmatprep.subr.mxu0 0.0
  %5160 = vmatpush1.msra.mxu0 0.0
  %5161 = vmatprep.subr.mxu0 0.0
  %5162 = vmatpush1.msra.mxu0 0.0
  %5163 = vmatprep.subr.mxu0 0.0
  %5164 = vmatpush1.msra.mxu0 0.0
  %5165 = vmatprep.subr.mxu0 0.0
  %5166 = vmatpush1.msra.mxu0 0.0
  %5167 = vmatprep.subr.mxu0 0.0
  %5168 = vmatpush1.msra.mxu0 0.0
  %5169 = vmatprep.subr.mxu0 0.0
  %5170 = vmatpush1.msra.mxu0 0.0
  %5171 = vmatprep.subr.mxu0 0.0
  %5172 = vmatpush1.msra.mxu0 0.0
  %5173 = vmatprep.subr.mxu0 0.0
  %5174 = vmatpush1.msra.mxu0 0.0
  %5175 = vmatprep.subr.mxu0 0.0
  %5176 = vmatpush1.msra.mxu0 0.0
  %5177 = vmatprep.subr.mxu0 0.0
  %5178 = vmatpush1.msra.mxu0 0.0
  %5179 = vmatprep.subr.mxu0 0.0
  %5180 = vmatpush1.msra.mxu0 0.0
  %v5181 = vand.u32 %v168, 4294901760
  %v5182 = vsub.f32 %v168, %v5181
  %v5183 = vand.u32 %v5182, 4294901760
  %v5184 = vsub.f32 %v5182, %v5183
  %v5185 = vand.u32 %v5184, 4294901760
  %5186 = vmatprep.subr.mxu0 %v5185
  %v5187 = vand.u32 %v165, 4294901760
  %v5188 = vsub.f32 %v165, %v5187
  %v5189 = vand.u32 %v5188, 4294901760
  %v5190 = vsub.f32 %v5188, %v5189
  %v5191 = vand.u32 %v5190, 4294901760
  %5192 = vmatpush1.msra.mxu0 %v5191
  %v5193 = vand.u32 %v119, 4294901760
  %v5194 = vsub.f32 %v119, %v5193
  %v5195 = vand.u32 %v5194, 4294901760
  %v5196 = vsub.f32 %v5194, %v5195
  %v5197 = vand.u32 %v5196, 4294901760
  %5198 = vmatprep.subr.mxu0 %v5197
  %v5199 = vand.u32 %v118, 4294901760
  %v5200 = vsub.f32 %v118, %v5199
  %v5201 = vand.u32 %v5200, 4294901760
  %v5202 = vsub.f32 %v5200, %v5201
  %v5203 = vand.u32 %v5202, 4294901760
  %5204 = vmatpush1.msra.mxu0 %v5203
  %v5205 = vand.u32 %v113, 4294901760
  %v5206 = vsub.f32 %v113, %v5205
  %v5207 = vand.u32 %v5206, 4294901760
  %v5208 = vsub.f32 %v5206, %v5207
  %v5209 = vand.u32 %v5208, 4294901760
  %5210 = vmatprep.subr.mxu0 %v5209
  %v5211 = vand.u32 %v112, 4294901760
  %v5212 = vsub.f32 %v112, %v5211
  %v5213 = vand.u32 %v5212, 4294901760
  %v5214 = vsub.f32 %v5212, %v5213
  %v5215 = vand.u32 %v5214, 4294901760
  %5216 = vmatpush1.msra.mxu0 %v5215
  %v5217 = vand.u32 %v107, 4294901760
  %v5218 = vsub.f32 %v107, %v5217
  %v5219 = vand.u32 %v5218, 4294901760
  %v5220 = vsub.f32 %v5218, %v5219
  %v5221 = vand.u32 %v5220, 4294901760
  %5222 = vmatprep.subr.mxu0 %v5221
  %v5223 = vand.u32 %v106, 4294901760
  %v5224 = vsub.f32 %v106, %v5223
  %v5225 = vand.u32 %v5224, 4294901760
  %v5226 = vsub.f32 %v5224, %v5225
  %v5227 = vand.u32 %v5226, 4294901760
  %5228 = vmatpush1.msra.mxu0 %v5227
  %5229 = vmatprep.subr.mxu0 0.0
  %5230 = vmatpush2.msra.mxu0 0.0
  %5231 = vmatprep.subr.mxu0 0.0
  %5232 = vmatpush2.msra.mxu0 0.0
  %5233 = vmatprep.subr.mxu0 0.0
  %5234 = vmatpush2.msra.mxu0 0.0
  %5235 = vmatprep.subr.mxu0 0.0
  %5236 = vmatpush2.msra.mxu0 0.0
  %5237 = vmatprep.subr.mxu0 0.0
  %5238 = vmatpush2.msra.mxu0 0.0
  %5239 = vmatprep.subr.mxu0 0.0
  %5240 = vmatpush2.msra.mxu0 0.0
  %5241 = vmatprep.subr.mxu0 0.0
  %5242 = vmatpush2.msra.mxu0 0.0
  %5243 = vmatprep.subr.mxu0 0.0
  %5244 = vmatpush2.msra.mxu0 0.0
  %5245 = vmatprep.subr.mxu0 0.0
  %5246 = vmatpush2.msra.mxu0 0.0
  %5247 = vmatprep.subr.mxu0 0.0
  %5248 = vmatpush2.msra.mxu0 0.0
  %5249 = vmatprep.subr.mxu0 0.0
  %5250 = vmatpush2.msra.mxu0 0.0
  %5251 = vmatprep.subr.mxu0 0.0
  %5252 = vmatpush2.msra.mxu0 0.0
  %5253 = vmatprep.subr.mxu0 0.0
  %5254 = vmatpush2.msra.mxu0 0.0
  %5255 = vmatprep.subr.mxu0 0.0
  %5256 = vmatpush2.msra.mxu0 0.0
  %5257 = vmatprep.subr.mxu0 0.0
  %5258 = vmatpush2.msra.mxu0 0.0
  %5259 = vmatprep.subr.mxu0 0.0
  %5260 = vmatpush2.msra.mxu0 0.0
  %5261 = vmatprep.mubr.f32.mxu0 0.0
  %v5262 = vand.u32 %v4339, 4294901760
  %5263 = vmatmul.mubr.f32.gmra.mxu0 %v5262
  %v5264 = vpop.f32.mrf.mxu0
  %v5265 = vadd.f32 %v5120, %v5264
  %v5266 = vpop.f32.mrf.mxu0
  %v5267 = vadd.f32 %v5122, %v5266
  %5268 = vmatprep.mubr.f32.mxu0 0.0
  %v5269 = vand.u32 %v4342, 4294901760
  %5270 = vmatmul.mubr.f32.gmra.mxu0 %v5269
  %v5271 = vpop.f32.mrf.mxu0
  %v5272 = vadd.f32 %v5131, %v5271
  %v5273 = vpop.f32.mrf.mxu0
  %v5274 = vadd.f32 %v5133, %v5273
  %5275 = vmatprep.mubr.f32.mxu0 0.0
  %v5276 = vand.u32 %v4345, 4294901760
  %5277 = vmatmul.mubr.f32.gmra.mxu0 %v5276
  %v5278 = vpop.f32.mrf.mxu0
  %v5279 = vadd.f32 %v5142, %v5278
  %v5280 = vpop.f32.mrf.mxu0
  %v5281 = vadd.f32 %v5144, %v5280
  %5282 = vmatprep.mubr.f32.mxu0 0.0
  %v5283 = vand.u32 %v4348, 4294901760
  %5284 = vmatmul.mubr.f32.gmra.mxu0 %v5283
  %v5285 = vpop.f32.mrf.mxu0
  %v5286 = vadd.f32 %v5153, %v5285
  %v5287 = vpop.f32.mrf.mxu0
  %v5288 = vadd.f32 %v5155, %v5287
  %5289 = vdwg.mxu0
  %5290 = vmatprep.subr.mxu0 0.0
  %5291 = vmatpush1.msra.mxu0 0.0
  %5292 = vmatprep.subr.mxu0 0.0
  %5293 = vmatpush1.msra.mxu0 0.0
  %5294 = vmatprep.subr.mxu0 0.0
  %5295 = vmatpush1.msra.mxu0 0.0
  %5296 = vmatprep.subr.mxu0 0.0
  %5297 = vmatpush1.msra.mxu0 0.0
  %5298 = vmatprep.subr.mxu0 0.0
  %5299 = vmatpush1.msra.mxu0 0.0
  %5300 = vmatprep.subr.mxu0 0.0
  %5301 = vmatpush1.msra.mxu0 0.0
  %5302 = vmatprep.subr.mxu0 0.0
  %5303 = vmatpush1.msra.mxu0 0.0
  %5304 = vmatprep.subr.mxu0 0.0
  %5305 = vmatpush1.msra.mxu0 0.0
  %5306 = vmatprep.subr.mxu0 0.0
  %5307 = vmatpush1.msra.mxu0 0.0
  %5308 = vmatprep.subr.mxu0 0.0
  %5309 = vmatpush1.msra.mxu0 0.0
  %5310 = vmatprep.subr.mxu0 0.0
  %5311 = vmatpush1.msra.mxu0 0.0
  %5312 = vmatprep.subr.mxu0 0.0
  %5313 = vmatpush1.msra.mxu0 0.0
  %v5314 = vand.u32 %v168, 4294901760
  %v5315 = vsub.f32 %v168, %v5314
  %5316 = vmatprep.subr.mxu0 %v5315
  %v5317 = vand.u32 %v165, 4294901760
  %v5318 = vsub.f32 %v165, %v5317
  %5319 = vmatpush1.msra.mxu0 %v5318
  %v5320 = vand.u32 %v119, 4294901760
  %v5321 = vsub.f32 %v119, %v5320
  %5322 = vmatprep.subr.mxu0 %v5321
  %v5323 = vand.u32 %v118, 4294901760
  %v5324 = vsub.f32 %v118, %v5323
  %5325 = vmatpush1.msra.mxu0 %v5324
  %v5326 = vand.u32 %v113, 4294901760
  %v5327 = vsub.f32 %v113, %v5326
  %5328 = vmatprep.subr.mxu0 %v5327
  %v5329 = vand.u32 %v112, 4294901760
  %v5330 = vsub.f32 %v112, %v5329
  %5331 = vmatpush1.msra.mxu0 %v5330
  %v5332 = vand.u32 %v107, 4294901760
  %v5333 = vsub.f32 %v107, %v5332
  %5334 = vmatprep.subr.mxu0 %v5333
  %v5335 = vand.u32 %v106, 4294901760
  %v5336 = vsub.f32 %v106, %v5335
  %5337 = vmatpush1.msra.mxu0 %v5336
  %5338 = vmatprep.subr.mxu0 0.0
  %5339 = vmatpush2.msra.mxu0 0.0
  %5340 = vmatprep.subr.mxu0 0.0
  %5341 = vmatpush2.msra.mxu0 0.0
  %5342 = vmatprep.subr.mxu0 0.0
  %5343 = vmatpush2.msra.mxu0 0.0
  %5344 = vmatprep.subr.mxu0 0.0
  %5345 = vmatpush2.msra.mxu0 0.0
  %5346 = vmatprep.subr.mxu0 0.0
  %5347 = vmatpush2.msra.mxu0 0.0
  %5348 = vmatprep.subr.mxu0 0.0
  %5349 = vmatpush2.msra.mxu0 0.0
  %5350 = vmatprep.subr.mxu0 0.0
  %5351 = vmatpush2.msra.mxu0 0.0
  %5352 = vmatprep.subr.mxu0 0.0
  %5353 = vmatpush2.msra.mxu0 0.0
  %5354 = vmatprep.subr.mxu0 0.0
  %5355 = vmatpush2.msra.mxu0 0.0
  %5356 = vmatprep.subr.mxu0 0.0
  %5357 = vmatpush2.msra.mxu0 0.0
  %5358 = vmatprep.subr.mxu0 0.0
  %5359 = vmatpush2.msra.mxu0 0.0
  %5360 = vmatprep.subr.mxu0 0.0
  %5361 = vmatpush2.msra.mxu0 0.0
  %5362 = vmatprep.subr.mxu0 0.0
  %5363 = vmatpush2.msra.mxu0 0.0
  %5364 = vmatprep.subr.mxu0 0.0
  %5365 = vmatpush2.msra.mxu0 0.0
  %5366 = vmatprep.subr.mxu0 0.0
  %5367 = vmatpush2.msra.mxu0 0.0
  %5368 = vmatprep.subr.mxu0 0.0
  %5369 = vmatpush2.msra.mxu0 0.0
  %5370 = vmatprep.mubr.f32.mxu0 0.0
  %v5371 = vand.u32 %v4339, 4294901760
  %v5372 = vsub.f32 %v4339, %v5371
  %5373 = vmatmul.mubr.f32.gmra.mxu0 %v5372
  %v5374 = vpop.f32.mrf.mxu0
  %v5375 = vadd.f32 %v5265, %v5374
  %v5376 = vpop.f32.mrf.mxu0
  %v5377 = vadd.f32 %v5267, %v5376
  %5378 = vmatprep.mubr.f32.mxu0 0.0
  %v5379 = vand.u32 %v4342, 4294901760
  %v5380 = vsub.f32 %v4342, %v5379
  %5381 = vmatmul.mubr.f32.gmra.mxu0 %v5380
  %v5382 = vpop.f32.mrf.mxu0
  %v5383 = vadd.f32 %v5272, %v5382
  %v5384 = vpop.f32.mrf.mxu0
  %v5385 = vadd.f32 %v5274, %v5384
  %5386 = vmatprep.mubr.f32.mxu0 0.0
  %v5387 = vand.u32 %v4345, 4294901760
  %v5388 = vsub.f32 %v4345, %v5387
  %5389 = vmatmul.mubr.f32.gmra.mxu0 %v5388
  %v5390 = vpop.f32.mrf.mxu0
  %v5391 = vadd.f32 %v5279, %v5390
  %v5392 = vpop.f32.mrf.mxu0
  %v5393 = vadd.f32 %v5281, %v5392
  %5394 = vmatprep.mubr.f32.mxu0 0.0
  %v5395 = vand.u32 %v4348, 4294901760
  %v5396 = vsub.f32 %v4348, %v5395
  %5397 = vmatmul.mubr.f32.gmra.mxu0 %v5396
  %v5398 = vpop.f32.mrf.mxu0
  %v5399 = vadd.f32 %v5286, %v5398
  %v5400 = vpop.f32.mrf.mxu0
  %v5401 = vadd.f32 %v5288, %v5400
  %5402 = vdwg.mxu0
  %5403 = vmatprep.subr.mxu0 0.0
  %5404 = vmatpush1.msra.mxu0 0.0
  %5405 = vmatprep.subr.mxu0 0.0
  %5406 = vmatpush1.msra.mxu0 0.0
  %5407 = vmatprep.subr.mxu0 0.0
  %5408 = vmatpush1.msra.mxu0 0.0
  %5409 = vmatprep.subr.mxu0 0.0
  %5410 = vmatpush1.msra.mxu0 0.0
  %5411 = vmatprep.subr.mxu0 0.0
  %5412 = vmatpush1.msra.mxu0 0.0
  %5413 = vmatprep.subr.mxu0 0.0
  %5414 = vmatpush1.msra.mxu0 0.0
  %5415 = vmatprep.subr.mxu0 0.0
  %5416 = vmatpush1.msra.mxu0 0.0
  %5417 = vmatprep.subr.mxu0 0.0
  %5418 = vmatpush1.msra.mxu0 0.0
  %5419 = vmatprep.subr.mxu0 0.0
  %5420 = vmatpush1.msra.mxu0 0.0
  %5421 = vmatprep.subr.mxu0 0.0
  %5422 = vmatpush1.msra.mxu0 0.0
  %5423 = vmatprep.subr.mxu0 0.0
  %5424 = vmatpush1.msra.mxu0 0.0
  %5425 = vmatprep.subr.mxu0 0.0
  %5426 = vmatpush1.msra.mxu0 0.0
  %v5427 = vand.u32 %v168, 4294901760
  %5428 = vmatprep.subr.mxu0 %v5427
  %v5429 = vand.u32 %v165, 4294901760
  %5430 = vmatpush1.msra.mxu0 %v5429
  %v5431 = vand.u32 %v119, 4294901760
  %5432 = vmatprep.subr.mxu0 %v5431
  %v5433 = vand.u32 %v118, 4294901760
  %5434 = vmatpush1.msra.mxu0 %v5433
  %v5435 = vand.u32 %v113, 4294901760
  %5436 = vmatprep.subr.mxu0 %v5435
  %v5437 = vand.u32 %v112, 4294901760
  %5438 = vmatpush1.msra.mxu0 %v5437
  %v5439 = vand.u32 %v107, 4294901760
  %5440 = vmatprep.subr.mxu0 %v5439
  %v5441 = vand.u32 %v106, 4294901760
  %5442 = vmatpush1.msra.mxu0 %v5441
  %5443 = vmatprep.subr.mxu0 0.0
  %5444 = vmatpush2.msra.mxu0 0.0
  %5445 = vmatprep.subr.mxu0 0.0
  %5446 = vmatpush2.msra.mxu0 0.0
  %5447 = vmatprep.subr.mxu0 0.0
  %5448 = vmatpush2.msra.mxu0 0.0
  %5449 = vmatprep.subr.mxu0 0.0
  %5450 = vmatpush2.msra.mxu0 0.0
  %5451 = vmatprep.subr.mxu0 0.0
  %5452 = vmatpush2.msra.mxu0 0.0
  %5453 = vmatprep.subr.mxu0 0.0
  %5454 = vmatpush2.msra.mxu0 0.0
  %5455 = vmatprep.subr.mxu0 0.0
  %5456 = vmatpush2.msra.mxu0 0.0
  %5457 = vmatprep.subr.mxu0 0.0
  %5458 = vmatpush2.msra.mxu0 0.0
  %5459 = vmatprep.subr.mxu0 0.0
  %5460 = vmatpush2.msra.mxu0 0.0
  %5461 = vmatprep.subr.mxu0 0.0
  %5462 = vmatpush2.msra.mxu0 0.0
  %5463 = vmatprep.subr.mxu0 0.0
  %5464 = vmatpush2.msra.mxu0 0.0
  %5465 = vmatprep.subr.mxu0 0.0
  %5466 = vmatpush2.msra.mxu0 0.0
  %5467 = vmatprep.subr.mxu0 0.0
  %5468 = vmatpush2.msra.mxu0 0.0
  %5469 = vmatprep.subr.mxu0 0.0
  %5470 = vmatpush2.msra.mxu0 0.0
  %5471 = vmatprep.subr.mxu0 0.0
  %5472 = vmatpush2.msra.mxu0 0.0
  %5473 = vmatprep.subr.mxu0 0.0
  %5474 = vmatpush2.msra.mxu0 0.0
  %5475 = vmatprep.mubr.f32.mxu0 0.0
  %v5476 = vand.u32 %v4339, 4294901760
  %v5477 = vsub.f32 %v4339, %v5476
  %v5478 = vand.u32 %v5477, 4294901760
  %5479 = vmatmul.mubr.f32.gmra.mxu0 %v5478
  %v5480 = vpop.f32.mrf.mxu0
  %v5481 = vadd.f32 %v5375, %v5480
  %v5482 = vpop.f32.mrf.mxu0
  %v5483 = vadd.f32 %v5377, %v5482
  %5484 = vmatprep.mubr.f32.mxu0 0.0
  %v5485 = vand.u32 %v4342, 4294901760
  %v5486 = vsub.f32 %v4342, %v5485
  %v5487 = vand.u32 %v5486, 4294901760
  %5488 = vmatmul.mubr.f32.gmra.mxu0 %v5487
  %v5489 = vpop.f32.mrf.mxu0
  %v5490 = vadd.f32 %v5383, %v5489
  %v5491 = vpop.f32.mrf.mxu0
  %v5492 = vadd.f32 %v5385, %v5491
  %5493 = vmatprep.mubr.f32.mxu0 0.0
  %v5494 = vand.u32 %v4345, 4294901760
  %v5495 = vsub.f32 %v4345, %v5494
  %v5496 = vand.u32 %v5495, 4294901760
  %5497 = vmatmul.mubr.f32.gmra.mxu0 %v5496
  %v5498 = vpop.f32.mrf.mxu0
  %v5499 = vadd.f32 %v5391, %v5498
  %v5500 = vpop.f32.mrf.mxu0
  %v5501 = vadd.f32 %v5393, %v5500
  %5502 = vmatprep.mubr.f32.mxu0 0.0
  %v5503 = vand.u32 %v4348, 4294901760
  %v5504 = vsub.f32 %v4348, %v5503
  %v5505 = vand.u32 %v5504, 4294901760
  %5506 = vmatmul.mubr.f32.gmra.mxu0 %v5505
  %v5507 = vpop.f32.mrf.mxu0
  %v5508 = vadd.f32 %v5399, %v5507
  %v5509 = vpop.f32.mrf.mxu0
  %v5510 = vadd.f32 %v5401, %v5509
  %5511 = vdwg.mxu0
  %5512 = vmatprep.subr.mxu0 0.0
  %5513 = vmatpush1.msra.mxu0 0.0
  %5514 = vmatprep.subr.mxu0 0.0
  %5515 = vmatpush1.msra.mxu0 0.0
  %5516 = vmatprep.subr.mxu0 0.0
  %5517 = vmatpush1.msra.mxu0 0.0
  %5518 = vmatprep.subr.mxu0 0.0
  %5519 = vmatpush1.msra.mxu0 0.0
  %5520 = vmatprep.subr.mxu0 0.0
  %5521 = vmatpush1.msra.mxu0 0.0
  %5522 = vmatprep.subr.mxu0 0.0
  %5523 = vmatpush1.msra.mxu0 0.0
  %5524 = vmatprep.subr.mxu0 0.0
  %5525 = vmatpush1.msra.mxu0 0.0
  %5526 = vmatprep.subr.mxu0 0.0
  %5527 = vmatpush1.msra.mxu0 0.0
  %5528 = vmatprep.subr.mxu0 0.0
  %5529 = vmatpush1.msra.mxu0 0.0
  %5530 = vmatprep.subr.mxu0 0.0
  %5531 = vmatpush1.msra.mxu0 0.0
  %5532 = vmatprep.subr.mxu0 0.0
  %5533 = vmatpush1.msra.mxu0 0.0
  %5534 = vmatprep.subr.mxu0 0.0
  %5535 = vmatpush1.msra.mxu0 0.0
  %v5536 = vand.u32 %v168, 4294901760
  %v5537 = vsub.f32 %v168, %v5536
  %v5538 = vand.u32 %v5537, 4294901760
  %5539 = vmatprep.subr.mxu0 %v5538
  %v5540 = vand.u32 %v165, 4294901760
  %v5541 = vsub.f32 %v165, %v5540
  %v5542 = vand.u32 %v5541, 4294901760
  %5543 = vmatpush1.msra.mxu0 %v5542
  %v5544 = vand.u32 %v119, 4294901760
  %v5545 = vsub.f32 %v119, %v5544
  %v5546 = vand.u32 %v5545, 4294901760
  %5547 = vmatprep.subr.mxu0 %v5546
  %v5548 = vand.u32 %v118, 4294901760
  %v5549 = vsub.f32 %v118, %v5548
  %v5550 = vand.u32 %v5549, 4294901760
  %5551 = vmatpush1.msra.mxu0 %v5550
  %v5552 = vand.u32 %v113, 4294901760
  %v5553 = vsub.f32 %v113, %v5552
  %v5554 = vand.u32 %v5553, 4294901760
  %5555 = vmatprep.subr.mxu0 %v5554
  %v5556 = vand.u32 %v112, 4294901760
  %v5557 = vsub.f32 %v112, %v5556
  %v5558 = vand.u32 %v5557, 4294901760
  %5559 = vmatpush1.msra.mxu0 %v5558
  %v5560 = vand.u32 %v107, 4294901760
  %v5561 = vsub.f32 %v107, %v5560
  %v5562 = vand.u32 %v5561, 4294901760
  %5563 = vmatprep.subr.mxu0 %v5562
  %v5564 = vand.u32 %v106, 4294901760
  %v5565 = vsub.f32 %v106, %v5564
  %v5566 = vand.u32 %v5565, 4294901760
  %5567 = vmatpush1.msra.mxu0 %v5566
  %5568 = vmatprep.subr.mxu0 0.0
  %5569 = vmatpush2.msra.mxu0 0.0
  %5570 = vmatprep.subr.mxu0 0.0
  %5571 = vmatpush2.msra.mxu0 0.0
  %5572 = vmatprep.subr.mxu0 0.0
  %5573 = vmatpush2.msra.mxu0 0.0
  %5574 = vmatprep.subr.mxu0 0.0
  %5575 = vmatpush2.msra.mxu0 0.0
  %5576 = vmatprep.subr.mxu0 0.0
  %5577 = vmatpush2.msra.mxu0 0.0
  %5578 = vmatprep.subr.mxu0 0.0
  %5579 = vmatpush2.msra.mxu0 0.0
  %5580 = vmatprep.subr.mxu0 0.0
  %5581 = vmatpush2.msra.mxu0 0.0
  %5582 = vmatprep.subr.mxu0 0.0
  %5583 = vmatpush2.msra.mxu0 0.0
  %5584 = vmatprep.subr.mxu0 0.0
  %5585 = vmatpush2.msra.mxu0 0.0
  %5586 = vmatprep.subr.mxu0 0.0
  %5587 = vmatpush2.msra.mxu0 0.0
  %5588 = vmatprep.subr.mxu0 0.0
  %5589 = vmatpush2.msra.mxu0 0.0
  %5590 = vmatprep.subr.mxu0 0.0
  %5591 = vmatpush2.msra.mxu0 0.0
  %5592 = vmatprep.subr.mxu0 0.0
  %5593 = vmatpush2.msra.mxu0 0.0
  %5594 = vmatprep.subr.mxu0 0.0
  %5595 = vmatpush2.msra.mxu0 0.0
  %5596 = vmatprep.subr.mxu0 0.0
  %5597 = vmatpush2.msra.mxu0 0.0
  %5598 = vmatprep.subr.mxu0 0.0
  %5599 = vmatpush2.msra.mxu0 0.0
  %5600 = vmatprep.mubr.f32.mxu0 0.0
  %v5601 = vand.u32 %v4339, 4294901760
  %5602 = vmatmul.mubr.f32.gmra.mxu0 %v5601
  %v5603 = vpop.f32.mrf.mxu0
  %v5604 = vadd.f32 %v5481, %v5603
  %v5605 = vpop.f32.mrf.mxu0
  %v5606 = vadd.f32 %v5483, %v5605
  %5607 = vmatprep.mubr.f32.mxu0 0.0
  %v5608 = vand.u32 %v4342, 4294901760
  %5609 = vmatmul.mubr.f32.gmra.mxu0 %v5608
  %v5610 = vpop.f32.mrf.mxu0
  %v5611 = vadd.f32 %v5490, %v5610
  %v5612 = vpop.f32.mrf.mxu0
  %v5613 = vadd.f32 %v5492, %v5612
  %5614 = vmatprep.mubr.f32.mxu0 0.0
  %v5615 = vand.u32 %v4345, 4294901760
  %5616 = vmatmul.mubr.f32.gmra.mxu0 %v5615
  %v5617 = vpop.f32.mrf.mxu0
  %v5618 = vadd.f32 %v5499, %v5617
  %v5619 = vpop.f32.mrf.mxu0
  %v5620 = vadd.f32 %v5501, %v5619
  %5621 = vmatprep.mubr.f32.mxu0 0.0
  %v5622 = vand.u32 %v4348, 4294901760
  %5623 = vmatmul.mubr.f32.gmra.mxu0 %v5622
  %v5624 = vpop.f32.mrf.mxu0
  %v5625 = vadd.f32 %v5508, %v5624
  %v5626 = vpop.f32.mrf.mxu0
  %v5627 = vadd.f32 %v5510, %v5626
  %5628 = vdwg.mxu0
  %5629 = vmatprep.subr.mxu0 0.0
  %5630 = vmatpush1.msra.mxu0 0.0
  %5631 = vmatprep.subr.mxu0 0.0
  %5632 = vmatpush1.msra.mxu0 0.0
  %5633 = vmatprep.subr.mxu0 0.0
  %5634 = vmatpush1.msra.mxu0 0.0
  %5635 = vmatprep.subr.mxu0 0.0
  %5636 = vmatpush1.msra.mxu0 0.0
  %5637 = vmatprep.subr.mxu0 0.0
  %5638 = vmatpush1.msra.mxu0 0.0
  %5639 = vmatprep.subr.mxu0 0.0
  %5640 = vmatpush1.msra.mxu0 0.0
  %5641 = vmatprep.subr.mxu0 0.0
  %5642 = vmatpush1.msra.mxu0 0.0
  %5643 = vmatprep.subr.mxu0 0.0
  %5644 = vmatpush1.msra.mxu0 0.0
  %5645 = vmatprep.subr.mxu0 0.0
  %5646 = vmatpush1.msra.mxu0 0.0
  %5647 = vmatprep.subr.mxu0 0.0
  %5648 = vmatpush1.msra.mxu0 0.0
  %5649 = vmatprep.subr.mxu0 0.0
  %5650 = vmatpush1.msra.mxu0 0.0
  %5651 = vmatprep.subr.mxu0 0.0
  %5652 = vmatpush1.msra.mxu0 0.0
  %v5653 = vand.u32 %v168, 4294901760
  %5654 = vmatprep.subr.mxu0 %v5653
  %v5655 = vand.u32 %v165, 4294901760
  %5656 = vmatpush1.msra.mxu0 %v5655
  %v5657 = vand.u32 %v119, 4294901760
  %5658 = vmatprep.subr.mxu0 %v5657
  %v5659 = vand.u32 %v118, 4294901760
  %5660 = vmatpush1.msra.mxu0 %v5659
  %v5661 = vand.u32 %v113, 4294901760
  %5662 = vmatprep.subr.mxu0 %v5661
  %v5663 = vand.u32 %v112, 4294901760
  %5664 = vmatpush1.msra.mxu0 %v5663
  %v5665 = vand.u32 %v107, 4294901760
  %5666 = vmatprep.subr.mxu0 %v5665
  %v5667 = vand.u32 %v106, 4294901760
  %5668 = vmatpush1.msra.mxu0 %v5667
  %5669 = vmatprep.subr.mxu0 0.0
  %5670 = vmatpush2.msra.mxu0 0.0
  %5671 = vmatprep.subr.mxu0 0.0
  %5672 = vmatpush2.msra.mxu0 0.0
  %5673 = vmatprep.subr.mxu0 0.0
  %5674 = vmatpush2.msra.mxu0 0.0
  %5675 = vmatprep.subr.mxu0 0.0
  %5676 = vmatpush2.msra.mxu0 0.0
  %5677 = vmatprep.subr.mxu0 0.0
  %5678 = vmatpush2.msra.mxu0 0.0
  %5679 = vmatprep.subr.mxu0 0.0
  %5680 = vmatpush2.msra.mxu0 0.0
  %5681 = vmatprep.subr.mxu0 0.0
  %5682 = vmatpush2.msra.mxu0 0.0
  %5683 = vmatprep.subr.mxu0 0.0
  %5684 = vmatpush2.msra.mxu0 0.0
  %5685 = vmatprep.subr.mxu0 0.0
  %5686 = vmatpush2.msra.mxu0 0.0
  %5687 = vmatprep.subr.mxu0 0.0
  %5688 = vmatpush2.msra.mxu0 0.0
  %5689 = vmatprep.subr.mxu0 0.0
  %5690 = vmatpush2.msra.mxu0 0.0
  %5691 = vmatprep.subr.mxu0 0.0
  %5692 = vmatpush2.msra.mxu0 0.0
  %5693 = vmatprep.subr.mxu0 0.0
  %5694 = vmatpush2.msra.mxu0 0.0
  %5695 = vmatprep.subr.mxu0 0.0
  %5696 = vmatpush2.msra.mxu0 0.0
  %5697 = vmatprep.subr.mxu0 0.0
  %5698 = vmatpush2.msra.mxu0 0.0
  %5699 = vmatprep.subr.mxu0 0.0
  %5700 = vmatpush2.msra.mxu0 0.0
  %5701 = vmatprep.mubr.f32.mxu0 0.0
  %v5702 = vand.u32 %v4339, 4294901760
  %5703 = vmatmul.mubr.f32.gmra.mxu0 %v5702
  %v5704 = vpop.f32.mrf.mxu0
  %v5705 = vadd.f32 %v5604, %v5704
  %v5706 = vpop.f32.mrf.mxu0
  %v5707 = vadd.f32 %v5606, %v5706
  %5708 = vmatprep.mubr.f32.mxu0 0.0
  %v5709 = vand.u32 %v4342, 4294901760
  %5710 = vmatmul.mubr.f32.gmra.mxu0 %v5709
  %v5711 = vpop.f32.mrf.mxu0
  %v5712 = vadd.f32 %v5611, %v5711
  %v5713 = vpop.f32.mrf.mxu0
  %v5714 = vadd.f32 %v5613, %v5713
  %5715 = vmatprep.mubr.f32.mxu0 0.0
  %v5716 = vand.u32 %v4345, 4294901760
  %5717 = vmatmul.mubr.f32.gmra.mxu0 %v5716
  %v5718 = vpop.f32.mrf.mxu0
  %v5719 = vadd.f32 %v5618, %v5718
  %v5720 = vpop.f32.mrf.mxu0
  %v5721 = vadd.f32 %v5620, %v5720
  %5722 = vmatprep.mubr.f32.mxu0 0.0
  %v5723 = vand.u32 %v4348, 4294901760
  %5724 = vmatmul.mubr.f32.gmra.mxu0 %v5723
  %v5725 = vpop.f32.mrf.mxu0
  %v5726 = vadd.f32 %v5625, %v5725
  %v5727 = vpop.f32.mrf.mxu0
  %v5728 = vadd.f32 %v5627, %v5727
  %5729 = vdwg.mxu0
  %5730 = vmatprep.subr.mxu0 0.0
  %5731 = vmatpush1.msra.mxu0 0.0
  %5732 = vmatprep.subr.mxu0 0.0
  %5733 = vmatpush1.msra.mxu0 0.0
  %5734 = vmatprep.subr.mxu0 0.0
  %5735 = vmatpush1.msra.mxu0 0.0
  %5736 = vmatprep.subr.mxu0 0.0
  %5737 = vmatpush1.msra.mxu0 0.0
  %5738 = vmatprep.subr.mxu0 0.0
  %5739 = vmatpush1.msra.mxu0 0.0
  %5740 = vmatprep.subr.mxu0 0.0
  %5741 = vmatpush1.msra.mxu0 0.0
  %5742 = vmatprep.subr.mxu0 0.0
  %5743 = vmatpush1.msra.mxu0 0.0
  %5744 = vmatprep.subr.mxu0 0.0
  %5745 = vmatpush1.msra.mxu0 0.0
  %5746 = vmatprep.subr.mxu0 0.0
  %5747 = vmatpush1.msra.mxu0 0.0
  %5748 = vmatprep.subr.mxu0 0.0
  %5749 = vmatpush1.msra.mxu0 0.0
  %5750 = vmatprep.subr.mxu0 0.0
  %5751 = vmatpush1.msra.mxu0 0.0
  %5752 = vmatprep.subr.mxu0 0.0
  %5753 = vmatpush1.msra.mxu0 0.0
  %v5754 = vand.u32 %v174, 4294901760
  %5755 = vmatprep.subr.mxu0 %v5754
  %v5756 = vand.u32 %v171, 4294901760
  %5757 = vmatpush1.msra.mxu0 %v5756
  %v5758 = vand.u32 %v121, 4294901760
  %5759 = vmatprep.subr.mxu0 %v5758
  %v5760 = vand.u32 %v120, 4294901760
  %5761 = vmatpush1.msra.mxu0 %v5760
  %v5762 = vand.u32 %v115, 4294901760
  %5763 = vmatprep.subr.mxu0 %v5762
  %v5764 = vand.u32 %v114, 4294901760
  %5765 = vmatpush1.msra.mxu0 %v5764
  %v5766 = vand.u32 %v109, 4294901760
  %5767 = vmatprep.subr.mxu0 %v5766
  %v5768 = vand.u32 %v108, 4294901760
  %5769 = vmatpush1.msra.mxu0 %v5768
  %5770 = vmatprep.subr.mxu0 0.0
  %5771 = vmatpush2.msra.mxu0 0.0
  %5772 = vmatprep.subr.mxu0 0.0
  %5773 = vmatpush2.msra.mxu0 0.0
  %5774 = vmatprep.subr.mxu0 0.0
  %5775 = vmatpush2.msra.mxu0 0.0
  %5776 = vmatprep.subr.mxu0 0.0
  %5777 = vmatpush2.msra.mxu0 0.0
  %5778 = vmatprep.subr.mxu0 0.0
  %5779 = vmatpush2.msra.mxu0 0.0
  %5780 = vmatprep.subr.mxu0 0.0
  %5781 = vmatpush2.msra.mxu0 0.0
  %5782 = vmatprep.subr.mxu0 0.0
  %5783 = vmatpush2.msra.mxu0 0.0
  %5784 = vmatprep.subr.mxu0 0.0
  %5785 = vmatpush2.msra.mxu0 0.0
  %5786 = vmatprep.subr.mxu0 0.0
  %5787 = vmatpush2.msra.mxu0 0.0
  %5788 = vmatprep.subr.mxu0 0.0
  %5789 = vmatpush2.msra.mxu0 0.0
  %5790 = vmatprep.subr.mxu0 0.0
  %5791 = vmatpush2.msra.mxu0 0.0
  %5792 = vmatprep.subr.mxu0 0.0
  %5793 = vmatpush2.msra.mxu0 0.0
  %5794 = vmatprep.subr.mxu0 0.0
  %5795 = vmatpush2.msra.mxu0 0.0
  %5796 = vmatprep.subr.mxu0 0.0
  %5797 = vmatpush2.msra.mxu0 0.0
  %5798 = vmatprep.subr.mxu0 0.0
  %5799 = vmatpush2.msra.mxu0 0.0
  %5800 = vmatprep.subr.mxu0 0.0
  %5801 = vmatpush2.msra.mxu0 0.0
  %5802 = vmatprep.mubr.f32.mxu0 0.0
  %v5803 = vand.u32 %v4339, 4294901760
  %v5804 = vsub.f32 %v4339, %v5803
  %v5805 = vand.u32 %v5804, 4294901760
  %v5806 = vsub.f32 %v5804, %v5805
  %v5807 = vand.u32 %v5806, 4294901760
  %5808 = vmatmul.mubr.f32.gmra.mxu0 %v5807
  %v5809 = vpop.f32.mrf.mxu0
  %v5810 = vadd.f32 0.0, %v5809
  %v5811 = vpop.f32.mrf.mxu0
  %v5812 = vadd.f32 0.0, %v5811
  %5813 = vmatprep.mubr.f32.mxu0 0.0
  %v5814 = vand.u32 %v4342, 4294901760
  %v5815 = vsub.f32 %v4342, %v5814
  %v5816 = vand.u32 %v5815, 4294901760
  %v5817 = vsub.f32 %v5815, %v5816
  %v5818 = vand.u32 %v5817, 4294901760
  %5819 = vmatmul.mubr.f32.gmra.mxu0 %v5818
  %v5820 = vpop.f32.mrf.mxu0
  %v5821 = vadd.f32 0.0, %v5820
  %v5822 = vpop.f32.mrf.mxu0
  %v5823 = vadd.f32 0.0, %v5822
  %5824 = vmatprep.mubr.f32.mxu0 0.0
  %v5825 = vand.u32 %v4345, 4294901760
  %v5826 = vsub.f32 %v4345, %v5825
  %v5827 = vand.u32 %v5826, 4294901760
  %v5828 = vsub.f32 %v5826, %v5827
  %v5829 = vand.u32 %v5828, 4294901760
  %5830 = vmatmul.mubr.f32.gmra.mxu0 %v5829
  %v5831 = vpop.f32.mrf.mxu0
  %v5832 = vadd.f32 0.0, %v5831
  %v5833 = vpop.f32.mrf.mxu0
  %v5834 = vadd.f32 0.0, %v5833
  %5835 = vmatprep.mubr.f32.mxu0 0.0
  %v5836 = vand.u32 %v4348, 4294901760
  %v5837 = vsub.f32 %v4348, %v5836
  %v5838 = vand.u32 %v5837, 4294901760
  %v5839 = vsub.f32 %v5837, %v5838
  %v5840 = vand.u32 %v5839, 4294901760
  %5841 = vmatmul.mubr.f32.gmra.mxu0 %v5840
  %v5842 = vpop.f32.mrf.mxu0
  %v5843 = vadd.f32 0.0, %v5842
  %v5844 = vpop.f32.mrf.mxu0
  %v5845 = vadd.f32 0.0, %v5844
  %5846 = vdwg.mxu0
  %5847 = vmatprep.subr.mxu0 0.0
  %5848 = vmatpush1.msra.mxu0 0.0
  %5849 = vmatprep.subr.mxu0 0.0
  %5850 = vmatpush1.msra.mxu0 0.0
  %5851 = vmatprep.subr.mxu0 0.0
  %5852 = vmatpush1.msra.mxu0 0.0
  %5853 = vmatprep.subr.mxu0 0.0
  %5854 = vmatpush1.msra.mxu0 0.0
  %5855 = vmatprep.subr.mxu0 0.0
  %5856 = vmatpush1.msra.mxu0 0.0
  %5857 = vmatprep.subr.mxu0 0.0
  %5858 = vmatpush1.msra.mxu0 0.0
  %5859 = vmatprep.subr.mxu0 0.0
  %5860 = vmatpush1.msra.mxu0 0.0
  %5861 = vmatprep.subr.mxu0 0.0
  %5862 = vmatpush1.msra.mxu0 0.0
  %5863 = vmatprep.subr.mxu0 0.0
  %5864 = vmatpush1.msra.mxu0 0.0
  %5865 = vmatprep.subr.mxu0 0.0
  %5866 = vmatpush1.msra.mxu0 0.0
  %5867 = vmatprep.subr.mxu0 0.0
  %5868 = vmatpush1.msra.mxu0 0.0
  %5869 = vmatprep.subr.mxu0 0.0
  %5870 = vmatpush1.msra.mxu0 0.0
  %v5871 = vand.u32 %v174, 4294901760
  %v5872 = vsub.f32 %v174, %v5871
  %v5873 = vand.u32 %v5872, 4294901760
  %v5874 = vsub.f32 %v5872, %v5873
  %v5875 = vand.u32 %v5874, 4294901760
  %5876 = vmatprep.subr.mxu0 %v5875
  %v5877 = vand.u32 %v171, 4294901760
  %v5878 = vsub.f32 %v171, %v5877
  %v5879 = vand.u32 %v5878, 4294901760
  %v5880 = vsub.f32 %v5878, %v5879
  %v5881 = vand.u32 %v5880, 4294901760
  %5882 = vmatpush1.msra.mxu0 %v5881
  %v5883 = vand.u32 %v121, 4294901760
  %v5884 = vsub.f32 %v121, %v5883
  %v5885 = vand.u32 %v5884, 4294901760
  %v5886 = vsub.f32 %v5884, %v5885
  %v5887 = vand.u32 %v5886, 4294901760
  %5888 = vmatprep.subr.mxu0 %v5887
  %v5889 = vand.u32 %v120, 4294901760
  %v5890 = vsub.f32 %v120, %v5889
  %v5891 = vand.u32 %v5890, 4294901760
  %v5892 = vsub.f32 %v5890, %v5891
  %v5893 = vand.u32 %v5892, 4294901760
  %5894 = vmatpush1.msra.mxu0 %v5893
  %v5895 = vand.u32 %v115, 4294901760
  %v5896 = vsub.f32 %v115, %v5895
  %v5897 = vand.u32 %v5896, 4294901760
  %v5898 = vsub.f32 %v5896, %v5897
  %v5899 = vand.u32 %v5898, 4294901760
  %5900 = vmatprep.subr.mxu0 %v5899
  %v5901 = vand.u32 %v114, 4294901760
  %v5902 = vsub.f32 %v114, %v5901
  %v5903 = vand.u32 %v5902, 4294901760
  %v5904 = vsub.f32 %v5902, %v5903
  %v5905 = vand.u32 %v5904, 4294901760
  %5906 = vmatpush1.msra.mxu0 %v5905
  %v5907 = vand.u32 %v109, 4294901760
  %v5908 = vsub.f32 %v109, %v5907
  %v5909 = vand.u32 %v5908, 4294901760
  %v5910 = vsub.f32 %v5908, %v5909
  %v5911 = vand.u32 %v5910, 4294901760
  %5912 = vmatprep.subr.mxu0 %v5911
  %v5913 = vand.u32 %v108, 4294901760
  %v5914 = vsub.f32 %v108, %v5913
  %v5915 = vand.u32 %v5914, 4294901760
  %v5916 = vsub.f32 %v5914, %v5915
  %v5917 = vand.u32 %v5916, 4294901760
  %5918 = vmatpush1.msra.mxu0 %v5917
  %5919 = vmatprep.subr.mxu0 0.0
  %5920 = vmatpush2.msra.mxu0 0.0
  %5921 = vmatprep.subr.mxu0 0.0
  %5922 = vmatpush2.msra.mxu0 0.0
  %5923 = vmatprep.subr.mxu0 0.0
  %5924 = vmatpush2.msra.mxu0 0.0
  %5925 = vmatprep.subr.mxu0 0.0
  %5926 = vmatpush2.msra.mxu0 0.0
  %5927 = vmatprep.subr.mxu0 0.0
  %5928 = vmatpush2.msra.mxu0 0.0
  %5929 = vmatprep.subr.mxu0 0.0
  %5930 = vmatpush2.msra.mxu0 0.0
  %5931 = vmatprep.subr.mxu0 0.0
  %5932 = vmatpush2.msra.mxu0 0.0
  %5933 = vmatprep.subr.mxu0 0.0
  %5934 = vmatpush2.msra.mxu0 0.0
  %5935 = vmatprep.subr.mxu0 0.0
  %5936 = vmatpush2.msra.mxu0 0.0
  %5937 = vmatprep.subr.mxu0 0.0
  %5938 = vmatpush2.msra.mxu0 0.0
  %5939 = vmatprep.subr.mxu0 0.0
  %5940 = vmatpush2.msra.mxu0 0.0
  %5941 = vmatprep.subr.mxu0 0.0
  %5942 = vmatpush2.msra.mxu0 0.0
  %5943 = vmatprep.subr.mxu0 0.0
  %5944 = vmatpush2.msra.mxu0 0.0
  %5945 = vmatprep.subr.mxu0 0.0
  %5946 = vmatpush2.msra.mxu0 0.0
  %5947 = vmatprep.subr.mxu0 0.0
  %5948 = vmatpush2.msra.mxu0 0.0
  %5949 = vmatprep.subr.mxu0 0.0
  %5950 = vmatpush2.msra.mxu0 0.0
  %5951 = vmatprep.mubr.f32.mxu0 0.0
  %v5952 = vand.u32 %v4339, 4294901760
  %5953 = vmatmul.mubr.f32.gmra.mxu0 %v5952
  %v5954 = vpop.f32.mrf.mxu0
  %v5955 = vadd.f32 %v5810, %v5954
  %v5956 = vpop.f32.mrf.mxu0
  %v5957 = vadd.f32 %v5812, %v5956
  %5958 = vmatprep.mubr.f32.mxu0 0.0
  %v5959 = vand.u32 %v4342, 4294901760
  %5960 = vmatmul.mubr.f32.gmra.mxu0 %v5959
  %v5961 = vpop.f32.mrf.mxu0
  %v5962 = vadd.f32 %v5821, %v5961
  %v5963 = vpop.f32.mrf.mxu0
  %v5964 = vadd.f32 %v5823, %v5963
  %5965 = vmatprep.mubr.f32.mxu0 0.0
  %v5966 = vand.u32 %v4345, 4294901760
  %5967 = vmatmul.mubr.f32.gmra.mxu0 %v5966
  %v5968 = vpop.f32.mrf.mxu0
  %v5969 = vadd.f32 %v5832, %v5968
  %v5970 = vpop.f32.mrf.mxu0
  %v5971 = vadd.f32 %v5834, %v5970
  %5972 = vmatprep.mubr.f32.mxu0 0.0
  %v5973 = vand.u32 %v4348, 4294901760
  %5974 = vmatmul.mubr.f32.gmra.mxu0 %v5973
  %v5975 = vpop.f32.mrf.mxu0
  %v5976 = vadd.f32 %v5843, %v5975
  %v5977 = vpop.f32.mrf.mxu0
  %v5978 = vadd.f32 %v5845, %v5977
  %5979 = vdwg.mxu0
  %5980 = vmatprep.subr.mxu0 0.0
  %5981 = vmatpush1.msra.mxu0 0.0
  %5982 = vmatprep.subr.mxu0 0.0
  %5983 = vmatpush1.msra.mxu0 0.0
  %5984 = vmatprep.subr.mxu0 0.0
  %5985 = vmatpush1.msra.mxu0 0.0
  %5986 = vmatprep.subr.mxu0 0.0
  %5987 = vmatpush1.msra.mxu0 0.0
  %5988 = vmatprep.subr.mxu0 0.0
  %5989 = vmatpush1.msra.mxu0 0.0
  %5990 = vmatprep.subr.mxu0 0.0
  %5991 = vmatpush1.msra.mxu0 0.0
  %5992 = vmatprep.subr.mxu0 0.0
  %5993 = vmatpush1.msra.mxu0 0.0
  %5994 = vmatprep.subr.mxu0 0.0
  %5995 = vmatpush1.msra.mxu0 0.0
  %5996 = vmatprep.subr.mxu0 0.0
  %5997 = vmatpush1.msra.mxu0 0.0
  %5998 = vmatprep.subr.mxu0 0.0
  %5999 = vmatpush1.msra.mxu0 0.0
  %6000 = vmatprep.subr.mxu0 0.0
  %6001 = vmatpush1.msra.mxu0 0.0
  %6002 = vmatprep.subr.mxu0 0.0
  %6003 = vmatpush1.msra.mxu0 0.0
  %v6004 = vand.u32 %v174, 4294901760
  %v6005 = vsub.f32 %v174, %v6004
  %6006 = vmatprep.subr.mxu0 %v6005
  %v6007 = vand.u32 %v171, 4294901760
  %v6008 = vsub.f32 %v171, %v6007
  %6009 = vmatpush1.msra.mxu0 %v6008
  %v6010 = vand.u32 %v121, 4294901760
  %v6011 = vsub.f32 %v121, %v6010
  %6012 = vmatprep.subr.mxu0 %v6011
  %v6013 = vand.u32 %v120, 4294901760
  %v6014 = vsub.f32 %v120, %v6013
  %6015 = vmatpush1.msra.mxu0 %v6014
  %v6016 = vand.u32 %v115, 4294901760
  %v6017 = vsub.f32 %v115, %v6016
  %6018 = vmatprep.subr.mxu0 %v6017
  %v6019 = vand.u32 %v114, 4294901760
  %v6020 = vsub.f32 %v114, %v6019
  %6021 = vmatpush1.msra.mxu0 %v6020
  %v6022 = vand.u32 %v109, 4294901760
  %v6023 = vsub.f32 %v109, %v6022
  %6024 = vmatprep.subr.mxu0 %v6023
  %v6025 = vand.u32 %v108, 4294901760
  %v6026 = vsub.f32 %v108, %v6025
  %6027 = vmatpush1.msra.mxu0 %v6026
  %6028 = vmatprep.subr.mxu0 0.0
  %6029 = vmatpush2.msra.mxu0 0.0
  %6030 = vmatprep.subr.mxu0 0.0
  %6031 = vmatpush2.msra.mxu0 0.0
  %6032 = vmatprep.subr.mxu0 0.0
  %6033 = vmatpush2.msra.mxu0 0.0
  %6034 = vmatprep.subr.mxu0 0.0
  %6035 = vmatpush2.msra.mxu0 0.0
  %6036 = vmatprep.subr.mxu0 0.0
  %6037 = vmatpush2.msra.mxu0 0.0
  %6038 = vmatprep.subr.mxu0 0.0
  %6039 = vmatpush2.msra.mxu0 0.0
  %6040 = vmatprep.subr.mxu0 0.0
  %6041 = vmatpush2.msra.mxu0 0.0
  %6042 = vmatprep.subr.mxu0 0.0
  %6043 = vmatpush2.msra.mxu0 0.0
  %6044 = vmatprep.subr.mxu0 0.0
  %6045 = vmatpush2.msra.mxu0 0.0
  %6046 = vmatprep.subr.mxu0 0.0
  %6047 = vmatpush2.msra.mxu0 0.0
  %6048 = vmatprep.subr.mxu0 0.0
  %6049 = vmatpush2.msra.mxu0 0.0
  %6050 = vmatprep.subr.mxu0 0.0
  %6051 = vmatpush2.msra.mxu0 0.0
  %6052 = vmatprep.subr.mxu0 0.0
  %6053 = vmatpush2.msra.mxu0 0.0
  %6054 = vmatprep.subr.mxu0 0.0
  %6055 = vmatpush2.msra.mxu0 0.0
  %6056 = vmatprep.subr.mxu0 0.0
  %6057 = vmatpush2.msra.mxu0 0.0
  %6058 = vmatprep.subr.mxu0 0.0
  %6059 = vmatpush2.msra.mxu0 0.0
  %6060 = vmatprep.mubr.f32.mxu0 0.0
  %v6061 = vand.u32 %v4339, 4294901760
  %v6062 = vsub.f32 %v4339, %v6061
  %6063 = vmatmul.mubr.f32.gmra.mxu0 %v6062
  %v6064 = vpop.f32.mrf.mxu0
  %v6065 = vadd.f32 %v5955, %v6064
  %v6066 = vpop.f32.mrf.mxu0
  %v6067 = vadd.f32 %v5957, %v6066
  %6068 = vmatprep.mubr.f32.mxu0 0.0
  %v6069 = vand.u32 %v4342, 4294901760
  %v6070 = vsub.f32 %v4342, %v6069
  %6071 = vmatmul.mubr.f32.gmra.mxu0 %v6070
  %v6072 = vpop.f32.mrf.mxu0
  %v6073 = vadd.f32 %v5962, %v6072
  %v6074 = vpop.f32.mrf.mxu0
  %v6075 = vadd.f32 %v5964, %v6074
  %6076 = vmatprep.mubr.f32.mxu0 0.0
  %v6077 = vand.u32 %v4345, 4294901760
  %v6078 = vsub.f32 %v4345, %v6077
  %6079 = vmatmul.mubr.f32.gmra.mxu0 %v6078
  %v6080 = vpop.f32.mrf.mxu0
  %v6081 = vadd.f32 %v5969, %v6080
  %v6082 = vpop.f32.mrf.mxu0
  %v6083 = vadd.f32 %v5971, %v6082
  %6084 = vmatprep.mubr.f32.mxu0 0.0
  %v6085 = vand.u32 %v4348, 4294901760
  %v6086 = vsub.f32 %v4348, %v6085
  %6087 = vmatmul.mubr.f32.gmra.mxu0 %v6086
  %v6088 = vpop.f32.mrf.mxu0
  %v6089 = vadd.f32 %v5976, %v6088
  %v6090 = vpop.f32.mrf.mxu0
  %v6091 = vadd.f32 %v5978, %v6090
  %6092 = vdwg.mxu0
  %6093 = vmatprep.subr.mxu0 0.0
  %6094 = vmatpush1.msra.mxu0 0.0
  %6095 = vmatprep.subr.mxu0 0.0
  %6096 = vmatpush1.msra.mxu0 0.0
  %6097 = vmatprep.subr.mxu0 0.0
  %6098 = vmatpush1.msra.mxu0 0.0
  %6099 = vmatprep.subr.mxu0 0.0
  %6100 = vmatpush1.msra.mxu0 0.0
  %6101 = vmatprep.subr.mxu0 0.0
  %6102 = vmatpush1.msra.mxu0 0.0
  %6103 = vmatprep.subr.mxu0 0.0
  %6104 = vmatpush1.msra.mxu0 0.0
  %6105 = vmatprep.subr.mxu0 0.0
  %6106 = vmatpush1.msra.mxu0 0.0
  %6107 = vmatprep.subr.mxu0 0.0
  %6108 = vmatpush1.msra.mxu0 0.0
  %6109 = vmatprep.subr.mxu0 0.0
  %6110 = vmatpush1.msra.mxu0 0.0
  %6111 = vmatprep.subr.mxu0 0.0
  %6112 = vmatpush1.msra.mxu0 0.0
  %6113 = vmatprep.subr.mxu0 0.0
  %6114 = vmatpush1.msra.mxu0 0.0
  %6115 = vmatprep.subr.mxu0 0.0
  %6116 = vmatpush1.msra.mxu0 0.0
  %v6117 = vand.u32 %v174, 4294901760
  %6118 = vmatprep.subr.mxu0 %v6117
  %v6119 = vand.u32 %v171, 4294901760
  %6120 = vmatpush1.msra.mxu0 %v6119
  %v6121 = vand.u32 %v121, 4294901760
  %6122 = vmatprep.subr.mxu0 %v6121
  %v6123 = vand.u32 %v120, 4294901760
  %6124 = vmatpush1.msra.mxu0 %v6123
  %v6125 = vand.u32 %v115, 4294901760
  %6126 = vmatprep.subr.mxu0 %v6125
  %v6127 = vand.u32 %v114, 4294901760
  %6128 = vmatpush1.msra.mxu0 %v6127
  %v6129 = vand.u32 %v109, 4294901760
  %6130 = vmatprep.subr.mxu0 %v6129
  %v6131 = vand.u32 %v108, 4294901760
  %6132 = vmatpush1.msra.mxu0 %v6131
  %6133 = vmatprep.subr.mxu0 0.0
  %6134 = vmatpush2.msra.mxu0 0.0
  %6135 = vmatprep.subr.mxu0 0.0
  %6136 = vmatpush2.msra.mxu0 0.0
  %6137 = vmatprep.subr.mxu0 0.0
  %6138 = vmatpush2.msra.mxu0 0.0
  %6139 = vmatprep.subr.mxu0 0.0
  %6140 = vmatpush2.msra.mxu0 0.0
  %6141 = vmatprep.subr.mxu0 0.0
  %6142 = vmatpush2.msra.mxu0 0.0
  %6143 = vmatprep.subr.mxu0 0.0
  %6144 = vmatpush2.msra.mxu0 0.0
  %6145 = vmatprep.subr.mxu0 0.0
  %6146 = vmatpush2.msra.mxu0 0.0
  %6147 = vmatprep.subr.mxu0 0.0
  %6148 = vmatpush2.msra.mxu0 0.0
  %6149 = vmatprep.subr.mxu0 0.0
  %6150 = vmatpush2.msra.mxu0 0.0
  %6151 = vmatprep.subr.mxu0 0.0
  %6152 = vmatpush2.msra.mxu0 0.0
  %6153 = vmatprep.subr.mxu0 0.0
  %6154 = vmatpush2.msra.mxu0 0.0
  %6155 = vmatprep.subr.mxu0 0.0
  %6156 = vmatpush2.msra.mxu0 0.0
  %6157 = vmatprep.subr.mxu0 0.0
  %6158 = vmatpush2.msra.mxu0 0.0
  %6159 = vmatprep.subr.mxu0 0.0
  %6160 = vmatpush2.msra.mxu0 0.0
  %6161 = vmatprep.subr.mxu0 0.0
  %6162 = vmatpush2.msra.mxu0 0.0
  %6163 = vmatprep.subr.mxu0 0.0
  %6164 = vmatpush2.msra.mxu0 0.0
  %6165 = vmatprep.mubr.f32.mxu0 0.0
  %v6166 = vand.u32 %v4339, 4294901760
  %v6167 = vsub.f32 %v4339, %v6166
  %v6168 = vand.u32 %v6167, 4294901760
  %6169 = vmatmul.mubr.f32.gmra.mxu0 %v6168
  %v6170 = vpop.f32.mrf.mxu0
  %v6171 = vadd.f32 %v6065, %v6170
  %v6172 = vpop.f32.mrf.mxu0
  %v6173 = vadd.f32 %v6067, %v6172
  %6174 = vmatprep.mubr.f32.mxu0 0.0
  %v6175 = vand.u32 %v4342, 4294901760
  %v6176 = vsub.f32 %v4342, %v6175
  %v6177 = vand.u32 %v6176, 4294901760
  %6178 = vmatmul.mubr.f32.gmra.mxu0 %v6177
  %v6179 = vpop.f32.mrf.mxu0
  %v6180 = vadd.f32 %v6073, %v6179
  %v6181 = vpop.f32.mrf.mxu0
  %v6182 = vadd.f32 %v6075, %v6181
  %6183 = vmatprep.mubr.f32.mxu0 0.0
  %v6184 = vand.u32 %v4345, 4294901760
  %v6185 = vsub.f32 %v4345, %v6184
  %v6186 = vand.u32 %v6185, 4294901760
  %6187 = vmatmul.mubr.f32.gmra.mxu0 %v6186
  %v6188 = vpop.f32.mrf.mxu0
  %v6189 = vadd.f32 %v6081, %v6188
  %v6190 = vpop.f32.mrf.mxu0
  %v6191 = vadd.f32 %v6083, %v6190
  %6192 = vmatprep.mubr.f32.mxu0 0.0
  %v6193 = vand.u32 %v4348, 4294901760
  %v6194 = vsub.f32 %v4348, %v6193
  %v6195 = vand.u32 %v6194, 4294901760
  %6196 = vmatmul.mubr.f32.gmra.mxu0 %v6195
  %v6197 = vpop.f32.mrf.mxu0
  %v6198 = vadd.f32 %v6089, %v6197
  %v6199 = vpop.f32.mrf.mxu0
  %v6200 = vadd.f32 %v6091, %v6199
  %6201 = vdwg.mxu0
  %6202 = vmatprep.subr.mxu0 0.0
  %6203 = vmatpush1.msra.mxu0 0.0
  %6204 = vmatprep.subr.mxu0 0.0
  %6205 = vmatpush1.msra.mxu0 0.0
  %6206 = vmatprep.subr.mxu0 0.0
  %6207 = vmatpush1.msra.mxu0 0.0
  %6208 = vmatprep.subr.mxu0 0.0
  %6209 = vmatpush1.msra.mxu0 0.0
  %6210 = vmatprep.subr.mxu0 0.0
  %6211 = vmatpush1.msra.mxu0 0.0
  %6212 = vmatprep.subr.mxu0 0.0
  %6213 = vmatpush1.msra.mxu0 0.0
  %6214 = vmatprep.subr.mxu0 0.0
  %6215 = vmatpush1.msra.mxu0 0.0
  %6216 = vmatprep.subr.mxu0 0.0
  %6217 = vmatpush1.msra.mxu0 0.0
  %6218 = vmatprep.subr.mxu0 0.0
  %6219 = vmatpush1.msra.mxu0 0.0
  %6220 = vmatprep.subr.mxu0 0.0
  %6221 = vmatpush1.msra.mxu0 0.0
  %6222 = vmatprep.subr.mxu0 0.0
  %6223 = vmatpush1.msra.mxu0 0.0
  %6224 = vmatprep.subr.mxu0 0.0
  %6225 = vmatpush1.msra.mxu0 0.0
  %v6226 = vand.u32 %v174, 4294901760
  %v6227 = vsub.f32 %v174, %v6226
  %v6228 = vand.u32 %v6227, 4294901760
  %6229 = vmatprep.subr.mxu0 %v6228
  %v6230 = vand.u32 %v171, 4294901760
  %v6231 = vsub.f32 %v171, %v6230
  %v6232 = vand.u32 %v6231, 4294901760
  %6233 = vmatpush1.msra.mxu0 %v6232
  %v6234 = vand.u32 %v121, 4294901760
  %v6235 = vsub.f32 %v121, %v6234
  %v6236 = vand.u32 %v6235, 4294901760
  %6237 = vmatprep.subr.mxu0 %v6236
  %v6238 = vand.u32 %v120, 4294901760
  %v6239 = vsub.f32 %v120, %v6238
  %v6240 = vand.u32 %v6239, 4294901760
  %6241 = vmatpush1.msra.mxu0 %v6240
  %v6242 = vand.u32 %v115, 4294901760
  %v6243 = vsub.f32 %v115, %v6242
  %v6244 = vand.u32 %v6243, 4294901760
  %6245 = vmatprep.subr.mxu0 %v6244
  %v6246 = vand.u32 %v114, 4294901760
  %v6247 = vsub.f32 %v114, %v6246
  %v6248 = vand.u32 %v6247, 4294901760
  %6249 = vmatpush1.msra.mxu0 %v6248
  %v6250 = vand.u32 %v109, 4294901760
  %v6251 = vsub.f32 %v109, %v6250
  %v6252 = vand.u32 %v6251, 4294901760
  %6253 = vmatprep.subr.mxu0 %v6252
  %v6254 = vand.u32 %v108, 4294901760
  %v6255 = vsub.f32 %v108, %v6254
  %v6256 = vand.u32 %v6255, 4294901760
  %6257 = vmatpush1.msra.mxu0 %v6256
  %6258 = vmatprep.subr.mxu0 0.0
  %6259 = vmatpush2.msra.mxu0 0.0
  %6260 = vmatprep.subr.mxu0 0.0
  %6261 = vmatpush2.msra.mxu0 0.0
  %6262 = vmatprep.subr.mxu0 0.0
  %6263 = vmatpush2.msra.mxu0 0.0
  %6264 = vmatprep.subr.mxu0 0.0
  %6265 = vmatpush2.msra.mxu0 0.0
  %6266 = vmatprep.subr.mxu0 0.0
  %6267 = vmatpush2.msra.mxu0 0.0
  %6268 = vmatprep.subr.mxu0 0.0
  %6269 = vmatpush2.msra.mxu0 0.0
  %6270 = vmatprep.subr.mxu0 0.0
  %6271 = vmatpush2.msra.mxu0 0.0
  %6272 = vmatprep.subr.mxu0 0.0
  %6273 = vmatpush2.msra.mxu0 0.0
  %6274 = vmatprep.subr.mxu0 0.0
  %6275 = vmatpush2.msra.mxu0 0.0
  %6276 = vmatprep.subr.mxu0 0.0
  %6277 = vmatpush2.msra.mxu0 0.0
  %6278 = vmatprep.subr.mxu0 0.0
  %6279 = vmatpush2.msra.mxu0 0.0
  %6280 = vmatprep.subr.mxu0 0.0
  %6281 = vmatpush2.msra.mxu0 0.0
  %6282 = vmatprep.subr.mxu0 0.0
  %6283 = vmatpush2.msra.mxu0 0.0
  %6284 = vmatprep.subr.mxu0 0.0
  %6285 = vmatpush2.msra.mxu0 0.0
  %6286 = vmatprep.subr.mxu0 0.0
  %6287 = vmatpush2.msra.mxu0 0.0
  %6288 = vmatprep.subr.mxu0 0.0
  %6289 = vmatpush2.msra.mxu0 0.0
  %6290 = vmatprep.mubr.f32.mxu0 0.0
  %v6291 = vand.u32 %v4339, 4294901760
  %6292 = vmatmul.mubr.f32.gmra.mxu0 %v6291
  %v6293 = vpop.f32.mrf.mxu0
  %v6294 = vadd.f32 %v6171, %v6293
  %v6295 = vpop.f32.mrf.mxu0
  %v6296 = vadd.f32 %v6173, %v6295
  %6297 = vmatprep.mubr.f32.mxu0 0.0
  %v6298 = vand.u32 %v4342, 4294901760
  %6299 = vmatmul.mubr.f32.gmra.mxu0 %v6298
  %v6300 = vpop.f32.mrf.mxu0
  %v6301 = vadd.f32 %v6180, %v6300
  %v6302 = vpop.f32.mrf.mxu0
  %v6303 = vadd.f32 %v6182, %v6302
  %6304 = vmatprep.mubr.f32.mxu0 0.0
  %v6305 = vand.u32 %v4345, 4294901760
  %6306 = vmatmul.mubr.f32.gmra.mxu0 %v6305
  %v6307 = vpop.f32.mrf.mxu0
  %v6308 = vadd.f32 %v6189, %v6307
  %v6309 = vpop.f32.mrf.mxu0
  %v6310 = vadd.f32 %v6191, %v6309
  %6311 = vmatprep.mubr.f32.mxu0 0.0
  %v6312 = vand.u32 %v4348, 4294901760
  %6313 = vmatmul.mubr.f32.gmra.mxu0 %v6312
  %v6314 = vpop.f32.mrf.mxu0
  %v6315 = vadd.f32 %v6198, %v6314
  %v6316 = vpop.f32.mrf.mxu0
  %v6317 = vadd.f32 %v6200, %v6316
  %6318 = vdwg.mxu0
  %6319 = vmatprep.subr.mxu0 0.0
  %6320 = vmatpush1.msra.mxu0 0.0
  %6321 = vmatprep.subr.mxu0 0.0
  %6322 = vmatpush1.msra.mxu0 0.0
  %6323 = vmatprep.subr.mxu0 0.0
  %6324 = vmatpush1.msra.mxu0 0.0
  %6325 = vmatprep.subr.mxu0 0.0
  %6326 = vmatpush1.msra.mxu0 0.0
  %6327 = vmatprep.subr.mxu0 0.0
  %6328 = vmatpush1.msra.mxu0 0.0
  %6329 = vmatprep.subr.mxu0 0.0
  %6330 = vmatpush1.msra.mxu0 0.0
  %6331 = vmatprep.subr.mxu0 0.0
  %6332 = vmatpush1.msra.mxu0 0.0
  %6333 = vmatprep.subr.mxu0 0.0
  %6334 = vmatpush1.msra.mxu0 0.0
  %6335 = vmatprep.subr.mxu0 0.0
  %6336 = vmatpush1.msra.mxu0 0.0
  %6337 = vmatprep.subr.mxu0 0.0
  %6338 = vmatpush1.msra.mxu0 0.0
  %6339 = vmatprep.subr.mxu0 0.0
  %6340 = vmatpush1.msra.mxu0 0.0
  %6341 = vmatprep.subr.mxu0 0.0
  %6342 = vmatpush1.msra.mxu0 0.0
  %v6343 = vand.u32 %v174, 4294901760
  %6344 = vmatprep.subr.mxu0 %v6343
  %v6345 = vand.u32 %v171, 4294901760
  %6346 = vmatpush1.msra.mxu0 %v6345
  %v6347 = vand.u32 %v121, 4294901760
  %6348 = vmatprep.subr.mxu0 %v6347
  %v6349 = vand.u32 %v120, 4294901760
  %6350 = vmatpush1.msra.mxu0 %v6349
  %v6351 = vand.u32 %v115, 4294901760
  %6352 = vmatprep.subr.mxu0 %v6351
  %v6353 = vand.u32 %v114, 4294901760
  %6354 = vmatpush1.msra.mxu0 %v6353
  %v6355 = vand.u32 %v109, 4294901760
  %6356 = vmatprep.subr.mxu0 %v6355
  %v6357 = vand.u32 %v108, 4294901760
  %6358 = vmatpush1.msra.mxu0 %v6357
  %6359 = vmatprep.subr.mxu0 0.0
  %6360 = vmatpush2.msra.mxu0 0.0
  %6361 = vmatprep.subr.mxu0 0.0
  %6362 = vmatpush2.msra.mxu0 0.0
  %6363 = vmatprep.subr.mxu0 0.0
  %6364 = vmatpush2.msra.mxu0 0.0
  %6365 = vmatprep.subr.mxu0 0.0
  %6366 = vmatpush2.msra.mxu0 0.0
  %6367 = vmatprep.subr.mxu0 0.0
  %6368 = vmatpush2.msra.mxu0 0.0
  %6369 = vmatprep.subr.mxu0 0.0
  %6370 = vmatpush2.msra.mxu0 0.0
  %6371 = vmatprep.subr.mxu0 0.0
  %6372 = vmatpush2.msra.mxu0 0.0
  %6373 = vmatprep.subr.mxu0 0.0
  %6374 = vmatpush2.msra.mxu0 0.0
  %6375 = vmatprep.subr.mxu0 0.0
  %6376 = vmatpush2.msra.mxu0 0.0
  %6377 = vmatprep.subr.mxu0 0.0
  %6378 = vmatpush2.msra.mxu0 0.0
  %6379 = vmatprep.subr.mxu0 0.0
  %6380 = vmatpush2.msra.mxu0 0.0
  %6381 = vmatprep.subr.mxu0 0.0
  %6382 = vmatpush2.msra.mxu0 0.0
  %6383 = vmatprep.subr.mxu0 0.0
  %6384 = vmatpush2.msra.mxu0 0.0
  %6385 = vmatprep.subr.mxu0 0.0
  %6386 = vmatpush2.msra.mxu0 0.0
  %6387 = vmatprep.subr.mxu0 0.0
  %6388 = vmatpush2.msra.mxu0 0.0
  %6389 = vmatprep.subr.mxu0 0.0
  %6390 = vmatpush2.msra.mxu0 0.0
  %6391 = vmatprep.mubr.f32.mxu0 0.0
  %v6392 = vand.u32 %v4339, 4294901760
  %6393 = vmatmul.mubr.f32.gmra.mxu0 %v6392
  %v6394 = vpop.f32.mrf.mxu0
  %v6395 = vadd.f32 %v6294, %v6394
  %v6396 = vpop.f32.mrf.mxu0
  %v6397 = vadd.f32 %v6296, %v6396
  %6398 = vmatprep.mubr.f32.mxu0 0.0
  %v6399 = vand.u32 %v4342, 4294901760
  %6400 = vmatmul.mubr.f32.gmra.mxu0 %v6399
  %v6401 = vpop.f32.mrf.mxu0
  %v6402 = vadd.f32 %v6301, %v6401
  %v6403 = vpop.f32.mrf.mxu0
  %v6404 = vadd.f32 %v6303, %v6403
  %6405 = vmatprep.mubr.f32.mxu0 0.0
  %v6406 = vand.u32 %v4345, 4294901760
  %6407 = vmatmul.mubr.f32.gmra.mxu0 %v6406
  %v6408 = vpop.f32.mrf.mxu0
  %v6409 = vadd.f32 %v6308, %v6408
  %v6410 = vpop.f32.mrf.mxu0
  %v6411 = vadd.f32 %v6310, %v6410
  %6412 = vmatprep.mubr.f32.mxu0 0.0
  %v6413 = vand.u32 %v4348, 4294901760
  %6414 = vmatmul.mubr.f32.gmra.mxu0 %v6413
  %v6415 = vpop.f32.mrf.mxu0
  %v6416 = vadd.f32 %v6315, %v6415
  %v6417 = vpop.f32.mrf.mxu0
  %v6418 = vadd.f32 %v6317, %v6417
  %6419 = vdwg.mxu0
  %v6420 = vmul.u32 %v134, 2
  %v6421 = vmul.u32 %v135, 2
  %v6422 = vmul.u32 %v136, 2
  %v6423 = vmul.u32 %v137, 2
  %v6424 = vmul.u32 %v138, 2
  %v6425 = vmul.u32 %v139, 2
  %v6426 = vsub.s32 %v6420, 1
  %v6427 = vsub.s32 %v6421, 1
  %v6428 = vsub.s32 %v6422, 1
  %v6429 = vsub.s32 %v6423, 1
  %v6430 = vsub.s32 %v6424, 1
  %v6431 = vsub.s32 %v6425, 1
  %vm6432 = vcmp.eq.s32.totalorder %v15, %v6426
  %vm6433 = vcmp.eq.s32.totalorder %v15, %v6427
  %vm6434 = vcmp.eq.s32.totalorder %v15, %v6428
  %vm6435 = vcmp.eq.s32.totalorder %v15, %v6429
  %vm6436 = vcmp.eq.s32.totalorder %v15, %v6430
  %vm6437 = vcmp.eq.s32.totalorder %v15, %v6431
  %vm6438 = vcmp.eq.s32.totalorder %v16, %v6426
  %vm6439 = vcmp.eq.s32.totalorder %v16, %v6427
  %vm6440 = vcmp.eq.s32.totalorder %v16, %v6428
  %vm6441 = vcmp.eq.s32.totalorder %v16, %v6429
  %vm6442 = vcmp.eq.s32.totalorder %v16, %v6430
  %vm6443 = vcmp.eq.s32.totalorder %v16, %v6431
  %vm6444 = vcmp.eq.s32.totalorder %v17, %v6426
  %vm6445 = vcmp.eq.s32.totalorder %v17, %v6427
  %vm6446 = vcmp.eq.s32.totalorder %v17, %v6428
  %vm6447 = vcmp.eq.s32.totalorder %v17, %v6429
  %vm6448 = vcmp.eq.s32.totalorder %v17, %v6430
  %vm6449 = vcmp.eq.s32.totalorder %v17, %v6431
  %vm6450 = vcmp.eq.s32.totalorder %v18, %v6426
  %vm6451 = vcmp.eq.s32.totalorder %v18, %v6427
  %vm6452 = vcmp.eq.s32.totalorder %v18, %v6428
  %vm6453 = vcmp.eq.s32.totalorder %v18, %v6429
  %vm6454 = vcmp.eq.s32.totalorder %v18, %v6430
  %vm6455 = vcmp.eq.s32.totalorder %v18, %v6431
  %v6456 = vsel %vm6432, 1, 0
  %v6457 = vsel %vm6433, 1, 0
  %v6458 = vsel %vm6434, 1, 0
  %v6459 = vsel %vm6435, 1, 0
  %v6460 = vsel %vm6436, 1, 0
  %v6461 = vsel %vm6437, 1, 0
  %v6462 = vsel %vm6438, 1, 0
  %v6463 = vsel %vm6439, 1, 0
  %v6464 = vsel %vm6440, 1, 0
  %v6465 = vsel %vm6441, 1, 0
  %v6466 = vsel %vm6442, 1, 0
  %v6467 = vsel %vm6443, 1, 0
  %v6468 = vsel %vm6444, 1, 0
  %v6469 = vsel %vm6445, 1, 0
  %v6470 = vsel %vm6446, 1, 0
  %v6471 = vsel %vm6447, 1, 0
  %v6472 = vsel %vm6448, 1, 0
  %v6473 = vsel %vm6449, 1, 0
  %v6474 = vsel %vm6450, 1, 0
  %v6475 = vsel %vm6451, 1, 0
  %v6476 = vsel %vm6452, 1, 0
  %v6477 = vsel %vm6453, 1, 0
  %v6478 = vsel %vm6454, 1, 0
  %v6479 = vsel %vm6455, 1, 0
  %v6480 = vcvt.s32.f32 %v6456
  %v6481 = vcvt.s32.f32 %v6457
  %v6482 = vcvt.s32.f32 %v6458
  %v6483 = vcvt.s32.f32 %v6459
  %v6484 = vcvt.s32.f32 %v6460
  %v6485 = vcvt.s32.f32 %v6461
  %v6486 = vcvt.s32.f32 %v6462
  %v6487 = vcvt.s32.f32 %v6463
  %v6488 = vcvt.s32.f32 %v6464
  %v6489 = vcvt.s32.f32 %v6465
  %v6490 = vcvt.s32.f32 %v6466
  %v6491 = vcvt.s32.f32 %v6467
  %v6492 = vcvt.s32.f32 %v6468
  %v6493 = vcvt.s32.f32 %v6469
  %v6494 = vcvt.s32.f32 %v6470
  %v6495 = vcvt.s32.f32 %v6471
  %v6496 = vcvt.s32.f32 %v6472
  %v6497 = vcvt.s32.f32 %v6473
  %v6498 = vcvt.s32.f32 %v6474
  %v6499 = vcvt.s32.f32 %v6475
  %v6500 = vcvt.s32.f32 %v6476
  %v6501 = vcvt.s32.f32 %v6477
  %v6502 = vcvt.s32.f32 %v6478
  %v6503 = vcvt.s32.f32 %v6479
  %v6504 = vmul.f32 %v841, %v6480
  %v6505 = vmul.f32 %v843, %v6481
  %v6506 = vmul.f32 %v1531, %v6482
  %v6507 = vmul.f32 %v1533, %v6483
  %v6508 = vmul.f32 %v2221, %v6484
  %v6509 = vmul.f32 %v2223, %v6485
  %v6510 = vmul.f32 %v848, %v6486
  %v6511 = vmul.f32 %v850, %v6487
  %v6512 = vmul.f32 %v1538, %v6488
  %v6513 = vmul.f32 %v1540, %v6489
  %v6514 = vmul.f32 %v2228, %v6490
  %v6515 = vmul.f32 %v2230, %v6491
  %v6516 = vmul.f32 %v855, %v6492
  %v6517 = vmul.f32 %v857, %v6493
  %v6518 = vmul.f32 %v1545, %v6494
  %v6519 = vmul.f32 %v1547, %v6495
  %v6520 = vmul.f32 %v2235, %v6496
  %v6521 = vmul.f32 %v2237, %v6497
  %v6522 = vmul.f32 %v862, %v6498
  %v6523 = vmul.f32 %v864, %v6499
  %v6524 = vmul.f32 %v1552, %v6500
  %v6525 = vmul.f32 %v1554, %v6501
  %v6526 = vmul.f32 %v2242, %v6502
  %v6527 = vmul.f32 %v2244, %v6503
  %v6528 = vadd.f32 %v6504, %v6510
  %v6529 = vadd.f32 %v6528, %v6516
  %v6530 = vsel %vm157, %v6522, 0.0
  %v6531 = vadd.f32 %v6529, %v6530
  %v6532 = vrot.slane %v6531, 4
  %v6533 = vadd.f32 %v6531, %v6532
  %v6534 = vrot.slane %v6533, 2
  %v6535 = vadd.f32 %v6533, %v6534
  %v6536 = vrot.slane %v6535, 1
  %v6537 = vadd.f32 %v6535, %v6536
  %v6538 = vadd.f32 %v6505, %v6511
  %v6539 = vadd.f32 %v6538, %v6517
  %v6540 = vsel %vm157, %v6523, 0.0
  %v6541 = vadd.f32 %v6539, %v6540
  %v6542 = vrot.slane %v6541, 4
  %v6543 = vadd.f32 %v6541, %v6542
  %v6544 = vrot.slane %v6543, 2
  %v6545 = vadd.f32 %v6543, %v6544
  %v6546 = vrot.slane %v6545, 1
  %v6547 = vadd.f32 %v6545, %v6546
  %v6548 = vadd.f32 %v6506, %v6512
  %v6549 = vadd.f32 %v6548, %v6518
  %v6550 = vsel %vm157, %v6524, 0.0
  %v6551 = vadd.f32 %v6549, %v6550
  %v6552 = vrot.slane %v6551, 4
  %v6553 = vadd.f32 %v6551, %v6552
  %v6554 = vrot.slane %v6553, 2
  %v6555 = vadd.f32 %v6553, %v6554
  %v6556 = vrot.slane %v6555, 1
  %v6557 = vadd.f32 %v6555, %v6556
  %v6558 = vadd.f32 %v6507, %v6513
  %v6559 = vadd.f32 %v6558, %v6519
  %v6560 = vsel %vm157, %v6525, 0.0
  %v6561 = vadd.f32 %v6559, %v6560
  %v6562 = vrot.slane %v6561, 4
  %v6563 = vadd.f32 %v6561, %v6562
  %v6564 = vrot.slane %v6563, 2
  %v6565 = vadd.f32 %v6563, %v6564
  %v6566 = vrot.slane %v6565, 1
  %v6567 = vadd.f32 %v6565, %v6566
  %v6568 = vadd.f32 %v6508, %v6514
  %v6569 = vadd.f32 %v6568, %v6520
  %v6570 = vsel %vm157, %v6526, 0.0
  %v6571 = vadd.f32 %v6569, %v6570
  %v6572 = vrot.slane %v6571, 4
  %v6573 = vadd.f32 %v6571, %v6572
  %v6574 = vrot.slane %v6573, 2
  %v6575 = vadd.f32 %v6573, %v6574
  %v6576 = vrot.slane %v6575, 1
  %v6577 = vadd.f32 %v6575, %v6576
  %v6578 = vadd.f32 %v6509, %v6515
  %v6579 = vadd.f32 %v6578, %v6521
  %v6580 = vsel %vm157, %v6527, 0.0
  %v6581 = vadd.f32 %v6579, %v6580
  %v6582 = vrot.slane %v6581, 4
  %v6583 = vadd.f32 %v6581, %v6582
  %v6584 = vrot.slane %v6583, 2
  %v6585 = vadd.f32 %v6583, %v6584
  %v6586 = vrot.slane %v6585, 1
  %v6587 = vadd.f32 %v6585, %v6586
  %v6588 = vld [vmem:[%s1] sm:$0xff]
  %v6589 = vld [vmem:[%s1 + $0x8] sm:$0xff]
  %v6590 = vld [vmem:[%s1 + $0x10] sm:$0x7]
  %6592 = vset.pattern.permute.xlu0 0
  %6593 = vperm.xlu0 %6592, %v6588
  %v6594 = vpop.permute.xlu0 %6593
  %6597 = vset.pattern.permute.xlu0 0
  %6598 = vperm.xlu0 %6597, %v6589
  %v6599 = vpop.permute.xlu0 %6598
  %6602 = vset.pattern.permute.xlu0 0
  %6603 = vperm.xlu0 %6602, %v6590
  %v6604 = vpop.permute.xlu0 %6603
  %v6606 = vmul.f32 %v6594, %v6537
  %v6607 = vmul.f32 %v6594, %v6547
  %v6608 = vmul.f32 %v6599, %v6537
  %v6609 = vmul.f32 %v6599, %v6547
  %v6610 = vmul.f32 %v6604, %v6537
  %v6611 = vmul.f32 %v6604, %v6547
  %v6612 = vadd.f32 %v6606, 0.0
  %v6613 = vadd.f32 %v6607, 0.0
  %v6614 = vadd.f32 %v6608, 0.0
  %v6615 = vadd.f32 %v6609, 0.0
  %v6616 = vadd.f32 %v6610, 0.0
  %v6617 = vadd.f32 %v6611, 0.0
  %s6618 = scalar_lea.vmem %s1, 72
  %v6619 = vld [vmem:[%s6618] sm:$0xff]
  %v6620 = vld [vmem:[%s6618 + $0x8] sm:$0xff]
  %v6621 = vld [vmem:[%s6618 + $0x10] sm:$0x7]
  %6623 = vset.pattern.permute.xlu0 0
  %6624 = vperm.xlu0 %6623, %v6619
  %v6625 = vpop.permute.xlu0 %6624
  %6628 = vset.pattern.permute.xlu0 0
  %6629 = vperm.xlu0 %6628, %v6620
  %v6630 = vpop.permute.xlu0 %6629
  %6633 = vset.pattern.permute.xlu0 0
  %6634 = vperm.xlu0 %6633, %v6621
  %v6635 = vpop.permute.xlu0 %6634
  %v6637 = vmul.f32 %v6625, %v6557
  %v6638 = vmul.f32 %v6625, %v6567
  %v6639 = vmul.f32 %v6630, %v6557
  %v6640 = vmul.f32 %v6630, %v6567
  %v6641 = vmul.f32 %v6635, %v6557
  %v6642 = vmul.f32 %v6635, %v6567
  %v6643 = vadd.f32 %v6612, %v6637
  %v6644 = vadd.f32 %v6613, %v6638
  %v6645 = vadd.f32 %v6614, %v6639
  %v6646 = vadd.f32 %v6615, %v6640
  %v6647 = vadd.f32 %v6616, %v6641
  %v6648 = vadd.f32 %v6617, %v6642
  %s6649 = scalar_lea.vmem %s1, 144
  %v6650 = vld [vmem:[%s6649] sm:$0xff]
  %v6651 = vld [vmem:[%s6649 + $0x8] sm:$0xff]
  %v6652 = vld [vmem:[%s6649 + $0x10] sm:$0x7]
  %6654 = vset.pattern.permute.xlu0 0
  %6655 = vperm.xlu0 %6654, %v6650
  %v6656 = vpop.permute.xlu0 %6655
  %6659 = vset.pattern.permute.xlu0 0
  %6660 = vperm.xlu0 %6659, %v6651
  %v6661 = vpop.permute.xlu0 %6660
  %6664 = vset.pattern.permute.xlu0 0
  %6665 = vperm.xlu0 %6664, %v6652
  %v6666 = vpop.permute.xlu0 %6665
  %v6668 = vmul.f32 %v6656, %v6577
  %v6669 = vmul.f32 %v6656, %v6587
  %v6670 = vmul.f32 %v6661, %v6577
  %v6671 = vmul.f32 %v6661, %v6587
  %v6672 = vmul.f32 %v6666, %v6577
  %v6673 = vmul.f32 %v6666, %v6587
  %v6674 = vadd.f32 %v6643, %v6668
  %v6675 = vadd.f32 %v6644, %v6669
  %v6676 = vadd.f32 %v6645, %v6670
  %v6677 = vadd.f32 %v6646, %v6671
  %v6678 = vadd.f32 %v6647, %v6672
  %v6679 = vadd.f32 %v6648, %v6673
  %v6680 = vmul.f32 %v2928, %v6480
  %v6681 = vmul.f32 %v2930, %v6481
  %v6682 = vmul.f32 %v3618, %v6482
  %v6683 = vmul.f32 %v3620, %v6483
  %v6684 = vmul.f32 %v4308, %v6484
  %v6685 = vmul.f32 %v4310, %v6485
  %v6686 = vmul.f32 %v2935, %v6486
  %v6687 = vmul.f32 %v2937, %v6487
  %v6688 = vmul.f32 %v3625, %v6488
  %v6689 = vmul.f32 %v3627, %v6489
  %v6690 = vmul.f32 %v4315, %v6490
  %v6691 = vmul.f32 %v4317, %v6491
  %v6692 = vmul.f32 %v2942, %v6492
  %v6693 = vmul.f32 %v2944, %v6493
  %v6694 = vmul.f32 %v3632, %v6494
  %v6695 = vmul.f32 %v3634, %v6495
  %v6696 = vmul.f32 %v4322, %v6496
  %v6697 = vmul.f32 %v4324, %v6497
  %v6698 = vmul.f32 %v2949, %v6498
  %v6699 = vmul.f32 %v2951, %v6499
  %v6700 = vmul.f32 %v3639, %v6500
  %v6701 = vmul.f32 %v3641, %v6501
  %v6702 = vmul.f32 %v4329, %v6502
  %v6703 = vmul.f32 %v4331, %v6503
  %v6704 = vadd.f32 %v6680, %v6686
  %v6705 = vadd.f32 %v6704, %v6692
  %v6706 = vsel %vm157, %v6698, 0.0
  %v6707 = vadd.f32 %v6705, %v6706
  %v6708 = vrot.slane %v6707, 4
  %v6709 = vadd.f32 %v6707, %v6708
  %v6710 = vrot.slane %v6709, 2
  %v6711 = vadd.f32 %v6709, %v6710
  %v6712 = vrot.slane %v6711, 1
  %v6713 = vadd.f32 %v6711, %v6712
  %v6714 = vadd.f32 %v6681, %v6687
  %v6715 = vadd.f32 %v6714, %v6693
  %v6716 = vsel %vm157, %v6699, 0.0
  %v6717 = vadd.f32 %v6715, %v6716
  %v6718 = vrot.slane %v6717, 4
  %v6719 = vadd.f32 %v6717, %v6718
  %v6720 = vrot.slane %v6719, 2
  %v6721 = vadd.f32 %v6719, %v6720
  %v6722 = vrot.slane %v6721, 1
  %v6723 = vadd.f32 %v6721, %v6722
  %v6724 = vadd.f32 %v6682, %v6688
  %v6725 = vadd.f32 %v6724, %v6694
  %v6726 = vsel %vm157, %v6700, 0.0
  %v6727 = vadd.f32 %v6725, %v6726
  %v6728 = vrot.slane %v6727, 4
  %v6729 = vadd.f32 %v6727, %v6728
  %v6730 = vrot.slane %v6729, 2
  %v6731 = vadd.f32 %v6729, %v6730
  %v6732 = vrot.slane %v6731, 1
  %v6733 = vadd.f32 %v6731, %v6732
  %v6734 = vadd.f32 %v6683, %v6689
  %v6735 = vadd.f32 %v6734, %v6695
  %v6736 = vsel %vm157, %v6701, 0.0
  %v6737 = vadd.f32 %v6735, %v6736
  %v6738 = vrot.slane %v6737, 4
  %v6739 = vadd.f32 %v6737, %v6738
  %v6740 = vrot.slane %v6739, 2
  %v6741 = vadd.f32 %v6739, %v6740
  %v6742 = vrot.slane %v6741, 1
  %v6743 = vadd.f32 %v6741, %v6742
  %v6744 = vadd.f32 %v6684, %v6690
  %v6745 = vadd.f32 %v6744, %v6696
  %v6746 = vsel %vm157, %v6702, 0.0
  %v6747 = vadd.f32 %v6745, %v6746
  %v6748 = vrot.slane %v6747, 4
  %v6749 = vadd.f32 %v6747, %v6748
  %v6750 = vrot.slane %v6749, 2
  %v6751 = vadd.f32 %v6749, %v6750
  %v6752 = vrot.slane %v6751, 1
  %v6753 = vadd.f32 %v6751, %v6752
  %v6754 = vadd.f32 %v6685, %v6691
  %v6755 = vadd.f32 %v6754, %v6697
  %v6756 = vsel %vm157, %v6703, 0.0
  %v6757 = vadd.f32 %v6755, %v6756
  %v6758 = vrot.slane %v6757, 4
  %v6759 = vadd.f32 %v6757, %v6758
  %v6760 = vrot.slane %v6759, 2
  %v6761 = vadd.f32 %v6759, %v6760
  %v6762 = vrot.slane %v6761, 1
  %v6763 = vadd.f32 %v6761, %v6762
  %s6764 = scalar_lea.vmem %s1, 24
  %v6765 = vld [vmem:[%s6764] sm:$0xff]
  %v6766 = vld [vmem:[%s6764 + $0x8] sm:$0xff]
  %v6767 = vld [vmem:[%s6764 + $0x10] sm:$0x7]
  %6769 = vset.pattern.permute.xlu0 0
  %6770 = vperm.xlu0 %6769, %v6765
  %v6771 = vpop.permute.xlu0 %6770
  %6774 = vset.pattern.permute.xlu0 0
  %6775 = vperm.xlu0 %6774, %v6766
  %v6776 = vpop.permute.xlu0 %6775
  %6779 = vset.pattern.permute.xlu0 0
  %6780 = vperm.xlu0 %6779, %v6767
  %v6781 = vpop.permute.xlu0 %6780
  %v6783 = vmul.f32 %v6771, %v6713
  %v6784 = vmul.f32 %v6771, %v6723
  %v6785 = vmul.f32 %v6776, %v6713
  %v6786 = vmul.f32 %v6776, %v6723
  %v6787 = vmul.f32 %v6781, %v6713
  %v6788 = vmul.f32 %v6781, %v6723
  %v6789 = vadd.f32 %v6674, %v6783
  %v6790 = vadd.f32 %v6675, %v6784
  %v6791 = vadd.f32 %v6676, %v6785
  %v6792 = vadd.f32 %v6677, %v6786
  %v6793 = vadd.f32 %v6678, %v6787
  %v6794 = vadd.f32 %v6679, %v6788
  %s6795 = scalar_lea.vmem %s1, 96
  %v6796 = vld [vmem:[%s6795] sm:$0xff]
  %v6797 = vld [vmem:[%s6795 + $0x8] sm:$0xff]
  %v6798 = vld [vmem:[%s6795 + $0x10] sm:$0x7]
  %6800 = vset.pattern.permute.xlu0 0
  %6801 = vperm.xlu0 %6800, %v6796
  %v6802 = vpop.permute.xlu0 %6801
  %6805 = vset.pattern.permute.xlu0 0
  %6806 = vperm.xlu0 %6805, %v6797
  %v6807 = vpop.permute.xlu0 %6806
  %6810 = vset.pattern.permute.xlu0 0
  %6811 = vperm.xlu0 %6810, %v6798
  %v6812 = vpop.permute.xlu0 %6811
  %v6814 = vmul.f32 %v6802, %v6733
  %v6815 = vmul.f32 %v6802, %v6743
  %v6816 = vmul.f32 %v6807, %v6733
  %v6817 = vmul.f32 %v6807, %v6743
  %v6818 = vmul.f32 %v6812, %v6733
  %v6819 = vmul.f32 %v6812, %v6743
  %v6820 = vadd.f32 %v6789, %v6814
  %v6821 = vadd.f32 %v6790, %v6815
  %v6822 = vadd.f32 %v6791, %v6816
  %v6823 = vadd.f32 %v6792, %v6817
  %v6824 = vadd.f32 %v6793, %v6818
  %v6825 = vadd.f32 %v6794, %v6819
  %s6826 = scalar_lea.vmem %s1, 168
  %v6827 = vld [vmem:[%s6826] sm:$0xff]
  %v6828 = vld [vmem:[%s6826 + $0x8] sm:$0xff]
  %v6829 = vld [vmem:[%s6826 + $0x10] sm:$0x7]
  %6831 = vset.pattern.permute.xlu0 0
  %6832 = vperm.xlu0 %6831, %v6827
  %v6833 = vpop.permute.xlu0 %6832
  %6836 = vset.pattern.permute.xlu0 0
  %6837 = vperm.xlu0 %6836, %v6828
  %v6838 = vpop.permute.xlu0 %6837
  %6841 = vset.pattern.permute.xlu0 0
  %6842 = vperm.xlu0 %6841, %v6829
  %v6843 = vpop.permute.xlu0 %6842
  %v6845 = vmul.f32 %v6833, %v6753
  %v6846 = vmul.f32 %v6833, %v6763
  %v6847 = vmul.f32 %v6838, %v6753
  %v6848 = vmul.f32 %v6838, %v6763
  %v6849 = vmul.f32 %v6843, %v6753
  %v6850 = vmul.f32 %v6843, %v6763
  %v6851 = vadd.f32 %v6820, %v6845
  %v6852 = vadd.f32 %v6821, %v6846
  %v6853 = vadd.f32 %v6822, %v6847
  %v6854 = vadd.f32 %v6823, %v6848
  %v6855 = vadd.f32 %v6824, %v6849
  %v6856 = vadd.f32 %v6825, %v6850
  %v6857 = vmul.f32 %v5015, %v6480
  %v6858 = vmul.f32 %v5017, %v6481
  %v6859 = vmul.f32 %v5705, %v6482
  %v6860 = vmul.f32 %v5707, %v6483
  %v6861 = vmul.f32 %v6395, %v6484
  %v6862 = vmul.f32 %v6397, %v6485
  %v6863 = vmul.f32 %v5022, %v6486
  %v6864 = vmul.f32 %v5024, %v6487
  %v6865 = vmul.f32 %v5712, %v6488
  %v6866 = vmul.f32 %v5714, %v6489
  %v6867 = vmul.f32 %v6402, %v6490
  %v6868 = vmul.f32 %v6404, %v6491
  %v6869 = vmul.f32 %v5029, %v6492
  %v6870 = vmul.f32 %v5031, %v6493
  %v6871 = vmul.f32 %v5719, %v6494
  %v6872 = vmul.f32 %v5721, %v6495
  %v6873 = vmul.f32 %v6409, %v6496
  %v6874 = vmul.f32 %v6411, %v6497
  %v6875 = vmul.f32 %v5036, %v6498
  %v6876 = vmul.f32 %v5038, %v6499
  %v6877 = vmul.f32 %v5726, %v6500
  %v6878 = vmul.f32 %v5728, %v6501
  %v6879 = vmul.f32 %v6416, %v6502
  %v6880 = vmul.f32 %v6418, %v6503
  %v6881 = vadd.f32 %v6857, %v6863
  %v6882 = vadd.f32 %v6881, %v6869
  %v6883 = vsel %vm157, %v6875, 0.0
  %v6884 = vadd.f32 %v6882, %v6883
  %v6885 = vrot.slane %v6884, 4
  %v6886 = vadd.f32 %v6884, %v6885
  %v6887 = vrot.slane %v6886, 2
  %v6888 = vadd.f32 %v6886, %v6887
  %v6889 = vrot.slane %v6888, 1
  %v6890 = vadd.f32 %v6888, %v6889
  %v6891 = vadd.f32 %v6858, %v6864
  %v6892 = vadd.f32 %v6891, %v6870
  %v6893 = vsel %vm157, %v6876, 0.0
  %v6894 = vadd.f32 %v6892, %v6893
  %v6895 = vrot.slane %v6894, 4
  %v6896 = vadd.f32 %v6894, %v6895
  %v6897 = vrot.slane %v6896, 2
  %v6898 = vadd.f32 %v6896, %v6897
  %v6899 = vrot.slane %v6898, 1
  %v6900 = vadd.f32 %v6898, %v6899
  %v6901 = vadd.f32 %v6859, %v6865
  %v6902 = vadd.f32 %v6901, %v6871
  %v6903 = vsel %vm157, %v6877, 0.0
  %v6904 = vadd.f32 %v6902, %v6903
  %v6905 = vrot.slane %v6904, 4
  %v6906 = vadd.f32 %v6904, %v6905
  %v6907 = vrot.slane %v6906, 2
  %v6908 = vadd.f32 %v6906, %v6907
  %v6909 = vrot.slane %v6908, 1
  %v6910 = vadd.f32 %v6908, %v6909
  %v6911 = vadd.f32 %v6860, %v6866
  %v6912 = vadd.f32 %v6911, %v6872
  %v6913 = vsel %vm157, %v6878, 0.0
  %v6914 = vadd.f32 %v6912, %v6913
  %v6915 = vrot.slane %v6914, 4
  %v6916 = vadd.f32 %v6914, %v6915
  %v6917 = vrot.slane %v6916, 2
  %v6918 = vadd.f32 %v6916, %v6917
  %v6919 = vrot.slane %v6918, 1
  %v6920 = vadd.f32 %v6918, %v6919
  %v6921 = vadd.f32 %v6861, %v6867
  %v6922 = vadd.f32 %v6921, %v6873
  %v6923 = vsel %vm157, %v6879, 0.0
  %v6924 = vadd.f32 %v6922, %v6923
  %v6925 = vrot.slane %v6924, 4
  %v6926 = vadd.f32 %v6924, %v6925
  %v6927 = vrot.slane %v6926, 2
  %v6928 = vadd.f32 %v6926, %v6927
  %v6929 = vrot.slane %v6928, 1
  %v6930 = vadd.f32 %v6928, %v6929
  %v6931 = vadd.f32 %v6862, %v6868
  %v6932 = vadd.f32 %v6931, %v6874
  %v6933 = vsel %vm157, %v6880, 0.0
  %v6934 = vadd.f32 %v6932, %v6933
  %v6935 = vrot.slane %v6934, 4
  %v6936 = vadd.f32 %v6934, %v6935
  %v6937 = vrot.slane %v6936, 2
  %v6938 = vadd.f32 %v6936, %v6937
  %v6939 = vrot.slane %v6938, 1
  %v6940 = vadd.f32 %v6938, %v6939
  %s6941 = scalar_lea.vmem %s1, 48
  %v6942 = vld [vmem:[%s6941] sm:$0xff]
  %v6943 = vld [vmem:[%s6941 + $0x8] sm:$0xff]
  %v6944 = vld [vmem:[%s6941 + $0x10] sm:$0x7]
  %6946 = vset.pattern.permute.xlu0 0
  %6947 = vperm.xlu0 %6946, %v6942
  %v6948 = vpop.permute.xlu0 %6947
  %6951 = vset.pattern.permute.xlu0 0
  %6952 = vperm.xlu0 %6951, %v6943
  %v6953 = vpop.permute.xlu0 %6952
  %6956 = vset.pattern.permute.xlu0 0
  %6957 = vperm.xlu0 %6956, %v6944
  %v6958 = vpop.permute.xlu0 %6957
  %v6960 = vmul.f32 %v6948, %v6890
  %v6961 = vmul.f32 %v6948, %v6900
  %v6962 = vmul.f32 %v6953, %v6890
  %v6963 = vmul.f32 %v6953, %v6900
  %v6964 = vmul.f32 %v6958, %v6890
  %v6965 = vmul.f32 %v6958, %v6900
  %v6966 = vadd.f32 %v6851, %v6960
  %v6967 = vadd.f32 %v6852, %v6961
  %v6968 = vadd.f32 %v6853, %v6962
  %v6969 = vadd.f32 %v6854, %v6963
  %v6970 = vadd.f32 %v6855, %v6964
  %v6971 = vadd.f32 %v6856, %v6965
  %s6972 = scalar_lea.vmem %s1, 120
  %v6973 = vld [vmem:[%s6972] sm:$0xff]
  %v6974 = vld [vmem:[%s6972 + $0x8] sm:$0xff]
  %v6975 = vld [vmem:[%s6972 + $0x10] sm:$0x7]
  %6977 = vset.pattern.permute.xlu0 0
  %6978 = vperm.xlu0 %6977, %v6973
  %v6979 = vpop.permute.xlu0 %6978
  %6982 = vset.pattern.permute.xlu0 0
  %6983 = vperm.xlu0 %6982, %v6974
  %v6984 = vpop.permute.xlu0 %6983
  %6987 = vset.pattern.permute.xlu0 0
  %6988 = vperm.xlu0 %6987, %v6975
  %v6989 = vpop.permute.xlu0 %6988
  %v6991 = vmul.f32 %v6979, %v6910
  %v6992 = vmul.f32 %v6979, %v6920
  %v6993 = vmul.f32 %v6984, %v6910
  %v6994 = vmul.f32 %v6984, %v6920
  %v6995 = vmul.f32 %v6989, %v6910
  %v6996 = vmul.f32 %v6989, %v6920
  %v6997 = vadd.f32 %v6966, %v6991
  %v6998 = vadd.f32 %v6967, %v6992
  %v6999 = vadd.f32 %v6968, %v6993
  %v7000 = vadd.f32 %v6969, %v6994
  %v7001 = vadd.f32 %v6970, %v6995
  %v7002 = vadd.f32 %v6971, %v6996
  %s7003 = scalar_lea.vmem %s1, 192
  %v7004 = vld [vmem:[%s7003] sm:$0xff]
  %v7005 = vld [vmem:[%s7003 + $0x8] sm:$0xff]
  %v7006 = vld [vmem:[%s7003 + $0x10] sm:$0x7]
  %7008 = vset.pattern.permute.xlu0 0
  %7009 = vperm.xlu0 %7008, %v7004
  %v7010 = vpop.permute.xlu0 %7009
  %7013 = vset.pattern.permute.xlu0 0
  %7014 = vperm.xlu0 %7013, %v7005
  %v7015 = vpop.permute.xlu0 %7014
  %7018 = vset.pattern.permute.xlu0 0
  %7019 = vperm.xlu0 %7018, %v7006
  %v7020 = vpop.permute.xlu0 %7019
  %v7022 = vmul.f32 %v7010, %v6930
  %v7023 = vmul.f32 %v7010, %v6940
  %v7024 = vmul.f32 %v7015, %v6930
  %v7025 = vmul.f32 %v7015, %v6940
  %v7026 = vmul.f32 %v7020, %v6930
  %v7027 = vmul.f32 %v7020, %v6940
  %v7028 = vadd.f32 %v6997, %v7022
  %v7029 = vadd.f32 %v6998, %v7023
  %v7030 = vadd.f32 %v6999, %v7024
  %v7031 = vadd.f32 %v7000, %v7025
  %v7032 = vadd.f32 %v7001, %v7026
  %v7033 = vadd.f32 %v7002, %v7027
  %vm7034 = vcmp.eq.s32.totalorder %v15, %v6420
  %vm7035 = vcmp.eq.s32.totalorder %v15, %v6421
  %vm7036 = vcmp.eq.s32.totalorder %v15, %v6422
  %vm7037 = vcmp.eq.s32.totalorder %v15, %v6423
  %vm7038 = vcmp.eq.s32.totalorder %v15, %v6424
  %vm7039 = vcmp.eq.s32.totalorder %v15, %v6425
  %vm7040 = vcmp.eq.s32.totalorder %v16, %v6420
  %vm7041 = vcmp.eq.s32.totalorder %v16, %v6421
  %vm7042 = vcmp.eq.s32.totalorder %v16, %v6422
  %vm7043 = vcmp.eq.s32.totalorder %v16, %v6423
  %vm7044 = vcmp.eq.s32.totalorder %v16, %v6424
  %vm7045 = vcmp.eq.s32.totalorder %v16, %v6425
  %vm7046 = vcmp.eq.s32.totalorder %v17, %v6420
  %vm7047 = vcmp.eq.s32.totalorder %v17, %v6421
  %vm7048 = vcmp.eq.s32.totalorder %v17, %v6422
  %vm7049 = vcmp.eq.s32.totalorder %v17, %v6423
  %vm7050 = vcmp.eq.s32.totalorder %v17, %v6424
  %vm7051 = vcmp.eq.s32.totalorder %v17, %v6425
  %vm7052 = vcmp.eq.s32.totalorder %v18, %v6420
  %vm7053 = vcmp.eq.s32.totalorder %v18, %v6421
  %vm7054 = vcmp.eq.s32.totalorder %v18, %v6422
  %vm7055 = vcmp.eq.s32.totalorder %v18, %v6423
  %vm7056 = vcmp.eq.s32.totalorder %v18, %v6424
  %vm7057 = vcmp.eq.s32.totalorder %v18, %v6425
  %v7058 = vsel %vm7034, 1, 0
  %v7059 = vsel %vm7035, 1, 0
  %v7060 = vsel %vm7036, 1, 0
  %v7061 = vsel %vm7037, 1, 0
  %v7062 = vsel %vm7038, 1, 0
  %v7063 = vsel %vm7039, 1, 0
  %v7064 = vsel %vm7040, 1, 0
  %v7065 = vsel %vm7041, 1, 0
  %v7066 = vsel %vm7042, 1, 0
  %v7067 = vsel %vm7043, 1, 0
  %v7068 = vsel %vm7044, 1, 0
  %v7069 = vsel %vm7045, 1, 0
  %v7070 = vsel %vm7046, 1, 0
  %v7071 = vsel %vm7047, 1, 0
  %v7072 = vsel %vm7048, 1, 0
  %v7073 = vsel %vm7049, 1, 0
  %v7074 = vsel %vm7050, 1, 0
  %v7075 = vsel %vm7051, 1, 0
  %v7076 = vsel %vm7052, 1, 0
  %v7077 = vsel %vm7053, 1, 0
  %v7078 = vsel %vm7054, 1, 0
  %v7079 = vsel %vm7055, 1, 0
  %v7080 = vsel %vm7056, 1, 0
  %v7081 = vsel %vm7057, 1, 0
  %v7082 = vcvt.s32.f32 %v7058
  %v7083 = vcvt.s32.f32 %v7059
  %v7084 = vcvt.s32.f32 %v7060
  %v7085 = vcvt.s32.f32 %v7061
  %v7086 = vcvt.s32.f32 %v7062
  %v7087 = vcvt.s32.f32 %v7063
  %v7088 = vcvt.s32.f32 %v7064
  %v7089 = vcvt.s32.f32 %v7065
  %v7090 = vcvt.s32.f32 %v7066
  %v7091 = vcvt.s32.f32 %v7067
  %v7092 = vcvt.s32.f32 %v7068
  %v7093 = vcvt.s32.f32 %v7069
  %v7094 = vcvt.s32.f32 %v7070
  %v7095 = vcvt.s32.f32 %v7071
  %v7096 = vcvt.s32.f32 %v7072
  %v7097 = vcvt.s32.f32 %v7073
  %v7098 = vcvt.s32.f32 %v7074
  %v7099 = vcvt.s32.f32 %v7075
  %v7100 = vcvt.s32.f32 %v7076
  %v7101 = vcvt.s32.f32 %v7077
  %v7102 = vcvt.s32.f32 %v7078
  %v7103 = vcvt.s32.f32 %v7079
  %v7104 = vcvt.s32.f32 %v7080
  %v7105 = vcvt.s32.f32 %v7081
  %v7106 = vmul.f32 %v841, %v7082
  %v7107 = vmul.f32 %v843, %v7083
  %v7108 = vmul.f32 %v1531, %v7084
  %v7109 = vmul.f32 %v1533, %v7085
  %v7110 = vmul.f32 %v2221, %v7086
  %v7111 = vmul.f32 %v2223, %v7087
  %v7112 = vmul.f32 %v848, %v7088
  %v7113 = vmul.f32 %v850, %v7089
  %v7114 = vmul.f32 %v1538, %v7090
  %v7115 = vmul.f32 %v1540, %v7091
  %v7116 = vmul.f32 %v2228, %v7092
  %v7117 = vmul.f32 %v2230, %v7093
  %v7118 = vmul.f32 %v855, %v7094
  %v7119 = vmul.f32 %v857, %v7095
  %v7120 = vmul.f32 %v1545, %v7096
  %v7121 = vmul.f32 %v1547, %v7097
  %v7122 = vmul.f32 %v2235, %v7098
  %v7123 = vmul.f32 %v2237, %v7099
  %v7124 = vmul.f32 %v862, %v7100
  %v7125 = vmul.f32 %v864, %v7101
  %v7126 = vmul.f32 %v1552, %v7102
  %v7127 = vmul.f32 %v1554, %v7103
  %v7128 = vmul.f32 %v2242, %v7104
  %v7129 = vmul.f32 %v2244, %v7105
  %v7130 = vadd.f32 %v7106, %v7112
  %v7131 = vadd.f32 %v7130, %v7118
  %v7132 = vsel %vm157, %v7124, 0.0
  %v7133 = vadd.f32 %v7131, %v7132
  %v7134 = vrot.slane %v7133, 4
  %v7135 = vadd.f32 %v7133, %v7134
  %v7136 = vrot.slane %v7135, 2
  %v7137 = vadd.f32 %v7135, %v7136
  %v7138 = vrot.slane %v7137, 1
  %v7139 = vadd.f32 %v7137, %v7138
  %v7140 = vadd.f32 %v7107, %v7113
  %v7141 = vadd.f32 %v7140, %v7119
  %v7142 = vsel %vm157, %v7125, 0.0
  %v7143 = vadd.f32 %v7141, %v7142
  %v7144 = vrot.slane %v7143, 4
  %v7145 = vadd.f32 %v7143, %v7144
  %v7146 = vrot.slane %v7145, 2
  %v7147 = vadd.f32 %v7145, %v7146
  %v7148 = vrot.slane %v7147, 1
  %v7149 = vadd.f32 %v7147, %v7148
  %v7150 = vadd.f32 %v7108, %v7114
  %v7151 = vadd.f32 %v7150, %v7120
  %v7152 = vsel %vm157, %v7126, 0.0
  %v7153 = vadd.f32 %v7151, %v7152
  %v7154 = vrot.slane %v7153, 4
  %v7155 = vadd.f32 %v7153, %v7154
  %v7156 = vrot.slane %v7155, 2
  %v7157 = vadd.f32 %v7155, %v7156
  %v7158 = vrot.slane %v7157, 1
  %v7159 = vadd.f32 %v7157, %v7158
  %v7160 = vadd.f32 %v7109, %v7115
  %v7161 = vadd.f32 %v7160, %v7121
  %v7162 = vsel %vm157, %v7127, 0.0
  %v7163 = vadd.f32 %v7161, %v7162
  %v7164 = vrot.slane %v7163, 4
  %v7165 = vadd.f32 %v7163, %v7164
  %v7166 = vrot.slane %v7165, 2
  %v7167 = vadd.f32 %v7165, %v7166
  %v7168 = vrot.slane %v7167, 1
  %v7169 = vadd.f32 %v7167, %v7168
  %v7170 = vadd.f32 %v7110, %v7116
  %v7171 = vadd.f32 %v7170, %v7122
  %v7172 = vsel %vm157, %v7128, 0.0
  %v7173 = vadd.f32 %v7171, %v7172
  %v7174 = vrot.slane %v7173, 4
  %v7175 = vadd.f32 %v7173, %v7174
  %v7176 = vrot.slane %v7175, 2
  %v7177 = vadd.f32 %v7175, %v7176
  %v7178 = vrot.slane %v7177, 1
  %v7179 = vadd.f32 %v7177, %v7178
  %v7180 = vadd.f32 %v7111, %v7117
  %v7181 = vadd.f32 %v7180, %v7123
  %v7182 = vsel %vm157, %v7129, 0.0
  %v7183 = vadd.f32 %v7181, %v7182
  %v7184 = vrot.slane %v7183, 4
  %v7185 = vadd.f32 %v7183, %v7184
  %v7186 = vrot.slane %v7185, 2
  %v7187 = vadd.f32 %v7185, %v7186
  %v7188 = vrot.slane %v7187, 1
  %v7189 = vadd.f32 %v7187, %v7188
  %s7190 = scalar_lea.vmem %s1, 216
  %v7191 = vld [vmem:[%s7190] sm:$0xff]
  %v7192 = vld [vmem:[%s7190 + $0x8] sm:$0xff]
  %v7193 = vld [vmem:[%s7190 + $0x10] sm:$0x7]
  %7195 = vset.pattern.permute.xlu0 0
  %7196 = vperm.xlu0 %7195, %v7191
  %v7197 = vpop.permute.xlu0 %7196
  %7200 = vset.pattern.permute.xlu0 0
  %7201 = vperm.xlu0 %7200, %v7192
  %v7202 = vpop.permute.xlu0 %7201
  %7205 = vset.pattern.permute.xlu0 0
  %7206 = vperm.xlu0 %7205, %v7193
  %v7207 = vpop.permute.xlu0 %7206
  %v7209 = vmul.f32 %v7197, %v7139
  %v7210 = vmul.f32 %v7197, %v7149
  %v7211 = vmul.f32 %v7202, %v7139
  %v7212 = vmul.f32 %v7202, %v7149
  %v7213 = vmul.f32 %v7207, %v7139
  %v7214 = vmul.f32 %v7207, %v7149
  %v7215 = vadd.f32 %v7028, %v7209
  %v7216 = vadd.f32 %v7029, %v7210
  %v7217 = vadd.f32 %v7030, %v7211
  %v7218 = vadd.f32 %v7031, %v7212
  %v7219 = vadd.f32 %v7032, %v7213
  %v7220 = vadd.f32 %v7033, %v7214
  %s7221 = scalar_lea.vmem %s1, 288
  %v7222 = vld [vmem:[%s7221] sm:$0xff]
  %v7223 = vld [vmem:[%s7221 + $0x8] sm:$0xff]
  %v7224 = vld [vmem:[%s7221 + $0x10] sm:$0x7]
  %7226 = vset.pattern.permute.xlu0 0
  %7227 = vperm.xlu0 %7226, %v7222
  %v7228 = vpop.permute.xlu0 %7227
  %7231 = vset.pattern.permute.xlu0 0
  %7232 = vperm.xlu0 %7231, %v7223
  %v7233 = vpop.permute.xlu0 %7232
  %7236 = vset.pattern.permute.xlu0 0
  %7237 = vperm.xlu0 %7236, %v7224
  %v7238 = vpop.permute.xlu0 %7237
  %v7240 = vmul.f32 %v7228, %v7159
  %v7241 = vmul.f32 %v7228, %v7169
  %v7242 = vmul.f32 %v7233, %v7159
  %v7243 = vmul.f32 %v7233, %v7169
  %v7244 = vmul.f32 %v7238, %v7159
  %v7245 = vmul.f32 %v7238, %v7169
  %v7246 = vadd.f32 %v7215, %v7240
  %v7247 = vadd.f32 %v7216, %v7241
  %v7248 = vadd.f32 %v7217, %v7242
  %v7249 = vadd.f32 %v7218, %v7243
  %v7250 = vadd.f32 %v7219, %v7244
  %v7251 = vadd.f32 %v7220, %v7245
  %s7252 = scalar_lea.vmem %s1, 360
  %v7253 = vld [vmem:[%s7252] sm:$0xff]
  %v7254 = vld [vmem:[%s7252 + $0x8] sm:$0xff]
  %v7255 = vld [vmem:[%s7252 + $0x10] sm:$0x7]
  %7257 = vset.pattern.permute.xlu0 0
  %7258 = vperm.xlu0 %7257, %v7253
  %v7259 = vpop.permute.xlu0 %7258
  %7262 = vset.pattern.permute.xlu0 0
  %7263 = vperm.xlu0 %7262, %v7254
  %v7264 = vpop.permute.xlu0 %7263
  %7267 = vset.pattern.permute.xlu0 0
  %7268 = vperm.xlu0 %7267, %v7255
  %v7269 = vpop.permute.xlu0 %7268
  %v7271 = vmul.f32 %v7259, %v7179
  %v7272 = vmul.f32 %v7259, %v7189
  %v7273 = vmul.f32 %v7264, %v7179
  %v7274 = vmul.f32 %v7264, %v7189
  %v7275 = vmul.f32 %v7269, %v7179
  %v7276 = vmul.f32 %v7269, %v7189
  %v7277 = vadd.f32 %v7246, %v7271
  %v7278 = vadd.f32 %v7247, %v7272
  %v7279 = vadd.f32 %v7248, %v7273
  %v7280 = vadd.f32 %v7249, %v7274
  %v7281 = vadd.f32 %v7250, %v7275
  %v7282 = vadd.f32 %v7251, %v7276
  %v7283 = vmul.f32 %v2928, %v7082
  %v7284 = vmul.f32 %v2930, %v7083
  %v7285 = vmul.f32 %v3618, %v7084
  %v7286 = vmul.f32 %v3620, %v7085
  %v7287 = vmul.f32 %v4308, %v7086
  %v7288 = vmul.f32 %v4310, %v7087
  %v7289 = vmul.f32 %v2935, %v7088
  %v7290 = vmul.f32 %v2937, %v7089
  %v7291 = vmul.f32 %v3625, %v7090
  %v7292 = vmul.f32 %v3627, %v7091
  %v7293 = vmul.f32 %v4315, %v7092
  %v7294 = vmul.f32 %v4317, %v7093
  %v7295 = vmul.f32 %v2942, %v7094
  %v7296 = vmul.f32 %v2944, %v7095
  %v7297 = vmul.f32 %v3632, %v7096
  %v7298 = vmul.f32 %v3634, %v7097
  %v7299 = vmul.f32 %v4322, %v7098
  %v7300 = vmul.f32 %v4324, %v7099
  %v7301 = vmul.f32 %v2949, %v7100
  %v7302 = vmul.f32 %v2951, %v7101
  %v7303 = vmul.f32 %v3639, %v7102
  %v7304 = vmul.f32 %v3641, %v7103
  %v7305 = vmul.f32 %v4329, %v7104
  %v7306 = vmul.f32 %v4331, %v7105
  %v7307 = vadd.f32 %v7283, %v7289
  %v7308 = vadd.f32 %v7307, %v7295
  %v7309 = vsel %vm157, %v7301, 0.0
  %v7310 = vadd.f32 %v7308, %v7309
  %v7311 = vrot.slane %v7310, 4
  %v7312 = vadd.f32 %v7310, %v7311
  %v7313 = vrot.slane %v7312, 2
  %v7314 = vadd.f32 %v7312, %v7313
  %v7315 = vrot.slane %v7314, 1
  %v7316 = vadd.f32 %v7314, %v7315
  %v7317 = vadd.f32 %v7284, %v7290
  %v7318 = vadd.f32 %v7317, %v7296
  %v7319 = vsel %vm157, %v7302, 0.0
  %v7320 = vadd.f32 %v7318, %v7319
  %v7321 = vrot.slane %v7320, 4
  %v7322 = vadd.f32 %v7320, %v7321
  %v7323 = vrot.slane %v7322, 2
  %v7324 = vadd.f32 %v7322, %v7323
  %v7325 = vrot.slane %v7324, 1
  %v7326 = vadd.f32 %v7324, %v7325
  %v7327 = vadd.f32 %v7285, %v7291
  %v7328 = vadd.f32 %v7327, %v7297
  %v7329 = vsel %vm157, %v7303, 0.0
  %v7330 = vadd.f32 %v7328, %v7329
  %v7331 = vrot.slane %v7330, 4
  %v7332 = vadd.f32 %v7330, %v7331
  %v7333 = vrot.slane %v7332, 2
  %v7334 = vadd.f32 %v7332, %v7333
  %v7335 = vrot.slane %v7334, 1
  %v7336 = vadd.f32 %v7334, %v7335
  %v7337 = vadd.f32 %v7286, %v7292
  %v7338 = vadd.f32 %v7337, %v7298
  %v7339 = vsel %vm157, %v7304, 0.0
  %v7340 = vadd.f32 %v7338, %v7339
  %v7341 = vrot.slane %v7340, 4
  %v7342 = vadd.f32 %v7340, %v7341
  %v7343 = vrot.slane %v7342, 2
  %v7344 = vadd.f32 %v7342, %v7343
  %v7345 = vrot.slane %v7344, 1
  %v7346 = vadd.f32 %v7344, %v7345
  %v7347 = vadd.f32 %v7287, %v7293
  %v7348 = vadd.f32 %v7347, %v7299
  %v7349 = vsel %vm157, %v7305, 0.0
  %v7350 = vadd.f32 %v7348, %v7349
  %v7351 = vrot.slane %v7350, 4
  %v7352 = vadd.f32 %v7350, %v7351
  %v7353 = vrot.slane %v7352, 2
  %v7354 = vadd.f32 %v7352, %v7353
  %v7355 = vrot.slane %v7354, 1
  %v7356 = vadd.f32 %v7354, %v7355
  %v7357 = vadd.f32 %v7288, %v7294
  %v7358 = vadd.f32 %v7357, %v7300
  %v7359 = vsel %vm157, %v7306, 0.0
  %v7360 = vadd.f32 %v7358, %v7359
  %v7361 = vrot.slane %v7360, 4
  %v7362 = vadd.f32 %v7360, %v7361
  %v7363 = vrot.slane %v7362, 2
  %v7364 = vadd.f32 %v7362, %v7363
  %v7365 = vrot.slane %v7364, 1
  %v7366 = vadd.f32 %v7364, %v7365
  %s7367 = scalar_lea.vmem %s1, 240
  %v7368 = vld [vmem:[%s7367] sm:$0xff]
  %v7369 = vld [vmem:[%s7367 + $0x8] sm:$0xff]
  %v7370 = vld [vmem:[%s7367 + $0x10] sm:$0x7]
  %7372 = vset.pattern.permute.xlu0 0
  %7373 = vperm.xlu0 %7372, %v7368
  %v7374 = vpop.permute.xlu0 %7373
  %7377 = vset.pattern.permute.xlu0 0
  %7378 = vperm.xlu0 %7377, %v7369
  %v7379 = vpop.permute.xlu0 %7378
  %7382 = vset.pattern.permute.xlu0 0
  %7383 = vperm.xlu0 %7382, %v7370
  %v7384 = vpop.permute.xlu0 %7383
  %v7386 = vmul.f32 %v7374, %v7316
  %v7387 = vmul.f32 %v7374, %v7326
  %v7388 = vmul.f32 %v7379, %v7316
  %v7389 = vmul.f32 %v7379, %v7326
  %v7390 = vmul.f32 %v7384, %v7316
  %v7391 = vmul.f32 %v7384, %v7326
  %v7392 = vadd.f32 %v7277, %v7386
  %v7393 = vadd.f32 %v7278, %v7387
  %v7394 = vadd.f32 %v7279, %v7388
  %v7395 = vadd.f32 %v7280, %v7389
  %v7396 = vadd.f32 %v7281, %v7390
  %v7397 = vadd.f32 %v7282, %v7391
  %s7398 = scalar_lea.vmem %s1, 312
  %v7399 = vld [vmem:[%s7398] sm:$0xff]
  %v7400 = vld [vmem:[%s7398 + $0x8] sm:$0xff]
  %v7401 = vld [vmem:[%s7398 + $0x10] sm:$0x7]
  %7403 = vset.pattern.permute.xlu0 0
  %7404 = vperm.xlu0 %7403, %v7399
  %v7405 = vpop.permute.xlu0 %7404
  %7408 = vset.pattern.permute.xlu0 0
  %7409 = vperm.xlu0 %7408, %v7400
  %v7410 = vpop.permute.xlu0 %7409
  %7413 = vset.pattern.permute.xlu0 0
  %7414 = vperm.xlu0 %7413, %v7401
  %v7415 = vpop.permute.xlu0 %7414
  %v7417 = vmul.f32 %v7405, %v7336
  %v7418 = vmul.f32 %v7405, %v7346
  %v7419 = vmul.f32 %v7410, %v7336
  %v7420 = vmul.f32 %v7410, %v7346
  %v7421 = vmul.f32 %v7415, %v7336
  %v7422 = vmul.f32 %v7415, %v7346
  %v7423 = vadd.f32 %v7392, %v7417
  %v7424 = vadd.f32 %v7393, %v7418
  %v7425 = vadd.f32 %v7394, %v7419
  %v7426 = vadd.f32 %v7395, %v7420
  %v7427 = vadd.f32 %v7396, %v7421
  %v7428 = vadd.f32 %v7397, %v7422
  %s7429 = scalar_lea.vmem %s1, 384
  %v7430 = vld [vmem:[%s7429] sm:$0xff]
  %v7431 = vld [vmem:[%s7429 + $0x8] sm:$0xff]
  %v7432 = vld [vmem:[%s7429 + $0x10] sm:$0x7]
  %7434 = vset.pattern.permute.xlu0 0
  %7435 = vperm.xlu0 %7434, %v7430
  %v7436 = vpop.permute.xlu0 %7435
  %7439 = vset.pattern.permute.xlu0 0
  %7440 = vperm.xlu0 %7439, %v7431
  %v7441 = vpop.permute.xlu0 %7440
  %7444 = vset.pattern.permute.xlu0 0
  %7445 = vperm.xlu0 %7444, %v7432
  %v7446 = vpop.permute.xlu0 %7445
  %v7448 = vmul.f32 %v7436, %v7356
  %v7449 = vmul.f32 %v7436, %v7366
  %v7450 = vmul.f32 %v7441, %v7356
  %v7451 = vmul.f32 %v7441, %v7366
  %v7452 = vmul.f32 %v7446, %v7356
  %v7453 = vmul.f32 %v7446, %v7366
  %v7454 = vadd.f32 %v7423, %v7448
  %v7455 = vadd.f32 %v7424, %v7449
  %v7456 = vadd.f32 %v7425, %v7450
  %v7457 = vadd.f32 %v7426, %v7451
  %v7458 = vadd.f32 %v7427, %v7452
  %v7459 = vadd.f32 %v7428, %v7453
  %v7460 = vmul.f32 %v5015, %v7082
  %v7461 = vmul.f32 %v5017, %v7083
  %v7462 = vmul.f32 %v5705, %v7084
  %v7463 = vmul.f32 %v5707, %v7085
  %v7464 = vmul.f32 %v6395, %v7086
  %v7465 = vmul.f32 %v6397, %v7087
  %v7466 = vmul.f32 %v5022, %v7088
  %v7467 = vmul.f32 %v5024, %v7089
  %v7468 = vmul.f32 %v5712, %v7090
  %v7469 = vmul.f32 %v5714, %v7091
  %v7470 = vmul.f32 %v6402, %v7092
  %v7471 = vmul.f32 %v6404, %v7093
  %v7472 = vmul.f32 %v5029, %v7094
  %v7473 = vmul.f32 %v5031, %v7095
  %v7474 = vmul.f32 %v5719, %v7096
  %v7475 = vmul.f32 %v5721, %v7097
  %v7476 = vmul.f32 %v6409, %v7098
  %v7477 = vmul.f32 %v6411, %v7099
  %v7478 = vmul.f32 %v5036, %v7100
  %v7479 = vmul.f32 %v5038, %v7101
  %v7480 = vmul.f32 %v5726, %v7102
  %v7481 = vmul.f32 %v5728, %v7103
  %v7482 = vmul.f32 %v6416, %v7104
  %v7483 = vmul.f32 %v6418, %v7105
  %v7484 = vadd.f32 %v7460, %v7466
  %v7485 = vadd.f32 %v7484, %v7472
  %v7486 = vsel %vm157, %v7478, 0.0
  %v7487 = vadd.f32 %v7485, %v7486
  %v7488 = vrot.slane %v7487, 4
  %v7489 = vadd.f32 %v7487, %v7488
  %v7490 = vrot.slane %v7489, 2
  %v7491 = vadd.f32 %v7489, %v7490
  %v7492 = vrot.slane %v7491, 1
  %v7493 = vadd.f32 %v7491, %v7492
  %v7494 = vadd.f32 %v7461, %v7467
  %v7495 = vadd.f32 %v7494, %v7473
  %v7496 = vsel %vm157, %v7479, 0.0
  %v7497 = vadd.f32 %v7495, %v7496
  %v7498 = vrot.slane %v7497, 4
  %v7499 = vadd.f32 %v7497, %v7498
  %v7500 = vrot.slane %v7499, 2
  %v7501 = vadd.f32 %v7499, %v7500
  %v7502 = vrot.slane %v7501, 1
  %v7503 = vadd.f32 %v7501, %v7502
  %v7504 = vadd.f32 %v7462, %v7468
  %v7505 = vadd.f32 %v7504, %v7474
  %v7506 = vsel %vm157, %v7480, 0.0
  %v7507 = vadd.f32 %v7505, %v7506
  %v7508 = vrot.slane %v7507, 4
  %v7509 = vadd.f32 %v7507, %v7508
  %v7510 = vrot.slane %v7509, 2
  %v7511 = vadd.f32 %v7509, %v7510
  %v7512 = vrot.slane %v7511, 1
  %v7513 = vadd.f32 %v7511, %v7512
  %v7514 = vadd.f32 %v7463, %v7469
  %v7515 = vadd.f32 %v7514, %v7475
  %v7516 = vsel %vm157, %v7481, 0.0
  %v7517 = vadd.f32 %v7515, %v7516
  %v7518 = vrot.slane %v7517, 4
  %v7519 = vadd.f32 %v7517, %v7518
  %v7520 = vrot.slane %v7519, 2
  %v7521 = vadd.f32 %v7519, %v7520
  %v7522 = vrot.slane %v7521, 1
  %v7523 = vadd.f32 %v7521, %v7522
  %v7524 = vadd.f32 %v7464, %v7470
  %v7525 = vadd.f32 %v7524, %v7476
  %v7526 = vsel %vm157, %v7482, 0.0
  %v7527 = vadd.f32 %v7525, %v7526
  %v7528 = vrot.slane %v7527, 4
  %v7529 = vadd.f32 %v7527, %v7528
  %v7530 = vrot.slane %v7529, 2
  %v7531 = vadd.f32 %v7529, %v7530
  %v7532 = vrot.slane %v7531, 1
  %v7533 = vadd.f32 %v7531, %v7532
  %v7534 = vadd.f32 %v7465, %v7471
  %v7535 = vadd.f32 %v7534, %v7477
  %v7536 = vsel %vm157, %v7483, 0.0
  %v7537 = vadd.f32 %v7535, %v7536
  %v7538 = vrot.slane %v7537, 4
  %v7539 = vadd.f32 %v7537, %v7538
  %v7540 = vrot.slane %v7539, 2
  %v7541 = vadd.f32 %v7539, %v7540
  %v7542 = vrot.slane %v7541, 1
  %v7543 = vadd.f32 %v7541, %v7542
  %s7544 = scalar_lea.vmem %s1, 264
  %v7545 = vld [vmem:[%s7544] sm:$0xff]
  %v7546 = vld [vmem:[%s7544 + $0x8] sm:$0xff]
  %v7547 = vld [vmem:[%s7544 + $0x10] sm:$0x7]
  %7549 = vset.pattern.permute.xlu0 0
  %7550 = vperm.xlu0 %7549, %v7545
  %v7551 = vpop.permute.xlu0 %7550
  %7554 = vset.pattern.permute.xlu0 0
  %7555 = vperm.xlu0 %7554, %v7546
  %v7556 = vpop.permute.xlu0 %7555
  %7559 = vset.pattern.permute.xlu0 0
  %7560 = vperm.xlu0 %7559, %v7547
  %v7561 = vpop.permute.xlu0 %7560
  %v7563 = vmul.f32 %v7551, %v7493
  %v7564 = vmul.f32 %v7551, %v7503
  %v7565 = vmul.f32 %v7556, %v7493
  %v7566 = vmul.f32 %v7556, %v7503
  %v7567 = vmul.f32 %v7561, %v7493
  %v7568 = vmul.f32 %v7561, %v7503
  %v7569 = vadd.f32 %v7454, %v7563
  %v7570 = vadd.f32 %v7455, %v7564
  %v7571 = vadd.f32 %v7456, %v7565
  %v7572 = vadd.f32 %v7457, %v7566
  %v7573 = vadd.f32 %v7458, %v7567
  %v7574 = vadd.f32 %v7459, %v7568
  %s7575 = scalar_lea.vmem %s1, 336
  %v7576 = vld [vmem:[%s7575] sm:$0xff]
  %v7577 = vld [vmem:[%s7575 + $0x8] sm:$0xff]
  %v7578 = vld [vmem:[%s7575 + $0x10] sm:$0x7]
  %7580 = vset.pattern.permute.xlu0 0
  %7581 = vperm.xlu0 %7580, %v7576
  %v7582 = vpop.permute.xlu0 %7581
  %7585 = vset.pattern.permute.xlu0 0
  %7586 = vperm.xlu0 %7585, %v7577
  %v7587 = vpop.permute.xlu0 %7586
  %7590 = vset.pattern.permute.xlu0 0
  %7591 = vperm.xlu0 %7590, %v7578
  %v7592 = vpop.permute.xlu0 %7591
  %v7594 = vmul.f32 %v7582, %v7513
  %v7595 = vmul.f32 %v7582, %v7523
  %v7596 = vmul.f32 %v7587, %v7513
  %v7597 = vmul.f32 %v7587, %v7523
  %v7598 = vmul.f32 %v7592, %v7513
  %v7599 = vmul.f32 %v7592, %v7523
  %v7600 = vadd.f32 %v7569, %v7594
  %v7601 = vadd.f32 %v7570, %v7595
  %v7602 = vadd.f32 %v7571, %v7596
  %v7603 = vadd.f32 %v7572, %v7597
  %v7604 = vadd.f32 %v7573, %v7598
  %v7605 = vadd.f32 %v7574, %v7599
  %s7606 = scalar_lea.vmem %s1, 408
  %v7607 = vld [vmem:[%s7606] sm:$0xff]
  %v7608 = vld [vmem:[%s7606 + $0x8] sm:$0xff]
  %v7609 = vld [vmem:[%s7606 + $0x10] sm:$0x7]
  %7611 = vset.pattern.permute.xlu0 0
  %7612 = vperm.xlu0 %7611, %v7607
  %v7613 = vpop.permute.xlu0 %7612
  %7616 = vset.pattern.permute.xlu0 0
  %7617 = vperm.xlu0 %7616, %v7608
  %v7618 = vpop.permute.xlu0 %7617
  %7621 = vset.pattern.permute.xlu0 0
  %7622 = vperm.xlu0 %7621, %v7609
  %v7623 = vpop.permute.xlu0 %7622
  %v7625 = vmul.f32 %v7613, %v7533
  %v7626 = vmul.f32 %v7613, %v7543
  %v7627 = vmul.f32 %v7618, %v7533
  %v7628 = vmul.f32 %v7618, %v7543
  %v7629 = vmul.f32 %v7623, %v7533
  %v7630 = vmul.f32 %v7623, %v7543
  %v7631 = vadd.f32 %v7600, %v7625
  %v7632 = vadd.f32 %v7601, %v7626
  %v7633 = vadd.f32 %v7602, %v7627
  %v7634 = vadd.f32 %v7603, %v7628
  %v7635 = vadd.f32 %v7604, %v7629
  %v7636 = vadd.f32 %v7605, %v7630
  %v7637 = vadd.s32 %v6420, 2
  %v7638 = vadd.s32 %v6421, 2
  %v7639 = vadd.s32 %v6422, 2
  %v7640 = vadd.s32 %v6423, 2
  %v7641 = vadd.s32 %v6424, 2
  %v7642 = vadd.s32 %v6425, 2
  %v7643 = vsub.s32 %v7637, 1
  %v7644 = vsub.s32 %v7638, 1
  %v7645 = vsub.s32 %v7639, 1
  %v7646 = vsub.s32 %v7640, 1
  %v7647 = vsub.s32 %v7641, 1
  %v7648 = vsub.s32 %v7642, 1
  %vm7649 = vcmp.eq.s32.totalorder %v15, %v7643
  %vm7650 = vcmp.eq.s32.totalorder %v15, %v7644
  %vm7651 = vcmp.eq.s32.totalorder %v15, %v7645
  %vm7652 = vcmp.eq.s32.totalorder %v15, %v7646
  %vm7653 = vcmp.eq.s32.totalorder %v15, %v7647
  %vm7654 = vcmp.eq.s32.totalorder %v15, %v7648
  %vm7655 = vcmp.eq.s32.totalorder %v16, %v7643
  %vm7656 = vcmp.eq.s32.totalorder %v16, %v7644
  %vm7657 = vcmp.eq.s32.totalorder %v16, %v7645
  %vm7658 = vcmp.eq.s32.totalorder %v16, %v7646
  %vm7659 = vcmp.eq.s32.totalorder %v16, %v7647
  %vm7660 = vcmp.eq.s32.totalorder %v16, %v7648
  %vm7661 = vcmp.eq.s32.totalorder %v17, %v7643
  %vm7662 = vcmp.eq.s32.totalorder %v17, %v7644
  %vm7663 = vcmp.eq.s32.totalorder %v17, %v7645
  %vm7664 = vcmp.eq.s32.totalorder %v17, %v7646
  %vm7665 = vcmp.eq.s32.totalorder %v17, %v7647
  %vm7666 = vcmp.eq.s32.totalorder %v17, %v7648
  %vm7667 = vcmp.eq.s32.totalorder %v18, %v7643
  %vm7668 = vcmp.eq.s32.totalorder %v18, %v7644
  %vm7669 = vcmp.eq.s32.totalorder %v18, %v7645
  %vm7670 = vcmp.eq.s32.totalorder %v18, %v7646
  %vm7671 = vcmp.eq.s32.totalorder %v18, %v7647
  %vm7672 = vcmp.eq.s32.totalorder %v18, %v7648
  %v7673 = vsel %vm7649, 1, 0
  %v7674 = vsel %vm7650, 1, 0
  %v7675 = vsel %vm7651, 1, 0
  %v7676 = vsel %vm7652, 1, 0
  %v7677 = vsel %vm7653, 1, 0
  %v7678 = vsel %vm7654, 1, 0
  %v7679 = vsel %vm7655, 1, 0
  %v7680 = vsel %vm7656, 1, 0
  %v7681 = vsel %vm7657, 1, 0
  %v7682 = vsel %vm7658, 1, 0
  %v7683 = vsel %vm7659, 1, 0
  %v7684 = vsel %vm7660, 1, 0
  %v7685 = vsel %vm7661, 1, 0
  %v7686 = vsel %vm7662, 1, 0
  %v7687 = vsel %vm7663, 1, 0
  %v7688 = vsel %vm7664, 1, 0
  %v7689 = vsel %vm7665, 1, 0
  %v7690 = vsel %vm7666, 1, 0
  %v7691 = vsel %vm7667, 1, 0
  %v7692 = vsel %vm7668, 1, 0
  %v7693 = vsel %vm7669, 1, 0
  %v7694 = vsel %vm7670, 1, 0
  %v7695 = vsel %vm7671, 1, 0
  %v7696 = vsel %vm7672, 1, 0
  %v7697 = vcvt.s32.f32 %v7673
  %v7698 = vcvt.s32.f32 %v7674
  %v7699 = vcvt.s32.f32 %v7675
  %v7700 = vcvt.s32.f32 %v7676
  %v7701 = vcvt.s32.f32 %v7677
  %v7702 = vcvt.s32.f32 %v7678
  %v7703 = vcvt.s32.f32 %v7679
  %v7704 = vcvt.s32.f32 %v7680
  %v7705 = vcvt.s32.f32 %v7681
  %v7706 = vcvt.s32.f32 %v7682
  %v7707 = vcvt.s32.f32 %v7683
  %v7708 = vcvt.s32.f32 %v7684
  %v7709 = vcvt.s32.f32 %v7685
  %v7710 = vcvt.s32.f32 %v7686
  %v7711 = vcvt.s32.f32 %v7687
  %v7712 = vcvt.s32.f32 %v7688
  %v7713 = vcvt.s32.f32 %v7689
  %v7714 = vcvt.s32.f32 %v7690
  %v7715 = vcvt.s32.f32 %v7691
  %v7716 = vcvt.s32.f32 %v7692
  %v7717 = vcvt.s32.f32 %v7693
  %v7718 = vcvt.s32.f32 %v7694
  %v7719 = vcvt.s32.f32 %v7695
  %v7720 = vcvt.s32.f32 %v7696
  %v7721 = vmul.f32 %v841, %v7697
  %v7722 = vmul.f32 %v843, %v7698
  %v7723 = vmul.f32 %v1531, %v7699
  %v7724 = vmul.f32 %v1533, %v7700
  %v7725 = vmul.f32 %v2221, %v7701
  %v7726 = vmul.f32 %v2223, %v7702
  %v7727 = vmul.f32 %v848, %v7703
  %v7728 = vmul.f32 %v850, %v7704
  %v7729 = vmul.f32 %v1538, %v7705
  %v7730 = vmul.f32 %v1540, %v7706
  %v7731 = vmul.f32 %v2228, %v7707
  %v7732 = vmul.f32 %v2230, %v7708
  %v7733 = vmul.f32 %v855, %v7709
  %v7734 = vmul.f32 %v857, %v7710
  %v7735 = vmul.f32 %v1545, %v7711
  %v7736 = vmul.f32 %v1547, %v7712
  %v7737 = vmul.f32 %v2235, %v7713
  %v7738 = vmul.f32 %v2237, %v7714
  %v7739 = vmul.f32 %v862, %v7715
  %v7740 = vmul.f32 %v864, %v7716
  %v7741 = vmul.f32 %v1552, %v7717
  %v7742 = vmul.f32 %v1554, %v7718
  %v7743 = vmul.f32 %v2242, %v7719
  %v7744 = vmul.f32 %v2244, %v7720
  %v7745 = vadd.f32 %v7721, %v7727
  %v7746 = vadd.f32 %v7745, %v7733
  %v7747 = vsel %vm157, %v7739, 0.0
  %v7748 = vadd.f32 %v7746, %v7747
  %v7749 = vrot.slane %v7748, 4
  %v7750 = vadd.f32 %v7748, %v7749
  %v7751 = vrot.slane %v7750, 2
  %v7752 = vadd.f32 %v7750, %v7751
  %v7753 = vrot.slane %v7752, 1
  %v7754 = vadd.f32 %v7752, %v7753
  %v7755 = vadd.f32 %v7722, %v7728
  %v7756 = vadd.f32 %v7755, %v7734
  %v7757 = vsel %vm157, %v7740, 0.0
  %v7758 = vadd.f32 %v7756, %v7757
  %v7759 = vrot.slane %v7758, 4
  %v7760 = vadd.f32 %v7758, %v7759
  %v7761 = vrot.slane %v7760, 2
  %v7762 = vadd.f32 %v7760, %v7761
  %v7763 = vrot.slane %v7762, 1
  %v7764 = vadd.f32 %v7762, %v7763
  %v7765 = vadd.f32 %v7723, %v7729
  %v7766 = vadd.f32 %v7765, %v7735
  %v7767 = vsel %vm157, %v7741, 0.0
  %v7768 = vadd.f32 %v7766, %v7767
  %v7769 = vrot.slane %v7768, 4
  %v7770 = vadd.f32 %v7768, %v7769
  %v7771 = vrot.slane %v7770, 2
  %v7772 = vadd.f32 %v7770, %v7771
  %v7773 = vrot.slane %v7772, 1
  %v7774 = vadd.f32 %v7772, %v7773
  %v7775 = vadd.f32 %v7724, %v7730
  %v7776 = vadd.f32 %v7775, %v7736
  %v7777 = vsel %vm157, %v7742, 0.0
  %v7778 = vadd.f32 %v7776, %v7777
  %v7779 = vrot.slane %v7778, 4
  %v7780 = vadd.f32 %v7778, %v7779
  %v7781 = vrot.slane %v7780, 2
  %v7782 = vadd.f32 %v7780, %v7781
  %v7783 = vrot.slane %v7782, 1
  %v7784 = vadd.f32 %v7782, %v7783
  %v7785 = vadd.f32 %v7725, %v7731
  %v7786 = vadd.f32 %v7785, %v7737
  %v7787 = vsel %vm157, %v7743, 0.0
  %v7788 = vadd.f32 %v7786, %v7787
  %v7789 = vrot.slane %v7788, 4
  %v7790 = vadd.f32 %v7788, %v7789
  %v7791 = vrot.slane %v7790, 2
  %v7792 = vadd.f32 %v7790, %v7791
  %v7793 = vrot.slane %v7792, 1
  %v7794 = vadd.f32 %v7792, %v7793
  %v7795 = vadd.f32 %v7726, %v7732
  %v7796 = vadd.f32 %v7795, %v7738
  %v7797 = vsel %vm157, %v7744, 0.0
  %v7798 = vadd.f32 %v7796, %v7797
  %v7799 = vrot.slane %v7798, 4
  %v7800 = vadd.f32 %v7798, %v7799
  %v7801 = vrot.slane %v7800, 2
  %v7802 = vadd.f32 %v7800, %v7801
  %v7803 = vrot.slane %v7802, 1
  %v7804 = vadd.f32 %v7802, %v7803
  %s7805 = scalar_lea.vmem %s1, 432
  %v7806 = vld [vmem:[%s7805] sm:$0xff]
  %v7807 = vld [vmem:[%s7805 + $0x8] sm:$0xff]
  %v7808 = vld [vmem:[%s7805 + $0x10] sm:$0x7]
  %7810 = vset.pattern.permute.xlu0 0
  %7811 = vperm.xlu0 %7810, %v7806
  %v7812 = vpop.permute.xlu0 %7811
  %7815 = vset.pattern.permute.xlu0 0
  %7816 = vperm.xlu0 %7815, %v7807
  %v7817 = vpop.permute.xlu0 %7816
  %7820 = vset.pattern.permute.xlu0 0
  %7821 = vperm.xlu0 %7820, %v7808
  %v7822 = vpop.permute.xlu0 %7821
  %v7824 = vmul.f32 %v7812, %v7754
  %v7825 = vmul.f32 %v7812, %v7764
  %v7826 = vmul.f32 %v7817, %v7754
  %v7827 = vmul.f32 %v7817, %v7764
  %v7828 = vmul.f32 %v7822, %v7754
  %v7829 = vmul.f32 %v7822, %v7764
  %v7830 = vadd.f32 %v7631, %v7824
  %v7831 = vadd.f32 %v7632, %v7825
  %v7832 = vadd.f32 %v7633, %v7826
  %v7833 = vadd.f32 %v7634, %v7827
  %v7834 = vadd.f32 %v7635, %v7828
  %v7835 = vadd.f32 %v7636, %v7829
  %s7836 = scalar_lea.vmem %s1, 504
  %v7837 = vld [vmem:[%s7836] sm:$0xff]
  %v7838 = vld [vmem:[%s7836 + $0x8] sm:$0xff]
  %v7839 = vld [vmem:[%s7836 + $0x10] sm:$0x7]
  %7841 = vset.pattern.permute.xlu0 0
  %7842 = vperm.xlu0 %7841, %v7837
  %v7843 = vpop.permute.xlu0 %7842
  %7846 = vset.pattern.permute.xlu0 0
  %7847 = vperm.xlu0 %7846, %v7838
  %v7848 = vpop.permute.xlu0 %7847
  %7851 = vset.pattern.permute.xlu0 0
  %7852 = vperm.xlu0 %7851, %v7839
  %v7853 = vpop.permute.xlu0 %7852
  %v7855 = vmul.f32 %v7843, %v7774
  %v7856 = vmul.f32 %v7843, %v7784
  %v7857 = vmul.f32 %v7848, %v7774
  %v7858 = vmul.f32 %v7848, %v7784
  %v7859 = vmul.f32 %v7853, %v7774
  %v7860 = vmul.f32 %v7853, %v7784
  %v7861 = vadd.f32 %v7830, %v7855
  %v7862 = vadd.f32 %v7831, %v7856
  %v7863 = vadd.f32 %v7832, %v7857
  %v7864 = vadd.f32 %v7833, %v7858
  %v7865 = vadd.f32 %v7834, %v7859
  %v7866 = vadd.f32 %v7835, %v7860
  %s7867 = scalar_lea.vmem %s1, 576
  %v7868 = vld [vmem:[%s7867] sm:$0xff]
  %v7869 = vld [vmem:[%s7867 + $0x8] sm:$0xff]
  %v7870 = vld [vmem:[%s7867 + $0x10] sm:$0x7]
  %7872 = vset.pattern.permute.xlu0 0
  %7873 = vperm.xlu0 %7872, %v7868
  %v7874 = vpop.permute.xlu0 %7873
  %7877 = vset.pattern.permute.xlu0 0
  %7878 = vperm.xlu0 %7877, %v7869
  %v7879 = vpop.permute.xlu0 %7878
  %7882 = vset.pattern.permute.xlu0 0
  %7883 = vperm.xlu0 %7882, %v7870
  %v7884 = vpop.permute.xlu0 %7883
  %v7886 = vmul.f32 %v7874, %v7794
  %v7887 = vmul.f32 %v7874, %v7804
  %v7888 = vmul.f32 %v7879, %v7794
  %v7889 = vmul.f32 %v7879, %v7804
  %v7890 = vmul.f32 %v7884, %v7794
  %v7891 = vmul.f32 %v7884, %v7804
  %v7892 = vadd.f32 %v7861, %v7886
  %v7893 = vadd.f32 %v7862, %v7887
  %v7894 = vadd.f32 %v7863, %v7888
  %v7895 = vadd.f32 %v7864, %v7889
  %v7896 = vadd.f32 %v7865, %v7890
  %v7897 = vadd.f32 %v7866, %v7891
  %v7898 = vmul.f32 %v2928, %v7697
  %v7899 = vmul.f32 %v2930, %v7698
  %v7900 = vmul.f32 %v3618, %v7699
  %v7901 = vmul.f32 %v3620, %v7700
  %v7902 = vmul.f32 %v4308, %v7701
  %v7903 = vmul.f32 %v4310, %v7702
  %v7904 = vmul.f32 %v2935, %v7703
  %v7905 = vmul.f32 %v2937, %v7704
  %v7906 = vmul.f32 %v3625, %v7705
  %v7907 = vmul.f32 %v3627, %v7706
  %v7908 = vmul.f32 %v4315, %v7707
  %v7909 = vmul.f32 %v4317, %v7708
  %v7910 = vmul.f32 %v2942, %v7709
  %v7911 = vmul.f32 %v2944, %v7710
  %v7912 = vmul.f32 %v3632, %v7711
  %v7913 = vmul.f32 %v3634, %v7712
  %v7914 = vmul.f32 %v4322, %v7713
  %v7915 = vmul.f32 %v4324, %v7714
  %v7916 = vmul.f32 %v2949, %v7715
  %v7917 = vmul.f32 %v2951, %v7716
  %v7918 = vmul.f32 %v3639, %v7717
  %v7919 = vmul.f32 %v3641, %v7718
  %v7920 = vmul.f32 %v4329, %v7719
  %v7921 = vmul.f32 %v4331, %v7720
  %v7922 = vadd.f32 %v7898, %v7904
  %v7923 = vadd.f32 %v7922, %v7910
  %v7924 = vsel %vm157, %v7916, 0.0
  %v7925 = vadd.f32 %v7923, %v7924
  %v7926 = vrot.slane %v7925, 4
  %v7927 = vadd.f32 %v7925, %v7926
  %v7928 = vrot.slane %v7927, 2
  %v7929 = vadd.f32 %v7927, %v7928
  %v7930 = vrot.slane %v7929, 1
  %v7931 = vadd.f32 %v7929, %v7930
  %v7932 = vadd.f32 %v7899, %v7905
  %v7933 = vadd.f32 %v7932, %v7911
  %v7934 = vsel %vm157, %v7917, 0.0
  %v7935 = vadd.f32 %v7933, %v7934
  %v7936 = vrot.slane %v7935, 4
  %v7937 = vadd.f32 %v7935, %v7936
  %v7938 = vrot.slane %v7937, 2
  %v7939 = vadd.f32 %v7937, %v7938
  %v7940 = vrot.slane %v7939, 1
  %v7941 = vadd.f32 %v7939, %v7940
  %v7942 = vadd.f32 %v7900, %v7906
  %v7943 = vadd.f32 %v7942, %v7912
  %v7944 = vsel %vm157, %v7918, 0.0
  %v7945 = vadd.f32 %v7943, %v7944
  %v7946 = vrot.slane %v7945, 4
  %v7947 = vadd.f32 %v7945, %v7946
  %v7948 = vrot.slane %v7947, 2
  %v7949 = vadd.f32 %v7947, %v7948
  %v7950 = vrot.slane %v7949, 1
  %v7951 = vadd.f32 %v7949, %v7950
  %v7952 = vadd.f32 %v7901, %v7907
  %v7953 = vadd.f32 %v7952, %v7913
  %v7954 = vsel %vm157, %v7919, 0.0
  %v7955 = vadd.f32 %v7953, %v7954
  %v7956 = vrot.slane %v7955, 4
  %v7957 = vadd.f32 %v7955, %v7956
  %v7958 = vrot.slane %v7957, 2
  %v7959 = vadd.f32 %v7957, %v7958
  %v7960 = vrot.slane %v7959, 1
  %v7961 = vadd.f32 %v7959, %v7960
  %v7962 = vadd.f32 %v7902, %v7908
  %v7963 = vadd.f32 %v7962, %v7914
  %v7964 = vsel %vm157, %v7920, 0.0
  %v7965 = vadd.f32 %v7963, %v7964
  %v7966 = vrot.slane %v7965, 4
  %v7967 = vadd.f32 %v7965, %v7966
  %v7968 = vrot.slane %v7967, 2
  %v7969 = vadd.f32 %v7967, %v7968
  %v7970 = vrot.slane %v7969, 1
  %v7971 = vadd.f32 %v7969, %v7970
  %v7972 = vadd.f32 %v7903, %v7909
  %v7973 = vadd.f32 %v7972, %v7915
  %v7974 = vsel %vm157, %v7921, 0.0
  %v7975 = vadd.f32 %v7973, %v7974
  %v7976 = vrot.slane %v7975, 4
  %v7977 = vadd.f32 %v7975, %v7976
  %v7978 = vrot.slane %v7977, 2
  %v7979 = vadd.f32 %v7977, %v7978
  %v7980 = vrot.slane %v7979, 1
  %v7981 = vadd.f32 %v7979, %v7980
  %s7982 = scalar_lea.vmem %s1, 456
  %v7983 = vld [vmem:[%s7982] sm:$0xff]
  %v7984 = vld [vmem:[%s7982 + $0x8] sm:$0xff]
  %v7985 = vld [vmem:[%s7982 + $0x10] sm:$0x7]
  %7987 = vset.pattern.permute.xlu0 0
  %7988 = vperm.xlu0 %7987, %v7983
  %v7989 = vpop.permute.xlu0 %7988
  %7992 = vset.pattern.permute.xlu0 0
  %7993 = vperm.xlu0 %7992, %v7984
  %v7994 = vpop.permute.xlu0 %7993
  %7997 = vset.pattern.permute.xlu0 0
  %7998 = vperm.xlu0 %7997, %v7985
  %v7999 = vpop.permute.xlu0 %7998
  %v8001 = vmul.f32 %v7989, %v7931
  %v8002 = vmul.f32 %v7989, %v7941
  %v8003 = vmul.f32 %v7994, %v7931
  %v8004 = vmul.f32 %v7994, %v7941
  %v8005 = vmul.f32 %v7999, %v7931
  %v8006 = vmul.f32 %v7999, %v7941
  %v8007 = vadd.f32 %v7892, %v8001
  %v8008 = vadd.f32 %v7893, %v8002
  %v8009 = vadd.f32 %v7894, %v8003
  %v8010 = vadd.f32 %v7895, %v8004
  %v8011 = vadd.f32 %v7896, %v8005
  %v8012 = vadd.f32 %v7897, %v8006
  %s8013 = scalar_lea.vmem %s1, 528
  %v8014 = vld [vmem:[%s8013] sm:$0xff]
  %v8015 = vld [vmem:[%s8013 + $0x8] sm:$0xff]
  %v8016 = vld [vmem:[%s8013 + $0x10] sm:$0x7]
  %8018 = vset.pattern.permute.xlu0 0
  %8019 = vperm.xlu0 %8018, %v8014
  %v8020 = vpop.permute.xlu0 %8019
  %8023 = vset.pattern.permute.xlu0 0
  %8024 = vperm.xlu0 %8023, %v8015
  %v8025 = vpop.permute.xlu0 %8024
  %8028 = vset.pattern.permute.xlu0 0
  %8029 = vperm.xlu0 %8028, %v8016
  %v8030 = vpop.permute.xlu0 %8029
  %v8032 = vmul.f32 %v8020, %v7951
  %v8033 = vmul.f32 %v8020, %v7961
  %v8034 = vmul.f32 %v8025, %v7951
  %v8035 = vmul.f32 %v8025, %v7961
  %v8036 = vmul.f32 %v8030, %v7951
  %v8037 = vmul.f32 %v8030, %v7961
  %v8038 = vadd.f32 %v8007, %v8032
  %v8039 = vadd.f32 %v8008, %v8033
  %v8040 = vadd.f32 %v8009, %v8034
  %v8041 = vadd.f32 %v8010, %v8035
  %v8042 = vadd.f32 %v8011, %v8036
  %v8043 = vadd.f32 %v8012, %v8037
  %s8044 = scalar_lea.vmem %s1, 600
  %v8045 = vld [vmem:[%s8044] sm:$0xff]
  %v8046 = vld [vmem:[%s8044 + $0x8] sm:$0xff]
  %v8047 = vld [vmem:[%s8044 + $0x10] sm:$0x7]
  %8049 = vset.pattern.permute.xlu0 0
  %8050 = vperm.xlu0 %8049, %v8045
  %v8051 = vpop.permute.xlu0 %8050
  %8054 = vset.pattern.permute.xlu0 0
  %8055 = vperm.xlu0 %8054, %v8046
  %v8056 = vpop.permute.xlu0 %8055
  %8059 = vset.pattern.permute.xlu0 0
  %8060 = vperm.xlu0 %8059, %v8047
  %v8061 = vpop.permute.xlu0 %8060
  %v8063 = vmul.f32 %v8051, %v7971
  %v8064 = vmul.f32 %v8051, %v7981
  %v8065 = vmul.f32 %v8056, %v7971
  %v8066 = vmul.f32 %v8056, %v7981
  %v8067 = vmul.f32 %v8061, %v7971
  %v8068 = vmul.f32 %v8061, %v7981
  %v8069 = vadd.f32 %v8038, %v8063
  %v8070 = vadd.f32 %v8039, %v8064
  %v8071 = vadd.f32 %v8040, %v8065
  %v8072 = vadd.f32 %v8041, %v8066
  %v8073 = vadd.f32 %v8042, %v8067
  %v8074 = vadd.f32 %v8043, %v8068
  %v8075 = vmul.f32 %v5015, %v7697
  %v8076 = vmul.f32 %v5017, %v7698
  %v8077 = vmul.f32 %v5705, %v7699
  %v8078 = vmul.f32 %v5707, %v7700
  %v8079 = vmul.f32 %v6395, %v7701
  %v8080 = vmul.f32 %v6397, %v7702
  %v8081 = vmul.f32 %v5022, %v7703
  %v8082 = vmul.f32 %v5024, %v7704
  %v8083 = vmul.f32 %v5712, %v7705
  %v8084 = vmul.f32 %v5714, %v7706
  %v8085 = vmul.f32 %v6402, %v7707
  %v8086 = vmul.f32 %v6404, %v7708
  %v8087 = vmul.f32 %v5029, %v7709
  %v8088 = vmul.f32 %v5031, %v7710
  %v8089 = vmul.f32 %v5719, %v7711
  %v8090 = vmul.f32 %v5721, %v7712
  %v8091 = vmul.f32 %v6409, %v7713
  %v8092 = vmul.f32 %v6411, %v7714
  %v8093 = vmul.f32 %v5036, %v7715
  %v8094 = vmul.f32 %v5038, %v7716
  %v8095 = vmul.f32 %v5726, %v7717
  %v8096 = vmul.f32 %v5728, %v7718
  %v8097 = vmul.f32 %v6416, %v7719
  %v8098 = vmul.f32 %v6418, %v7720
  %v8099 = vadd.f32 %v8075, %v8081
  %v8100 = vadd.f32 %v8099, %v8087
  %v8101 = vsel %vm157, %v8093, 0.0
  %v8102 = vadd.f32 %v8100, %v8101
  %v8103 = vrot.slane %v8102, 4
  %v8104 = vadd.f32 %v8102, %v8103
  %v8105 = vrot.slane %v8104, 2
  %v8106 = vadd.f32 %v8104, %v8105
  %v8107 = vrot.slane %v8106, 1
  %v8108 = vadd.f32 %v8106, %v8107
  %v8109 = vadd.f32 %v8076, %v8082
  %v8110 = vadd.f32 %v8109, %v8088
  %v8111 = vsel %vm157, %v8094, 0.0
  %v8112 = vadd.f32 %v8110, %v8111
  %v8113 = vrot.slane %v8112, 4
  %v8114 = vadd.f32 %v8112, %v8113
  %v8115 = vrot.slane %v8114, 2
  %v8116 = vadd.f32 %v8114, %v8115
  %v8117 = vrot.slane %v8116, 1
  %v8118 = vadd.f32 %v8116, %v8117
  %v8119 = vadd.f32 %v8077, %v8083
  %v8120 = vadd.f32 %v8119, %v8089
  %v8121 = vsel %vm157, %v8095, 0.0
  %v8122 = vadd.f32 %v8120, %v8121
  %v8123 = vrot.slane %v8122, 4
  %v8124 = vadd.f32 %v8122, %v8123
  %v8125 = vrot.slane %v8124, 2
  %v8126 = vadd.f32 %v8124, %v8125
  %v8127 = vrot.slane %v8126, 1
  %v8128 = vadd.f32 %v8126, %v8127
  %v8129 = vadd.f32 %v8078, %v8084
  %v8130 = vadd.f32 %v8129, %v8090
  %v8131 = vsel %vm157, %v8096, 0.0
  %v8132 = vadd.f32 %v8130, %v8131
  %v8133 = vrot.slane %v8132, 4
  %v8134 = vadd.f32 %v8132, %v8133
  %v8135 = vrot.slane %v8134, 2
  %v8136 = vadd.f32 %v8134, %v8135
  %v8137 = vrot.slane %v8136, 1
  %v8138 = vadd.f32 %v8136, %v8137
  %v8139 = vadd.f32 %v8079, %v8085
  %v8140 = vadd.f32 %v8139, %v8091
  %v8141 = vsel %vm157, %v8097, 0.0
  %v8142 = vadd.f32 %v8140, %v8141
  %v8143 = vrot.slane %v8142, 4
  %v8144 = vadd.f32 %v8142, %v8143
  %v8145 = vrot.slane %v8144, 2
  %v8146 = vadd.f32 %v8144, %v8145
  %v8147 = vrot.slane %v8146, 1
  %v8148 = vadd.f32 %v8146, %v8147
  %v8149 = vadd.f32 %v8080, %v8086
  %v8150 = vadd.f32 %v8149, %v8092
  %v8151 = vsel %vm157, %v8098, 0.0
  %v8152 = vadd.f32 %v8150, %v8151
  %v8153 = vrot.slane %v8152, 4
  %v8154 = vadd.f32 %v8152, %v8153
  %v8155 = vrot.slane %v8154, 2
  %v8156 = vadd.f32 %v8154, %v8155
  %v8157 = vrot.slane %v8156, 1
  %v8158 = vadd.f32 %v8156, %v8157
  %s8159 = scalar_lea.vmem %s1, 480
  %v8160 = vld [vmem:[%s8159] sm:$0xff]
  %v8161 = vld [vmem:[%s8159 + $0x8] sm:$0xff]
  %v8162 = vld [vmem:[%s8159 + $0x10] sm:$0x7]
  %8164 = vset.pattern.permute.xlu0 0
  %8165 = vperm.xlu0 %8164, %v8160
  %v8166 = vpop.permute.xlu0 %8165
  %8169 = vset.pattern.permute.xlu0 0
  %8170 = vperm.xlu0 %8169, %v8161
  %v8171 = vpop.permute.xlu0 %8170
  %8174 = vset.pattern.permute.xlu0 0
  %8175 = vperm.xlu0 %8174, %v8162
  %v8176 = vpop.permute.xlu0 %8175
  %v8178 = vmul.f32 %v8166, %v8108
  %v8179 = vmul.f32 %v8166, %v8118
  %v8180 = vmul.f32 %v8171, %v8108
  %v8181 = vmul.f32 %v8171, %v8118
  %v8182 = vmul.f32 %v8176, %v8108
  %v8183 = vmul.f32 %v8176, %v8118
  %v8184 = vadd.f32 %v8069, %v8178
  %v8185 = vadd.f32 %v8070, %v8179
  %v8186 = vadd.f32 %v8071, %v8180
  %v8187 = vadd.f32 %v8072, %v8181
  %v8188 = vadd.f32 %v8073, %v8182
  %v8189 = vadd.f32 %v8074, %v8183
  %s8190 = scalar_lea.vmem %s1, 552
  %v8191 = vld [vmem:[%s8190] sm:$0xff]
  %v8192 = vld [vmem:[%s8190 + $0x8] sm:$0xff]
  %v8193 = vld [vmem:[%s8190 + $0x10] sm:$0x7]
  %8195 = vset.pattern.permute.xlu0 0
  %8196 = vperm.xlu0 %8195, %v8191
  %v8197 = vpop.permute.xlu0 %8196
  %8200 = vset.pattern.permute.xlu0 0
  %8201 = vperm.xlu0 %8200, %v8192
  %v8202 = vpop.permute.xlu0 %8201
  %8205 = vset.pattern.permute.xlu0 0
  %8206 = vperm.xlu0 %8205, %v8193
  %v8207 = vpop.permute.xlu0 %8206
  %v8209 = vmul.f32 %v8197, %v8128
  %v8210 = vmul.f32 %v8197, %v8138
  %v8211 = vmul.f32 %v8202, %v8128
  %v8212 = vmul.f32 %v8202, %v8138
  %v8213 = vmul.f32 %v8207, %v8128
  %v8214 = vmul.f32 %v8207, %v8138
  %v8215 = vadd.f32 %v8184, %v8209
  %v8216 = vadd.f32 %v8185, %v8210
  %v8217 = vadd.f32 %v8186, %v8211
  %v8218 = vadd.f32 %v8187, %v8212
  %v8219 = vadd.f32 %v8188, %v8213
  %v8220 = vadd.f32 %v8189, %v8214
  %s8221 = scalar_lea.vmem %s1, 624
  %v8222 = vld [vmem:[%s8221] sm:$0xff]
  %v8223 = vld [vmem:[%s8221 + $0x8] sm:$0xff]
  %v8224 = vld [vmem:[%s8221 + $0x10] sm:$0x7]
  %8226 = vset.pattern.permute.xlu0 0
  %8227 = vperm.xlu0 %8226, %v8222
  %v8228 = vpop.permute.xlu0 %8227
  %8231 = vset.pattern.permute.xlu0 0
  %8232 = vperm.xlu0 %8231, %v8223
  %v8233 = vpop.permute.xlu0 %8232
  %8236 = vset.pattern.permute.xlu0 0
  %8237 = vperm.xlu0 %8236, %v8224
  %v8238 = vpop.permute.xlu0 %8237
  %v8240 = vmul.f32 %v8228, %v8148
  %v8241 = vmul.f32 %v8228, %v8158
  %v8242 = vmul.f32 %v8233, %v8148
  %v8243 = vmul.f32 %v8233, %v8158
  %v8244 = vmul.f32 %v8238, %v8148
  %v8245 = vmul.f32 %v8238, %v8158
  %v8246 = vadd.f32 %v8215, %v8240
  %v8247 = vadd.f32 %v8216, %v8241
  %v8248 = vadd.f32 %v8217, %v8242
  %v8249 = vadd.f32 %v8218, %v8243
  %v8250 = vadd.f32 %v8219, %v8244
  %v8251 = vadd.f32 %v8220, %v8245
  %v8252 = vld [vmem:[%s2] sm:$0xff]
  %v8253 = vld [vmem:[%s2 + $0x8] sm:$0xff]
  %v8254 = vld [vmem:[%s2 + $0x10] sm:$0x7]
  %8256 = vset.pattern.permute.xlu0 0
  %8257 = vperm.xlu0 %8256, %v8252
  %v8258 = vpop.permute.xlu0 %8257
  %8261 = vset.pattern.permute.xlu0 0
  %8262 = vperm.xlu0 %8261, %v8253
  %v8263 = vpop.permute.xlu0 %8262
  %8266 = vset.pattern.permute.xlu0 0
  %8267 = vperm.xlu0 %8266, %v8254
  %v8268 = vpop.permute.xlu0 %8267
  %v8270 = vadd.f32 %v8246, %v8258
  %v8271 = vadd.f32 %v8247, %v8258
  %v8272 = vadd.f32 %v8248, %v8263
  %v8273 = vadd.f32 %v8249, %v8263
  %v8274 = vadd.f32 %v8250, %v8268
  %v8275 = vadd.f32 %v8251, %v8268
  %v8276 = vmax.f32 %v8270, 0.0
  %v8277 = vmax.f32 %v8271, 0.0
  %v8278 = vmax.f32 %v8272, 0.0
  %v8279 = vmax.f32 %v8273, 0.0
  %v8280 = vmax.f32 %v8274, 0.0
  %v8281 = vmax.f32 %v8275, 0.0
  %8282 = vst [vmem:[%s3] sm:$0xff] %v8276
  %8283 = vst [vmem:[%s3 + $0x8] sm:$0xff] %v8277
  %8284 = vst [vmem:[%s3 + $0x10] sm:$0xff] %v8278
  %8285 = vst [vmem:[%s3 + $0x18] sm:$0xff] %v8279
  %8286 = vst [vmem:[%s3 + $0x20] sm:$0x7] %v8280
  %8287 = vst [vmem:[%s3 + $0x28] sm:$0x7] %v8281
  // Predicated region
  $region14: #{model_forward.1} parent=0 // pred_check
    _
  $region15: #{model_forward.1} parent=0 // pred_check_branch
    %8289 = sbr.rel (0) target = $region17
  $region16: #{model_forward.1} parent=0 // pred_region
    _
  $region17: #{model_forward.1} parent=0 // pred_fallthru
    _
  // Predicated region
  $region18: #{model_forward.1} parent=0 // pred_check
    _
  $region19: #{model_forward.1} parent=0 // pred_check_branch
    %8291 = sbr.rel (0) target = $region21
  $region20: #{model_forward.1} parent=0 // pred_region
    _
  $region21: #{model_forward.1} parent=0 // pred_fallthru
    _

</llo_original>
